<compile_context>
chip_gen: v7x
topology: tpu7x:2x2x1
jax: 0.10.0
libtpu: 0.0.40
codegen_flags: <defaults>
</compile_context>

<pallas_src>
import functools

import numpy as np
import jax
import jax.numpy as jnp
from jax.experimental import pallas as pl
from jax.experimental.pallas import tpu as pltpu

_VMEM_LIMIT_BYTES = 32 * 1024 * 1024


def _round_up(x, m):
    return (x + m - 1) // m * m


# ---------------------------------------------------------------------------
# XLA glue: im2col for the FIRST conv only (Cin=3 -> K=147).  The patch rows
# use pitch `ws` (= Wo + 2) so the kernel can store the conv output into the
# zero-padded pooling slab with a single contiguous store; the dummy trailing
# columns of each row are masked to zero in-kernel.
# ---------------------------------------------------------------------------
def _conv1_im2col(x_nhwc, *, k, stride, pad, ws):
    """(N,H,W,C) -> (N, Ho*ws, k*k*C) bf16 patches, (dy, dx, cin) tap order."""
    n, h, w, c = x_nhwc.shape
    ho = (h + 2 * pad - k) // stride + 1
    wo = (w + 2 * pad - k) // stride + 1
    xp = jnp.pad(x_nhwc, ((0, 0), (pad, pad), (pad, pad), (0, 0)))
    cols = []
    for dy in range(k):
        for dx in range(k):
            sl = jax.lax.slice(
                xp,
                (0, dy, dx, 0),
                (n, dy + stride * (ho - 1) + 1, dx + stride * (wo - 1) + 1, c),
                (1, stride, stride, 1))
            cols.append(sl)                                  # (n, ho, wo, c)
    patches = jnp.concatenate(cols, axis=-1)                 # (n, ho, wo, kkc)
    patches = jnp.pad(patches, ((0, 0), (0, 0), (0, ws - wo), (0, 0)))
    return patches.reshape(n, ho * ws, k * k * c).astype(jnp.bfloat16)


def _col_mask(ho, ws, wo):
    """(ho*ws, 1) f32 0/1 mask: 1 where the flat row's column index < wo."""
    m = (np.arange(ho * ws) % ws) < wo
    return jnp.asarray(m.astype(np.float32).reshape(ho * ws, 1))


# ---------------------------------------------------------------------------
# In-kernel helpers
# ---------------------------------------------------------------------------
def _masked(val, mask_ref):
    return jnp.where(mask_ref[...] > 0.5, val, 0.0)


def _store_slab(s_ref, val, off):
    """Write a (M, C) activation into a zero-padded slab with three
    contiguous stores (top border / interior at an 8-aligned offset / tail).
    Masked-to-zero garbage columns of `val` become the slab's horizontal
    padding, so no per-row scatter is needed."""
    rows, c = s_ref.shape
    m = val.shape[0]
    s_ref[0:off, :] = jnp.zeros((off, c), s_ref.dtype)
    s_ref[off:off + m, :] = val.astype(s_ref.dtype)
    s_ref[off + m:rows, :] = jnp.zeros((rows - off - m, c), s_ref.dtype)


def _conv3x3(s_ref, w_ref, b_ref, mask_ref, *, base, ws, ho, stride):
    """3x3 conv (pad=1, stride 1 or 2) + bias + ReLU over a zero-padded f32
    slab with row pitch ws.  Each tap is one contiguous (stride 1) or strided
    (stride 2) slice feeding one bf16 MXU matmul; two independent f32
    accumulators overlap MXU pushes with the result-FIFO drain.  Returns an
    (ho*ws, Cout) f32 value with garbage columns masked to zero."""
    m = ho * ws
    acc = [None, None]
    t = 0
    for dy in range(3):
        for dx in range(3):
            start = base + dy * ws + dx
            if stride == 1:
                lhs = s_ref[pl.ds(start, m), :]
            else:
                lhs = s_ref[pl.ds(start, m, stride=stride), :]
            d = jnp.dot(lhs.astype(jnp.bfloat16), w_ref[t],
                        preferred_element_type=jnp.float32)
            acc[t % 2] = d if acc[t % 2] is None else acc[t % 2] + d
            t += 1
    out = jnp.maximum(acc[0] + acc[1] + b_ref[...], 0.0)
    return _masked(out, mask_ref)


def _maxpool3x3s2(s_ref, mask_ref, *, base, ws, ho):
    """3x3 / stride-2 / pad-1 max pool over a zero-padded f32 slab (the
    pooled activation is post-ReLU, so zero padding never wins the max)."""
    m = ho * ws
    out = None
    for dy in range(3):
        for dx in range(3):
            v = s_ref[pl.ds(base + dy * ws + dx, m, stride=2), :]
            out = v if out is None else jnp.maximum(out, v)
    return _masked(out, mask_ref)


# ---------------------------------------------------------------------------
# The fused kernel: conv1 -> maxpool -> convBlock1 -> convBlock2 -> head
# ---------------------------------------------------------------------------
def _cnn_fused_kernel(
        patches_ref,
        w1_ref, b1_ref, w2a_ref, b2a_ref, w2b_ref, b2b_ref,
        w3a_ref, b3a_ref, w3b_ref, b3b_ref, w4_ref, b4_ref,
        m1_ref, mp_ref, mb1_ref, mb2_ref,
        o_ref,
        slab_a, slab_b, slab_c, slab_d, slab_e,
        *, ws, g):
    # inputCovLayer conv: ONE (M, 147) @ (147, 32) MXU matmul (im2col LHS),
    # f32 accumulation, bias + ReLU epilogue, dummy columns masked to zero.
    a = jnp.dot(patches_ref[0], w1_ref[...],
                preferred_element_type=jnp.float32)
    a = _masked(jnp.maximum(a + b1_ref[...], 0.0), m1_ref)
    _store_slab(slab_a, a, g["off_a"])

    # inputCovLayer maxpool (f32 VPU max chain over strided slab reads).
    p = _maxpool3x3s2(slab_a, mp_ref, base=g["skew_a"], ws=ws, ho=g["ho_p"])
    _store_slab(slab_b, p, g["off_b"])

    # convBlock1: 3x3/s2 + ReLU -> 3x3/s1 + ReLU (VMEM resident).
    x = _conv3x3(slab_b, w2a_ref, b2a_ref, mb1_ref,
                 base=g["skew_b"], ws=ws, ho=g["ho_b1"], stride=2)
    _store_slab(slab_c, x, g["off_c"])
    x = _conv3x3(slab_c, w2b_ref, b2b_ref, mb1_ref,
                 base=g["skew_c"], ws=ws, ho=g["ho_b1"], stride=1)
    _store_slab(slab_d, x, g["off_d"])

    # convBlock2: 3x3/s2 + ReLU -> 3x3/s1 + ReLU.
    x = _conv3x3(slab_d, w3a_ref, b3a_ref, mb2_ref,
                 base=g["skew_d"], ws=ws, ho=g["ho_b2"], stride=2)
    _store_slab(slab_e, x, g["off_e"])
    x = _conv3x3(slab_e, w3b_ref, b3b_ref, mb2_ref,
                 base=g["skew_e"], ws=ws, ho=g["ho_b2"], stride=1)

    # Head: spatial mean, then the 1x1 output conv (linear ops commute), so
    # only the (1, 6) logits row leaves the kernel.
    pooled = jnp.sum(x, axis=0, keepdims=True) * (
        1.0 / (g["ho_b2"] * g["wo_b2"]))
    logits = jnp.dot(pooled, w4_ref[...],
                     preferred_element_type=jnp.float32) + b4_ref[...]
    o_ref[0, :, :] = logits


# ---------------------------------------------------------------------------
# Wrapper (geometry + pallas_call)
# ---------------------------------------------------------------------------
def cnn_classifier_forward(x_nchw, params):
    """x_nchw: (N, 3, H, W) -> (N, 6) float32 logits (CNNClassifier.forward)."""
    x = jnp.transpose(x_nchw, (0, 2, 3, 1)).astype(jnp.float32)  # NCHW -> NHWC
    n, h, w, _ = x.shape

    # Static geometry.
    ho1, wo1 = (h - 1) // 2 + 1, (w - 1) // 2 + 1         # conv 7x7 / s2 / p3
    ho_p, wo_p = (ho1 - 1) // 2 + 1, (wo1 - 1) // 2 + 1   # maxpool 3 / s2 / p1
    ho_b1, wo_b1 = (ho_p - 1) // 2 + 1, (wo_p - 1) // 2 + 1
    ho_b2, wo_b2 = (ho_b1 - 1) // 2 + 1, (wo_b1 - 1) // 2 + 1
    ws = wo1 + 2                                          # common slab row pitch

    def slab_geom(h_valid):
        skew = (-(ws + 1)) % 8               # interior store lands 8-aligned
        off = skew + ws + 1
        rows = _round_up(skew + (h_valid + 4) * ws, 8)    # + safety rows
        return skew, off, rows

    skew_a, off_a, rows_a = slab_geom(ho1)
    skew_b, off_b, rows_b = slab_geom(ho_p)
    skew_c, off_c, rows_c = slab_geom(ho_b1)
    skew_d, off_d, rows_d = slab_geom(ho_b1)
    skew_e, off_e, rows_e = slab_geom(ho_b2)
    geom = dict(off_a=off_a, skew_a=skew_a, ho_p=ho_p,
                off_b=off_b, skew_b=skew_b, ho_b1=ho_b1,
                off_c=off_c, skew_c=skew_c,
                off_d=off_d, skew_d=skew_d, ho_b2=ho_b2, wo_b2=wo_b2,
                off_e=off_e, skew_e=skew_e)

    # Inputs: im2col patches for conv1 (bf16) + VMEM-resident weights/masks.
    patches = _conv1_im2col(x, k=7, stride=2, pad=3, ws=ws)
    m1 = ho1 * ws

    w1 = params["w1"].reshape(7 * 7 * 3, 32).astype(jnp.bfloat16)
    w2a = params["w2a"].reshape(9, 32, 64).astype(jnp.bfloat16)
    w2b = params["w2b"].reshape(9, 64, 64).astype(jnp.bfloat16)
    w3a = params["w3a"].reshape(9, 64, 128).astype(jnp.bfloat16)
    w3b = params["w3b"].reshape(9, 128, 128).astype(jnp.bfloat16)
    w4 = params["w4"].reshape(128, 6).astype(jnp.float32)
    b1 = params["b1"].reshape(1, 32).astype(jnp.float32)
    b2a = params["b2a"].reshape(1, 64).astype(jnp.float32)
    b2b = params["b2b"].reshape(1, 64).astype(jnp.float32)
    b3a = params["b3a"].reshape(1, 128).astype(jnp.float32)
    b3b = params["b3b"].reshape(1, 128).astype(jnp.float32)
    b4 = params["b4"].reshape(1, 6).astype(jnp.float32)

    mask1 = _col_mask(ho1, ws, wo1)
    mask_p = _col_mask(ho_p, ws, wo_p)
    mask_b1 = _col_mask(ho_b1, ws, wo_b1)
    mask_b2 = _col_mask(ho_b2, ws, wo_b2)

    resident = [w1, b1, w2a, b2a, w2b, b2b, w3a, b3a, w3b, b3b, w4, b4,
                mask1, mask_p, mask_b1, mask_b2]

    def const_index_map(rank):
        zeros = (0,) * rank

        def index_map(i):
            return zeros
        return index_map

    in_specs = [pl.BlockSpec((1, m1, patches.shape[-1]), lambda i: (i, 0, 0))]
    in_specs += [pl.BlockSpec(a.shape, const_index_map(a.ndim))
                 for a in resident]

    out = pl.pallas_call(
        functools.partial(_cnn_fused_kernel, ws=ws, g=geom),
        out_shape=jax.ShapeDtypeStruct((n, 1, 6), jnp.float32),
        grid=(n,),
        in_specs=in_specs,
        out_specs=pl.BlockSpec((1, 1, 6), lambda i: (i, 0, 0)),
        scratch_shapes=[
            pltpu.VMEM((rows_a, 32), jnp.float32),    # pool input slab
            pltpu.VMEM((rows_b, 32), jnp.float32),    # block1 convA input
            pltpu.VMEM((rows_c, 64), jnp.float32),    # block1 convB input
            pltpu.VMEM((rows_d, 64), jnp.float32),    # block2 convA input
            pltpu.VMEM((rows_e, 128), jnp.float32),   # block2 convB input
        ],
        compiler_params=pltpu.CompilerParams(
            dimension_semantics=("parallel",),
            vmem_limit_bytes=_VMEM_LIMIT_BYTES),
    )(patches, *resident)
    return out.reshape(n, 6)


# ---------------------------------------------------------------------------
# Parameters + pure-JAX f32 reference (matches CNNClassifier semantics).
# ---------------------------------------------------------------------------
def init_params(key):
    """Deterministic PyTorch-like uniform(-1/sqrt(fan_in), 1/sqrt(fan_in))."""
    def conv_init(k_, ksize, cin, cout):
        kw, kb = jax.random.split(k_)
        bound = 1.0 / float(jnp.sqrt(ksize * ksize * cin))
        w = jax.random.uniform(
            kw, (ksize, ksize, cin, cout), jnp.float32, -bound, bound)
        b = jax.random.uniform(kb, (cout,), jnp.float32, -bound, bound)
        return w, b

    keys = jax.random.split(key, 6)
    p = {}
    p["w1"], p["b1"] = conv_init(keys[0], 7, 3, 32)        # inputCovLayer conv
    p["w2a"], p["b2a"] = conv_init(keys[1], 3, 32, 64)     # convBlock1 conv1
    p["w2b"], p["b2b"] = conv_init(keys[2], 3, 64, 64)     # convBlock1 conv2
    p["w3a"], p["b3a"] = conv_init(keys[3], 3, 64, 128)    # convBlock2 conv1
    p["w3b"], p["b3b"] = conv_init(keys[4], 3, 128, 128)   # convBlock2 conv2
    p["w4"], p["b4"] = conv_init(keys[5], 1, 128, 6)       # outputConvLayer
    return p


def _reference_forward(x_nchw, params):
    x = jnp.transpose(x_nchw, (0, 2, 3, 1)).astype(jnp.float32)

    def conv(x, w, b, stride, pad):
        y = jax.lax.conv_general_dilated(
            x, w, (stride, stride), [(pad, pad), (pad, pad)],
            dimension_numbers=("NHWC", "HWIO", "NHWC"))
        return y + b.reshape(1, 1, 1, -1)

    x = jax.nn.relu(conv(x, params["w1"], params["b1"], 2, 3))
    x = jax.lax.reduce_window(
        x, -jnp.inf, jax.lax.max, (1, 3, 3, 1), (1, 2, 2, 1),
        [(0, 0), (1, 1), (1, 1), (0, 0)])
    x = jax.nn.relu(conv(x, params["w2a"], params["b2a"], 2, 1))
    x = jax.nn.relu(conv(x, params["w2b"], params["b2b"], 1, 1))
    x = jax.nn.relu(conv(x, params["w3a"], params["b3a"], 2, 1))
    x = jax.nn.relu(conv(x, params["w3b"], params["b3b"], 1, 1))
    x = conv(x, params["w4"], params["b4"], 1, 0)
    return jnp.mean(x, axis=(1, 2))


if __name__ == "__main__":
    key = jax.random.PRNGKey(0)
    k_in, k_p = jax.random.split(key)
    x = jax.random.normal(k_in, (2, 3, 32, 32), dtype=jnp.float32)
    params = init_params(k_p)

    fwd = jax.jit(cnn_classifier_forward)
    out = jax.block_until_ready(fwd(x, params))

    assert out.shape == (2, 6), out.shape
    assert bool(jnp.all(jnp.isfinite(out)))

    # Tolerance check against the pure-JAX f32 reference (small bf16 drift
    # expected, per the review's correctness note).
    ref = _reference_forward(x, params)
    err = float(jnp.max(jnp.abs(out - ref)))
    assert err < 0.25, f"kernel deviates from f32 reference: max|diff|={err}"

    print("KERNEL_OK")
</pallas_src>

<mosaic_0001>
module attributes {stable_mosaic.version = 11 : i64} {
  func.func @_cnn_fused_kernel(%arg0: i32, %arg1: memref<1x288x147xbf16, #tpu.memory_space<vmem>>, %arg2: memref<147x32xbf16, #tpu.memory_space<vmem>>, %arg3: memref<1x32xf32, #tpu.memory_space<vmem>>, %arg4: memref<9x32x64xbf16, #tpu.memory_space<vmem>>, %arg5: memref<1x64xf32, #tpu.memory_space<vmem>>, %arg6: memref<9x64x64xbf16, #tpu.memory_space<vmem>>, %arg7: memref<1x64xf32, #tpu.memory_space<vmem>>, %arg8: memref<9x64x128xbf16, #tpu.memory_space<vmem>>, %arg9: memref<1x128xf32, #tpu.memory_space<vmem>>, %arg10: memref<9x128x128xbf16, #tpu.memory_space<vmem>>, %arg11: memref<1x128xf32, #tpu.memory_space<vmem>>, %arg12: memref<128x6xf32, #tpu.memory_space<vmem>>, %arg13: memref<1x6xf32, #tpu.memory_space<vmem>>, %arg14: memref<288x1xf32, #tpu.memory_space<vmem>>, %arg15: memref<144x1xf32, #tpu.memory_space<vmem>>, %arg16: memref<72x1xf32, #tpu.memory_space<vmem>>, %arg17: memref<36x1xf32, #tpu.memory_space<vmem>>, %arg18: memref<1x1x6xf32, #tpu.memory_space<vmem>>, %arg19: memref<368x32xf32, #tpu.memory_space<vmem>>, %arg20: memref<224x32xf32, #tpu.memory_space<vmem>>, %arg21: memref<152x64xf32, #tpu.memory_space<vmem>>, %arg22: memref<152x64xf32, #tpu.memory_space<vmem>>, %arg23: memref<120x128xf32, #tpu.memory_space<vmem>>) attributes {dimension_semantics = [#tpu.dimension_semantics<parallel>], iteration_bounds = array<i64: 2>, scalar_prefetch = 0 : i64, scratch_operands = 5 : i64, tpu.core_type = #tpu.core_type<tc>, window_params = [{transform_indices = @transform_0, window_bounds = array<i64: 1, 288, 147>}, {pipeline_mode = #tpu.pipeline_mode<synchronous>, transform_indices = @transform_1, window_bounds = array<i64: 147, 32>}, {pipeline_mode = #tpu.pipeline_mode<synchronous>, transform_indices = @transform_2, window_bounds = array<i64: 1, 32>}, {pipeline_mode = #tpu.pipeline_mode<synchronous>, transform_indices = @transform_3, window_bounds = array<i64: 9, 32, 64>}, {pipeline_mode = #tpu.pipeline_mode<synchronous>, transform_indices = @transform_4, window_bounds = array<i64: 1, 64>}, {pipeline_mode = #tpu.pipeline_mode<synchronous>, transform_indices = @transform_5, window_bounds = array<i64: 9, 64, 64>}, {pipeline_mode = #tpu.pipeline_mode<synchronous>, transform_indices = @transform_6, window_bounds = array<i64: 1, 64>}, {pipeline_mode = #tpu.pipeline_mode<synchronous>, transform_indices = @transform_7, window_bounds = array<i64: 9, 64, 128>}, {pipeline_mode = #tpu.pipeline_mode<synchronous>, transform_indices = @transform_8, window_bounds = array<i64: 1, 128>}, {pipeline_mode = #tpu.pipeline_mode<synchronous>, transform_indices = @transform_9, window_bounds = array<i64: 9, 128, 128>}, {pipeline_mode = #tpu.pipeline_mode<synchronous>, transform_indices = @transform_10, window_bounds = array<i64: 1, 128>}, {pipeline_mode = #tpu.pipeline_mode<synchronous>, transform_indices = @transform_11, window_bounds = array<i64: 128, 6>}, {pipeline_mode = #tpu.pipeline_mode<synchronous>, transform_indices = @transform_12, window_bounds = array<i64: 1, 6>}, {pipeline_mode = #tpu.pipeline_mode<synchronous>, transform_indices = @transform_13, window_bounds = array<i64: 288, 1>}, {pipeline_mode = #tpu.pipeline_mode<synchronous>, transform_indices = @transform_14, window_bounds = array<i64: 144, 1>}, {pipeline_mode = #tpu.pipeline_mode<synchronous>, transform_indices = @transform_15, window_bounds = array<i64: 72, 1>}, {pipeline_mode = #tpu.pipeline_mode<synchronous>, transform_indices = @transform_16, window_bounds = array<i64: 36, 1>}, {transform_indices = @transform_17, window_bounds = array<i64: 1, 1, 6>}]} {
    %c0 = arith.constant 0 : index
    %c0_0 = arith.constant 0 : index
    %c0_1 = arith.constant 0 : index
    %0 = vector.load %arg1[%c0, %c0_0, %c0_1] : memref<1x288x147xbf16, #tpu.memory_space<vmem>>, vector<1x288x147xbf16>
    %1 = vector.shape_cast %0 : vector<1x288x147xbf16> to vector<288x147xbf16>
    %c0_2 = arith.constant 0 : index
    %c0_3 = arith.constant 0 : index
    %2 = vector.load %arg2[%c0_2, %c0_3] : memref<147x32xbf16, #tpu.memory_space<vmem>>, vector<147x32xbf16>
    %cst = arith.constant dense<0.000000e+00> : vector<288x32xf32>
    %3 = tpu.matmul %1, %2, %cst {dimension_numbers = #tpu.dot_dimension_numbers<[1], [0], [0], [1], [0, 0, 1, 1], [], []>} : vector<288x147xbf16>, vector<147x32xbf16>, vector<288x32xf32> -> vector<288x32xf32>
    %c0_4 = arith.constant 0 : index
    %c0_5 = arith.constant 0 : index
    %4 = vector.load %arg3[%c0_4, %c0_5] : memref<1x32xf32, #tpu.memory_space<vmem>>, vector<1x32xf32>
    %5 = vector.broadcast %4 : vector<1x32xf32> to vector<288x32xf32>
    %6 = arith.addf %3, %5 : vector<288x32xf32>
    %cst_6 = arith.constant 0.000000e+00 : f32
    %7 = vector.broadcast %cst_6 : f32 to vector<288x32xf32>
    %8 = arith.maximumf %6, %7 : vector<288x32xf32>
    %c0_7 = arith.constant 0 : index
    %c0_8 = arith.constant 0 : index
    %9 = vector.load %arg14[%c0_7, %c0_8] : memref<288x1xf32, #tpu.memory_space<vmem>>, vector<288x1xf32>
    %cst_9 = arith.constant 5.000000e-01 : f32
    %10 = vector.broadcast %cst_9 : f32 to vector<288x1xf32>
    %11 = arith.cmpf ogt, %9, %10 : vector<288x1xf32>
    %cst_10 = arith.constant 0.000000e+00 : f32
    %12 = vector.shape_cast %11 : vector<288x1xi1> to vector<288x1xi1>
    %13 = vector.broadcast %12 : vector<288x1xi1> to vector<288x32xi1>
    %14 = vector.broadcast %cst_10 : f32 to vector<288x32xf32>
    %15 = arith.select %13, %8, %14 : vector<288x32xi1>, vector<288x32xf32>
    %cst_11 = arith.constant 0.000000e+00 : f32
    %16 = vector.broadcast %cst_11 : f32 to vector<24x32xf32>
    %c0_12 = arith.constant 0 : index
    %c0_13 = arith.constant 0 : index
    %17 = vector.load %arg19[%c0_12, %c0_13] : memref<368x32xf32, #tpu.memory_space<vmem>>, vector<24x32xf32>
    tpu.vector_store %arg19[%c0_12, %c0_13], %16 {strides = array<i32>} : memref<368x32xf32, #tpu.memory_space<vmem>>, vector<24x32xf32>,
    %c24 = arith.constant 24 : index
    %c0_14 = arith.constant 0 : index
    %18 = vector.load %arg19[%c24, %c0_14] : memref<368x32xf32, #tpu.memory_space<vmem>>, vector<288x32xf32>
    tpu.vector_store %arg19[%c24, %c0_14], %15 {strides = array<i32>} : memref<368x32xf32, #tpu.memory_space<vmem>>, vector<288x32xf32>,
    %cst_15 = arith.constant 0.000000e+00 : f32
    %19 = vector.broadcast %cst_15 : f32 to vector<56x32xf32>
    %c312 = arith.constant 312 : index
    %c0_16 = arith.constant 0 : index
    %20 = vector.load %arg19[%c312, %c0_16] : memref<368x32xf32, #tpu.memory_space<vmem>>, vector<56x32xf32>
    tpu.vector_store %arg19[%c312, %c0_16], %19 {strides = array<i32>} : memref<368x32xf32, #tpu.memory_space<vmem>>, vector<56x32xf32>,
    %c5 = arith.constant 5 : index
    %c0_17 = arith.constant 0 : index
    %21 = tpu.strided_load %arg19[%c5, %c0_17] {strides = array<i32: 2, 1>} : memref<368x32xf32, #tpu.memory_space<vmem>>, vector<144x32xf32>
    %c6 = arith.constant 6 : index
    %c0_18 = arith.constant 0 : index
    %22 = tpu.strided_load %arg19[%c6, %c0_18] {strides = array<i32: 2, 1>} : memref<368x32xf32, #tpu.memory_space<vmem>>, vector<144x32xf32>
    %23 = arith.maximumf %21, %22 : vector<144x32xf32>
    %c7 = arith.constant 7 : index
    %c0_19 = arith.constant 0 : index
    %24 = tpu.strided_load %arg19[%c7, %c0_19] {strides = array<i32: 2, 1>} : memref<368x32xf32, #tpu.memory_space<vmem>>, vector<144x32xf32>
    %25 = arith.maximumf %23, %24 : vector<144x32xf32>
    %c23 = arith.constant 23 : index
    %c0_20 = arith.constant 0 : index
    %26 = tpu.strided_load %arg19[%c23, %c0_20] {strides = array<i32: 2, 1>} : memref<368x32xf32, #tpu.memory_space<vmem>>, vector<144x32xf32>
    %27 = arith.maximumf %25, %26 : vector<144x32xf32>
    %c24_21 = arith.constant 24 : index
    %c0_22 = arith.constant 0 : index
    %28 = tpu.strided_load %arg19[%c24_21, %c0_22] {strides = array<i32: 2, 1>} : memref<368x32xf32, #tpu.memory_space<vmem>>, vector<144x32xf32>
    %29 = arith.maximumf %27, %28 : vector<144x32xf32>
    %c25 = arith.constant 25 : index
    %c0_23 = arith.constant 0 : index
    %30 = tpu.strided_load %arg19[%c25, %c0_23] {strides = array<i32: 2, 1>} : memref<368x32xf32, #tpu.memory_space<vmem>>, vector<144x32xf32>
    %31 = arith.maximumf %29, %30 : vector<144x32xf32>
    %c41 = arith.constant 41 : index
    %c0_24 = arith.constant 0 : index
    %32 = tpu.strided_load %arg19[%c41, %c0_24] {strides = array<i32: 2, 1>} : memref<368x32xf32, #tpu.memory_space<vmem>>, vector<144x32xf32>
    %33 = arith.maximumf %31, %32 : vector<144x32xf32>
    %c42 = arith.constant 42 : index
    %c0_25 = arith.constant 0 : index
    %34 = tpu.strided_load %arg19[%c42, %c0_25] {strides = array<i32: 2, 1>} : memref<368x32xf32, #tpu.memory_space<vmem>>, vector<144x32xf32>
    %35 = arith.maximumf %33, %34 : vector<144x32xf32>
    %c43 = arith.constant 43 : index
    %c0_26 = arith.constant 0 : index
    %36 = tpu.strided_load %arg19[%c43, %c0_26] {strides = array<i32: 2, 1>} : memref<368x32xf32, #tpu.memory_space<vmem>>, vector<144x32xf32>
    %37 = arith.maximumf %35, %36 : vector<144x32xf32>
    %c0_27 = arith.constant 0 : index
    %c0_28 = arith.constant 0 : index
    %38 = vector.load %arg15[%c0_27, %c0_28] : memref<144x1xf32, #tpu.memory_space<vmem>>, vector<144x1xf32>
    %cst_29 = arith.constant 5.000000e-01 : f32
    %39 = vector.broadcast %cst_29 : f32 to vector<144x1xf32>
    %40 = arith.cmpf ogt, %38, %39 : vector<144x1xf32>
    %cst_30 = arith.constant 0.000000e+00 : f32
    %41 = vector.shape_cast %40 : vector<144x1xi1> to vector<144x1xi1>
    %42 = vector.broadcast %41 : vector<144x1xi1> to vector<144x32xi1>
    %43 = vector.broadcast %cst_30 : f32 to vector<144x32xf32>
    %44 = arith.select %42, %37, %43 : vector<144x32xi1>, vector<144x32xf32>
    %cst_31 = arith.constant 0.000000e+00 : f32
    %45 = vector.broadcast %cst_31 : f32 to vector<24x32xf32>
    %c0_32 = arith.constant 0 : index
    %c0_33 = arith.constant 0 : index
    %46 = vector.load %arg20[%c0_32, %c0_33] : memref<224x32xf32, #tpu.memory_space<vmem>>, vector<24x32xf32>
    tpu.vector_store %arg20[%c0_32, %c0_33], %45 {strides = array<i32>} : memref<224x32xf32, #tpu.memory_space<vmem>>, vector<24x32xf32>,
    %c24_34 = arith.constant 24 : index
    %c0_35 = arith.constant 0 : index
    %47 = vector.load %arg20[%c24_34, %c0_35] : memref<224x32xf32, #tpu.memory_space<vmem>>, vector<144x32xf32>
    tpu.vector_store %arg20[%c24_34, %c0_35], %44 {strides = array<i32>} : memref<224x32xf32, #tpu.memory_space<vmem>>, vector<144x32xf32>,
    %cst_36 = arith.constant 0.000000e+00 : f32
    %48 = vector.broadcast %cst_36 : f32 to vector<56x32xf32>
    %c168 = arith.constant 168 : index
    %c0_37 = arith.constant 0 : index
    %49 = vector.load %arg20[%c168, %c0_37] : memref<224x32xf32, #tpu.memory_space<vmem>>, vector<56x32xf32>
    tpu.vector_store %arg20[%c168, %c0_37], %48 {strides = array<i32>} : memref<224x32xf32, #tpu.memory_space<vmem>>, vector<56x32xf32>,
    %c5_38 = arith.constant 5 : index
    %c0_39 = arith.constant 0 : index
    %50 = tpu.strided_load %arg20[%c5_38, %c0_39] {strides = array<i32: 2, 1>} : memref<224x32xf32, #tpu.memory_space<vmem>>, vector<72x32xf32>
    %51 = arith.truncf %50 : vector<72x32xf32> to vector<72x32xbf16>
    %c0_40 = arith.constant 0 : index
    %c0_41 = arith.constant 0 : index
    %c0_42 = arith.constant 0 : index
    %52 = vector.load %arg4[%c0_40, %c0_41, %c0_42] : memref<9x32x64xbf16, #tpu.memory_space<vmem>>, vector<1x32x64xbf16>
    %53 = vector.shape_cast %52 : vector<1x32x64xbf16> to vector<32x64xbf16>
    %cst_43 = arith.constant dense<0.000000e+00> : vector<72x64xf32>
    %54 = tpu.matmul %51, %53, %cst_43 {dimension_numbers = #tpu.dot_dimension_numbers<[1], [0], [0], [1], [0, 0, 1, 1], [], []>} : vector<72x32xbf16>, vector<32x64xbf16>, vector<72x64xf32> -> vector<72x64xf32>
    %c6_44 = arith.constant 6 : index
    %c0_45 = arith.constant 0 : index
    %55 = tpu.strided_load %arg20[%c6_44, %c0_45] {strides = array<i32: 2, 1>} : memref<224x32xf32, #tpu.memory_space<vmem>>, vector<72x32xf32>
    %56 = arith.truncf %55 : vector<72x32xf32> to vector<72x32xbf16>
    %c1 = arith.constant 1 : index
    %c0_46 = arith.constant 0 : index
    %c0_47 = arith.constant 0 : index
    %57 = vector.load %arg4[%c1, %c0_46, %c0_47] : memref<9x32x64xbf16, #tpu.memory_space<vmem>>, vector<1x32x64xbf16>
    %58 = vector.shape_cast %57 : vector<1x32x64xbf16> to vector<32x64xbf16>
    %cst_48 = arith.constant dense<0.000000e+00> : vector<72x64xf32>
    %59 = tpu.matmul %56, %58, %cst_48 {dimension_numbers = #tpu.dot_dimension_numbers<[1], [0], [0], [1], [0, 0, 1, 1], [], []>} : vector<72x32xbf16>, vector<32x64xbf16>, vector<72x64xf32> -> vector<72x64xf32>
    %c7_49 = arith.constant 7 : index
    %c0_50 = arith.constant 0 : index
    %60 = tpu.strided_load %arg20[%c7_49, %c0_50] {strides = array<i32: 2, 1>} : memref<224x32xf32, #tpu.memory_space<vmem>>, vector<72x32xf32>
    %61 = arith.truncf %60 : vector<72x32xf32> to vector<72x32xbf16>
    %c2 = arith.constant 2 : index
    %c0_51 = arith.constant 0 : index
    %c0_52 = arith.constant 0 : index
    %62 = vector.load %arg4[%c2, %c0_51, %c0_52] : memref<9x32x64xbf16, #tpu.memory_space<vmem>>, vector<1x32x64xbf16>
    %63 = vector.shape_cast %62 : vector<1x32x64xbf16> to vector<32x64xbf16>
    %cst_53 = arith.constant dense<0.000000e+00> : vector<72x64xf32>
    %64 = tpu.matmul %61, %63, %cst_53 {dimension_numbers = #tpu.dot_dimension_numbers<[1], [0], [0], [1], [0, 0, 1, 1], [], []>} : vector<72x32xbf16>, vector<32x64xbf16>, vector<72x64xf32> -> vector<72x64xf32>
    %65 = arith.addf %54, %64 : vector<72x64xf32>
    %c23_54 = arith.constant 23 : index
    %c0_55 = arith.constant 0 : index
    %66 = tpu.strided_load %arg20[%c23_54, %c0_55] {strides = array<i32: 2, 1>} : memref<224x32xf32, #tpu.memory_space<vmem>>, vector<72x32xf32>
    %67 = arith.truncf %66 : vector<72x32xf32> to vector<72x32xbf16>
    %c3 = arith.constant 3 : index
    %c0_56 = arith.constant 0 : index
    %c0_57 = arith.constant 0 : index
    %68 = vector.load %arg4[%c3, %c0_56, %c0_57] : memref<9x32x64xbf16, #tpu.memory_space<vmem>>, vector<1x32x64xbf16>
    %69 = vector.shape_cast %68 : vector<1x32x64xbf16> to vector<32x64xbf16>
    %cst_58 = arith.constant dense<0.000000e+00> : vector<72x64xf32>
    %70 = tpu.matmul %67, %69, %cst_58 {dimension_numbers = #tpu.dot_dimension_numbers<[1], [0], [0], [1], [0, 0, 1, 1], [], []>} : vector<72x32xbf16>, vector<32x64xbf16>, vector<72x64xf32> -> vector<72x64xf32>
    %71 = arith.addf %59, %70 : vector<72x64xf32>
    %c24_59 = arith.constant 24 : index
    %c0_60 = arith.constant 0 : index
    %72 = tpu.strided_load %arg20[%c24_59, %c0_60] {strides = array<i32: 2, 1>} : memref<224x32xf32, #tpu.memory_space<vmem>>, vector<72x32xf32>
    %73 = arith.truncf %72 : vector<72x32xf32> to vector<72x32xbf16>
    %c4 = arith.constant 4 : index
    %c0_61 = arith.constant 0 : index
    %c0_62 = arith.constant 0 : index
    %74 = vector.load %arg4[%c4, %c0_61, %c0_62] : memref<9x32x64xbf16, #tpu.memory_space<vmem>>, vector<1x32x64xbf16>
    %75 = vector.shape_cast %74 : vector<1x32x64xbf16> to vector<32x64xbf16>
    %cst_63 = arith.constant dense<0.000000e+00> : vector<72x64xf32>
    %76 = tpu.matmul %73, %75, %cst_63 {dimension_numbers = #tpu.dot_dimension_numbers<[1], [0], [0], [1], [0, 0, 1, 1], [], []>} : vector<72x32xbf16>, vector<32x64xbf16>, vector<72x64xf32> -> vector<72x64xf32>
    %77 = arith.addf %65, %76 : vector<72x64xf32>
    %c25_64 = arith.constant 25 : index
    %c0_65 = arith.constant 0 : index
    %78 = tpu.strided_load %arg20[%c25_64, %c0_65] {strides = array<i32: 2, 1>} : memref<224x32xf32, #tpu.memory_space<vmem>>, vector<72x32xf32>
    %79 = arith.truncf %78 : vector<72x32xf32> to vector<72x32xbf16>
    %c5_66 = arith.constant 5 : index
    %c0_67 = arith.constant 0 : index
    %c0_68 = arith.constant 0 : index
    %80 = vector.load %arg4[%c5_66, %c0_67, %c0_68] : memref<9x32x64xbf16, #tpu.memory_space<vmem>>, vector<1x32x64xbf16>
    %81 = vector.shape_cast %80 : vector<1x32x64xbf16> to vector<32x64xbf16>
    %cst_69 = arith.constant dense<0.000000e+00> : vector<72x64xf32>
    %82 = tpu.matmul %79, %81, %cst_69 {dimension_numbers = #tpu.dot_dimension_numbers<[1], [0], [0], [1], [0, 0, 1, 1], [], []>} : vector<72x32xbf16>, vector<32x64xbf16>, vector<72x64xf32> -> vector<72x64xf32>
    %83 = arith.addf %71, %82 : vector<72x64xf32>
    %c41_70 = arith.constant 41 : index
    %c0_71 = arith.constant 0 : index
    %84 = tpu.strided_load %arg20[%c41_70, %c0_71] {strides = array<i32: 2, 1>} : memref<224x32xf32, #tpu.memory_space<vmem>>, vector<72x32xf32>
    %85 = arith.truncf %84 : vector<72x32xf32> to vector<72x32xbf16>
    %c6_72 = arith.constant 6 : index
    %c0_73 = arith.constant 0 : index
    %c0_74 = arith.constant 0 : index
    %86 = vector.load %arg4[%c6_72, %c0_73, %c0_74] : memref<9x32x64xbf16, #tpu.memory_space<vmem>>, vector<1x32x64xbf16>
    %87 = vector.shape_cast %86 : vector<1x32x64xbf16> to vector<32x64xbf16>
    %cst_75 = arith.constant dense<0.000000e+00> : vector<72x64xf32>
    %88 = tpu.matmul %85, %87, %cst_75 {dimension_numbers = #tpu.dot_dimension_numbers<[1], [0], [0], [1], [0, 0, 1, 1], [], []>} : vector<72x32xbf16>, vector<32x64xbf16>, vector<72x64xf32> -> vector<72x64xf32>
    %89 = arith.addf %77, %88 : vector<72x64xf32>
    %c42_76 = arith.constant 42 : index
    %c0_77 = arith.constant 0 : index
    %90 = tpu.strided_load %arg20[%c42_76, %c0_77] {strides = array<i32: 2, 1>} : memref<224x32xf32, #tpu.memory_space<vmem>>, vector<72x32xf32>
    %91 = arith.truncf %90 : vector<72x32xf32> to vector<72x32xbf16>
    %c7_78 = arith.constant 7 : index
    %c0_79 = arith.constant 0 : index
    %c0_80 = arith.constant 0 : index
    %92 = vector.load %arg4[%c7_78, %c0_79, %c0_80] : memref<9x32x64xbf16, #tpu.memory_space<vmem>>, vector<1x32x64xbf16>
    %93 = vector.shape_cast %92 : vector<1x32x64xbf16> to vector<32x64xbf16>
    %cst_81 = arith.constant dense<0.000000e+00> : vector<72x64xf32>
    %94 = tpu.matmul %91, %93, %cst_81 {dimension_numbers = #tpu.dot_dimension_numbers<[1], [0], [0], [1], [0, 0, 1, 1], [], []>} : vector<72x32xbf16>, vector<32x64xbf16>, vector<72x64xf32> -> vector<72x64xf32>
    %95 = arith.addf %83, %94 : vector<72x64xf32>
    %c43_82 = arith.constant 43 : index
    %c0_83 = arith.constant 0 : index
    %96 = tpu.strided_load %arg20[%c43_82, %c0_83] {strides = array<i32: 2, 1>} : memref<224x32xf32, #tpu.memory_space<vmem>>, vector<72x32xf32>
    %97 = arith.truncf %96 : vector<72x32xf32> to vector<72x32xbf16>
    %c8 = arith.constant 8 : index
    %c0_84 = arith.constant 0 : index
    %c0_85 = arith.constant 0 : index
    %98 = vector.load %arg4[%c8, %c0_84, %c0_85] : memref<9x32x64xbf16, #tpu.memory_space<vmem>>, vector<1x32x64xbf16>
    %99 = vector.shape_cast %98 : vector<1x32x64xbf16> to vector<32x64xbf16>
    %cst_86 = arith.constant dense<0.000000e+00> : vector<72x64xf32>
    %100 = tpu.matmul %97, %99, %cst_86 {dimension_numbers = #tpu.dot_dimension_numbers<[1], [0], [0], [1], [0, 0, 1, 1], [], []>} : vector<72x32xbf16>, vector<32x64xbf16>, vector<72x64xf32> -> vector<72x64xf32>
    %101 = arith.addf %89, %100 : vector<72x64xf32>
    %102 = arith.addf %101, %95 : vector<72x64xf32>
    %c0_87 = arith.constant 0 : index
    %c0_88 = arith.constant 0 : index
    %103 = vector.load %arg5[%c0_87, %c0_88] : memref<1x64xf32, #tpu.memory_space<vmem>>, vector<1x64xf32>
    %104 = vector.broadcast %103 : vector<1x64xf32> to vector<72x64xf32>
    %105 = arith.addf %102, %104 : vector<72x64xf32>
    %cst_89 = arith.constant 0.000000e+00 : f32
    %106 = vector.broadcast %cst_89 : f32 to vector<72x64xf32>
    %107 = arith.maximumf %105, %106 : vector<72x64xf32>
    %c0_90 = arith.constant 0 : index
    %c0_91 = arith.constant 0 : index
    %108 = vector.load %arg16[%c0_90, %c0_91] : memref<72x1xf32, #tpu.memory_space<vmem>>, vector<72x1xf32>
    %cst_92 = arith.constant 5.000000e-01 : f32
    %109 = vector.broadcast %cst_92 : f32 to vector<72x1xf32>
    %110 = arith.cmpf ogt, %108, %109 : vector<72x1xf32>
    %cst_93 = arith.constant 0.000000e+00 : f32
    %111 = vector.shape_cast %110 : vector<72x1xi1> to vector<72x1xi1>
    %112 = vector.broadcast %111 : vector<72x1xi1> to vector<72x64xi1>
    %113 = vector.broadcast %cst_93 : f32 to vector<72x64xf32>
    %114 = arith.select %112, %107, %113 : vector<72x64xi1>, vector<72x64xf32>
    %cst_94 = arith.constant 0.000000e+00 : f32
    %115 = vector.broadcast %cst_94 : f32 to vector<24x64xf32>
    %c0_95 = arith.constant 0 : index
    %c0_96 = arith.constant 0 : index
    %116 = vector.load %arg21[%c0_95, %c0_96] : memref<152x64xf32, #tpu.memory_space<vmem>>, vector<24x64xf32>
    tpu.vector_store %arg21[%c0_95, %c0_96], %115 {strides = array<i32>} : memref<152x64xf32, #tpu.memory_space<vmem>>, vector<24x64xf32>,
    %c24_97 = arith.constant 24 : index
    %c0_98 = arith.constant 0 : index
    %117 = vector.load %arg21[%c24_97, %c0_98] : memref<152x64xf32, #tpu.memory_space<vmem>>, vector<72x64xf32>
    tpu.vector_store %arg21[%c24_97, %c0_98], %114 {strides = array<i32>} : memref<152x64xf32, #tpu.memory_space<vmem>>, vector<72x64xf32>,
    %cst_99 = arith.constant 0.000000e+00 : f32
    %118 = vector.broadcast %cst_99 : f32 to vector<56x64xf32>
    %c96 = arith.constant 96 : index
    %c0_100 = arith.constant 0 : index
    %119 = vector.load %arg21[%c96, %c0_100] : memref<152x64xf32, #tpu.memory_space<vmem>>, vector<56x64xf32>
    tpu.vector_store %arg21[%c96, %c0_100], %118 {strides = array<i32>} : memref<152x64xf32, #tpu.memory_space<vmem>>, vector<56x64xf32>,
    %c5_101 = arith.constant 5 : index
    %c0_102 = arith.constant 0 : index
    %120 = vector.load %arg21[%c5_101, %c0_102] : memref<152x64xf32, #tpu.memory_space<vmem>>, vector<72x64xf32>
    %121 = arith.truncf %120 : vector<72x64xf32> to vector<72x64xbf16>
    %c0_103 = arith.constant 0 : index
    %c0_104 = arith.constant 0 : index
    %c0_105 = arith.constant 0 : index
    %122 = vector.load %arg6[%c0_103, %c0_104, %c0_105] : memref<9x64x64xbf16, #tpu.memory_space<vmem>>, vector<1x64x64xbf16>
    %123 = vector.shape_cast %122 : vector<1x64x64xbf16> to vector<64x64xbf16>
    %cst_106 = arith.constant dense<0.000000e+00> : vector<72x64xf32>
    %124 = tpu.matmul %121, %123, %cst_106 {dimension_numbers = #tpu.dot_dimension_numbers<[1], [0], [0], [1], [0, 0, 1, 1], [], []>} : vector<72x64xbf16>, vector<64x64xbf16>, vector<72x64xf32> -> vector<72x64xf32>
    %c6_107 = arith.constant 6 : index
    %c0_108 = arith.constant 0 : index
    %125 = vector.load %arg21[%c6_107, %c0_108] : memref<152x64xf32, #tpu.memory_space<vmem>>, vector<72x64xf32>
    %126 = arith.truncf %125 : vector<72x64xf32> to vector<72x64xbf16>
    %c1_109 = arith.constant 1 : index
    %c0_110 = arith.constant 0 : index
    %c0_111 = arith.constant 0 : index
    %127 = vector.load %arg6[%c1_109, %c0_110, %c0_111] : memref<9x64x64xbf16, #tpu.memory_space<vmem>>, vector<1x64x64xbf16>
    %128 = vector.shape_cast %127 : vector<1x64x64xbf16> to vector<64x64xbf16>
    %cst_112 = arith.constant dense<0.000000e+00> : vector<72x64xf32>
    %129 = tpu.matmul %126, %128, %cst_112 {dimension_numbers = #tpu.dot_dimension_numbers<[1], [0], [0], [1], [0, 0, 1, 1], [], []>} : vector<72x64xbf16>, vector<64x64xbf16>, vector<72x64xf32> -> vector<72x64xf32>
    %c7_113 = arith.constant 7 : index
    %c0_114 = arith.constant 0 : index
    %130 = vector.load %arg21[%c7_113, %c0_114] : memref<152x64xf32, #tpu.memory_space<vmem>>, vector<72x64xf32>
    %131 = arith.truncf %130 : vector<72x64xf32> to vector<72x64xbf16>
    %c2_115 = arith.constant 2 : index
    %c0_116 = arith.constant 0 : index
    %c0_117 = arith.constant 0 : index
    %132 = vector.load %arg6[%c2_115, %c0_116, %c0_117] : memref<9x64x64xbf16, #tpu.memory_space<vmem>>, vector<1x64x64xbf16>
    %133 = vector.shape_cast %132 : vector<1x64x64xbf16> to vector<64x64xbf16>
    %cst_118 = arith.constant dense<0.000000e+00> : vector<72x64xf32>
    %134 = tpu.matmul %131, %133, %cst_118 {dimension_numbers = #tpu.dot_dimension_numbers<[1], [0], [0], [1], [0, 0, 1, 1], [], []>} : vector<72x64xbf16>, vector<64x64xbf16>, vector<72x64xf32> -> vector<72x64xf32>
    %135 = arith.addf %124, %134 : vector<72x64xf32>
    %c23_119 = arith.constant 23 : index
    %c0_120 = arith.constant 0 : index
    %136 = vector.load %arg21[%c23_119, %c0_120] : memref<152x64xf32, #tpu.memory_space<vmem>>, vector<72x64xf32>
    %137 = arith.truncf %136 : vector<72x64xf32> to vector<72x64xbf16>
    %c3_121 = arith.constant 3 : index
    %c0_122 = arith.constant 0 : index
    %c0_123 = arith.constant 0 : index
    %138 = vector.load %arg6[%c3_121, %c0_122, %c0_123] : memref<9x64x64xbf16, #tpu.memory_space<vmem>>, vector<1x64x64xbf16>
    %139 = vector.shape_cast %138 : vector<1x64x64xbf16> to vector<64x64xbf16>
    %cst_124 = arith.constant dense<0.000000e+00> : vector<72x64xf32>
    %140 = tpu.matmul %137, %139, %cst_124 {dimension_numbers = #tpu.dot_dimension_numbers<[1], [0], [0], [1], [0, 0, 1, 1], [], []>} : vector<72x64xbf16>, vector<64x64xbf16>, vector<72x64xf32> -> vector<72x64xf32>
    %141 = arith.addf %129, %140 : vector<72x64xf32>
    %c24_125 = arith.constant 24 : index
    %c0_126 = arith.constant 0 : index
    %142 = vector.load %arg21[%c24_125, %c0_126] : memref<152x64xf32, #tpu.memory_space<vmem>>, vector<72x64xf32>
    %143 = arith.truncf %142 : vector<72x64xf32> to vector<72x64xbf16>
    %c4_127 = arith.constant 4 : index
    %c0_128 = arith.constant 0 : index
    %c0_129 = arith.constant 0 : index
    %144 = vector.load %arg6[%c4_127, %c0_128, %c0_129] : memref<9x64x64xbf16, #tpu.memory_space<vmem>>, vector<1x64x64xbf16>
    %145 = vector.shape_cast %144 : vector<1x64x64xbf16> to vector<64x64xbf16>
    %cst_130 = arith.constant dense<0.000000e+00> : vector<72x64xf32>
    %146 = tpu.matmul %143, %145, %cst_130 {dimension_numbers = #tpu.dot_dimension_numbers<[1], [0], [0], [1], [0, 0, 1, 1], [], []>} : vector<72x64xbf16>, vector<64x64xbf16>, vector<72x64xf32> -> vector<72x64xf32>
    %147 = arith.addf %135, %146 : vector<72x64xf32>
    %c25_131 = arith.constant 25 : index
    %c0_132 = arith.constant 0 : index
    %148 = vector.load %arg21[%c25_131, %c0_132] : memref<152x64xf32, #tpu.memory_space<vmem>>, vector<72x64xf32>
    %149 = arith.truncf %148 : vector<72x64xf32> to vector<72x64xbf16>
    %c5_133 = arith.constant 5 : index
    %c0_134 = arith.constant 0 : index
    %c0_135 = arith.constant 0 : index
    %150 = vector.load %arg6[%c5_133, %c0_134, %c0_135] : memref<9x64x64xbf16, #tpu.memory_space<vmem>>, vector<1x64x64xbf16>
    %151 = vector.shape_cast %150 : vector<1x64x64xbf16> to vector<64x64xbf16>
    %cst_136 = arith.constant dense<0.000000e+00> : vector<72x64xf32>
    %152 = tpu.matmul %149, %151, %cst_136 {dimension_numbers = #tpu.dot_dimension_numbers<[1], [0], [0], [1], [0, 0, 1, 1], [], []>} : vector<72x64xbf16>, vector<64x64xbf16>, vector<72x64xf32> -> vector<72x64xf32>
    %153 = arith.addf %141, %152 : vector<72x64xf32>
    %c41_137 = arith.constant 41 : index
    %c0_138 = arith.constant 0 : index
    %154 = vector.load %arg21[%c41_137, %c0_138] : memref<152x64xf32, #tpu.memory_space<vmem>>, vector<72x64xf32>
    %155 = arith.truncf %154 : vector<72x64xf32> to vector<72x64xbf16>
    %c6_139 = arith.constant 6 : index
    %c0_140 = arith.constant 0 : index
    %c0_141 = arith.constant 0 : index
    %156 = vector.load %arg6[%c6_139, %c0_140, %c0_141] : memref<9x64x64xbf16, #tpu.memory_space<vmem>>, vector<1x64x64xbf16>
    %157 = vector.shape_cast %156 : vector<1x64x64xbf16> to vector<64x64xbf16>
    %cst_142 = arith.constant dense<0.000000e+00> : vector<72x64xf32>
    %158 = tpu.matmul %155, %157, %cst_142 {dimension_numbers = #tpu.dot_dimension_numbers<[1], [0], [0], [1], [0, 0, 1, 1], [], []>} : vector<72x64xbf16>, vector<64x64xbf16>, vector<72x64xf32> -> vector<72x64xf32>
    %159 = arith.addf %147, %158 : vector<72x64xf32>
    %c42_143 = arith.constant 42 : index
    %c0_144 = arith.constant 0 : index
    %160 = vector.load %arg21[%c42_143, %c0_144] : memref<152x64xf32, #tpu.memory_space<vmem>>, vector<72x64xf32>
    %161 = arith.truncf %160 : vector<72x64xf32> to vector<72x64xbf16>
    %c7_145 = arith.constant 7 : index
    %c0_146 = arith.constant 0 : index
    %c0_147 = arith.constant 0 : index
    %162 = vector.load %arg6[%c7_145, %c0_146, %c0_147] : memref<9x64x64xbf16, #tpu.memory_space<vmem>>, vector<1x64x64xbf16>
    %163 = vector.shape_cast %162 : vector<1x64x64xbf16> to vector<64x64xbf16>
    %cst_148 = arith.constant dense<0.000000e+00> : vector<72x64xf32>
    %164 = tpu.matmul %161, %163, %cst_148 {dimension_numbers = #tpu.dot_dimension_numbers<[1], [0], [0], [1], [0, 0, 1, 1], [], []>} : vector<72x64xbf16>, vector<64x64xbf16>, vector<72x64xf32> -> vector<72x64xf32>
    %165 = arith.addf %153, %164 : vector<72x64xf32>
    %c43_149 = arith.constant 43 : index
    %c0_150 = arith.constant 0 : index
    %166 = vector.load %arg21[%c43_149, %c0_150] : memref<152x64xf32, #tpu.memory_space<vmem>>, vector<72x64xf32>
    %167 = arith.truncf %166 : vector<72x64xf32> to vector<72x64xbf16>
    %c8_151 = arith.constant 8 : index
    %c0_152 = arith.constant 0 : index
    %c0_153 = arith.constant 0 : index
    %168 = vector.load %arg6[%c8_151, %c0_152, %c0_153] : memref<9x64x64xbf16, #tpu.memory_space<vmem>>, vector<1x64x64xbf16>
    %169 = vector.shape_cast %168 : vector<1x64x64xbf16> to vector<64x64xbf16>
    %cst_154 = arith.constant dense<0.000000e+00> : vector<72x64xf32>
    %170 = tpu.matmul %167, %169, %cst_154 {dimension_numbers = #tpu.dot_dimension_numbers<[1], [0], [0], [1], [0, 0, 1, 1], [], []>} : vector<72x64xbf16>, vector<64x64xbf16>, vector<72x64xf32> -> vector<72x64xf32>
    %171 = arith.addf %159, %170 : vector<72x64xf32>
    %172 = arith.addf %171, %165 : vector<72x64xf32>
    %c0_155 = arith.constant 0 : index
    %c0_156 = arith.constant 0 : index
    %173 = vector.load %arg7[%c0_155, %c0_156] : memref<1x64xf32, #tpu.memory_space<vmem>>, vector<1x64xf32>
    %174 = vector.broadcast %173 : vector<1x64xf32> to vector<72x64xf32>
    %175 = arith.addf %172, %174 : vector<72x64xf32>
    %cst_157 = arith.constant 0.000000e+00 : f32
    %176 = vector.broadcast %cst_157 : f32 to vector<72x64xf32>
    %177 = arith.maximumf %175, %176 : vector<72x64xf32>
    %c0_158 = arith.constant 0 : index
    %c0_159 = arith.constant 0 : index
    %178 = vector.load %arg16[%c0_158, %c0_159] : memref<72x1xf32, #tpu.memory_space<vmem>>, vector<72x1xf32>
    %cst_160 = arith.constant 5.000000e-01 : f32
    %179 = vector.broadcast %cst_160 : f32 to vector<72x1xf32>
    %180 = arith.cmpf ogt, %178, %179 : vector<72x1xf32>
    %cst_161 = arith.constant 0.000000e+00 : f32
    %181 = vector.shape_cast %180 : vector<72x1xi1> to vector<72x1xi1>
    %182 = vector.broadcast %181 : vector<72x1xi1> to vector<72x64xi1>
    %183 = vector.broadcast %cst_161 : f32 to vector<72x64xf32>
    %184 = arith.select %182, %177, %183 : vector<72x64xi1>, vector<72x64xf32>
    %cst_162 = arith.constant 0.000000e+00 : f32
    %185 = vector.broadcast %cst_162 : f32 to vector<24x64xf32>
    %c0_163 = arith.constant 0 : index
    %c0_164 = arith.constant 0 : index
    %186 = vector.load %arg22[%c0_163, %c0_164] : memref<152x64xf32, #tpu.memory_space<vmem>>, vector<24x64xf32>
    tpu.vector_store %arg22[%c0_163, %c0_164], %185 {strides = array<i32>} : memref<152x64xf32, #tpu.memory_space<vmem>>, vector<24x64xf32>,
    %c24_165 = arith.constant 24 : index
    %c0_166 = arith.constant 0 : index
    %187 = vector.load %arg22[%c24_165, %c0_166] : memref<152x64xf32, #tpu.memory_space<vmem>>, vector<72x64xf32>
    tpu.vector_store %arg22[%c24_165, %c0_166], %184 {strides = array<i32>} : memref<152x64xf32, #tpu.memory_space<vmem>>, vector<72x64xf32>,
    %cst_167 = arith.constant 0.000000e+00 : f32
    %188 = vector.broadcast %cst_167 : f32 to vector<56x64xf32>
    %c96_168 = arith.constant 96 : index
    %c0_169 = arith.constant 0 : index
    %189 = vector.load %arg22[%c96_168, %c0_169] : memref<152x64xf32, #tpu.memory_space<vmem>>, vector<56x64xf32>
    tpu.vector_store %arg22[%c96_168, %c0_169], %188 {strides = array<i32>} : memref<152x64xf32, #tpu.memory_space<vmem>>, vector<56x64xf32>,
    %c5_170 = arith.constant 5 : index
    %c0_171 = arith.constant 0 : index
    %190 = tpu.strided_load %arg22[%c5_170, %c0_171] {strides = array<i32: 2, 1>} : memref<152x64xf32, #tpu.memory_space<vmem>>, vector<36x64xf32>
    %191 = arith.truncf %190 : vector<36x64xf32> to vector<36x64xbf16>
    %c0_172 = arith.constant 0 : index
    %c0_173 = arith.constant 0 : index
    %c0_174 = arith.constant 0 : index
    %192 = vector.load %arg8[%c0_172, %c0_173, %c0_174] : memref<9x64x128xbf16, #tpu.memory_space<vmem>>, vector<1x64x128xbf16>
    %193 = vector.shape_cast %192 : vector<1x64x128xbf16> to vector<64x128xbf16>
    %cst_175 = arith.constant dense<0.000000e+00> : vector<36x128xf32>
    %194 = tpu.matmul %191, %193, %cst_175 {dimension_numbers = #tpu.dot_dimension_numbers<[1], [0], [0], [1], [0, 0, 1, 1], [], []>} : vector<36x64xbf16>, vector<64x128xbf16>, vector<36x128xf32> -> vector<36x128xf32>
    %c6_176 = arith.constant 6 : index
    %c0_177 = arith.constant 0 : index
    %195 = tpu.strided_load %arg22[%c6_176, %c0_177] {strides = array<i32: 2, 1>} : memref<152x64xf32, #tpu.memory_space<vmem>>, vector<36x64xf32>
    %196 = arith.truncf %195 : vector<36x64xf32> to vector<36x64xbf16>
    %c1_178 = arith.constant 1 : index
    %c0_179 = arith.constant 0 : index
    %c0_180 = arith.constant 0 : index
    %197 = vector.load %arg8[%c1_178, %c0_179, %c0_180] : memref<9x64x128xbf16, #tpu.memory_space<vmem>>, vector<1x64x128xbf16>
    %198 = vector.shape_cast %197 : vector<1x64x128xbf16> to vector<64x128xbf16>
    %cst_181 = arith.constant dense<0.000000e+00> : vector<36x128xf32>
    %199 = tpu.matmul %196, %198, %cst_181 {dimension_numbers = #tpu.dot_dimension_numbers<[1], [0], [0], [1], [0, 0, 1, 1], [], []>} : vector<36x64xbf16>, vector<64x128xbf16>, vector<36x128xf32> -> vector<36x128xf32>
    %c7_182 = arith.constant 7 : index
    %c0_183 = arith.constant 0 : index
    %200 = tpu.strided_load %arg22[%c7_182, %c0_183] {strides = array<i32: 2, 1>} : memref<152x64xf32, #tpu.memory_space<vmem>>, vector<36x64xf32>
    %201 = arith.truncf %200 : vector<36x64xf32> to vector<36x64xbf16>
    %c2_184 = arith.constant 2 : index
    %c0_185 = arith.constant 0 : index
    %c0_186 = arith.constant 0 : index
    %202 = vector.load %arg8[%c2_184, %c0_185, %c0_186] : memref<9x64x128xbf16, #tpu.memory_space<vmem>>, vector<1x64x128xbf16>
    %203 = vector.shape_cast %202 : vector<1x64x128xbf16> to vector<64x128xbf16>
    %cst_187 = arith.constant dense<0.000000e+00> : vector<36x128xf32>
    %204 = tpu.matmul %201, %203, %cst_187 {dimension_numbers = #tpu.dot_dimension_numbers<[1], [0], [0], [1], [0, 0, 1, 1], [], []>} : vector<36x64xbf16>, vector<64x128xbf16>, vector<36x128xf32> -> vector<36x128xf32>
    %205 = arith.addf %194, %204 : vector<36x128xf32>
    %c23_188 = arith.constant 23 : index
    %c0_189 = arith.constant 0 : index
    %206 = tpu.strided_load %arg22[%c23_188, %c0_189] {strides = array<i32: 2, 1>} : memref<152x64xf32, #tpu.memory_space<vmem>>, vector<36x64xf32>
    %207 = arith.truncf %206 : vector<36x64xf32> to vector<36x64xbf16>
    %c3_190 = arith.constant 3 : index
    %c0_191 = arith.constant 0 : index
    %c0_192 = arith.constant 0 : index
    %208 = vector.load %arg8[%c3_190, %c0_191, %c0_192] : memref<9x64x128xbf16, #tpu.memory_space<vmem>>, vector<1x64x128xbf16>
    %209 = vector.shape_cast %208 : vector<1x64x128xbf16> to vector<64x128xbf16>
    %cst_193 = arith.constant dense<0.000000e+00> : vector<36x128xf32>
    %210 = tpu.matmul %207, %209, %cst_193 {dimension_numbers = #tpu.dot_dimension_numbers<[1], [0], [0], [1], [0, 0, 1, 1], [], []>} : vector<36x64xbf16>, vector<64x128xbf16>, vector<36x128xf32> -> vector<36x128xf32>
    %211 = arith.addf %199, %210 : vector<36x128xf32>
    %c24_194 = arith.constant 24 : index
    %c0_195 = arith.constant 0 : index
    %212 = tpu.strided_load %arg22[%c24_194, %c0_195] {strides = array<i32: 2, 1>} : memref<152x64xf32, #tpu.memory_space<vmem>>, vector<36x64xf32>
    %213 = arith.truncf %212 : vector<36x64xf32> to vector<36x64xbf16>
    %c4_196 = arith.constant 4 : index
    %c0_197 = arith.constant 0 : index
    %c0_198 = arith.constant 0 : index
    %214 = vector.load %arg8[%c4_196, %c0_197, %c0_198] : memref<9x64x128xbf16, #tpu.memory_space<vmem>>, vector<1x64x128xbf16>
    %215 = vector.shape_cast %214 : vector<1x64x128xbf16> to vector<64x128xbf16>
    %cst_199 = arith.constant dense<0.000000e+00> : vector<36x128xf32>
    %216 = tpu.matmul %213, %215, %cst_199 {dimension_numbers = #tpu.dot_dimension_numbers<[1], [0], [0], [1], [0, 0, 1, 1], [], []>} : vector<36x64xbf16>, vector<64x128xbf16>, vector<36x128xf32> -> vector<36x128xf32>
    %217 = arith.addf %205, %216 : vector<36x128xf32>
    %c25_200 = arith.constant 25 : index
    %c0_201 = arith.constant 0 : index
    %218 = tpu.strided_load %arg22[%c25_200, %c0_201] {strides = array<i32: 2, 1>} : memref<152x64xf32, #tpu.memory_space<vmem>>, vector<36x64xf32>
    %219 = arith.truncf %218 : vector<36x64xf32> to vector<36x64xbf16>
    %c5_202 = arith.constant 5 : index
    %c0_203 = arith.constant 0 : index
    %c0_204 = arith.constant 0 : index
    %220 = vector.load %arg8[%c5_202, %c0_203, %c0_204] : memref<9x64x128xbf16, #tpu.memory_space<vmem>>, vector<1x64x128xbf16>
    %221 = vector.shape_cast %220 : vector<1x64x128xbf16> to vector<64x128xbf16>
    %cst_205 = arith.constant dense<0.000000e+00> : vector<36x128xf32>
    %222 = tpu.matmul %219, %221, %cst_205 {dimension_numbers = #tpu.dot_dimension_numbers<[1], [0], [0], [1], [0, 0, 1, 1], [], []>} : vector<36x64xbf16>, vector<64x128xbf16>, vector<36x128xf32> -> vector<36x128xf32>
    %223 = arith.addf %211, %222 : vector<36x128xf32>
    %c41_206 = arith.constant 41 : index
    %c0_207 = arith.constant 0 : index
    %224 = tpu.strided_load %arg22[%c41_206, %c0_207] {strides = array<i32: 2, 1>} : memref<152x64xf32, #tpu.memory_space<vmem>>, vector<36x64xf32>
    %225 = arith.truncf %224 : vector<36x64xf32> to vector<36x64xbf16>
    %c6_208 = arith.constant 6 : index
    %c0_209 = arith.constant 0 : index
    %c0_210 = arith.constant 0 : index
    %226 = vector.load %arg8[%c6_208, %c0_209, %c0_210] : memref<9x64x128xbf16, #tpu.memory_space<vmem>>, vector<1x64x128xbf16>
    %227 = vector.shape_cast %226 : vector<1x64x128xbf16> to vector<64x128xbf16>
    %cst_211 = arith.constant dense<0.000000e+00> : vector<36x128xf32>
    %228 = tpu.matmul %225, %227, %cst_211 {dimension_numbers = #tpu.dot_dimension_numbers<[1], [0], [0], [1], [0, 0, 1, 1], [], []>} : vector<36x64xbf16>, vector<64x128xbf16>, vector<36x128xf32> -> vector<36x128xf32>
    %229 = arith.addf %217, %228 : vector<36x128xf32>
    %c42_212 = arith.constant 42 : index
    %c0_213 = arith.constant 0 : index
    %230 = tpu.strided_load %arg22[%c42_212, %c0_213] {strides = array<i32: 2, 1>} : memref<152x64xf32, #tpu.memory_space<vmem>>, vector<36x64xf32>
    %231 = arith.truncf %230 : vector<36x64xf32> to vector<36x64xbf16>
    %c7_214 = arith.constant 7 : index
    %c0_215 = arith.constant 0 : index
    %c0_216 = arith.constant 0 : index
    %232 = vector.load %arg8[%c7_214, %c0_215, %c0_216] : memref<9x64x128xbf16, #tpu.memory_space<vmem>>, vector<1x64x128xbf16>
    %233 = vector.shape_cast %232 : vector<1x64x128xbf16> to vector<64x128xbf16>
    %cst_217 = arith.constant dense<0.000000e+00> : vector<36x128xf32>
    %234 = tpu.matmul %231, %233, %cst_217 {dimension_numbers = #tpu.dot_dimension_numbers<[1], [0], [0], [1], [0, 0, 1, 1], [], []>} : vector<36x64xbf16>, vector<64x128xbf16>, vector<36x128xf32> -> vector<36x128xf32>
    %235 = arith.addf %223, %234 : vector<36x128xf32>
    %c43_218 = arith.constant 43 : index
    %c0_219 = arith.constant 0 : index
    %236 = tpu.strided_load %arg22[%c43_218, %c0_219] {strides = array<i32: 2, 1>} : memref<152x64xf32, #tpu.memory_space<vmem>>, vector<36x64xf32>
    %237 = arith.truncf %236 : vector<36x64xf32> to vector<36x64xbf16>
    %c8_220 = arith.constant 8 : index
    %c0_221 = arith.constant 0 : index
    %c0_222 = arith.constant 0 : index
    %238 = vector.load %arg8[%c8_220, %c0_221, %c0_222] : memref<9x64x128xbf16, #tpu.memory_space<vmem>>, vector<1x64x128xbf16>
    %239 = vector.shape_cast %238 : vector<1x64x128xbf16> to vector<64x128xbf16>
    %cst_223 = arith.constant dense<0.000000e+00> : vector<36x128xf32>
    %240 = tpu.matmul %237, %239, %cst_223 {dimension_numbers = #tpu.dot_dimension_numbers<[1], [0], [0], [1], [0, 0, 1, 1], [], []>} : vector<36x64xbf16>, vector<64x128xbf16>, vector<36x128xf32> -> vector<36x128xf32>
    %241 = arith.addf %229, %240 : vector<36x128xf32>
    %242 = arith.addf %241, %235 : vector<36x128xf32>
    %c0_224 = arith.constant 0 : index
    %c0_225 = arith.constant 0 : index
    %243 = vector.load %arg9[%c0_224, %c0_225] : memref<1x128xf32, #tpu.memory_space<vmem>>, vector<1x128xf32>
    %244 = vector.broadcast %243 : vector<1x128xf32> to vector<36x128xf32>
    %245 = arith.addf %242, %244 : vector<36x128xf32>
    %cst_226 = arith.constant 0.000000e+00 : f32
    %246 = vector.broadcast %cst_226 : f32 to vector<36x128xf32>
    %247 = arith.maximumf %245, %246 : vector<36x128xf32>
    %c0_227 = arith.constant 0 : index
    %c0_228 = arith.constant 0 : index
    %248 = vector.load %arg17[%c0_227, %c0_228] : memref<36x1xf32, #tpu.memory_space<vmem>>, vector<36x1xf32>
    %cst_229 = arith.constant 5.000000e-01 : f32
    %249 = vector.broadcast %cst_229 : f32 to vector<36x1xf32>
    %250 = arith.cmpf ogt, %248, %249 : vector<36x1xf32>
    %cst_230 = arith.constant 0.000000e+00 : f32
    %251 = vector.shape_cast %250 : vector<36x1xi1> to vector<36x1xi1>
    %252 = vector.broadcast %251 : vector<36x1xi1> to vector<36x128xi1>
    %253 = vector.broadcast %cst_230 : f32 to vector<36x128xf32>
    %254 = arith.select %252, %247, %253 : vector<36x128xi1>, vector<36x128xf32>
    %cst_231 = arith.constant 0.000000e+00 : f32
    %255 = vector.broadcast %cst_231 : f32 to vector<24x128xf32>
    %c0_232 = arith.constant 0 : index
    %c0_233 = arith.constant 0 : index
    %256 = vector.load %arg23[%c0_232, %c0_233] : memref<120x128xf32, #tpu.memory_space<vmem>>, vector<24x128xf32>
    tpu.vector_store %arg23[%c0_232, %c0_233], %255 {strides = array<i32>} : memref<120x128xf32, #tpu.memory_space<vmem>>, vector<24x128xf32>,
    %c24_234 = arith.constant 24 : index
    %c0_235 = arith.constant 0 : index
    %257 = vector.load %arg23[%c24_234, %c0_235] : memref<120x128xf32, #tpu.memory_space<vmem>>, vector<36x128xf32>
    tpu.vector_store %arg23[%c24_234, %c0_235], %254 {strides = array<i32>} : memref<120x128xf32, #tpu.memory_space<vmem>>, vector<36x128xf32>,
    %cst_236 = arith.constant 0.000000e+00 : f32
    %258 = vector.broadcast %cst_236 : f32 to vector<60x128xf32>
    %c60 = arith.constant 60 : index
    %c0_237 = arith.constant 0 : index
    %259 = vector.load %arg23[%c60, %c0_237] : memref<120x128xf32, #tpu.memory_space<vmem>>, vector<60x128xf32>
    tpu.vector_store %arg23[%c60, %c0_237], %258 {strides = array<i32>} : memref<120x128xf32, #tpu.memory_space<vmem>>, vector<60x128xf32>,
    %c5_238 = arith.constant 5 : index
    %c0_239 = arith.constant 0 : index
    %260 = vector.load %arg23[%c5_238, %c0_239] : memref<120x128xf32, #tpu.memory_space<vmem>>, vector<36x128xf32>
    %261 = arith.truncf %260 : vector<36x128xf32> to vector<36x128xbf16>
    %c0_240 = arith.constant 0 : index
    %c0_241 = arith.constant 0 : index
    %c0_242 = arith.constant 0 : index
    %262 = vector.load %arg10[%c0_240, %c0_241, %c0_242] : memref<9x128x128xbf16, #tpu.memory_space<vmem>>, vector<1x128x128xbf16>
    %263 = vector.shape_cast %262 : vector<1x128x128xbf16> to vector<128x128xbf16>
    %cst_243 = arith.constant dense<0.000000e+00> : vector<36x128xf32>
    %264 = tpu.matmul %261, %263, %cst_243 {dimension_numbers = #tpu.dot_dimension_numbers<[1], [0], [0], [1], [0, 0, 1, 1], [], []>} : vector<36x128xbf16>, vector<128x128xbf16>, vector<36x128xf32> -> vector<36x128xf32>
    %c6_244 = arith.constant 6 : index
    %c0_245 = arith.constant 0 : index
    %265 = vector.load %arg23[%c6_244, %c0_245] : memref<120x128xf32, #tpu.memory_space<vmem>>, vector<36x128xf32>
    %266 = arith.truncf %265 : vector<36x128xf32> to vector<36x128xbf16>
    %c1_246 = arith.constant 1 : index
    %c0_247 = arith.constant 0 : index
    %c0_248 = arith.constant 0 : index
    %267 = vector.load %arg10[%c1_246, %c0_247, %c0_248] : memref<9x128x128xbf16, #tpu.memory_space<vmem>>, vector<1x128x128xbf16>
    %268 = vector.shape_cast %267 : vector<1x128x128xbf16> to vector<128x128xbf16>
    %cst_249 = arith.constant dense<0.000000e+00> : vector<36x128xf32>
    %269 = tpu.matmul %266, %268, %cst_249 {dimension_numbers = #tpu.dot_dimension_numbers<[1], [0], [0], [1], [0, 0, 1, 1], [], []>} : vector<36x128xbf16>, vector<128x128xbf16>, vector<36x128xf32> -> vector<36x128xf32>
    %c7_250 = arith.constant 7 : index
    %c0_251 = arith.constant 0 : index
    %270 = vector.load %arg23[%c7_250, %c0_251] : memref<120x128xf32, #tpu.memory_space<vmem>>, vector<36x128xf32>
    %271 = arith.truncf %270 : vector<36x128xf32> to vector<36x128xbf16>
    %c2_252 = arith.constant 2 : index
    %c0_253 = arith.constant 0 : index
    %c0_254 = arith.constant 0 : index
    %272 = vector.load %arg10[%c2_252, %c0_253, %c0_254] : memref<9x128x128xbf16, #tpu.memory_space<vmem>>, vector<1x128x128xbf16>
    %273 = vector.shape_cast %272 : vector<1x128x128xbf16> to vector<128x128xbf16>
    %cst_255 = arith.constant dense<0.000000e+00> : vector<36x128xf32>
    %274 = tpu.matmul %271, %273, %cst_255 {dimension_numbers = #tpu.dot_dimension_numbers<[1], [0], [0], [1], [0, 0, 1, 1], [], []>} : vector<36x128xbf16>, vector<128x128xbf16>, vector<36x128xf32> -> vector<36x128xf32>
    %275 = arith.addf %264, %274 : vector<36x128xf32>
    %c23_256 = arith.constant 23 : index
    %c0_257 = arith.constant 0 : index
    %276 = vector.load %arg23[%c23_256, %c0_257] : memref<120x128xf32, #tpu.memory_space<vmem>>, vector<36x128xf32>
    %277 = arith.truncf %276 : vector<36x128xf32> to vector<36x128xbf16>
    %c3_258 = arith.constant 3 : index
    %c0_259 = arith.constant 0 : index
    %c0_260 = arith.constant 0 : index
    %278 = vector.load %arg10[%c3_258, %c0_259, %c0_260] : memref<9x128x128xbf16, #tpu.memory_space<vmem>>, vector<1x128x128xbf16>
    %279 = vector.shape_cast %278 : vector<1x128x128xbf16> to vector<128x128xbf16>
    %cst_261 = arith.constant dense<0.000000e+00> : vector<36x128xf32>
    %280 = tpu.matmul %277, %279, %cst_261 {dimension_numbers = #tpu.dot_dimension_numbers<[1], [0], [0], [1], [0, 0, 1, 1], [], []>} : vector<36x128xbf16>, vector<128x128xbf16>, vector<36x128xf32> -> vector<36x128xf32>
    %281 = arith.addf %269, %280 : vector<36x128xf32>
    %c24_262 = arith.constant 24 : index
    %c0_263 = arith.constant 0 : index
    %282 = vector.load %arg23[%c24_262, %c0_263] : memref<120x128xf32, #tpu.memory_space<vmem>>, vector<36x128xf32>
    %283 = arith.truncf %282 : vector<36x128xf32> to vector<36x128xbf16>
    %c4_264 = arith.constant 4 : index
    %c0_265 = arith.constant 0 : index
    %c0_266 = arith.constant 0 : index
    %284 = vector.load %arg10[%c4_264, %c0_265, %c0_266] : memref<9x128x128xbf16, #tpu.memory_space<vmem>>, vector<1x128x128xbf16>
    %285 = vector.shape_cast %284 : vector<1x128x128xbf16> to vector<128x128xbf16>
    %cst_267 = arith.constant dense<0.000000e+00> : vector<36x128xf32>
    %286 = tpu.matmul %283, %285, %cst_267 {dimension_numbers = #tpu.dot_dimension_numbers<[1], [0], [0], [1], [0, 0, 1, 1], [], []>} : vector<36x128xbf16>, vector<128x128xbf16>, vector<36x128xf32> -> vector<36x128xf32>
    %287 = arith.addf %275, %286 : vector<36x128xf32>
    %c25_268 = arith.constant 25 : index
    %c0_269 = arith.constant 0 : index
    %288 = vector.load %arg23[%c25_268, %c0_269] : memref<120x128xf32, #tpu.memory_space<vmem>>, vector<36x128xf32>
    %289 = arith.truncf %288 : vector<36x128xf32> to vector<36x128xbf16>
    %c5_270 = arith.constant 5 : index
    %c0_271 = arith.constant 0 : index
    %c0_272 = arith.constant 0 : index
    %290 = vector.load %arg10[%c5_270, %c0_271, %c0_272] : memref<9x128x128xbf16, #tpu.memory_space<vmem>>, vector<1x128x128xbf16>
    %291 = vector.shape_cast %290 : vector<1x128x128xbf16> to vector<128x128xbf16>
    %cst_273 = arith.constant dense<0.000000e+00> : vector<36x128xf32>
    %292 = tpu.matmul %289, %291, %cst_273 {dimension_numbers = #tpu.dot_dimension_numbers<[1], [0], [0], [1], [0, 0, 1, 1], [], []>} : vector<36x128xbf16>, vector<128x128xbf16>, vector<36x128xf32> -> vector<36x128xf32>
    %293 = arith.addf %281, %292 : vector<36x128xf32>
    %c41_274 = arith.constant 41 : index
    %c0_275 = arith.constant 0 : index
    %294 = vector.load %arg23[%c41_274, %c0_275] : memref<120x128xf32, #tpu.memory_space<vmem>>, vector<36x128xf32>
    %295 = arith.truncf %294 : vector<36x128xf32> to vector<36x128xbf16>
    %c6_276 = arith.constant 6 : index
    %c0_277 = arith.constant 0 : index
    %c0_278 = arith.constant 0 : index
    %296 = vector.load %arg10[%c6_276, %c0_277, %c0_278] : memref<9x128x128xbf16, #tpu.memory_space<vmem>>, vector<1x128x128xbf16>
    %297 = vector.shape_cast %296 : vector<1x128x128xbf16> to vector<128x128xbf16>
    %cst_279 = arith.constant dense<0.000000e+00> : vector<36x128xf32>
    %298 = tpu.matmul %295, %297, %cst_279 {dimension_numbers = #tpu.dot_dimension_numbers<[1], [0], [0], [1], [0, 0, 1, 1], [], []>} : vector<36x128xbf16>, vector<128x128xbf16>, vector<36x128xf32> -> vector<36x128xf32>
    %299 = arith.addf %287, %298 : vector<36x128xf32>
    %c42_280 = arith.constant 42 : index
    %c0_281 = arith.constant 0 : index
    %300 = vector.load %arg23[%c42_280, %c0_281] : memref<120x128xf32, #tpu.memory_space<vmem>>, vector<36x128xf32>
    %301 = arith.truncf %300 : vector<36x128xf32> to vector<36x128xbf16>
    %c7_282 = arith.constant 7 : index
    %c0_283 = arith.constant 0 : index
    %c0_284 = arith.constant 0 : index
    %302 = vector.load %arg10[%c7_282, %c0_283, %c0_284] : memref<9x128x128xbf16, #tpu.memory_space<vmem>>, vector<1x128x128xbf16>
    %303 = vector.shape_cast %302 : vector<1x128x128xbf16> to vector<128x128xbf16>
    %cst_285 = arith.constant dense<0.000000e+00> : vector<36x128xf32>
    %304 = tpu.matmul %301, %303, %cst_285 {dimension_numbers = #tpu.dot_dimension_numbers<[1], [0], [0], [1], [0, 0, 1, 1], [], []>} : vector<36x128xbf16>, vector<128x128xbf16>, vector<36x128xf32> -> vector<36x128xf32>
    %305 = arith.addf %293, %304 : vector<36x128xf32>
    %c43_286 = arith.constant 43 : index
    %c0_287 = arith.constant 0 : index
    %306 = vector.load %arg23[%c43_286, %c0_287] : memref<120x128xf32, #tpu.memory_space<vmem>>, vector<36x128xf32>
    %307 = arith.truncf %306 : vector<36x128xf32> to vector<36x128xbf16>
    %c8_288 = arith.constant 8 : index
    %c0_289 = arith.constant 0 : index
    %c0_290 = arith.constant 0 : index
    %308 = vector.load %arg10[%c8_288, %c0_289, %c0_290] : memref<9x128x128xbf16, #tpu.memory_space<vmem>>, vector<1x128x128xbf16>
    %309 = vector.shape_cast %308 : vector<1x128x128xbf16> to vector<128x128xbf16>
    %cst_291 = arith.constant dense<0.000000e+00> : vector<36x128xf32>
    %310 = tpu.matmul %307, %309, %cst_291 {dimension_numbers = #tpu.dot_dimension_numbers<[1], [0], [0], [1], [0, 0, 1, 1], [], []>} : vector<36x128xbf16>, vector<128x128xbf16>, vector<36x128xf32> -> vector<36x128xf32>
    %311 = arith.addf %299, %310 : vector<36x128xf32>
    %312 = arith.addf %311, %305 : vector<36x128xf32>
    %c0_292 = arith.constant 0 : index
    %c0_293 = arith.constant 0 : index
    %313 = vector.load %arg11[%c0_292, %c0_293] : memref<1x128xf32, #tpu.memory_space<vmem>>, vector<1x128xf32>
    %314 = vector.broadcast %313 : vector<1x128xf32> to vector<36x128xf32>
    %315 = arith.addf %312, %314 : vector<36x128xf32>
    %cst_294 = arith.constant 0.000000e+00 : f32
    %316 = vector.broadcast %cst_294 : f32 to vector<36x128xf32>
    %317 = arith.maximumf %315, %316 : vector<36x128xf32>
    %c0_295 = arith.constant 0 : index
    %c0_296 = arith.constant 0 : index
    %318 = vector.load %arg17[%c0_295, %c0_296] : memref<36x1xf32, #tpu.memory_space<vmem>>, vector<36x1xf32>
    %cst_297 = arith.constant 5.000000e-01 : f32
    %319 = vector.broadcast %cst_297 : f32 to vector<36x1xf32>
    %320 = arith.cmpf ogt, %318, %319 : vector<36x1xf32>
    %cst_298 = arith.constant 0.000000e+00 : f32
    %321 = vector.shape_cast %320 : vector<36x1xi1> to vector<36x1xi1>
    %322 = vector.broadcast %321 : vector<36x1xi1> to vector<36x128xi1>
    %323 = vector.broadcast %cst_298 : f32 to vector<36x128xf32>
    %324 = arith.select %322, %317, %323 : vector<36x128xi1>, vector<36x128xf32>
    %cst_299 = arith.constant dense<0.000000e+00> : vector<128xf32>
    %325 = vector.multi_reduction <add>, %324, %cst_299 [0] : vector<36x128xf32> to vector<128xf32>
    %326 = vector.shape_cast %325 : vector<128xf32> to vector<1x128xf32>
    %cst_300 = arith.constant 2.500000e-01 : f32
    %327 = vector.broadcast %cst_300 : f32 to vector<1x128xf32>
    %328 = arith.mulf %326, %327 : vector<1x128xf32>
    %c0_301 = arith.constant 0 : index
    %c0_302 = arith.constant 0 : index
    %329 = vector.load %arg12[%c0_301, %c0_302] : memref<128x6xf32, #tpu.memory_space<vmem>>, vector<128x6xf32>
    %cst_303 = arith.constant dense<0.000000e+00> : vector<1x6xf32>
    %330 = tpu.matmul %328, %329, %cst_303 {dimension_numbers = #tpu.dot_dimension_numbers<[1], [0], [0], [1], [0, 0, 1, 1], [], []>} : vector<1x128xf32>, vector<128x6xf32>, vector<1x6xf32> -> vector<1x6xf32>
    %c0_304 = arith.constant 0 : index
    %c0_305 = arith.constant 0 : index
    %331 = vector.load %arg13[%c0_304, %c0_305] : memref<1x6xf32, #tpu.memory_space<vmem>>, vector<1x6xf32>
    %332 = arith.addf %330, %331 : vector<1x6xf32>
    %c0_306 = arith.constant 0 : index
    %c0_307 = arith.constant 0 : index
    %c0_308 = arith.constant 0 : index
    %333 = vector.load %arg18[%c0_306, %c0_307, %c0_308] : memref<1x1x6xf32, #tpu.memory_space<vmem>>, vector<1x1x6xf32>
    %334 = vector.shape_cast %333 : vector<1x1x6xf32> to vector<1x6xf32>
    %335 = vector.shape_cast %332 : vector<1x6xf32> to vector<1x1x6xf32>
    tpu.vector_store %arg18[%c0_306, %c0_307, %c0_308], %335 {strides = array<i32>} : memref<1x1x6xf32, #tpu.memory_space<vmem>>, vector<1x1x6xf32>,
    return
  }
  func.func @transform_0(%arg0: i32) -> (i32, i32, i32) {
    %c0_i32 = arith.constant 0 : i32
    %c0_i32_0 = arith.constant 0 : i32
    %c0_i32_1 = arith.constant 0 : i32
    return %arg0, %c0_i32, %c0_i32_0 : i32, i32, i32
  }
  func.func @transform_1(%arg0: i32) -> (i32, i32) {
    %c0_i32 = arith.constant 0 : i32
    %c0_i32_0 = arith.constant 0 : i32
    %c0_i32_1 = arith.constant 0 : i32
    return %c0_i32, %c0_i32_0 : i32, i32
  }
  func.func @transform_2(%arg0: i32) -> (i32, i32) {
    %c0_i32 = arith.constant 0 : i32
    %c0_i32_0 = arith.constant 0 : i32
    %c0_i32_1 = arith.constant 0 : i32
    return %c0_i32, %c0_i32_0 : i32, i32
  }
  func.func @transform_3(%arg0: i32) -> (i32, i32, i32) {
    %c0_i32 = arith.constant 0 : i32
    %c0_i32_0 = arith.constant 0 : i32
    %c0_i32_1 = arith.constant 0 : i32
    %c0_i32_2 = arith.constant 0 : i32
    return %c0_i32, %c0_i32_0, %c0_i32_1 : i32, i32, i32
  }
  func.func @transform_4(%arg0: i32) -> (i32, i32) {
    %c0_i32 = arith.constant 0 : i32
    %c0_i32_0 = arith.constant 0 : i32
    %c0_i32_1 = arith.constant 0 : i32
    return %c0_i32, %c0_i32_0 : i32, i32
  }
  func.func @transform_5(%arg0: i32) -> (i32, i32, i32) {
    %c0_i32 = arith.constant 0 : i32
    %c0_i32_0 = arith.constant 0 : i32
    %c0_i32_1 = arith.constant 0 : i32
    %c0_i32_2 = arith.constant 0 : i32
    return %c0_i32, %c0_i32_0, %c0_i32_1 : i32, i32, i32
  }
  func.func @transform_6(%arg0: i32) -> (i32, i32) {
    %c0_i32 = arith.constant 0 : i32
    %c0_i32_0 = arith.constant 0 : i32
    %c0_i32_1 = arith.constant 0 : i32
    return %c0_i32, %c0_i32_0 : i32, i32
  }
  func.func @transform_7(%arg0: i32) -> (i32, i32, i32) {
    %c0_i32 = arith.constant 0 : i32
    %c0_i32_0 = arith.constant 0 : i32
    %c0_i32_1 = arith.constant 0 : i32
    %c0_i32_2 = arith.constant 0 : i32
    return %c0_i32, %c0_i32_0, %c0_i32_1 : i32, i32, i32
  }
  func.func @transform_8(%arg0: i32) -> (i32, i32) {
    %c0_i32 = arith.constant 0 : i32
    %c0_i32_0 = arith.constant 0 : i32
    %c0_i32_1 = arith.constant 0 : i32
    return %c0_i32, %c0_i32_0 : i32, i32
  }
  func.func @transform_9(%arg0: i32) -> (i32, i32, i32) {
    %c0_i32 = arith.constant 0 : i32
    %c0_i32_0 = arith.constant 0 : i32
    %c0_i32_1 = arith.constant 0 : i32
    %c0_i32_2 = arith.constant 0 : i32
    return %c0_i32, %c0_i32_0, %c0_i32_1 : i32, i32, i32
  }
  func.func @transform_10(%arg0: i32) -> (i32, i32) {
    %c0_i32 = arith.constant 0 : i32
    %c0_i32_0 = arith.constant 0 : i32
    %c0_i32_1 = arith.constant 0 : i32
    return %c0_i32, %c0_i32_0 : i32, i32
  }
  func.func @transform_11(%arg0: i32) -> (i32, i32) {
    %c0_i32 = arith.constant 0 : i32
    %c0_i32_0 = arith.constant 0 : i32
    %c0_i32_1 = arith.constant 0 : i32
    return %c0_i32, %c0_i32_0 : i32, i32
  }
  func.func @transform_12(%arg0: i32) -> (i32, i32) {
    %c0_i32 = arith.constant 0 : i32
    %c0_i32_0 = arith.constant 0 : i32
    %c0_i32_1 = arith.constant 0 : i32
    return %c0_i32, %c0_i32_0 : i32, i32
  }
  func.func @transform_13(%arg0: i32) -> (i32, i32) {
    %c0_i32 = arith.constant 0 : i32
    %c0_i32_0 = arith.constant 0 : i32
    %c0_i32_1 = arith.constant 0 : i32
    return %c0_i32, %c0_i32_0 : i32, i32
  }
  func.func @transform_14(%arg0: i32) -> (i32, i32) {
    %c0_i32 = arith.constant 0 : i32
    %c0_i32_0 = arith.constant 0 : i32
    %c0_i32_1 = arith.constant 0 : i32
    return %c0_i32, %c0_i32_0 : i32, i32
  }
  func.func @transform_15(%arg0: i32) -> (i32, i32) {
    %c0_i32 = arith.constant 0 : i32
    %c0_i32_0 = arith.constant 0 : i32
    %c0_i32_1 = arith.constant 0 : i32
    return %c0_i32, %c0_i32_0 : i32, i32
  }
  func.func @transform_16(%arg0: i32) -> (i32, i32) {
    %c0_i32 = arith.constant 0 : i32
    %c0_i32_0 = arith.constant 0 : i32
    %c0_i32_1 = arith.constant 0 : i32
    return %c0_i32, %c0_i32_0 : i32, i32
  }
  func.func @transform_17(%arg0: i32) -> (i32, i32, i32) {
    %c0_i32 = arith.constant 0 : i32
    %c0_i32_0 = arith.constant 0 : i32
    %c0_i32_1 = arith.constant 0 : i32
    return %arg0, %c0_i32, %c0_i32_0 : i32, i32, i32
  }
}

</mosaic_0001>

<llo_original>
// kernel: cnn_classifier_forward.1
$region0: #{cnn_classifier_forward.1}
  #allocation0 [shape = 'u32[]', space=smem, size = 0x4, offset = 0x4, fixed_abs, tag = 'smem constant byte address 0x4 - core index']
  #allocation1 [shape = 'u32[144,128]{1,0:T(1,128)}', space=vmem, size = 0x12000, scoped, tag = 'internal scratch']
  #allocation2 [shape = 'f32[368,32]{1,0:T(8,128)}', space=vmem, size = 0x2e000, scoped, tag = 'scratch operand']
  #allocation3 [shape = 'f32[224,32]{1,0:T(8,128)}', space=vmem, size = 0x1c000, scoped, tag = 'scratch operand']
  #allocation4 [shape = 'f32[152,64]{1,0:T(8,128)}', space=vmem, size = 0x13000, scoped, tag = 'scratch operand']
  #allocation5 [shape = 'f32[152,64]{1,0:T(8,128)}', space=vmem, size = 0x13000, scoped, tag = 'scratch operand']
  #allocation6 [shape = 'f32[120,128]{1,0:T(8,128)}', space=vmem, size = 0xf000, scoped, tag = 'scratch operand']
  %s0 = inlined_call_operand.vmem [shape: bf16[2,288,147], index: 0, kind: input, shape index: {}]
  %s1 = inlined_call_operand.vmem [shape: bf16[147,32], index: 1, kind: input, shape index: {}]
  %s2 = inlined_call_operand.vmem [shape: f32[1,32], index: 2, kind: input, shape index: {}]
  %s3 = inlined_call_operand.vmem [shape: bf16[9,32,64], index: 3, kind: input, shape index: {}]
  %s4 = inlined_call_operand.vmem [shape: f32[1,64], index: 4, kind: input, shape index: {}]
  %s5 = inlined_call_operand.vmem [shape: bf16[9,64,64], index: 5, kind: input, shape index: {}]
  %s6 = inlined_call_operand.vmem [shape: f32[1,64], index: 6, kind: input, shape index: {}]
  %s7 = inlined_call_operand.vmem [shape: bf16[9,64,128], index: 7, kind: input, shape index: {}]
  %s8 = inlined_call_operand.vmem [shape: f32[1,128], index: 8, kind: input, shape index: {}]
  %s9 = inlined_call_operand.vmem [shape: bf16[9,128,128], index: 9, kind: input, shape index: {}]
  %s10 = inlined_call_operand.vmem [shape: f32[1,128], index: 10, kind: input, shape index: {}]
  %s11 = inlined_call_operand.vmem [shape: f32[128,6], index: 11, kind: input, shape index: {}]
  %s12 = inlined_call_operand.vmem [shape: f32[1,6], index: 12, kind: input, shape index: {}]
  %s13 = inlined_call_operand.vmem [shape: f32[288,1], index: 13, kind: input, shape index: {}]
  %s14 = inlined_call_operand.vmem [shape: f32[144,1], index: 14, kind: input, shape index: {}]
  %s15 = inlined_call_operand.vmem [shape: f32[72,1], index: 15, kind: input, shape index: {}]
  %s16 = inlined_call_operand.vmem [shape: f32[36,1], index: 16, kind: input, shape index: {}]
  %s17 = inlined_call_operand.hbm [shape: f32[2,1,6], index: 17, kind: output, shape index: {}]
  %s18 = sld [smem:[#allocation0]]
  $region101: #{cnn_classifier_forward.1} parent=0
    _
  %s20 = ssub.s32 1, %s18
  %s21 = scalar_select 0, %s20, %s18
  $region1: #{cnn_classifier_forward.1} parent=0
    #allocation7 [shape = 'u8[1024]{0}', space=vmem, size = 0x400, scoped, tag = 'output window, operand 0']
    #allocation8 [shape = 's32[2]{0}', space=sflag, size = 0x8, scoped, tag = 'scoped memory for cnn_classifier_forward.1']
    %22 = vsyncpa [#allocation8], 0
    %s23 = scalar_lea.sflag [#allocation8], 1
    %24 = vsyncpa %s23, 0
    loop: start=0, step=1, limit=4
    $region2: #{cnn_classifier_forward.1} parent=1 // loop_pre_header
      _
    $region3: #{cnn_classifier_forward.1} parent=1 // loop_header
      %s26 = sphi 0, %s30
      %p27 = scmp.ge.s32.totalorder %s26, 4
      %s36 = sphi 0, %s38
      %s39 = sphi 0, %s36
      %s40 = sphi 0, %s39
      %s56 = sphi 0, %s40
      %s60 = sphi 0, %s60
      %s62 = sphi 0, %s60
      %s63 = sphi 0, %s62
      %s77 = sphi 0, %s63
      %s81 = sphi 0, %s81
      %s83 = sphi 0, %s81
      %s84 = sphi 0, %s83
      %s98 = sphi 0, %s84
      %s102 = sphi 0, %s102
      %s104 = sphi 0, %s102
      %s105 = sphi 0, %s104
      %s119 = sphi 0, %s105
      %s123 = sphi 0, %s123
      %s125 = sphi 0, %s123
      %s126 = sphi 0, %s125
      %s140 = sphi 0, %s126
      %s144 = sphi 0, %s144
      %s146 = sphi 0, %s144
      %s147 = sphi 0, %s146
      %s161 = sphi 0, %s147
      %s165 = sphi 0, %s165
      %s167 = sphi 0, %s165
      %s168 = sphi 0, %s167
      %s182 = sphi 0, %s168
      %s186 = sphi 0, %s186
      %s188 = sphi 0, %s186
      %s189 = sphi 0, %s188
      %s203 = sphi 0, %s189
      %s207 = sphi 0, %s207
      %s209 = sphi 0, %s207
      %s210 = sphi 0, %s209
      %s224 = sphi 0, %s210
      %s228 = sphi 0, %s228
      %s230 = sphi 0, %s228
      %s231 = sphi 0, %s230
      %s245 = sphi 0, %s231
      %s249 = sphi 0, %s249
      %s251 = sphi 0, %s249
      %s252 = sphi 0, %s251
      %s266 = sphi 0, %s252
      %s270 = sphi 0, %s270
      %s272 = sphi 0, %s270
      %s273 = sphi 0, %s272
      %s287 = sphi 0, %s273
      %s291 = sphi 0, %s291
      %s293 = sphi 0, %s291
      %s294 = sphi 0, %s293
      %s308 = sphi 0, %s294
      %s312 = sphi 0, %s312
      %s314 = sphi 0, %s312
      %s315 = sphi 0, %s314
      %s329 = sphi 0, %s315
      %s333 = sphi 0, %s333
      %s335 = sphi 0, %s333
      %s336 = sphi 0, %s335
      %s350 = sphi 0, %s336
      %s354 = sphi 0, %s354
      %s356 = sphi 0, %s354
      %s357 = sphi 0, %s356
      %s371 = sphi 0, %s357
      %s375 = sphi 0, %s375
      %s377 = sphi 0, %s375
      %s378 = sphi 0, %s377
      %s392 = sphi 0, %s378
      %s398 = sphi 0, %s400
      %s401 = sphi 0, %s398
      %s402 = sphi 0, %s401
      %s418 = sphi 0, %s402
    $region4: #{cnn_classifier_forward.1} parent=1 // loop_header_branch
      %29 = sbr.rel (%p27) target = $region8
    $region5: #{cnn_classifier_forward.1} parent=1 // loop_body
      %s31 = ssub.s32 %s26, 1
      %s32 = ssub.s32 %s26, 2
      %s33 = sadd.s32 %s26, 1
      %s34 = ssub.s32 %s26, %s33
      %p35 = scmp.eq.s32.totalorder %s34, 0
      %s37 = sadd.s32 %s36, 1
      %s38 = scalar_select %p35, %s36, %s37
      %p41 = pneg %p35
      %p42 = scmp.eq.s32.totalorder %s26, 1
      %p43 = por %p41, %p42
      %p44 = scmp.ne.s32.totalorder %s36, %s39
      %p45 = scmp.eq.s32.totalorder %s26, 0
      %p46 = por %p44, %p45
      %p47 = scmp.ne.s32.totalorder %s36, %s39
      %p48 = scmp.eq.s32.totalorder %s31, 1
      %p49 = por %p47, %p48
      %p50 = scmp.ne.s32.totalorder %s39, %s40
      %p51 = scmp.eq.s32.totalorder %s31, 0
      %p52 = por %p50, %p51
      %p53 = scmp.ne.s32.totalorder %s39, %s40
      %p54 = scmp.eq.s32.totalorder %s32, 1
      %p55 = por %p53, %p54
      %p57 = scmp.ne.s32.totalorder %s40, %s56
      %p58 = scmp.eq.s32.totalorder %s32, 0
      %p59 = por %p57, %p58
      %s61 = sadd.s32 %s60, 1
      %p64 = scmp.eq.s32.totalorder %s26, 1
      %p65 = scmp.ne.s32.totalorder %s60, %s62
      %p66 = scmp.eq.s32.totalorder %s26, 0
      %p67 = por %p65, %p66
      %p68 = scmp.ne.s32.totalorder %s60, %s62
      %p69 = scmp.eq.s32.totalorder %s31, 1
      %p70 = por %p68, %p69
      %p71 = scmp.ne.s32.totalorder %s62, %s63
      %p72 = scmp.eq.s32.totalorder %s31, 0
      %p73 = por %p71, %p72
      %p74 = scmp.ne.s32.totalorder %s62, %s63
      %p75 = scmp.eq.s32.totalorder %s32, 1
      %p76 = por %p74, %p75
      %p78 = scmp.ne.s32.totalorder %s63, %s77
      %p79 = scmp.eq.s32.totalorder %s32, 0
      %p80 = por %p78, %p79
      %s82 = sadd.s32 %s81, 1
      %p85 = scmp.eq.s32.totalorder %s26, 1
      %p86 = scmp.ne.s32.totalorder %s81, %s83
      %p87 = scmp.eq.s32.totalorder %s26, 0
      %p88 = por %p86, %p87
      %p89 = scmp.ne.s32.totalorder %s81, %s83
      %p90 = scmp.eq.s32.totalorder %s31, 1
      %p91 = por %p89, %p90
      %p92 = scmp.ne.s32.totalorder %s83, %s84
      %p93 = scmp.eq.s32.totalorder %s31, 0
      %p94 = por %p92, %p93
      %p95 = scmp.ne.s32.totalorder %s83, %s84
      %p96 = scmp.eq.s32.totalorder %s32, 1
      %p97 = por %p95, %p96
      %p99 = scmp.ne.s32.totalorder %s84, %s98
      %p100 = scmp.eq.s32.totalorder %s32, 0
      %p101 = por %p99, %p100
      %s103 = sadd.s32 %s102, 1
      %p106 = scmp.eq.s32.totalorder %s26, 1
      %p107 = scmp.ne.s32.totalorder %s102, %s104
      %p108 = scmp.eq.s32.totalorder %s26, 0
      %p109 = por %p107, %p108
      %p110 = scmp.ne.s32.totalorder %s102, %s104
      %p111 = scmp.eq.s32.totalorder %s31, 1
      %p112 = por %p110, %p111
      %p113 = scmp.ne.s32.totalorder %s104, %s105
      %p114 = scmp.eq.s32.totalorder %s31, 0
      %p115 = por %p113, %p114
      %p116 = scmp.ne.s32.totalorder %s104, %s105
      %p117 = scmp.eq.s32.totalorder %s32, 1
      %p118 = por %p116, %p117
      %p120 = scmp.ne.s32.totalorder %s105, %s119
      %p121 = scmp.eq.s32.totalorder %s32, 0
      %p122 = por %p120, %p121
      %s124 = sadd.s32 %s123, 1
      %p127 = scmp.eq.s32.totalorder %s26, 1
      %p128 = scmp.ne.s32.totalorder %s123, %s125
      %p129 = scmp.eq.s32.totalorder %s26, 0
      %p130 = por %p128, %p129
      %p131 = scmp.ne.s32.totalorder %s123, %s125
      %p132 = scmp.eq.s32.totalorder %s31, 1
      %p133 = por %p131, %p132
      %p134 = scmp.ne.s32.totalorder %s125, %s126
      %p135 = scmp.eq.s32.totalorder %s31, 0
      %p136 = por %p134, %p135
      %p137 = scmp.ne.s32.totalorder %s125, %s126
      %p138 = scmp.eq.s32.totalorder %s32, 1
      %p139 = por %p137, %p138
      %p141 = scmp.ne.s32.totalorder %s126, %s140
      %p142 = scmp.eq.s32.totalorder %s32, 0
      %p143 = por %p141, %p142
      %s145 = sadd.s32 %s144, 1
      %p148 = scmp.eq.s32.totalorder %s26, 1
      %p149 = scmp.ne.s32.totalorder %s144, %s146
      %p150 = scmp.eq.s32.totalorder %s26, 0
      %p151 = por %p149, %p150
      %p152 = scmp.ne.s32.totalorder %s144, %s146
      %p153 = scmp.eq.s32.totalorder %s31, 1
      %p154 = por %p152, %p153
      %p155 = scmp.ne.s32.totalorder %s146, %s147
      %p156 = scmp.eq.s32.totalorder %s31, 0
      %p157 = por %p155, %p156
      %p158 = scmp.ne.s32.totalorder %s146, %s147
      %p159 = scmp.eq.s32.totalorder %s32, 1
      %p160 = por %p158, %p159
      %p162 = scmp.ne.s32.totalorder %s147, %s161
      %p163 = scmp.eq.s32.totalorder %s32, 0
      %p164 = por %p162, %p163
      %s166 = sadd.s32 %s165, 1
      %p169 = scmp.eq.s32.totalorder %s26, 1
      %p170 = scmp.ne.s32.totalorder %s165, %s167
      %p171 = scmp.eq.s32.totalorder %s26, 0
      %p172 = por %p170, %p171
      %p173 = scmp.ne.s32.totalorder %s165, %s167
      %p174 = scmp.eq.s32.totalorder %s31, 1
      %p175 = por %p173, %p174
      %p176 = scmp.ne.s32.totalorder %s167, %s168
      %p177 = scmp.eq.s32.totalorder %s31, 0
      %p178 = por %p176, %p177
      %p179 = scmp.ne.s32.totalorder %s167, %s168
      %p180 = scmp.eq.s32.totalorder %s32, 1
      %p181 = por %p179, %p180
      %p183 = scmp.ne.s32.totalorder %s168, %s182
      %p184 = scmp.eq.s32.totalorder %s32, 0
      %p185 = por %p183, %p184
      %s187 = sadd.s32 %s186, 1
      %p190 = scmp.eq.s32.totalorder %s26, 1
      %p191 = scmp.ne.s32.totalorder %s186, %s188
      %p192 = scmp.eq.s32.totalorder %s26, 0
      %p193 = por %p191, %p192
      %p194 = scmp.ne.s32.totalorder %s186, %s188
      %p195 = scmp.eq.s32.totalorder %s31, 1
      %p196 = por %p194, %p195
      %p197 = scmp.ne.s32.totalorder %s188, %s189
      %p198 = scmp.eq.s32.totalorder %s31, 0
      %p199 = por %p197, %p198
      %p200 = scmp.ne.s32.totalorder %s188, %s189
      %p201 = scmp.eq.s32.totalorder %s32, 1
      %p202 = por %p200, %p201
      %p204 = scmp.ne.s32.totalorder %s189, %s203
      %p205 = scmp.eq.s32.totalorder %s32, 0
      %p206 = por %p204, %p205
      %s208 = sadd.s32 %s207, 1
      %p211 = scmp.eq.s32.totalorder %s26, 1
      %p212 = scmp.ne.s32.totalorder %s207, %s209
      %p213 = scmp.eq.s32.totalorder %s26, 0
      %p214 = por %p212, %p213
      %p215 = scmp.ne.s32.totalorder %s207, %s209
      %p216 = scmp.eq.s32.totalorder %s31, 1
      %p217 = por %p215, %p216
      %p218 = scmp.ne.s32.totalorder %s209, %s210
      %p219 = scmp.eq.s32.totalorder %s31, 0
      %p220 = por %p218, %p219
      %p221 = scmp.ne.s32.totalorder %s209, %s210
      %p222 = scmp.eq.s32.totalorder %s32, 1
      %p223 = por %p221, %p222
      %p225 = scmp.ne.s32.totalorder %s210, %s224
      %p226 = scmp.eq.s32.totalorder %s32, 0
      %p227 = por %p225, %p226
      %s229 = sadd.s32 %s228, 1
      %p232 = scmp.eq.s32.totalorder %s26, 1
      %p233 = scmp.ne.s32.totalorder %s228, %s230
      %p234 = scmp.eq.s32.totalorder %s26, 0
      %p235 = por %p233, %p234
      %p236 = scmp.ne.s32.totalorder %s228, %s230
      %p237 = scmp.eq.s32.totalorder %s31, 1
      %p238 = por %p236, %p237
      %p239 = scmp.ne.s32.totalorder %s230, %s231
      %p240 = scmp.eq.s32.totalorder %s31, 0
      %p241 = por %p239, %p240
      %p242 = scmp.ne.s32.totalorder %s230, %s231
      %p243 = scmp.eq.s32.totalorder %s32, 1
      %p244 = por %p242, %p243
      %p246 = scmp.ne.s32.totalorder %s231, %s245
      %p247 = scmp.eq.s32.totalorder %s32, 0
      %p248 = por %p246, %p247
      %s250 = sadd.s32 %s249, 1
      %p253 = scmp.eq.s32.totalorder %s26, 1
      %p254 = scmp.ne.s32.totalorder %s249, %s251
      %p255 = scmp.eq.s32.totalorder %s26, 0
      %p256 = por %p254, %p255
      %p257 = scmp.ne.s32.totalorder %s249, %s251
      %p258 = scmp.eq.s32.totalorder %s31, 1
      %p259 = por %p257, %p258
      %p260 = scmp.ne.s32.totalorder %s251, %s252
      %p261 = scmp.eq.s32.totalorder %s31, 0
      %p262 = por %p260, %p261
      %p263 = scmp.ne.s32.totalorder %s251, %s252
      %p264 = scmp.eq.s32.totalorder %s32, 1
      %p265 = por %p263, %p264
      %p267 = scmp.ne.s32.totalorder %s252, %s266
      %p268 = scmp.eq.s32.totalorder %s32, 0
      %p269 = por %p267, %p268
      %s271 = sadd.s32 %s270, 1
      %p274 = scmp.eq.s32.totalorder %s26, 1
      %p275 = scmp.ne.s32.totalorder %s270, %s272
      %p276 = scmp.eq.s32.totalorder %s26, 0
      %p277 = por %p275, %p276
      %p278 = scmp.ne.s32.totalorder %s270, %s272
      %p279 = scmp.eq.s32.totalorder %s31, 1
      %p280 = por %p278, %p279
      %p281 = scmp.ne.s32.totalorder %s272, %s273
      %p282 = scmp.eq.s32.totalorder %s31, 0
      %p283 = por %p281, %p282
      %p284 = scmp.ne.s32.totalorder %s272, %s273
      %p285 = scmp.eq.s32.totalorder %s32, 1
      %p286 = por %p284, %p285
      %p288 = scmp.ne.s32.totalorder %s273, %s287
      %p289 = scmp.eq.s32.totalorder %s32, 0
      %p290 = por %p288, %p289
      %s292 = sadd.s32 %s291, 1
      %p295 = scmp.eq.s32.totalorder %s26, 1
      %p296 = scmp.ne.s32.totalorder %s291, %s293
      %p297 = scmp.eq.s32.totalorder %s26, 0
      %p298 = por %p296, %p297
      %p299 = scmp.ne.s32.totalorder %s291, %s293
      %p300 = scmp.eq.s32.totalorder %s31, 1
      %p301 = por %p299, %p300
      %p302 = scmp.ne.s32.totalorder %s293, %s294
      %p303 = scmp.eq.s32.totalorder %s31, 0
      %p304 = por %p302, %p303
      %p305 = scmp.ne.s32.totalorder %s293, %s294
      %p306 = scmp.eq.s32.totalorder %s32, 1
      %p307 = por %p305, %p306
      %p309 = scmp.ne.s32.totalorder %s294, %s308
      %p310 = scmp.eq.s32.totalorder %s32, 0
      %p311 = por %p309, %p310
      %s313 = sadd.s32 %s312, 1
      %p316 = scmp.eq.s32.totalorder %s26, 1
      %p317 = scmp.ne.s32.totalorder %s312, %s314
      %p318 = scmp.eq.s32.totalorder %s26, 0
      %p319 = por %p317, %p318
      %p320 = scmp.ne.s32.totalorder %s312, %s314
      %p321 = scmp.eq.s32.totalorder %s31, 1
      %p322 = por %p320, %p321
      %p323 = scmp.ne.s32.totalorder %s314, %s315
      %p324 = scmp.eq.s32.totalorder %s31, 0
      %p325 = por %p323, %p324
      %p326 = scmp.ne.s32.totalorder %s314, %s315
      %p327 = scmp.eq.s32.totalorder %s32, 1
      %p328 = por %p326, %p327
      %p330 = scmp.ne.s32.totalorder %s315, %s329
      %p331 = scmp.eq.s32.totalorder %s32, 0
      %p332 = por %p330, %p331
      %s334 = sadd.s32 %s333, 1
      %p337 = scmp.eq.s32.totalorder %s26, 1
      %p338 = scmp.ne.s32.totalorder %s333, %s335
      %p339 = scmp.eq.s32.totalorder %s26, 0
      %p340 = por %p338, %p339
      %p341 = scmp.ne.s32.totalorder %s333, %s335
      %p342 = scmp.eq.s32.totalorder %s31, 1
      %p343 = por %p341, %p342
      %p344 = scmp.ne.s32.totalorder %s335, %s336
      %p345 = scmp.eq.s32.totalorder %s31, 0
      %p346 = por %p344, %p345
      %p347 = scmp.ne.s32.totalorder %s335, %s336
      %p348 = scmp.eq.s32.totalorder %s32, 1
      %p349 = por %p347, %p348
      %p351 = scmp.ne.s32.totalorder %s336, %s350
      %p352 = scmp.eq.s32.totalorder %s32, 0
      %p353 = por %p351, %p352
      %s355 = sadd.s32 %s354, 1
      %p358 = scmp.eq.s32.totalorder %s26, 1
      %p359 = scmp.ne.s32.totalorder %s354, %s356
      %p360 = scmp.eq.s32.totalorder %s26, 0
      %p361 = por %p359, %p360
      %p362 = scmp.ne.s32.totalorder %s354, %s356
      %p363 = scmp.eq.s32.totalorder %s31, 1
      %p364 = por %p362, %p363
      %p365 = scmp.ne.s32.totalorder %s356, %s357
      %p366 = scmp.eq.s32.totalorder %s31, 0
      %p367 = por %p365, %p366
      %p368 = scmp.ne.s32.totalorder %s356, %s357
      %p369 = scmp.eq.s32.totalorder %s32, 1
      %p370 = por %p368, %p369
      %p372 = scmp.ne.s32.totalorder %s357, %s371
      %p373 = scmp.eq.s32.totalorder %s32, 0
      %p374 = por %p372, %p373
      %s376 = sadd.s32 %s375, 1
      %p379 = scmp.eq.s32.totalorder %s26, 1
      %p380 = scmp.ne.s32.totalorder %s375, %s377
      %p381 = scmp.eq.s32.totalorder %s26, 0
      %p382 = por %p380, %p381
      %p383 = scmp.ne.s32.totalorder %s375, %s377
      %p384 = scmp.eq.s32.totalorder %s31, 1
      %p385 = por %p383, %p384
      %p386 = scmp.ne.s32.totalorder %s377, %s378
      %p387 = scmp.eq.s32.totalorder %s31, 0
      %p388 = por %p386, %p387
      %p389 = scmp.ne.s32.totalorder %s377, %s378
      %p390 = scmp.eq.s32.totalorder %s32, 1
      %p391 = por %p389, %p390
      %p393 = scmp.ne.s32.totalorder %s378, %s392
      %p394 = scmp.eq.s32.totalorder %s32, 0
      %p395 = por %p393, %p394
      %s396 = ssub.s32 %s26, %s33
      %p397 = scmp.eq.s32.totalorder %s396, 0
      %s399 = sadd.s32 %s398, 1
      %s400 = scalar_select %p397, %s398, %s399
      %p403 = pneg %p397
      %p404 = scmp.eq.s32.totalorder %s26, 1
      %p405 = por %p403, %p404
      %p406 = scmp.ne.s32.totalorder %s398, %s401
      %p407 = scmp.eq.s32.totalorder %s26, 0
      %p408 = por %p406, %p407
      %p409 = scmp.ne.s32.totalorder %s398, %s401
      %p410 = scmp.eq.s32.totalorder %s31, 1
      %p411 = por %p409, %p410
      %p412 = scmp.ne.s32.totalorder %s401, %s402
      %p413 = scmp.eq.s32.totalorder %s31, 0
      %p414 = por %p412, %p413
      %p415 = scmp.ne.s32.totalorder %s401, %s402
      %p416 = scmp.eq.s32.totalorder %s32, 1
      %p417 = por %p415, %p416
      %p419 = scmp.ne.s32.totalorder %s402, %s418
      %p420 = scmp.eq.s32.totalorder %s32, 0
      %p421 = por %p419, %p420
      %p422 = scmp.le.s32.totalorder 1, %s26
      %p423 = scmp.lt.s32.totalorder %s26, 3
      %p424 = pnand %p422, %p423
      %p425 = pneg %p424
      // Predicated region
      $region9: #{cnn_classifier_forward.1} parent=5 // pred_check
        _
      $region10: #{cnn_classifier_forward.1} parent=5 // pred_check_branch
        %427 = sbr.rel (%p424) target = $region12
      $region11: #{cnn_classifier_forward.1} parent=5 // pred_region
        %s428 = ssub.s32 %s26, 1
        // Predicated region
        $region13: #{cnn_classifier_forward.1} parent=11 // pred_check
          %p429 = pneg %p73
        $region14: #{cnn_classifier_forward.1} parent=11 // pred_check_branch
          %431 = sbr.rel (%p429) target = $region16
        $region15: #{cnn_classifier_forward.1} parent=11 // pred_region
          _
        $region16: #{cnn_classifier_forward.1} parent=11 // pred_fallthru
          _
        // Predicated region
        $region17: #{cnn_classifier_forward.1} parent=11 // pred_check
          %p432 = pneg %p94
        $region18: #{cnn_classifier_forward.1} parent=11 // pred_check_branch
          %434 = sbr.rel (%p432) target = $region20
        $region19: #{cnn_classifier_forward.1} parent=11 // pred_region
          _
        $region20: #{cnn_classifier_forward.1} parent=11 // pred_fallthru
          _
        // Predicated region
        $region21: #{cnn_classifier_forward.1} parent=11 // pred_check
          %p435 = pneg %p115
        $region22: #{cnn_classifier_forward.1} parent=11 // pred_check_branch
          %437 = sbr.rel (%p435) target = $region24
        $region23: #{cnn_classifier_forward.1} parent=11 // pred_region
          _
        $region24: #{cnn_classifier_forward.1} parent=11 // pred_fallthru
          _
        // Predicated region
        $region25: #{cnn_classifier_forward.1} parent=11 // pred_check
          %p438 = pneg %p136
        $region26: #{cnn_classifier_forward.1} parent=11 // pred_check_branch
          %440 = sbr.rel (%p438) target = $region28
        $region27: #{cnn_classifier_forward.1} parent=11 // pred_region
          _
        $region28: #{cnn_classifier_forward.1} parent=11 // pred_fallthru
          _
        // Predicated region
        $region29: #{cnn_classifier_forward.1} parent=11 // pred_check
          %p441 = pneg %p157
        $region30: #{cnn_classifier_forward.1} parent=11 // pred_check_branch
          %443 = sbr.rel (%p441) target = $region32
        $region31: #{cnn_classifier_forward.1} parent=11 // pred_region
          _
        $region32: #{cnn_classifier_forward.1} parent=11 // pred_fallthru
          _
        // Predicated region
        $region33: #{cnn_classifier_forward.1} parent=11 // pred_check
          %p444 = pneg %p178
        $region34: #{cnn_classifier_forward.1} parent=11 // pred_check_branch
          %446 = sbr.rel (%p444) target = $region36
        $region35: #{cnn_classifier_forward.1} parent=11 // pred_region
          _
        $region36: #{cnn_classifier_forward.1} parent=11 // pred_fallthru
          _
        // Predicated region
        $region37: #{cnn_classifier_forward.1} parent=11 // pred_check
          %p447 = pneg %p199
        $region38: #{cnn_classifier_forward.1} parent=11 // pred_check_branch
          %449 = sbr.rel (%p447) target = $region40
        $region39: #{cnn_classifier_forward.1} parent=11 // pred_region
          _
        $region40: #{cnn_classifier_forward.1} parent=11 // pred_fallthru
          _
        // Predicated region
        $region41: #{cnn_classifier_forward.1} parent=11 // pred_check
          %p450 = pneg %p220
        $region42: #{cnn_classifier_forward.1} parent=11 // pred_check_branch
          %452 = sbr.rel (%p450) target = $region44
        $region43: #{cnn_classifier_forward.1} parent=11 // pred_region
          _
        $region44: #{cnn_classifier_forward.1} parent=11 // pred_fallthru
          _
        // Predicated region
        $region45: #{cnn_classifier_forward.1} parent=11 // pred_check
          %p453 = pneg %p241
        $region46: #{cnn_classifier_forward.1} parent=11 // pred_check_branch
          %455 = sbr.rel (%p453) target = $region48
        $region47: #{cnn_classifier_forward.1} parent=11 // pred_region
          _
        $region48: #{cnn_classifier_forward.1} parent=11 // pred_fallthru
          _
        // Predicated region
        $region49: #{cnn_classifier_forward.1} parent=11 // pred_check
          %p456 = pneg %p262
        $region50: #{cnn_classifier_forward.1} parent=11 // pred_check_branch
          %458 = sbr.rel (%p456) target = $region52
        $region51: #{cnn_classifier_forward.1} parent=11 // pred_region
          _
        $region52: #{cnn_classifier_forward.1} parent=11 // pred_fallthru
          _
        // Predicated region
        $region53: #{cnn_classifier_forward.1} parent=11 // pred_check
          %p459 = pneg %p283
        $region54: #{cnn_classifier_forward.1} parent=11 // pred_check_branch
          %461 = sbr.rel (%p459) target = $region56
        $region55: #{cnn_classifier_forward.1} parent=11 // pred_region
          _
        $region56: #{cnn_classifier_forward.1} parent=11 // pred_fallthru
          _
        // Predicated region
        $region57: #{cnn_classifier_forward.1} parent=11 // pred_check
          %p462 = pneg %p304
        $region58: #{cnn_classifier_forward.1} parent=11 // pred_check_branch
          %464 = sbr.rel (%p462) target = $region60
        $region59: #{cnn_classifier_forward.1} parent=11 // pred_region
          _
        $region60: #{cnn_classifier_forward.1} parent=11 // pred_fallthru
          _
        // Predicated region
        $region61: #{cnn_classifier_forward.1} parent=11 // pred_check
          %p465 = pneg %p325
        $region62: #{cnn_classifier_forward.1} parent=11 // pred_check_branch
          %467 = sbr.rel (%p465) target = $region64
        $region63: #{cnn_classifier_forward.1} parent=11 // pred_region
          _
        $region64: #{cnn_classifier_forward.1} parent=11 // pred_fallthru
          _
        // Predicated region
        $region65: #{cnn_classifier_forward.1} parent=11 // pred_check
          %p468 = pneg %p346
        $region66: #{cnn_classifier_forward.1} parent=11 // pred_check_branch
          %470 = sbr.rel (%p468) target = $region68
        $region67: #{cnn_classifier_forward.1} parent=11 // pred_region
          _
        $region68: #{cnn_classifier_forward.1} parent=11 // pred_fallthru
          _
        // Predicated region
        $region69: #{cnn_classifier_forward.1} parent=11 // pred_check
          %p471 = pneg %p367
        $region70: #{cnn_classifier_forward.1} parent=11 // pred_check_branch
          %473 = sbr.rel (%p471) target = $region72
        $region71: #{cnn_classifier_forward.1} parent=11 // pred_region
          _
        $region72: #{cnn_classifier_forward.1} parent=11 // pred_fallthru
          _
        // Predicated region
        $region73: #{cnn_classifier_forward.1} parent=11 // pred_check
          %p474 = pneg %p388
        $region74: #{cnn_classifier_forward.1} parent=11 // pred_check_branch
          %476 = sbr.rel (%p474) target = $region76
        $region75: #{cnn_classifier_forward.1} parent=11 // pred_region
          _
        $region76: #{cnn_classifier_forward.1} parent=11 // pred_fallthru
          _
      $region12: #{cnn_classifier_forward.1} parent=5 // pred_fallthru
        _
      %p477 = scmp.lt.s32.totalorder %s26, 2
      // Predicated region
      $region77: #{cnn_classifier_forward.1} parent=5 // pred_check
        %p478 = pneg %p477
      $region78: #{cnn_classifier_forward.1} parent=5 // pred_check_branch
        %480 = sbr.rel (%p478) target = $region80
      $region79: #{cnn_classifier_forward.1} parent=5 // pred_region
        // Predicated region
        $region81: #{cnn_classifier_forward.1} parent=79 // pred_check
          %p481 = pneg %p46
        $region82: #{cnn_classifier_forward.1} parent=79 // pred_check_branch
          %483 = sbr.rel (%p481) target = $region84
        $region83: #{cnn_classifier_forward.1} parent=79 // pred_region
          %p484 = scmp.lt.s32.totalorder %s26, 1
          %s485 = scalar_select %p484, %s26, 1
          %s486 = smul.addr %s485, 72
          %s487 = smul.addr %s486, 4
          %s488 = scalar_lea.vmem %s0, %s487
        $region84: #{cnn_classifier_forward.1} parent=79 // pred_fallthru
          _
      $region80: #{cnn_classifier_forward.1} parent=5 // pred_fallthru
        _
      %p489 = scmp.le.s32.totalorder 1, %s26
      %p490 = scmp.lt.s32.totalorder %s26, 3
      %p491 = pnand %p489, %p490
      %p492 = pneg %p491
      // Predicated region
      $region85: #{cnn_classifier_forward.1} parent=5 // pred_check
        _
      $region86: #{cnn_classifier_forward.1} parent=5 // pred_check_branch
        %494 = sbr.rel (%p491) target = $region88
      $region87: #{cnn_classifier_forward.1} parent=5 // pred_region
        %s495 = ssub.s32 %s26, 1
        %p496 = scmp.lt.s32.totalorder %s31, 1
        %s497 = scalar_select %p496, %s31, 1
        %s498 = smul.addr %s497, 72
        %s499 = smul.addr %s498, 4
        %s500 = scalar_lea.vmem %s0, %s499
        %p501 = pneg %p52
        %p502 = pneg %p49
        %p503 = pneg %p73
        %p504 = pneg %p70
        %p505 = pneg %p94
        %p506 = pneg %p91
        %p507 = pneg %p115
        %p508 = pneg %p112
        %p509 = pneg %p136
        %p510 = pneg %p133
        %p511 = pneg %p157
        %p512 = pneg %p154
        %p513 = pneg %p178
        %p514 = pneg %p175
        %p515 = pneg %p199
        %p516 = pneg %p196
        %p517 = pneg %p220
        %p518 = pneg %p217
        %p519 = pneg %p241
        %p520 = pneg %p238
        %p521 = pneg %p262
        %p522 = pneg %p259
        %p523 = pneg %p283
        %p524 = pneg %p280
        %p525 = pneg %p304
        %p526 = pneg %p301
        %p527 = pneg %p325
        %p528 = pneg %p322
        %p529 = pneg %p346
        %p530 = pneg %p343
        %p531 = pneg %p367
        %p532 = pneg %p364
        %p533 = pneg %p388
        %p534 = pneg %p385
        %p535 = pneg %p414
        %p536 = pneg %p411
        %s537 = sand.u32 %s401, 1
        %s538 = scalar_lea.sflag [#allocation8], %s537
        %s539 = sand.u32 %s401, 1
        %s540 = scalar_lea.vmem [#allocation7], %s539
        %p541 = scmp.lt.s32.totalorder %s31, 1
        %s542 = scalar_select %p541, %s31, 1
        %s543 = smul.addr %s542, 72
        %s544 = smul.addr %s543, 4
        %s545 = scalar_lea.vmem %s0, %s544
        %v547 = vld [vmem:[%s545] sm:$0xff]
        %v548 = vld [vmem:[%s545 + $0x8] sm:$0xff]
        %v549 = vld [vmem:[%s545 + $0x10] sm:$0xff]
        %v550 = vld [vmem:[%s545 + $0x18] sm:$0xff]
        %v551 = vld [vmem:[%s545 + $0x20] sm:$0xff]
        %v552 = vld [vmem:[%s545 + $0x28] sm:$0xff]
        %v553 = vld [vmem:[%s545 + $0x30] sm:$0xff]
        %v554 = vld [vmem:[%s545 + $0x38] sm:$0xff]
        %v555 = vld [vmem:[%s545 + $0x40] sm:$0xff]
        %v556 = vld [vmem:[%s545 + $0x48] sm:$0xff]
        %v557 = vld [vmem:[%s545 + $0x50] sm:$0xff]
        %v558 = vld [vmem:[%s545 + $0x58] sm:$0xff]
        %v559 = vld [vmem:[%s545 + $0x60] sm:$0xff]
        %v560 = vld [vmem:[%s545 + $0x68] sm:$0xff]
        %v561 = vld [vmem:[%s545 + $0x70] sm:$0xff]
        %v562 = vld [vmem:[%s545 + $0x78] sm:$0xff]
        %v563 = vld [vmem:[%s545 + $0x80] sm:$0xff]
        %v564 = vld [vmem:[%s545 + $0x88] sm:$0xff]
        %v565 = vld [vmem:[%s545 + $0x90] sm:$0xff]
        %v566 = vld [vmem:[%s545 + $0x98] sm:$0xff]
        %v567 = vld [vmem:[%s545 + $0xa0] sm:$0xff]
        %v568 = vld [vmem:[%s545 + $0xa8] sm:$0xff]
        %v569 = vld [vmem:[%s545 + $0xb0] sm:$0xff]
        %v570 = vld [vmem:[%s545 + $0xb8] sm:$0xff]
        %v571 = vld [vmem:[%s545 + $0xc0] sm:$0xff]
        %v572 = vld [vmem:[%s545 + $0xc8] sm:$0xff]
        %v573 = vld [vmem:[%s545 + $0xd0] sm:$0xff]
        %v574 = vld [vmem:[%s545 + $0xd8] sm:$0xff]
        %v575 = vld [vmem:[%s545 + $0xe0] sm:$0xff]
        %v576 = vld [vmem:[%s545 + $0xe8] sm:$0xff]
        %v577 = vld [vmem:[%s545 + $0xf0] sm:$0xff]
        %v578 = vld [vmem:[%s545 + $0xf8] sm:$0xff]
        %v579 = vld [vmem:[%s545 + $0x100] sm:$0xff]
        %v580 = vld [vmem:[%s545 + $0x108] sm:$0xff]
        %v581 = vld [vmem:[%s545 + $0x110] sm:$0xff]
        %v582 = vld [vmem:[%s545 + $0x118] sm:$0xff]
        %v583 = vld [vmem:[%s1] sm:$0xf]
        %v584 = vld [vmem:[%s1 + $0x4] sm:$0xf]
        %v585 = vld [vmem:[%s1 + $0x8] sm:$0xf]
        %v586 = vld [vmem:[%s1 + $0xc] sm:$0xf]
        %v587 = vld [vmem:[%s1 + $0x10] sm:$0xf]
        %v588 = vld [vmem:[%s1 + $0x14] sm:$0xf]
        %v589 = vld [vmem:[%s1 + $0x18] sm:$0xf]
        %v590 = vld [vmem:[%s1 + $0x1c] sm:$0xf]
        %v591 = vld [vmem:[%s1 + $0x20] sm:$0xf]
        %v592 = vld [vmem:[%s1 + $0x24] sm:$0xf]
        %v593 = vld [vmem:[%s1 + $0x28] sm:$0xf]
        %v594 = vld [vmem:[%s1 + $0x2c] sm:$0xf]
        %v595 = vld [vmem:[%s1 + $0x30] sm:$0xf]
        %v596 = vld [vmem:[%s1 + $0x34] sm:$0xf]
        %v597 = vld [vmem:[%s1 + $0x38] sm:$0xf]
        %v598 = vld [vmem:[%s1 + $0x3c] sm:$0xf]
        %v599 = vld [vmem:[%s1 + $0x40] sm:$0xf]
        %v600 = vld [vmem:[%s1 + $0x44] sm:$0xf]
        %v601 = vld [vmem:[%s1 + $0x48] sm:$0x3]
        %v602 = vld [vmem:[%s2] sm:$0x1]
        %v604 = vlaneseq
        %v605 = vshrl.u32 %v604, 7
        %v606 = vsub.s32 0, %v605
        %v607 = vrot.slane %v602, %v606
        %v645 = vunpack.c.l.b16 %v547
        %v646 = vunpack.c.h.b16 %v547
        %v647 = vunpack.c.l.b16 %v548
        %v648 = vunpack.c.h.b16 %v548
        %v649 = vunpack.c.l.b16 %v549
        %v650 = vunpack.c.h.b16 %v549
        %v651 = vunpack.c.l.b16 %v550
        %v652 = vunpack.c.h.b16 %v550
        %v653 = vunpack.c.l.b16 %v551
        %v654 = vunpack.c.h.b16 %v551
        %v655 = vunpack.c.l.b16 %v552
        %v656 = vunpack.c.h.b16 %v552
        %v657 = vunpack.c.l.b16 %v553
        %v658 = vunpack.c.h.b16 %v553
        %v659 = vunpack.c.l.b16 %v554
        %v660 = vunpack.c.h.b16 %v554
        %v661 = vunpack.c.l.b16 %v555
        %v662 = vunpack.c.h.b16 %v555
        %v663 = vunpack.c.l.b16 %v556
        %v664 = vunpack.c.h.b16 %v556
        %v665 = vunpack.c.l.b16 %v557
        %v666 = vunpack.c.h.b16 %v557
        %v667 = vunpack.c.l.b16 %v558
        %v668 = vunpack.c.h.b16 %v558
        %v669 = vunpack.c.l.b16 %v559
        %v670 = vunpack.c.h.b16 %v559
        %v671 = vunpack.c.l.b16 %v560
        %v672 = vunpack.c.h.b16 %v560
        %v673 = vunpack.c.l.b16 %v561
        %v674 = vunpack.c.h.b16 %v561
        %v675 = vunpack.c.l.b16 %v562
        %v676 = vunpack.c.h.b16 %v562
        %v677 = vunpack.c.l.b16 %v563
        %v678 = vunpack.c.h.b16 %v563
        %v679 = vunpack.c.l.b16 %v564
        %v680 = vunpack.c.h.b16 %v564
        %v681 = vunpack.c.l.b16 %v565
        %v682 = vunpack.c.h.b16 %v565
        %v683 = vunpack.c.l.b16 %v566
        %v684 = vunpack.c.h.b16 %v566
        %v685 = vunpack.c.l.b16 %v567
        %v686 = vunpack.c.h.b16 %v567
        %v687 = vunpack.c.l.b16 %v568
        %v688 = vunpack.c.h.b16 %v568
        %v689 = vunpack.c.l.b16 %v569
        %v690 = vunpack.c.h.b16 %v569
        %v691 = vunpack.c.l.b16 %v570
        %v692 = vunpack.c.h.b16 %v570
        %v693 = vunpack.c.l.b16 %v571
        %v694 = vunpack.c.h.b16 %v571
        %v695 = vunpack.c.l.b16 %v572
        %v696 = vunpack.c.h.b16 %v572
        %v697 = vunpack.c.l.b16 %v573
        %v698 = vunpack.c.h.b16 %v573
        %v699 = vunpack.c.l.b16 %v574
        %v700 = vunpack.c.h.b16 %v574
        %v701 = vunpack.c.l.b16 %v575
        %v702 = vunpack.c.h.b16 %v575
        %v703 = vunpack.c.l.b16 %v576
        %v704 = vunpack.c.h.b16 %v576
        %v705 = vunpack.c.l.b16 %v577
        %v706 = vunpack.c.h.b16 %v577
        %v707 = vunpack.c.l.b16 %v578
        %v708 = vunpack.c.h.b16 %v578
        %v709 = vunpack.c.l.b16 %v579
        %v710 = vunpack.c.h.b16 %v579
        %v711 = vunpack.c.l.b16 %v580
        %v712 = vunpack.c.h.b16 %v580
        %v713 = vunpack.c.l.b16 %v581
        %v714 = vunpack.c.h.b16 %v581
        %v715 = vunpack.c.l.b16 %v582
        %v716 = vunpack.c.h.b16 %v582
        %v717 = vpack.c.b16 %v647, %v645
        %v718 = vpack.c.b16 %v648, %v646
        %v719 = vpack.c.b16 %v651, %v649
        %v720 = vpack.c.b16 %v652, %v650
        %v721 = vpack.c.b16 %v655, %v653
        %v722 = vpack.c.b16 %v656, %v654
        %v723 = vpack.c.b16 %v659, %v657
        %v724 = vpack.c.b16 %v660, %v658
        %v725 = vpack.c.b16 %v663, %v661
        %v726 = vpack.c.b16 %v664, %v662
        %v727 = vpack.c.b16 %v667, %v665
        %v728 = vpack.c.b16 %v668, %v666
        %v729 = vpack.c.b16 %v671, %v669
        %v730 = vpack.c.b16 %v672, %v670
        %v731 = vpack.c.b16 %v675, %v673
        %v732 = vpack.c.b16 %v676, %v674
        %v733 = vpack.c.b16 %v679, %v677
        %v734 = vpack.c.b16 %v680, %v678
        %v735 = vpack.c.b16 %v683, %v681
        %v736 = vpack.c.b16 %v684, %v682
        %v737 = vpack.c.b16 %v687, %v685
        %v738 = vpack.c.b16 %v688, %v686
        %v739 = vpack.c.b16 %v691, %v689
        %v740 = vpack.c.b16 %v692, %v690
        %v741 = vpack.c.b16 %v695, %v693
        %v742 = vpack.c.b16 %v696, %v694
        %v743 = vpack.c.b16 %v699, %v697
        %v744 = vpack.c.b16 %v700, %v698
        %v745 = vpack.c.b16 %v703, %v701
        %v746 = vpack.c.b16 %v704, %v702
        %v747 = vpack.c.b16 %v707, %v705
        %v748 = vpack.c.b16 %v708, %v706
        %v749 = vpack.c.b16 %v711, %v709
        %v750 = vpack.c.b16 %v712, %v710
        %v751 = vpack.c.b16 %v715, %v713
        %v752 = vpack.c.b16 %v716, %v714
        %v790 = vunpack.c.l.b16 %v583
        %v791 = vunpack.c.l.b16 %v584
        %v792 = vunpack.c.l.b16 %v585
        %v793 = vunpack.c.l.b16 %v586
        %v794 = vunpack.c.l.b16 %v587
        %v795 = vunpack.c.l.b16 %v588
        %v796 = vunpack.c.l.b16 %v589
        %v797 = vunpack.c.l.b16 %v590
        %v798 = vunpack.c.l.b16 %v591
        %v799 = vunpack.c.l.b16 %v592
        %v800 = vunpack.c.l.b16 %v593
        %v801 = vunpack.c.l.b16 %v594
        %v802 = vunpack.c.l.b16 %v595
        %v803 = vunpack.c.l.b16 %v596
        %v804 = vunpack.c.l.b16 %v597
        %v805 = vunpack.c.l.b16 %v598
        %v806 = vunpack.c.l.b16 %v599
        %v807 = vunpack.c.l.b16 %v600
        %v808 = vunpack.c.l.b16 %v601
        %v809 = vpack.c.b16 %v791, %v790
        %v810 = vpack.c.b16 %v793, %v792
        %v811 = vpack.c.b16 %v795, %v794
        %v812 = vpack.c.b16 %v797, %v796
        %v813 = vpack.c.b16 %v799, %v798
        %v814 = vpack.c.b16 %v801, %v800
        %v815 = vpack.c.b16 %v803, %v802
        %v816 = vpack.c.b16 %v805, %v804
        %v817 = vpack.c.b16 %v807, %v806
        %v818 = vpack.c.b16 %v808, %v808
        %vm828 = vcmask 154624
        %v830 = vsel %vm828, %v718, 0
        %v833 = vsel %vm828, %v720, 0
        %v836 = vsel %vm828, %v722, 0
        %v839 = vsel %vm828, %v724, 0
        %v842 = vsel %vm828, %v726, 0
        %v845 = vsel %vm828, %v728, 0
        %v848 = vsel %vm828, %v730, 0
        %v851 = vsel %vm828, %v732, 0
        %v854 = vsel %vm828, %v734, 0
        %v857 = vsel %vm828, %v736, 0
        %v860 = vsel %vm828, %v738, 0
        %v863 = vsel %vm828, %v740, 0
        %v866 = vsel %vm828, %v742, 0
        %v869 = vsel %vm828, %v744, 0
        %v872 = vsel %vm828, %v746, 0
        %v875 = vsel %vm828, %v748, 0
        %v878 = vsel %vm828, %v750, 0
        %v881 = vsel %vm828, %v752, 0
        %vm883 = vcmask 1040384
        %vm884 = vcmask 1041408
        %v885 = vsel %vm883, 4294967295, 65535
        %v886 = vsel %vm884, %v885, 0
        %v888 = vand.u32 %v818, %v886
        %890 = vmatprep.subr.bf16.mxu0 0
        %891 = vmatpush1.bf16.msra.mxu0 %v809
        %892 = vmatprep.subr.bf16.mxu0 0
        %893 = vmatpush1.bf16.msra.mxu0 %v810
        %894 = vmatprep.subr.bf16.mxu0 0
        %895 = vmatpush1.bf16.msra.mxu0 %v811
        %896 = vmatprep.subr.bf16.mxu0 0
        %897 = vmatpush1.bf16.msra.mxu0 %v812
        %898 = vmatprep.subr.bf16.mxu0 0
        %899 = vmatpush1.bf16.msra.mxu0 %v813
        %900 = vmatprep.subr.bf16.mxu0 0
        %901 = vmatpush1.bf16.msra.mxu0 %v814
        %902 = vmatprep.subr.bf16.mxu0 0
        %903 = vmatpush1.bf16.msra.mxu0 %v815
        %904 = vmatprep.subr.bf16.mxu0 0
        %905 = vmatpush1.bf16.msra.mxu0 %v816
        %906 = vmatprep.subr.bf16.mxu0 0
        %907 = vmatpush1.bf16.msra.mxu0 %v817
        %908 = vmatprep.subr.bf16.mxu0 0
        %909 = vmatpush1.bf16.msra.mxu0 %v888
        %910 = vmatprep.subr.bf16.mxu0 0
        %911 = vmatpush1.bf16.msra.mxu0 0
        %912 = vmatprep.subr.bf16.mxu0 0
        %913 = vmatpush1.bf16.msra.mxu0 0
        %914 = vmatprep.subr.bf16.mxu0 0
        %915 = vmatpush1.bf16.msra.mxu0 0
        %916 = vmatprep.subr.bf16.mxu0 0
        %917 = vmatpush1.bf16.msra.mxu0 0
        %918 = vmatprep.subr.bf16.mxu0 0
        %919 = vmatpush1.bf16.msra.mxu0 0
        %920 = vmatprep.subr.bf16.mxu0 0
        %921 = vmatpush1.bf16.msra.mxu0 0
        %922 = vmatprep.mubr.bf16.mxu0 %v830
        %923 = vmatmul.mubr.bf16.gmra.mrb[0].mxu0 %v717
        %v924 = vpop.f32.mrb[0].mxu0
        %v925 = vadd.f32 %v607, %v924
        %v926 = vpop.f32.mrb[0].mxu0
        %v927 = vpop.f32.mrb[0].mxu0
        %v928 = vadd.f32 %v607, %v927
        %v929 = vpop.f32.mrb[0].mxu0
        %930 = vmatprep.mubr.bf16.mxu0 %v833
        %931 = vmatmul.mubr.bf16.gmra.mrb[0].mxu0 %v719
        %v932 = vpop.f32.mrb[0].mxu0
        %v933 = vadd.f32 %v607, %v932
        %v934 = vpop.f32.mrb[0].mxu0
        %v935 = vpop.f32.mrb[0].mxu0
        %v936 = vadd.f32 %v607, %v935
        %v937 = vpop.f32.mrb[0].mxu0
        %938 = vmatprep.mubr.bf16.mxu0 %v836
        %939 = vmatmul.mubr.bf16.gmra.mrb[0].mxu0 %v721
        %v940 = vpop.f32.mrb[0].mxu0
        %v941 = vadd.f32 %v607, %v940
        %v942 = vpop.f32.mrb[0].mxu0
        %v943 = vpop.f32.mrb[0].mxu0
        %v944 = vadd.f32 %v607, %v943
        %v945 = vpop.f32.mrb[0].mxu0
        %946 = vmatprep.mubr.bf16.mxu0 %v839
        %947 = vmatmul.mubr.bf16.gmra.mrb[0].mxu0 %v723
        %v948 = vpop.f32.mrb[0].mxu0
        %v949 = vadd.f32 %v607, %v948
        %v950 = vpop.f32.mrb[0].mxu0
        %v951 = vpop.f32.mrb[0].mxu0
        %v952 = vadd.f32 %v607, %v951
        %v953 = vpop.f32.mrb[0].mxu0
        %954 = vmatprep.mubr.bf16.mxu0 %v842
        %955 = vmatmul.mubr.bf16.gmra.mrb[0].mxu0 %v725
        %v956 = vpop.f32.mrb[0].mxu0
        %v957 = vadd.f32 %v607, %v956
        %v958 = vpop.f32.mrb[0].mxu0
        %v959 = vpop.f32.mrb[0].mxu0
        %v960 = vadd.f32 %v607, %v959
        %v961 = vpop.f32.mrb[0].mxu0
        %962 = vmatprep.mubr.bf16.mxu0 %v845
        %963 = vmatmul.mubr.bf16.gmra.mrb[0].mxu0 %v727
        %v964 = vpop.f32.mrb[0].mxu0
        %v965 = vadd.f32 %v607, %v964
        %v966 = vpop.f32.mrb[0].mxu0
        %v967 = vpop.f32.mrb[0].mxu0
        %v968 = vadd.f32 %v607, %v967
        %v969 = vpop.f32.mrb[0].mxu0
        %970 = vmatprep.mubr.bf16.mxu0 %v848
        %971 = vmatmul.mubr.bf16.gmra.mrb[0].mxu0 %v729
        %v972 = vpop.f32.mrb[0].mxu0
        %v973 = vadd.f32 %v607, %v972
        %v974 = vpop.f32.mrb[0].mxu0
        %v975 = vpop.f32.mrb[0].mxu0
        %v976 = vadd.f32 %v607, %v975
        %v977 = vpop.f32.mrb[0].mxu0
        %978 = vmatprep.mubr.bf16.mxu0 %v851
        %979 = vmatmul.mubr.bf16.gmra.mrb[0].mxu0 %v731
        %v980 = vpop.f32.mrb[0].mxu0
        %v981 = vadd.f32 %v607, %v980
        %v982 = vpop.f32.mrb[0].mxu0
        %v983 = vpop.f32.mrb[0].mxu0
        %v984 = vadd.f32 %v607, %v983
        %v985 = vpop.f32.mrb[0].mxu0
        %986 = vmatprep.mubr.bf16.mxu0 %v854
        %987 = vmatmul.mubr.bf16.gmra.mrb[0].mxu0 %v733
        %v988 = vpop.f32.mrb[0].mxu0
        %v989 = vadd.f32 %v607, %v988
        %v990 = vpop.f32.mrb[0].mxu0
        %v991 = vpop.f32.mrb[0].mxu0
        %v992 = vadd.f32 %v607, %v991
        %v993 = vpop.f32.mrb[0].mxu0
        %994 = vmatprep.mubr.bf16.mxu0 %v857
        %995 = vmatmul.mubr.bf16.gmra.mrb[0].mxu0 %v735
        %v996 = vpop.f32.mrb[0].mxu0
        %v997 = vadd.f32 %v607, %v996
        %v998 = vpop.f32.mrb[0].mxu0
        %v999 = vpop.f32.mrb[0].mxu0
        %v1000 = vadd.f32 %v607, %v999
        %v1001 = vpop.f32.mrb[0].mxu0
        %1002 = vmatprep.mubr.bf16.mxu0 %v860
        %1003 = vmatmul.mubr.bf16.gmra.mrb[0].mxu0 %v737
        %v1004 = vpop.f32.mrb[0].mxu0
        %v1005 = vadd.f32 %v607, %v1004
        %v1006 = vpop.f32.mrb[0].mxu0
        %v1007 = vpop.f32.mrb[0].mxu0
        %v1008 = vadd.f32 %v607, %v1007
        %v1009 = vpop.f32.mrb[0].mxu0
        %1010 = vmatprep.mubr.bf16.mxu0 %v863
        %1011 = vmatmul.mubr.bf16.gmra.mrb[0].mxu0 %v739
        %v1012 = vpop.f32.mrb[0].mxu0
        %v1013 = vadd.f32 %v607, %v1012
        %v1014 = vpop.f32.mrb[0].mxu0
        %v1015 = vpop.f32.mrb[0].mxu0
        %v1016 = vadd.f32 %v607, %v1015
        %v1017 = vpop.f32.mrb[0].mxu0
        %1018 = vmatprep.mubr.bf16.mxu0 %v866
        %1019 = vmatmul.mubr.bf16.gmra.mrb[0].mxu0 %v741
        %v1020 = vpop.f32.mrb[0].mxu0
        %v1021 = vadd.f32 %v607, %v1020
        %v1022 = vpop.f32.mrb[0].mxu0
        %v1023 = vpop.f32.mrb[0].mxu0
        %v1024 = vadd.f32 %v607, %v1023
        %v1025 = vpop.f32.mrb[0].mxu0
        %1026 = vmatprep.mubr.bf16.mxu0 %v869
        %1027 = vmatmul.mubr.bf16.gmra.mrb[0].mxu0 %v743
        %v1028 = vpop.f32.mrb[0].mxu0
        %v1029 = vadd.f32 %v607, %v1028
        %v1030 = vpop.f32.mrb[0].mxu0
        %v1031 = vpop.f32.mrb[0].mxu0
        %v1032 = vadd.f32 %v607, %v1031
        %v1033 = vpop.f32.mrb[0].mxu0
        %1034 = vmatprep.mubr.bf16.mxu0 %v872
        %1035 = vmatmul.mubr.bf16.gmra.mrb[0].mxu0 %v745
        %v1036 = vpop.f32.mrb[0].mxu0
        %v1037 = vadd.f32 %v607, %v1036
        %v1038 = vpop.f32.mrb[0].mxu0
        %v1039 = vpop.f32.mrb[0].mxu0
        %v1040 = vadd.f32 %v607, %v1039
        %v1041 = vpop.f32.mrb[0].mxu0
        %1042 = vmatprep.mubr.bf16.mxu0 %v875
        %1043 = vmatmul.mubr.bf16.gmra.mrb[0].mxu0 %v747
        %v1044 = vpop.f32.mrb[0].mxu0
        %v1045 = vadd.f32 %v607, %v1044
        %v1046 = vpop.f32.mrb[0].mxu0
        %v1047 = vpop.f32.mrb[0].mxu0
        %v1048 = vadd.f32 %v607, %v1047
        %v1049 = vpop.f32.mrb[0].mxu0
        %1050 = vmatprep.mubr.bf16.mxu0 %v878
        %1051 = vmatmul.mubr.bf16.gmra.mrb[0].mxu0 %v749
        %v1052 = vpop.f32.mrb[0].mxu0
        %v1053 = vadd.f32 %v607, %v1052
        %v1054 = vpop.f32.mrb[0].mxu0
        %v1055 = vpop.f32.mrb[0].mxu0
        %v1056 = vadd.f32 %v607, %v1055
        %v1057 = vpop.f32.mrb[0].mxu0
        %1058 = vmatprep.mubr.bf16.mxu0 %v881
        %1059 = vmatmul.mubr.bf16.gmra.mrb[0].mxu0 %v751
        %v1060 = vpop.f32.mrb[0].mxu0
        %v1061 = vadd.f32 %v607, %v1060
        %v1062 = vpop.f32.mrb[0].mxu0
        %v1063 = vpop.f32.mrb[0].mxu0
        %v1064 = vadd.f32 %v607, %v1063
        %v1065 = vpop.f32.mrb[0].mxu0
        %1066 = vdwg.mxu0
        %v1067 = vmax.f32 %v925, 0.0
        %v1068 = vmax.f32 %v928, 0.0
        %v1069 = vmax.f32 %v933, 0.0
        %v1070 = vmax.f32 %v936, 0.0
        %v1071 = vmax.f32 %v941, 0.0
        %v1072 = vmax.f32 %v944, 0.0
        %v1073 = vmax.f32 %v949, 0.0
        %v1074 = vmax.f32 %v952, 0.0
        %v1075 = vmax.f32 %v957, 0.0
        %v1076 = vmax.f32 %v960, 0.0
        %v1077 = vmax.f32 %v965, 0.0
        %v1078 = vmax.f32 %v968, 0.0
        %v1079 = vmax.f32 %v973, 0.0
        %v1080 = vmax.f32 %v976, 0.0
        %v1081 = vmax.f32 %v981, 0.0
        %v1082 = vmax.f32 %v984, 0.0
        %v1083 = vmax.f32 %v989, 0.0
        %v1084 = vmax.f32 %v992, 0.0
        %v1085 = vmax.f32 %v997, 0.0
        %v1086 = vmax.f32 %v1000, 0.0
        %v1087 = vmax.f32 %v1005, 0.0
        %v1088 = vmax.f32 %v1008, 0.0
        %v1089 = vmax.f32 %v1013, 0.0
        %v1090 = vmax.f32 %v1016, 0.0
        %v1091 = vmax.f32 %v1021, 0.0
        %v1092 = vmax.f32 %v1024, 0.0
        %v1093 = vmax.f32 %v1029, 0.0
        %v1094 = vmax.f32 %v1032, 0.0
        %v1095 = vmax.f32 %v1037, 0.0
        %v1096 = vmax.f32 %v1040, 0.0
        %v1097 = vmax.f32 %v1045, 0.0
        %v1098 = vmax.f32 %v1048, 0.0
        %v1099 = vmax.f32 %v1053, 0.0
        %v1100 = vmax.f32 %v1056, 0.0
        %v1101 = vmax.f32 %v1061, 0.0
        %v1102 = vmax.f32 %v1064, 0.0
        %v1103 = vld [vmem:[%s13] sm:$0xff]
        %v1104 = vld [vmem:[%s13 + $0x8] sm:$0xff]
        %v1105 = vld [vmem:[%s13 + $0x10] sm:$0xff]
        %v1106 = vld [vmem:[%s13 + $0x18] sm:$0xff]
        %v1107 = vld [vmem:[%s13 + $0x20] sm:$0xff]
        %v1108 = vld [vmem:[%s13 + $0x28] sm:$0xff]
        %v1109 = vld [vmem:[%s13 + $0x30] sm:$0xff]
        %v1110 = vld [vmem:[%s13 + $0x38] sm:$0xff]
        %v1111 = vld [vmem:[%s13 + $0x40] sm:$0xff]
        %v1112 = vld [vmem:[%s13 + $0x48] sm:$0xff]
        %v1113 = vld [vmem:[%s13 + $0x50] sm:$0xff]
        %v1114 = vld [vmem:[%s13 + $0x58] sm:$0xff]
        %v1115 = vld [vmem:[%s13 + $0x60] sm:$0xff]
        %v1116 = vld [vmem:[%s13 + $0x68] sm:$0xff]
        %v1117 = vld [vmem:[%s13 + $0x70] sm:$0xff]
        %v1118 = vld [vmem:[%s13 + $0x78] sm:$0xff]
        %v1119 = vld [vmem:[%s13 + $0x80] sm:$0xff]
        %v1120 = vld [vmem:[%s13 + $0x88] sm:$0xff]
        %v1121 = vld [vmem:[%s13 + $0x90] sm:$0xff]
        %v1122 = vld [vmem:[%s13 + $0x98] sm:$0xff]
        %v1123 = vld [vmem:[%s13 + $0xa0] sm:$0xff]
        %v1124 = vld [vmem:[%s13 + $0xa8] sm:$0xff]
        %v1125 = vld [vmem:[%s13 + $0xb0] sm:$0xff]
        %v1126 = vld [vmem:[%s13 + $0xb8] sm:$0xff]
        %v1127 = vld [vmem:[%s13 + $0xc0] sm:$0xff]
        %v1128 = vld [vmem:[%s13 + $0xc8] sm:$0xff]
        %v1129 = vld [vmem:[%s13 + $0xd0] sm:$0xff]
        %v1130 = vld [vmem:[%s13 + $0xd8] sm:$0xff]
        %v1131 = vld [vmem:[%s13 + $0xe0] sm:$0xff]
        %v1132 = vld [vmem:[%s13 + $0xe8] sm:$0xff]
        %v1133 = vld [vmem:[%s13 + $0xf0] sm:$0xff]
        %v1134 = vld [vmem:[%s13 + $0xf8] sm:$0xff]
        %v1135 = vld [vmem:[%s13 + $0x100] sm:$0xff]
        %v1136 = vld [vmem:[%s13 + $0x108] sm:$0xff]
        %v1137 = vld [vmem:[%s13 + $0x110] sm:$0xff]
        %v1138 = vld [vmem:[%s13 + $0x118] sm:$0xff]
        %vm1139 = vcmp.gt.f32.partialorder %v1103, 0.5
        %vm1140 = vcmp.gt.f32.partialorder %v1104, 0.5
        %vm1141 = vcmp.gt.f32.partialorder %v1105, 0.5
        %vm1142 = vcmp.gt.f32.partialorder %v1106, 0.5
        %vm1143 = vcmp.gt.f32.partialorder %v1107, 0.5
        %vm1144 = vcmp.gt.f32.partialorder %v1108, 0.5
        %vm1145 = vcmp.gt.f32.partialorder %v1109, 0.5
        %vm1146 = vcmp.gt.f32.partialorder %v1110, 0.5
        %vm1147 = vcmp.gt.f32.partialorder %v1111, 0.5
        %vm1148 = vcmp.gt.f32.partialorder %v1112, 0.5
        %vm1149 = vcmp.gt.f32.partialorder %v1113, 0.5
        %vm1150 = vcmp.gt.f32.partialorder %v1114, 0.5
        %vm1151 = vcmp.gt.f32.partialorder %v1115, 0.5
        %vm1152 = vcmp.gt.f32.partialorder %v1116, 0.5
        %vm1153 = vcmp.gt.f32.partialorder %v1117, 0.5
        %vm1154 = vcmp.gt.f32.partialorder %v1118, 0.5
        %vm1155 = vcmp.gt.f32.partialorder %v1119, 0.5
        %vm1156 = vcmp.gt.f32.partialorder %v1120, 0.5
        %vm1157 = vcmp.gt.f32.partialorder %v1121, 0.5
        %vm1158 = vcmp.gt.f32.partialorder %v1122, 0.5
        %vm1159 = vcmp.gt.f32.partialorder %v1123, 0.5
        %vm1160 = vcmp.gt.f32.partialorder %v1124, 0.5
        %vm1161 = vcmp.gt.f32.partialorder %v1125, 0.5
        %vm1162 = vcmp.gt.f32.partialorder %v1126, 0.5
        %vm1163 = vcmp.gt.f32.partialorder %v1127, 0.5
        %vm1164 = vcmp.gt.f32.partialorder %v1128, 0.5
        %vm1165 = vcmp.gt.f32.partialorder %v1129, 0.5
        %vm1166 = vcmp.gt.f32.partialorder %v1130, 0.5
        %vm1167 = vcmp.gt.f32.partialorder %v1131, 0.5
        %vm1168 = vcmp.gt.f32.partialorder %v1132, 0.5
        %vm1169 = vcmp.gt.f32.partialorder %v1133, 0.5
        %vm1170 = vcmp.gt.f32.partialorder %v1134, 0.5
        %vm1171 = vcmp.gt.f32.partialorder %v1135, 0.5
        %vm1172 = vcmp.gt.f32.partialorder %v1136, 0.5
        %vm1173 = vcmp.gt.f32.partialorder %v1137, 0.5
        %vm1174 = vcmp.gt.f32.partialorder %v1138, 0.5
        %v1175 = vsel %vm1139, 1, 0
        %v1176 = vsel %vm1140, 1, 0
        %v1177 = vsel %vm1141, 1, 0
        %v1178 = vsel %vm1142, 1, 0
        %v1179 = vsel %vm1143, 1, 0
        %v1180 = vsel %vm1144, 1, 0
        %v1181 = vsel %vm1145, 1, 0
        %v1182 = vsel %vm1146, 1, 0
        %v1183 = vsel %vm1147, 1, 0
        %v1184 = vsel %vm1148, 1, 0
        %v1185 = vsel %vm1149, 1, 0
        %v1186 = vsel %vm1150, 1, 0
        %v1187 = vsel %vm1151, 1, 0
        %v1188 = vsel %vm1152, 1, 0
        %v1189 = vsel %vm1153, 1, 0
        %v1190 = vsel %vm1154, 1, 0
        %v1191 = vsel %vm1155, 1, 0
        %v1192 = vsel %vm1156, 1, 0
        %v1193 = vsel %vm1157, 1, 0
        %v1194 = vsel %vm1158, 1, 0
        %v1195 = vsel %vm1159, 1, 0
        %v1196 = vsel %vm1160, 1, 0
        %v1197 = vsel %vm1161, 1, 0
        %v1198 = vsel %vm1162, 1, 0
        %v1199 = vsel %vm1163, 1, 0
        %v1200 = vsel %vm1164, 1, 0
        %v1201 = vsel %vm1165, 1, 0
        %v1202 = vsel %vm1166, 1, 0
        %v1203 = vsel %vm1167, 1, 0
        %v1204 = vsel %vm1168, 1, 0
        %v1205 = vsel %vm1169, 1, 0
        %v1206 = vsel %vm1170, 1, 0
        %v1207 = vsel %vm1171, 1, 0
        %v1208 = vsel %vm1172, 1, 0
        %v1209 = vsel %vm1173, 1, 0
        %v1210 = vsel %vm1174, 1, 0
        %1211 = vset.pattern.permute.xlu0 0
        %1212 = vperm.xlu0 %1211, %v1175
        %v1213 = vpop.permute.xlu0 %1212
        %1214 = vset.pattern.permute.xlu0 0
        %1215 = vperm.xlu0 %1214, %v1176
        %v1216 = vpop.permute.xlu0 %1215
        %1217 = vset.pattern.permute.xlu0 0
        %1218 = vperm.xlu0 %1217, %v1177
        %v1219 = vpop.permute.xlu0 %1218
        %1220 = vset.pattern.permute.xlu0 0
        %1221 = vperm.xlu0 %1220, %v1178
        %v1222 = vpop.permute.xlu0 %1221
        %1223 = vset.pattern.permute.xlu0 0
        %1224 = vperm.xlu0 %1223, %v1179
        %v1225 = vpop.permute.xlu0 %1224
        %1226 = vset.pattern.permute.xlu0 0
        %1227 = vperm.xlu0 %1226, %v1180
        %v1228 = vpop.permute.xlu0 %1227
        %1229 = vset.pattern.permute.xlu0 0
        %1230 = vperm.xlu0 %1229, %v1181
        %v1231 = vpop.permute.xlu0 %1230
        %1232 = vset.pattern.permute.xlu0 0
        %1233 = vperm.xlu0 %1232, %v1182
        %v1234 = vpop.permute.xlu0 %1233
        %1235 = vset.pattern.permute.xlu0 0
        %1236 = vperm.xlu0 %1235, %v1183
        %v1237 = vpop.permute.xlu0 %1236
        %1238 = vset.pattern.permute.xlu0 0
        %1239 = vperm.xlu0 %1238, %v1184
        %v1240 = vpop.permute.xlu0 %1239
        %1241 = vset.pattern.permute.xlu0 0
        %1242 = vperm.xlu0 %1241, %v1185
        %v1243 = vpop.permute.xlu0 %1242
        %1244 = vset.pattern.permute.xlu0 0
        %1245 = vperm.xlu0 %1244, %v1186
        %v1246 = vpop.permute.xlu0 %1245
        %1247 = vset.pattern.permute.xlu0 0
        %1248 = vperm.xlu0 %1247, %v1187
        %v1249 = vpop.permute.xlu0 %1248
        %1250 = vset.pattern.permute.xlu0 0
        %1251 = vperm.xlu0 %1250, %v1188
        %v1252 = vpop.permute.xlu0 %1251
        %1253 = vset.pattern.permute.xlu0 0
        %1254 = vperm.xlu0 %1253, %v1189
        %v1255 = vpop.permute.xlu0 %1254
        %1256 = vset.pattern.permute.xlu0 0
        %1257 = vperm.xlu0 %1256, %v1190
        %v1258 = vpop.permute.xlu0 %1257
        %1259 = vset.pattern.permute.xlu0 0
        %1260 = vperm.xlu0 %1259, %v1191
        %v1261 = vpop.permute.xlu0 %1260
        %1262 = vset.pattern.permute.xlu0 0
        %1263 = vperm.xlu0 %1262, %v1192
        %v1264 = vpop.permute.xlu0 %1263
        %1265 = vset.pattern.permute.xlu0 0
        %1266 = vperm.xlu0 %1265, %v1193
        %v1267 = vpop.permute.xlu0 %1266
        %1268 = vset.pattern.permute.xlu0 0
        %1269 = vperm.xlu0 %1268, %v1194
        %v1270 = vpop.permute.xlu0 %1269
        %1271 = vset.pattern.permute.xlu0 0
        %1272 = vperm.xlu0 %1271, %v1195
        %v1273 = vpop.permute.xlu0 %1272
        %1274 = vset.pattern.permute.xlu0 0
        %1275 = vperm.xlu0 %1274, %v1196
        %v1276 = vpop.permute.xlu0 %1275
        %1277 = vset.pattern.permute.xlu0 0
        %1278 = vperm.xlu0 %1277, %v1197
        %v1279 = vpop.permute.xlu0 %1278
        %1280 = vset.pattern.permute.xlu0 0
        %1281 = vperm.xlu0 %1280, %v1198
        %v1282 = vpop.permute.xlu0 %1281
        %1283 = vset.pattern.permute.xlu0 0
        %1284 = vperm.xlu0 %1283, %v1199
        %v1285 = vpop.permute.xlu0 %1284
        %1286 = vset.pattern.permute.xlu0 0
        %1287 = vperm.xlu0 %1286, %v1200
        %v1288 = vpop.permute.xlu0 %1287
        %1289 = vset.pattern.permute.xlu0 0
        %1290 = vperm.xlu0 %1289, %v1201
        %v1291 = vpop.permute.xlu0 %1290
        %1292 = vset.pattern.permute.xlu0 0
        %1293 = vperm.xlu0 %1292, %v1202
        %v1294 = vpop.permute.xlu0 %1293
        %1295 = vset.pattern.permute.xlu0 0
        %1296 = vperm.xlu0 %1295, %v1203
        %v1297 = vpop.permute.xlu0 %1296
        %1298 = vset.pattern.permute.xlu0 0
        %1299 = vperm.xlu0 %1298, %v1204
        %v1300 = vpop.permute.xlu0 %1299
        %1301 = vset.pattern.permute.xlu0 0
        %1302 = vperm.xlu0 %1301, %v1205
        %v1303 = vpop.permute.xlu0 %1302
        %1304 = vset.pattern.permute.xlu0 0
        %1305 = vperm.xlu0 %1304, %v1206
        %v1306 = vpop.permute.xlu0 %1305
        %1307 = vset.pattern.permute.xlu0 0
        %1308 = vperm.xlu0 %1307, %v1207
        %v1309 = vpop.permute.xlu0 %1308
        %1310 = vset.pattern.permute.xlu0 0
        %1311 = vperm.xlu0 %1310, %v1208
        %v1312 = vpop.permute.xlu0 %1311
        %1313 = vset.pattern.permute.xlu0 0
        %1314 = vperm.xlu0 %1313, %v1209
        %v1315 = vpop.permute.xlu0 %1314
        %1316 = vset.pattern.permute.xlu0 0
        %1317 = vperm.xlu0 %1316, %v1210
        %v1318 = vpop.permute.xlu0 %1317
        %vm1319 = vcmp.eq.s32.totalorder %v1213, 1
        %vm1320 = vcmp.eq.s32.totalorder %v1216, 1
        %vm1321 = vcmp.eq.s32.totalorder %v1219, 1
        %vm1322 = vcmp.eq.s32.totalorder %v1222, 1
        %vm1323 = vcmp.eq.s32.totalorder %v1225, 1
        %vm1324 = vcmp.eq.s32.totalorder %v1228, 1
        %vm1325 = vcmp.eq.s32.totalorder %v1231, 1
        %vm1326 = vcmp.eq.s32.totalorder %v1234, 1
        %vm1327 = vcmp.eq.s32.totalorder %v1237, 1
        %vm1328 = vcmp.eq.s32.totalorder %v1240, 1
        %vm1329 = vcmp.eq.s32.totalorder %v1243, 1
        %vm1330 = vcmp.eq.s32.totalorder %v1246, 1
        %vm1331 = vcmp.eq.s32.totalorder %v1249, 1
        %vm1332 = vcmp.eq.s32.totalorder %v1252, 1
        %vm1333 = vcmp.eq.s32.totalorder %v1255, 1
        %vm1334 = vcmp.eq.s32.totalorder %v1258, 1
        %vm1335 = vcmp.eq.s32.totalorder %v1261, 1
        %vm1336 = vcmp.eq.s32.totalorder %v1264, 1
        %vm1337 = vcmp.eq.s32.totalorder %v1267, 1
        %vm1338 = vcmp.eq.s32.totalorder %v1270, 1
        %vm1339 = vcmp.eq.s32.totalorder %v1273, 1
        %vm1340 = vcmp.eq.s32.totalorder %v1276, 1
        %vm1341 = vcmp.eq.s32.totalorder %v1279, 1
        %vm1342 = vcmp.eq.s32.totalorder %v1282, 1
        %vm1343 = vcmp.eq.s32.totalorder %v1285, 1
        %vm1344 = vcmp.eq.s32.totalorder %v1288, 1
        %vm1345 = vcmp.eq.s32.totalorder %v1291, 1
        %vm1346 = vcmp.eq.s32.totalorder %v1294, 1
        %vm1347 = vcmp.eq.s32.totalorder %v1297, 1
        %vm1348 = vcmp.eq.s32.totalorder %v1300, 1
        %vm1349 = vcmp.eq.s32.totalorder %v1303, 1
        %vm1350 = vcmp.eq.s32.totalorder %v1306, 1
        %vm1351 = vcmp.eq.s32.totalorder %v1309, 1
        %vm1352 = vcmp.eq.s32.totalorder %v1312, 1
        %vm1353 = vcmp.eq.s32.totalorder %v1315, 1
        %vm1354 = vcmp.eq.s32.totalorder %v1318, 1
        %v1355 = vsel %vm1319, %v1067, 0.0
        %v1356 = vsel %vm1320, %v1068, 0.0
        %v1357 = vsel %vm1321, %v1069, 0.0
        %v1358 = vsel %vm1322, %v1070, 0.0
        %v1359 = vsel %vm1323, %v1071, 0.0
        %v1360 = vsel %vm1324, %v1072, 0.0
        %v1361 = vsel %vm1325, %v1073, 0.0
        %v1362 = vsel %vm1326, %v1074, 0.0
        %v1363 = vsel %vm1327, %v1075, 0.0
        %v1364 = vsel %vm1328, %v1076, 0.0
        %v1365 = vsel %vm1329, %v1077, 0.0
        %v1366 = vsel %vm1330, %v1078, 0.0
        %v1367 = vsel %vm1331, %v1079, 0.0
        %v1368 = vsel %vm1332, %v1080, 0.0
        %v1369 = vsel %vm1333, %v1081, 0.0
        %v1370 = vsel %vm1334, %v1082, 0.0
        %v1371 = vsel %vm1335, %v1083, 0.0
        %v1372 = vsel %vm1336, %v1084, 0.0
        %v1373 = vsel %vm1337, %v1085, 0.0
        %v1374 = vsel %vm1338, %v1086, 0.0
        %v1375 = vsel %vm1339, %v1087, 0.0
        %v1376 = vsel %vm1340, %v1088, 0.0
        %v1377 = vsel %vm1341, %v1089, 0.0
        %v1378 = vsel %vm1342, %v1090, 0.0
        %v1379 = vsel %vm1343, %v1091, 0.0
        %v1380 = vsel %vm1344, %v1092, 0.0
        %v1381 = vsel %vm1345, %v1093, 0.0
        %v1382 = vsel %vm1346, %v1094, 0.0
        %v1383 = vsel %vm1347, %v1095, 0.0
        %v1384 = vsel %vm1348, %v1096, 0.0
        %v1385 = vsel %vm1349, %v1097, 0.0
        %v1386 = vsel %vm1350, %v1098, 0.0
        %v1387 = vsel %vm1351, %v1099, 0.0
        %v1388 = vsel %vm1352, %v1100, 0.0
        %v1389 = vsel %vm1353, %v1101, 0.0
        %v1390 = vsel %vm1354, %v1102, 0.0
        %vm1391 = vcmask 261120
        %1392 = vst.msk [vmem:[#allocation2] sm:$0xff] %vm1391, 0.0
        %1393 = vst.msk [vmem:[#allocation2 + $0x8] sm:$0xff] %vm1391, 0.0
        %1394 = vst.msk [vmem:[#allocation2 + $0x10] sm:$0xff] %vm1391, 0.0
        %1395 = vst.msk [vmem:[#allocation2 + $0x18] sm:$0xff] %vm1391, %v1355
        %1396 = vst.msk [vmem:[#allocation2 + $0x20] sm:$0xff] %vm1391, %v1356
        %1397 = vst.msk [vmem:[#allocation2 + $0x28] sm:$0xff] %vm1391, %v1357
        %1398 = vst.msk [vmem:[#allocation2 + $0x30] sm:$0xff] %vm1391, %v1358
        %1399 = vst.msk [vmem:[#allocation2 + $0x38] sm:$0xff] %vm1391, %v1359
        %1400 = vst.msk [vmem:[#allocation2 + $0x40] sm:$0xff] %vm1391, %v1360
        %1401 = vst.msk [vmem:[#allocation2 + $0x48] sm:$0xff] %vm1391, %v1361
        %1402 = vst.msk [vmem:[#allocation2 + $0x50] sm:$0xff] %vm1391, %v1362
        %1403 = vst.msk [vmem:[#allocation2 + $0x58] sm:$0xff] %vm1391, %v1363
        %1404 = vst.msk [vmem:[#allocation2 + $0x60] sm:$0xff] %vm1391, %v1364
        %1405 = vst.msk [vmem:[#allocation2 + $0x68] sm:$0xff] %vm1391, %v1365
        %1406 = vst.msk [vmem:[#allocation2 + $0x70] sm:$0xff] %vm1391, %v1366
        %1407 = vst.msk [vmem:[#allocation2 + $0x78] sm:$0xff] %vm1391, %v1367
        %1408 = vst.msk [vmem:[#allocation2 + $0x80] sm:$0xff] %vm1391, %v1368
        %1409 = vst.msk [vmem:[#allocation2 + $0x88] sm:$0xff] %vm1391, %v1369
        %1410 = vst.msk [vmem:[#allocation2 + $0x90] sm:$0xff] %vm1391, %v1370
        %1411 = vst.msk [vmem:[#allocation2 + $0x98] sm:$0xff] %vm1391, %v1371
        %1412 = vst.msk [vmem:[#allocation2 + $0xa0] sm:$0xff] %vm1391, %v1372
        %1413 = vst.msk [vmem:[#allocation2 + $0xa8] sm:$0xff] %vm1391, %v1373
        %1414 = vst.msk [vmem:[#allocation2 + $0xb0] sm:$0xff] %vm1391, %v1374
        %1415 = vst.msk [vmem:[#allocation2 + $0xb8] sm:$0xff] %vm1391, %v1375
        %1416 = vst.msk [vmem:[#allocation2 + $0xc0] sm:$0xff] %vm1391, %v1376
        %1417 = vst.msk [vmem:[#allocation2 + $0xc8] sm:$0xff] %vm1391, %v1377
        %1418 = vst.msk [vmem:[#allocation2 + $0xd0] sm:$0xff] %vm1391, %v1378
        %1419 = vst.msk [vmem:[#allocation2 + $0xd8] sm:$0xff] %vm1391, %v1379
        %1420 = vst.msk [vmem:[#allocation2 + $0xe0] sm:$0xff] %vm1391, %v1380
        %1421 = vst.msk [vmem:[#allocation2 + $0xe8] sm:$0xff] %vm1391, %v1381
        %1422 = vst.msk [vmem:[#allocation2 + $0xf0] sm:$0xff] %vm1391, %v1382
        %1423 = vst.msk [vmem:[#allocation2 + $0xf8] sm:$0xff] %vm1391, %v1383
        %1424 = vst.msk [vmem:[#allocation2 + $0x100] sm:$0xff] %vm1391, %v1384
        %1425 = vst.msk [vmem:[#allocation2 + $0x108] sm:$0xff] %vm1391, %v1385
        %1426 = vst.msk [vmem:[#allocation2 + $0x110] sm:$0xff] %vm1391, %v1386
        %1427 = vst.msk [vmem:[#allocation2 + $0x118] sm:$0xff] %vm1391, %v1387
        %1428 = vst.msk [vmem:[#allocation2 + $0x120] sm:$0xff] %vm1391, %v1388
        %1429 = vst.msk [vmem:[#allocation2 + $0x128] sm:$0xff] %vm1391, %v1389
        %1430 = vst.msk [vmem:[#allocation2 + $0x130] sm:$0xff] %vm1391, %v1390
        %1431 = vst.msk [vmem:[#allocation2 + $0x138] sm:$0xff] %vm1391, 0.0
        %1432 = vst.msk [vmem:[#allocation2 + $0x140] sm:$0xff] %vm1391, 0.0
        %1433 = vst.msk [vmem:[#allocation2 + $0x148] sm:$0xff] %vm1391, 0.0
        %1434 = vst.msk [vmem:[#allocation2 + $0x150] sm:$0xff] %vm1391, 0.0
        %1435 = vst.msk [vmem:[#allocation2 + $0x158] sm:$0xff] %vm1391, 0.0
        %1436 = vst.msk [vmem:[#allocation2 + $0x160] sm:$0xff] %vm1391, 0.0
        %1437 = vst.msk [vmem:[#allocation2 + $0x168] sm:$0xff] %vm1391, 0.0
        %s1438 = scalar_lea.vmem [#allocation2], 5
        %v1439 = vld [vmem:[%s1438] ss:$2 sm:$0xff]
        %s1440 = scalar_lea.vmem [#allocation2], 21
        %v1441 = vld [vmem:[%s1440] ss:$2 sm:$0xff]
        %s1442 = scalar_lea.vmem [#allocation2], 37
        %v1443 = vld [vmem:[%s1442] ss:$2 sm:$0xff]
        %s1444 = scalar_lea.vmem [#allocation2], 53
        %v1445 = vld [vmem:[%s1444] ss:$2 sm:$0xff]
        %s1446 = scalar_lea.vmem [#allocation2], 69
        %v1447 = vld [vmem:[%s1446] ss:$2 sm:$0xff]
        %s1448 = scalar_lea.vmem [#allocation2], 85
        %v1449 = vld [vmem:[%s1448] ss:$2 sm:$0xff]
        %s1450 = scalar_lea.vmem [#allocation2], 101
        %v1451 = vld [vmem:[%s1450] ss:$2 sm:$0xff]
        %s1452 = scalar_lea.vmem [#allocation2], 117
        %v1453 = vld [vmem:[%s1452] ss:$2 sm:$0xff]
        %s1454 = scalar_lea.vmem [#allocation2], 133
        %v1455 = vld [vmem:[%s1454] ss:$2 sm:$0xff]
        %s1456 = scalar_lea.vmem [#allocation2], 149
        %v1457 = vld [vmem:[%s1456] ss:$2 sm:$0xff]
        %s1458 = scalar_lea.vmem [#allocation2], 165
        %v1459 = vld [vmem:[%s1458] ss:$2 sm:$0xff]
        %s1460 = scalar_lea.vmem [#allocation2], 181
        %v1461 = vld [vmem:[%s1460] ss:$2 sm:$0xff]
        %s1462 = scalar_lea.vmem [#allocation2], 197
        %v1463 = vld [vmem:[%s1462] ss:$2 sm:$0xff]
        %s1464 = scalar_lea.vmem [#allocation2], 213
        %v1465 = vld [vmem:[%s1464] ss:$2 sm:$0xff]
        %s1466 = scalar_lea.vmem [#allocation2], 229
        %v1467 = vld [vmem:[%s1466] ss:$2 sm:$0xff]
        %s1468 = scalar_lea.vmem [#allocation2], 245
        %v1469 = vld [vmem:[%s1468] ss:$2 sm:$0xff]
        %s1470 = scalar_lea.vmem [#allocation2], 261
        %v1471 = vld [vmem:[%s1470] ss:$2 sm:$0xff]
        %s1472 = scalar_lea.vmem [#allocation2], 277
        %v1473 = vld [vmem:[%s1472] ss:$2 sm:$0xff]
        %s1474 = scalar_lea.vmem [#allocation2], 6
        %v1475 = vld [vmem:[%s1474] ss:$2 sm:$0xff]
        %s1476 = scalar_lea.vmem [#allocation2], 22
        %v1477 = vld [vmem:[%s1476] ss:$2 sm:$0xff]
        %s1478 = scalar_lea.vmem [#allocation2], 38
        %v1479 = vld [vmem:[%s1478] ss:$2 sm:$0xff]
        %s1480 = scalar_lea.vmem [#allocation2], 54
        %v1481 = vld [vmem:[%s1480] ss:$2 sm:$0xff]
        %s1482 = scalar_lea.vmem [#allocation2], 70
        %v1483 = vld [vmem:[%s1482] ss:$2 sm:$0xff]
        %s1484 = scalar_lea.vmem [#allocation2], 86
        %v1485 = vld [vmem:[%s1484] ss:$2 sm:$0xff]
        %s1486 = scalar_lea.vmem [#allocation2], 102
        %v1487 = vld [vmem:[%s1486] ss:$2 sm:$0xff]
        %s1488 = scalar_lea.vmem [#allocation2], 118
        %v1489 = vld [vmem:[%s1488] ss:$2 sm:$0xff]
        %s1490 = scalar_lea.vmem [#allocation2], 134
        %v1491 = vld [vmem:[%s1490] ss:$2 sm:$0xff]
        %s1492 = scalar_lea.vmem [#allocation2], 150
        %v1493 = vld [vmem:[%s1492] ss:$2 sm:$0xff]
        %s1494 = scalar_lea.vmem [#allocation2], 166
        %v1495 = vld [vmem:[%s1494] ss:$2 sm:$0xff]
        %s1496 = scalar_lea.vmem [#allocation2], 182
        %v1497 = vld [vmem:[%s1496] ss:$2 sm:$0xff]
        %s1498 = scalar_lea.vmem [#allocation2], 198
        %v1499 = vld [vmem:[%s1498] ss:$2 sm:$0xff]
        %s1500 = scalar_lea.vmem [#allocation2], 214
        %v1501 = vld [vmem:[%s1500] ss:$2 sm:$0xff]
        %s1502 = scalar_lea.vmem [#allocation2], 230
        %v1503 = vld [vmem:[%s1502] ss:$2 sm:$0xff]
        %s1504 = scalar_lea.vmem [#allocation2], 246
        %v1505 = vld [vmem:[%s1504] ss:$2 sm:$0xff]
        %s1506 = scalar_lea.vmem [#allocation2], 262
        %v1507 = vld [vmem:[%s1506] ss:$2 sm:$0xff]
        %s1508 = scalar_lea.vmem [#allocation2], 278
        %v1509 = vld [vmem:[%s1508] ss:$2 sm:$0xff]
        %v1510 = vmax.f32 %v1439, %v1475
        %v1511 = vmax.f32 %v1441, %v1477
        %v1512 = vmax.f32 %v1443, %v1479
        %v1513 = vmax.f32 %v1445, %v1481
        %v1514 = vmax.f32 %v1447, %v1483
        %v1515 = vmax.f32 %v1449, %v1485
        %v1516 = vmax.f32 %v1451, %v1487
        %v1517 = vmax.f32 %v1453, %v1489
        %v1518 = vmax.f32 %v1455, %v1491
        %v1519 = vmax.f32 %v1457, %v1493
        %v1520 = vmax.f32 %v1459, %v1495
        %v1521 = vmax.f32 %v1461, %v1497
        %v1522 = vmax.f32 %v1463, %v1499
        %v1523 = vmax.f32 %v1465, %v1501
        %v1524 = vmax.f32 %v1467, %v1503
        %v1525 = vmax.f32 %v1469, %v1505
        %v1526 = vmax.f32 %v1471, %v1507
        %v1527 = vmax.f32 %v1473, %v1509
        %s1528 = scalar_lea.vmem [#allocation2], 7
        %v1529 = vld [vmem:[%s1528] ss:$2 sm:$0xff]
        %s1530 = scalar_lea.vmem [#allocation2], 23
        %v1531 = vld [vmem:[%s1530] ss:$2 sm:$0xff]
        %s1532 = scalar_lea.vmem [#allocation2], 39
        %v1533 = vld [vmem:[%s1532] ss:$2 sm:$0xff]
        %s1534 = scalar_lea.vmem [#allocation2], 55
        %v1535 = vld [vmem:[%s1534] ss:$2 sm:$0xff]
        %s1536 = scalar_lea.vmem [#allocation2], 71
        %v1537 = vld [vmem:[%s1536] ss:$2 sm:$0xff]
        %s1538 = scalar_lea.vmem [#allocation2], 87
        %v1539 = vld [vmem:[%s1538] ss:$2 sm:$0xff]
        %s1540 = scalar_lea.vmem [#allocation2], 103
        %v1541 = vld [vmem:[%s1540] ss:$2 sm:$0xff]
        %s1542 = scalar_lea.vmem [#allocation2], 119
        %v1543 = vld [vmem:[%s1542] ss:$2 sm:$0xff]
        %s1544 = scalar_lea.vmem [#allocation2], 135
        %v1545 = vld [vmem:[%s1544] ss:$2 sm:$0xff]
        %s1546 = scalar_lea.vmem [#allocation2], 151
        %v1547 = vld [vmem:[%s1546] ss:$2 sm:$0xff]
        %s1548 = scalar_lea.vmem [#allocation2], 167
        %v1549 = vld [vmem:[%s1548] ss:$2 sm:$0xff]
        %s1550 = scalar_lea.vmem [#allocation2], 183
        %v1551 = vld [vmem:[%s1550] ss:$2 sm:$0xff]
        %s1552 = scalar_lea.vmem [#allocation2], 199
        %v1553 = vld [vmem:[%s1552] ss:$2 sm:$0xff]
        %s1554 = scalar_lea.vmem [#allocation2], 215
        %v1555 = vld [vmem:[%s1554] ss:$2 sm:$0xff]
        %s1556 = scalar_lea.vmem [#allocation2], 231
        %v1557 = vld [vmem:[%s1556] ss:$2 sm:$0xff]
        %s1558 = scalar_lea.vmem [#allocation2], 247
        %v1559 = vld [vmem:[%s1558] ss:$2 sm:$0xff]
        %s1560 = scalar_lea.vmem [#allocation2], 263
        %v1561 = vld [vmem:[%s1560] ss:$2 sm:$0xff]
        %s1562 = scalar_lea.vmem [#allocation2], 279
        %v1563 = vld [vmem:[%s1562] ss:$2 sm:$0xff]
        %v1564 = vmax.f32 %v1510, %v1529
        %v1565 = vmax.f32 %v1511, %v1531
        %v1566 = vmax.f32 %v1512, %v1533
        %v1567 = vmax.f32 %v1513, %v1535
        %v1568 = vmax.f32 %v1514, %v1537
        %v1569 = vmax.f32 %v1515, %v1539
        %v1570 = vmax.f32 %v1516, %v1541
        %v1571 = vmax.f32 %v1517, %v1543
        %v1572 = vmax.f32 %v1518, %v1545
        %v1573 = vmax.f32 %v1519, %v1547
        %v1574 = vmax.f32 %v1520, %v1549
        %v1575 = vmax.f32 %v1521, %v1551
        %v1576 = vmax.f32 %v1522, %v1553
        %v1577 = vmax.f32 %v1523, %v1555
        %v1578 = vmax.f32 %v1524, %v1557
        %v1579 = vmax.f32 %v1525, %v1559
        %v1580 = vmax.f32 %v1526, %v1561
        %v1581 = vmax.f32 %v1527, %v1563
        %s1582 = scalar_lea.vmem [#allocation2], 295
        %v1583 = vld [vmem:[%s1582] ss:$2 sm:$0xff]
        %v1584 = vmax.f32 %v1564, %v1531
        %v1585 = vmax.f32 %v1565, %v1533
        %v1586 = vmax.f32 %v1566, %v1535
        %v1587 = vmax.f32 %v1567, %v1537
        %v1588 = vmax.f32 %v1568, %v1539
        %v1589 = vmax.f32 %v1569, %v1541
        %v1590 = vmax.f32 %v1570, %v1543
        %v1591 = vmax.f32 %v1571, %v1545
        %v1592 = vmax.f32 %v1572, %v1547
        %v1593 = vmax.f32 %v1573, %v1549
        %v1594 = vmax.f32 %v1574, %v1551
        %v1595 = vmax.f32 %v1575, %v1553
        %v1596 = vmax.f32 %v1576, %v1555
        %v1597 = vmax.f32 %v1577, %v1557
        %v1598 = vmax.f32 %v1578, %v1559
        %v1599 = vmax.f32 %v1579, %v1561
        %v1600 = vmax.f32 %v1580, %v1563
        %v1601 = vmax.f32 %v1581, %v1583
        %s1602 = scalar_lea.vmem [#allocation2], 24
        %v1603 = vld [vmem:[%s1602] ss:$2 sm:$0xff]
        %s1604 = scalar_lea.vmem [#allocation2], 40
        %v1605 = vld [vmem:[%s1604] ss:$2 sm:$0xff]
        %s1606 = scalar_lea.vmem [#allocation2], 56
        %v1607 = vld [vmem:[%s1606] ss:$2 sm:$0xff]
        %s1608 = scalar_lea.vmem [#allocation2], 72
        %v1609 = vld [vmem:[%s1608] ss:$2 sm:$0xff]
        %s1610 = scalar_lea.vmem [#allocation2], 88
        %v1611 = vld [vmem:[%s1610] ss:$2 sm:$0xff]
        %s1612 = scalar_lea.vmem [#allocation2], 104
        %v1613 = vld [vmem:[%s1612] ss:$2 sm:$0xff]
        %s1614 = scalar_lea.vmem [#allocation2], 120
        %v1615 = vld [vmem:[%s1614] ss:$2 sm:$0xff]
        %s1616 = scalar_lea.vmem [#allocation2], 136
        %v1617 = vld [vmem:[%s1616] ss:$2 sm:$0xff]
        %s1618 = scalar_lea.vmem [#allocation2], 152
        %v1619 = vld [vmem:[%s1618] ss:$2 sm:$0xff]
        %s1620 = scalar_lea.vmem [#allocation2], 168
        %v1621 = vld [vmem:[%s1620] ss:$2 sm:$0xff]
        %s1622 = scalar_lea.vmem [#allocation2], 184
        %v1623 = vld [vmem:[%s1622] ss:$2 sm:$0xff]
        %s1624 = scalar_lea.vmem [#allocation2], 200
        %v1625 = vld [vmem:[%s1624] ss:$2 sm:$0xff]
        %s1626 = scalar_lea.vmem [#allocation2], 216
        %v1627 = vld [vmem:[%s1626] ss:$2 sm:$0xff]
        %s1628 = scalar_lea.vmem [#allocation2], 232
        %v1629 = vld [vmem:[%s1628] ss:$2 sm:$0xff]
        %s1630 = scalar_lea.vmem [#allocation2], 248
        %v1631 = vld [vmem:[%s1630] ss:$2 sm:$0xff]
        %s1632 = scalar_lea.vmem [#allocation2], 264
        %v1633 = vld [vmem:[%s1632] ss:$2 sm:$0xff]
        %s1634 = scalar_lea.vmem [#allocation2], 280
        %v1635 = vld [vmem:[%s1634] ss:$2 sm:$0xff]
        %s1636 = scalar_lea.vmem [#allocation2], 296
        %v1637 = vld [vmem:[%s1636] ss:$2 sm:$0xff]
        %v1638 = vmax.f32 %v1584, %v1603
        %v1639 = vmax.f32 %v1585, %v1605
        %v1640 = vmax.f32 %v1586, %v1607
        %v1641 = vmax.f32 %v1587, %v1609
        %v1642 = vmax.f32 %v1588, %v1611
        %v1643 = vmax.f32 %v1589, %v1613
        %v1644 = vmax.f32 %v1590, %v1615
        %v1645 = vmax.f32 %v1591, %v1617
        %v1646 = vmax.f32 %v1592, %v1619
        %v1647 = vmax.f32 %v1593, %v1621
        %v1648 = vmax.f32 %v1594, %v1623
        %v1649 = vmax.f32 %v1595, %v1625
        %v1650 = vmax.f32 %v1596, %v1627
        %v1651 = vmax.f32 %v1597, %v1629
        %v1652 = vmax.f32 %v1598, %v1631
        %v1653 = vmax.f32 %v1599, %v1633
        %v1654 = vmax.f32 %v1600, %v1635
        %v1655 = vmax.f32 %v1601, %v1637
        %s1656 = scalar_lea.vmem [#allocation2], 25
        %v1657 = vld [vmem:[%s1656] ss:$2 sm:$0xff]
        %s1658 = scalar_lea.vmem [#allocation2], 41
        %v1659 = vld [vmem:[%s1658] ss:$2 sm:$0xff]
        %s1660 = scalar_lea.vmem [#allocation2], 57
        %v1661 = vld [vmem:[%s1660] ss:$2 sm:$0xff]
        %s1662 = scalar_lea.vmem [#allocation2], 73
        %v1663 = vld [vmem:[%s1662] ss:$2 sm:$0xff]
        %s1664 = scalar_lea.vmem [#allocation2], 89
        %v1665 = vld [vmem:[%s1664] ss:$2 sm:$0xff]
        %s1666 = scalar_lea.vmem [#allocation2], 105
        %v1667 = vld [vmem:[%s1666] ss:$2 sm:$0xff]
        %s1668 = scalar_lea.vmem [#allocation2], 121
        %v1669 = vld [vmem:[%s1668] ss:$2 sm:$0xff]
        %s1670 = scalar_lea.vmem [#allocation2], 137
        %v1671 = vld [vmem:[%s1670] ss:$2 sm:$0xff]
        %s1672 = scalar_lea.vmem [#allocation2], 153
        %v1673 = vld [vmem:[%s1672] ss:$2 sm:$0xff]
        %s1674 = scalar_lea.vmem [#allocation2], 169
        %v1675 = vld [vmem:[%s1674] ss:$2 sm:$0xff]
        %s1676 = scalar_lea.vmem [#allocation2], 185
        %v1677 = vld [vmem:[%s1676] ss:$2 sm:$0xff]
        %s1678 = scalar_lea.vmem [#allocation2], 201
        %v1679 = vld [vmem:[%s1678] ss:$2 sm:$0xff]
        %s1680 = scalar_lea.vmem [#allocation2], 217
        %v1681 = vld [vmem:[%s1680] ss:$2 sm:$0xff]
        %s1682 = scalar_lea.vmem [#allocation2], 233
        %v1683 = vld [vmem:[%s1682] ss:$2 sm:$0xff]
        %s1684 = scalar_lea.vmem [#allocation2], 249
        %v1685 = vld [vmem:[%s1684] ss:$2 sm:$0xff]
        %s1686 = scalar_lea.vmem [#allocation2], 265
        %v1687 = vld [vmem:[%s1686] ss:$2 sm:$0xff]
        %s1688 = scalar_lea.vmem [#allocation2], 281
        %v1689 = vld [vmem:[%s1688] ss:$2 sm:$0xff]
        %s1690 = scalar_lea.vmem [#allocation2], 297
        %v1691 = vld [vmem:[%s1690] ss:$2 sm:$0xff]
        %v1692 = vmax.f32 %v1638, %v1657
        %v1693 = vmax.f32 %v1639, %v1659
        %v1694 = vmax.f32 %v1640, %v1661
        %v1695 = vmax.f32 %v1641, %v1663
        %v1696 = vmax.f32 %v1642, %v1665
        %v1697 = vmax.f32 %v1643, %v1667
        %v1698 = vmax.f32 %v1644, %v1669
        %v1699 = vmax.f32 %v1645, %v1671
        %v1700 = vmax.f32 %v1646, %v1673
        %v1701 = vmax.f32 %v1647, %v1675
        %v1702 = vmax.f32 %v1648, %v1677
        %v1703 = vmax.f32 %v1649, %v1679
        %v1704 = vmax.f32 %v1650, %v1681
        %v1705 = vmax.f32 %v1651, %v1683
        %v1706 = vmax.f32 %v1652, %v1685
        %v1707 = vmax.f32 %v1653, %v1687
        %v1708 = vmax.f32 %v1654, %v1689
        %v1709 = vmax.f32 %v1655, %v1691
        %s1710 = scalar_lea.vmem [#allocation2], 313
        %v1711 = vld [vmem:[%s1710] ss:$2 sm:$0xff]
        %v1712 = vmax.f32 %v1692, %v1659
        %v1713 = vmax.f32 %v1693, %v1661
        %v1714 = vmax.f32 %v1694, %v1663
        %v1715 = vmax.f32 %v1695, %v1665
        %v1716 = vmax.f32 %v1696, %v1667
        %v1717 = vmax.f32 %v1697, %v1669
        %v1718 = vmax.f32 %v1698, %v1671
        %v1719 = vmax.f32 %v1699, %v1673
        %v1720 = vmax.f32 %v1700, %v1675
        %v1721 = vmax.f32 %v1701, %v1677
        %v1722 = vmax.f32 %v1702, %v1679
        %v1723 = vmax.f32 %v1703, %v1681
        %v1724 = vmax.f32 %v1704, %v1683
        %v1725 = vmax.f32 %v1705, %v1685
        %v1726 = vmax.f32 %v1706, %v1687
        %v1727 = vmax.f32 %v1707, %v1689
        %v1728 = vmax.f32 %v1708, %v1691
        %v1729 = vmax.f32 %v1709, %v1711
        %s1730 = scalar_lea.vmem [#allocation2], 42
        %v1731 = vld [vmem:[%s1730] ss:$2 sm:$0xff]
        %s1732 = scalar_lea.vmem [#allocation2], 58
        %v1733 = vld [vmem:[%s1732] ss:$2 sm:$0xff]
        %s1734 = scalar_lea.vmem [#allocation2], 74
        %v1735 = vld [vmem:[%s1734] ss:$2 sm:$0xff]
        %s1736 = scalar_lea.vmem [#allocation2], 90
        %v1737 = vld [vmem:[%s1736] ss:$2 sm:$0xff]
        %s1738 = scalar_lea.vmem [#allocation2], 106
        %v1739 = vld [vmem:[%s1738] ss:$2 sm:$0xff]
        %s1740 = scalar_lea.vmem [#allocation2], 122
        %v1741 = vld [vmem:[%s1740] ss:$2 sm:$0xff]
        %s1742 = scalar_lea.vmem [#allocation2], 138
        %v1743 = vld [vmem:[%s1742] ss:$2 sm:$0xff]
        %s1744 = scalar_lea.vmem [#allocation2], 154
        %v1745 = vld [vmem:[%s1744] ss:$2 sm:$0xff]
        %s1746 = scalar_lea.vmem [#allocation2], 170
        %v1747 = vld [vmem:[%s1746] ss:$2 sm:$0xff]
        %s1748 = scalar_lea.vmem [#allocation2], 186
        %v1749 = vld [vmem:[%s1748] ss:$2 sm:$0xff]
        %s1750 = scalar_lea.vmem [#allocation2], 202
        %v1751 = vld [vmem:[%s1750] ss:$2 sm:$0xff]
        %s1752 = scalar_lea.vmem [#allocation2], 218
        %v1753 = vld [vmem:[%s1752] ss:$2 sm:$0xff]
        %s1754 = scalar_lea.vmem [#allocation2], 234
        %v1755 = vld [vmem:[%s1754] ss:$2 sm:$0xff]
        %s1756 = scalar_lea.vmem [#allocation2], 250
        %v1757 = vld [vmem:[%s1756] ss:$2 sm:$0xff]
        %s1758 = scalar_lea.vmem [#allocation2], 266
        %v1759 = vld [vmem:[%s1758] ss:$2 sm:$0xff]
        %s1760 = scalar_lea.vmem [#allocation2], 282
        %v1761 = vld [vmem:[%s1760] ss:$2 sm:$0xff]
        %s1762 = scalar_lea.vmem [#allocation2], 298
        %v1763 = vld [vmem:[%s1762] ss:$2 sm:$0xff]
        %s1764 = scalar_lea.vmem [#allocation2], 314
        %v1765 = vld [vmem:[%s1764] ss:$2 sm:$0xff]
        %v1766 = vmax.f32 %v1712, %v1731
        %v1767 = vmax.f32 %v1713, %v1733
        %v1768 = vmax.f32 %v1714, %v1735
        %v1769 = vmax.f32 %v1715, %v1737
        %v1770 = vmax.f32 %v1716, %v1739
        %v1771 = vmax.f32 %v1717, %v1741
        %v1772 = vmax.f32 %v1718, %v1743
        %v1773 = vmax.f32 %v1719, %v1745
        %v1774 = vmax.f32 %v1720, %v1747
        %v1775 = vmax.f32 %v1721, %v1749
        %v1776 = vmax.f32 %v1722, %v1751
        %v1777 = vmax.f32 %v1723, %v1753
        %v1778 = vmax.f32 %v1724, %v1755
        %v1779 = vmax.f32 %v1725, %v1757
        %v1780 = vmax.f32 %v1726, %v1759
        %v1781 = vmax.f32 %v1727, %v1761
        %v1782 = vmax.f32 %v1728, %v1763
        %v1783 = vmax.f32 %v1729, %v1765
        %s1784 = scalar_lea.vmem [#allocation2], 43
        %v1785 = vld [vmem:[%s1784] ss:$2 sm:$0xff]
        %s1786 = scalar_lea.vmem [#allocation2], 59
        %v1787 = vld [vmem:[%s1786] ss:$2 sm:$0xff]
        %s1788 = scalar_lea.vmem [#allocation2], 75
        %v1789 = vld [vmem:[%s1788] ss:$2 sm:$0xff]
        %s1790 = scalar_lea.vmem [#allocation2], 91
        %v1791 = vld [vmem:[%s1790] ss:$2 sm:$0xff]
        %s1792 = scalar_lea.vmem [#allocation2], 107
        %v1793 = vld [vmem:[%s1792] ss:$2 sm:$0xff]
        %s1794 = scalar_lea.vmem [#allocation2], 123
        %v1795 = vld [vmem:[%s1794] ss:$2 sm:$0xff]
        %s1796 = scalar_lea.vmem [#allocation2], 139
        %v1797 = vld [vmem:[%s1796] ss:$2 sm:$0xff]
        %s1798 = scalar_lea.vmem [#allocation2], 155
        %v1799 = vld [vmem:[%s1798] ss:$2 sm:$0xff]
        %s1800 = scalar_lea.vmem [#allocation2], 171
        %v1801 = vld [vmem:[%s1800] ss:$2 sm:$0xff]
        %s1802 = scalar_lea.vmem [#allocation2], 187
        %v1803 = vld [vmem:[%s1802] ss:$2 sm:$0xff]
        %s1804 = scalar_lea.vmem [#allocation2], 203
        %v1805 = vld [vmem:[%s1804] ss:$2 sm:$0xff]
        %s1806 = scalar_lea.vmem [#allocation2], 219
        %v1807 = vld [vmem:[%s1806] ss:$2 sm:$0xff]
        %s1808 = scalar_lea.vmem [#allocation2], 235
        %v1809 = vld [vmem:[%s1808] ss:$2 sm:$0xff]
        %s1810 = scalar_lea.vmem [#allocation2], 251
        %v1811 = vld [vmem:[%s1810] ss:$2 sm:$0xff]
        %s1812 = scalar_lea.vmem [#allocation2], 267
        %v1813 = vld [vmem:[%s1812] ss:$2 sm:$0xff]
        %s1814 = scalar_lea.vmem [#allocation2], 283
        %v1815 = vld [vmem:[%s1814] ss:$2 sm:$0xff]
        %s1816 = scalar_lea.vmem [#allocation2], 299
        %v1817 = vld [vmem:[%s1816] ss:$2 sm:$0xff]
        %s1818 = scalar_lea.vmem [#allocation2], 315
        %v1819 = vld [vmem:[%s1818] ss:$2 sm:$0xff]
        %v1820 = vmax.f32 %v1766, %v1785
        %v1821 = vmax.f32 %v1767, %v1787
        %v1822 = vmax.f32 %v1768, %v1789
        %v1823 = vmax.f32 %v1769, %v1791
        %v1824 = vmax.f32 %v1770, %v1793
        %v1825 = vmax.f32 %v1771, %v1795
        %v1826 = vmax.f32 %v1772, %v1797
        %v1827 = vmax.f32 %v1773, %v1799
        %v1828 = vmax.f32 %v1774, %v1801
        %v1829 = vmax.f32 %v1775, %v1803
        %v1830 = vmax.f32 %v1776, %v1805
        %v1831 = vmax.f32 %v1777, %v1807
        %v1832 = vmax.f32 %v1778, %v1809
        %v1833 = vmax.f32 %v1779, %v1811
        %v1834 = vmax.f32 %v1780, %v1813
        %v1835 = vmax.f32 %v1781, %v1815
        %v1836 = vmax.f32 %v1782, %v1817
        %v1837 = vmax.f32 %v1783, %v1819
        %v1838 = vld [vmem:[%s14] sm:$0xff]
        %v1839 = vld [vmem:[%s14 + $0x8] sm:$0xff]
        %v1840 = vld [vmem:[%s14 + $0x10] sm:$0xff]
        %v1841 = vld [vmem:[%s14 + $0x18] sm:$0xff]
        %v1842 = vld [vmem:[%s14 + $0x20] sm:$0xff]
        %v1843 = vld [vmem:[%s14 + $0x28] sm:$0xff]
        %v1844 = vld [vmem:[%s14 + $0x30] sm:$0xff]
        %v1845 = vld [vmem:[%s14 + $0x38] sm:$0xff]
        %v1846 = vld [vmem:[%s14 + $0x40] sm:$0xff]
        %v1847 = vld [vmem:[%s14 + $0x48] sm:$0xff]
        %v1848 = vld [vmem:[%s14 + $0x50] sm:$0xff]
        %v1849 = vld [vmem:[%s14 + $0x58] sm:$0xff]
        %v1850 = vld [vmem:[%s14 + $0x60] sm:$0xff]
        %v1851 = vld [vmem:[%s14 + $0x68] sm:$0xff]
        %v1852 = vld [vmem:[%s14 + $0x70] sm:$0xff]
        %v1853 = vld [vmem:[%s14 + $0x78] sm:$0xff]
        %v1854 = vld [vmem:[%s14 + $0x80] sm:$0xff]
        %v1855 = vld [vmem:[%s14 + $0x88] sm:$0xff]
        %vm1856 = vcmp.gt.f32.partialorder %v1838, 0.5
        %vm1857 = vcmp.gt.f32.partialorder %v1839, 0.5
        %vm1858 = vcmp.gt.f32.partialorder %v1840, 0.5
        %vm1859 = vcmp.gt.f32.partialorder %v1841, 0.5
        %vm1860 = vcmp.gt.f32.partialorder %v1842, 0.5
        %vm1861 = vcmp.gt.f32.partialorder %v1843, 0.5
        %vm1862 = vcmp.gt.f32.partialorder %v1844, 0.5
        %vm1863 = vcmp.gt.f32.partialorder %v1845, 0.5
        %vm1864 = vcmp.gt.f32.partialorder %v1846, 0.5
        %vm1865 = vcmp.gt.f32.partialorder %v1847, 0.5
        %vm1866 = vcmp.gt.f32.partialorder %v1848, 0.5
        %vm1867 = vcmp.gt.f32.partialorder %v1849, 0.5
        %vm1868 = vcmp.gt.f32.partialorder %v1850, 0.5
        %vm1869 = vcmp.gt.f32.partialorder %v1851, 0.5
        %vm1870 = vcmp.gt.f32.partialorder %v1852, 0.5
        %vm1871 = vcmp.gt.f32.partialorder %v1853, 0.5
        %vm1872 = vcmp.gt.f32.partialorder %v1854, 0.5
        %vm1873 = vcmp.gt.f32.partialorder %v1855, 0.5
        %v1874 = vsel %vm1856, 1, 0
        %v1875 = vsel %vm1857, 1, 0
        %v1876 = vsel %vm1858, 1, 0
        %v1877 = vsel %vm1859, 1, 0
        %v1878 = vsel %vm1860, 1, 0
        %v1879 = vsel %vm1861, 1, 0
        %v1880 = vsel %vm1862, 1, 0
        %v1881 = vsel %vm1863, 1, 0
        %v1882 = vsel %vm1864, 1, 0
        %v1883 = vsel %vm1865, 1, 0
        %v1884 = vsel %vm1866, 1, 0
        %v1885 = vsel %vm1867, 1, 0
        %v1886 = vsel %vm1868, 1, 0
        %v1887 = vsel %vm1869, 1, 0
        %v1888 = vsel %vm1870, 1, 0
        %v1889 = vsel %vm1871, 1, 0
        %v1890 = vsel %vm1872, 1, 0
        %v1891 = vsel %vm1873, 1, 0
        %1892 = vset.pattern.permute.xlu0 0
        %1893 = vperm.xlu0 %1892, %v1874
        %v1894 = vpop.permute.xlu0 %1893
        %1895 = vset.pattern.permute.xlu0 0
        %1896 = vperm.xlu0 %1895, %v1875
        %v1897 = vpop.permute.xlu0 %1896
        %1898 = vset.pattern.permute.xlu0 0
        %1899 = vperm.xlu0 %1898, %v1876
        %v1900 = vpop.permute.xlu0 %1899
        %1901 = vset.pattern.permute.xlu0 0
        %1902 = vperm.xlu0 %1901, %v1877
        %v1903 = vpop.permute.xlu0 %1902
        %1904 = vset.pattern.permute.xlu0 0
        %1905 = vperm.xlu0 %1904, %v1878
        %v1906 = vpop.permute.xlu0 %1905
        %1907 = vset.pattern.permute.xlu0 0
        %1908 = vperm.xlu0 %1907, %v1879
        %v1909 = vpop.permute.xlu0 %1908
        %1910 = vset.pattern.permute.xlu0 0
        %1911 = vperm.xlu0 %1910, %v1880
        %v1912 = vpop.permute.xlu0 %1911
        %1913 = vset.pattern.permute.xlu0 0
        %1914 = vperm.xlu0 %1913, %v1881
        %v1915 = vpop.permute.xlu0 %1914
        %1916 = vset.pattern.permute.xlu0 0
        %1917 = vperm.xlu0 %1916, %v1882
        %v1918 = vpop.permute.xlu0 %1917
        %1919 = vset.pattern.permute.xlu0 0
        %1920 = vperm.xlu0 %1919, %v1883
        %v1921 = vpop.permute.xlu0 %1920
        %1922 = vset.pattern.permute.xlu0 0
        %1923 = vperm.xlu0 %1922, %v1884
        %v1924 = vpop.permute.xlu0 %1923
        %1925 = vset.pattern.permute.xlu0 0
        %1926 = vperm.xlu0 %1925, %v1885
        %v1927 = vpop.permute.xlu0 %1926
        %1928 = vset.pattern.permute.xlu0 0
        %1929 = vperm.xlu0 %1928, %v1886
        %v1930 = vpop.permute.xlu0 %1929
        %1931 = vset.pattern.permute.xlu0 0
        %1932 = vperm.xlu0 %1931, %v1887
        %v1933 = vpop.permute.xlu0 %1932
        %1934 = vset.pattern.permute.xlu0 0
        %1935 = vperm.xlu0 %1934, %v1888
        %v1936 = vpop.permute.xlu0 %1935
        %1937 = vset.pattern.permute.xlu0 0
        %1938 = vperm.xlu0 %1937, %v1889
        %v1939 = vpop.permute.xlu0 %1938
        %1940 = vset.pattern.permute.xlu0 0
        %1941 = vperm.xlu0 %1940, %v1890
        %v1942 = vpop.permute.xlu0 %1941
        %1943 = vset.pattern.permute.xlu0 0
        %1944 = vperm.xlu0 %1943, %v1891
        %v1945 = vpop.permute.xlu0 %1944
        %vm1946 = vcmp.eq.s32.totalorder %v1894, 1
        %vm1947 = vcmp.eq.s32.totalorder %v1897, 1
        %vm1948 = vcmp.eq.s32.totalorder %v1900, 1
        %vm1949 = vcmp.eq.s32.totalorder %v1903, 1
        %vm1950 = vcmp.eq.s32.totalorder %v1906, 1
        %vm1951 = vcmp.eq.s32.totalorder %v1909, 1
        %vm1952 = vcmp.eq.s32.totalorder %v1912, 1
        %vm1953 = vcmp.eq.s32.totalorder %v1915, 1
        %vm1954 = vcmp.eq.s32.totalorder %v1918, 1
        %vm1955 = vcmp.eq.s32.totalorder %v1921, 1
        %vm1956 = vcmp.eq.s32.totalorder %v1924, 1
        %vm1957 = vcmp.eq.s32.totalorder %v1927, 1
        %vm1958 = vcmp.eq.s32.totalorder %v1930, 1
        %vm1959 = vcmp.eq.s32.totalorder %v1933, 1
        %vm1960 = vcmp.eq.s32.totalorder %v1936, 1
        %vm1961 = vcmp.eq.s32.totalorder %v1939, 1
        %vm1962 = vcmp.eq.s32.totalorder %v1942, 1
        %vm1963 = vcmp.eq.s32.totalorder %v1945, 1
        %v1964 = vsel %vm1946, %v1820, 0.0
        %v1965 = vsel %vm1947, %v1821, 0.0
        %v1966 = vsel %vm1948, %v1822, 0.0
        %v1967 = vsel %vm1949, %v1823, 0.0
        %v1968 = vsel %vm1950, %v1824, 0.0
        %v1969 = vsel %vm1951, %v1825, 0.0
        %v1970 = vsel %vm1952, %v1826, 0.0
        %v1971 = vsel %vm1953, %v1827, 0.0
        %v1972 = vsel %vm1954, %v1828, 0.0
        %v1973 = vsel %vm1955, %v1829, 0.0
        %v1974 = vsel %vm1956, %v1830, 0.0
        %v1975 = vsel %vm1957, %v1831, 0.0
        %v1976 = vsel %vm1958, %v1832, 0.0
        %v1977 = vsel %vm1959, %v1833, 0.0
        %v1978 = vsel %vm1960, %v1834, 0.0
        %v1979 = vsel %vm1961, %v1835, 0.0
        %v1980 = vsel %vm1962, %v1836, 0.0
        %v1981 = vsel %vm1963, %v1837, 0.0
        %1982 = vst.msk [vmem:[#allocation3] sm:$0xff] %vm1391, 0.0
        %1983 = vst.msk [vmem:[#allocation3 + $0x8] sm:$0xff] %vm1391, 0.0
        %1984 = vst.msk [vmem:[#allocation3 + $0x10] sm:$0xff] %vm1391, 0.0
        %1985 = vst.msk [vmem:[#allocation3 + $0x18] sm:$0xff] %vm1391, %v1964
        %1986 = vst.msk [vmem:[#allocation3 + $0x20] sm:$0xff] %vm1391, %v1965
        %1987 = vst.msk [vmem:[#allocation3 + $0x28] sm:$0xff] %vm1391, %v1966
        %1988 = vst.msk [vmem:[#allocation3 + $0x30] sm:$0xff] %vm1391, %v1967
        %1989 = vst.msk [vmem:[#allocation3 + $0x38] sm:$0xff] %vm1391, %v1968
        %1990 = vst.msk [vmem:[#allocation3 + $0x40] sm:$0xff] %vm1391, %v1969
        %1991 = vst.msk [vmem:[#allocation3 + $0x48] sm:$0xff] %vm1391, %v1970
        %1992 = vst.msk [vmem:[#allocation3 + $0x50] sm:$0xff] %vm1391, %v1971
        %1993 = vst.msk [vmem:[#allocation3 + $0x58] sm:$0xff] %vm1391, %v1972
        %1994 = vst.msk [vmem:[#allocation3 + $0x60] sm:$0xff] %vm1391, %v1973
        %1995 = vst.msk [vmem:[#allocation3 + $0x68] sm:$0xff] %vm1391, %v1974
        %1996 = vst.msk [vmem:[#allocation3 + $0x70] sm:$0xff] %vm1391, %v1975
        %1997 = vst.msk [vmem:[#allocation3 + $0x78] sm:$0xff] %vm1391, %v1976
        %1998 = vst.msk [vmem:[#allocation3 + $0x80] sm:$0xff] %vm1391, %v1977
        %1999 = vst.msk [vmem:[#allocation3 + $0x88] sm:$0xff] %vm1391, %v1978
        %2000 = vst.msk [vmem:[#allocation3 + $0x90] sm:$0xff] %vm1391, %v1979
        %2001 = vst.msk [vmem:[#allocation3 + $0x98] sm:$0xff] %vm1391, %v1980
        %2002 = vst.msk [vmem:[#allocation3 + $0xa0] sm:$0xff] %vm1391, %v1981
        %2003 = vst.msk [vmem:[#allocation3 + $0xa8] sm:$0xff] %vm1391, 0.0
        %2004 = vst.msk [vmem:[#allocation3 + $0xb0] sm:$0xff] %vm1391, 0.0
        %2005 = vst.msk [vmem:[#allocation3 + $0xb8] sm:$0xff] %vm1391, 0.0
        %2006 = vst.msk [vmem:[#allocation3 + $0xc0] sm:$0xff] %vm1391, 0.0
        %2007 = vst.msk [vmem:[#allocation3 + $0xc8] sm:$0xff] %vm1391, 0.0
        %2008 = vst.msk [vmem:[#allocation3 + $0xd0] sm:$0xff] %vm1391, 0.0
        %2009 = vst.msk [vmem:[#allocation3 + $0xd8] sm:$0xff] %vm1391, 0.0
        %s2010 = scalar_lea.vmem [#allocation3], 5
        %v2011 = vld [vmem:[%s2010] ss:$2 sm:$0xff]
        %s2012 = scalar_lea.vmem [#allocation3], 21
        %v2013 = vld [vmem:[%s2012] ss:$2 sm:$0xff]
        %s2014 = scalar_lea.vmem [#allocation3], 37
        %v2015 = vld [vmem:[%s2014] ss:$2 sm:$0xff]
        %s2016 = scalar_lea.vmem [#allocation3], 53
        %v2017 = vld [vmem:[%s2016] ss:$2 sm:$0xff]
        %s2018 = scalar_lea.vmem [#allocation3], 69
        %v2019 = vld [vmem:[%s2018] ss:$2 sm:$0xff]
        %s2020 = scalar_lea.vmem [#allocation3], 85
        %v2021 = vld [vmem:[%s2020] ss:$2 sm:$0xff]
        %s2022 = scalar_lea.vmem [#allocation3], 101
        %v2023 = vld [vmem:[%s2022] ss:$2 sm:$0xff]
        %s2024 = scalar_lea.vmem [#allocation3], 117
        %v2025 = vld [vmem:[%s2024] ss:$2 sm:$0xff]
        %s2026 = scalar_lea.vmem [#allocation3], 133
        %v2027 = vld [vmem:[%s2026] ss:$2 sm:$0xff]
        %v2028 = vpack.c.bf16 %v2013, %v2011
        %v2029 = vpack.c.bf16 %v2017, %v2015
        %v2030 = vpack.c.bf16 %v2021, %v2019
        %v2031 = vpack.c.bf16 %v2025, %v2023
        %v2032 = vpack.c.bf16 %v2027, %v2027
        %v2033 = vld [vmem:[%s3] sm:$0xf]
        %v2034 = vld [vmem:[%s3 + $0x4] sm:$0xf]
        %v2035 = vld [vmem:[%s3 + $0x8] sm:$0xf]
        %v2036 = vld [vmem:[%s3 + $0xc] sm:$0xf]
        %s2037 = scalar_lea.vmem [#allocation3], 6
        %v2038 = vld [vmem:[%s2037] ss:$2 sm:$0xff]
        %s2039 = scalar_lea.vmem [#allocation3], 22
        %v2040 = vld [vmem:[%s2039] ss:$2 sm:$0xff]
        %s2041 = scalar_lea.vmem [#allocation3], 38
        %v2042 = vld [vmem:[%s2041] ss:$2 sm:$0xff]
        %s2043 = scalar_lea.vmem [#allocation3], 54
        %v2044 = vld [vmem:[%s2043] ss:$2 sm:$0xff]
        %s2045 = scalar_lea.vmem [#allocation3], 70
        %v2046 = vld [vmem:[%s2045] ss:$2 sm:$0xff]
        %s2047 = scalar_lea.vmem [#allocation3], 86
        %v2048 = vld [vmem:[%s2047] ss:$2 sm:$0xff]
        %s2049 = scalar_lea.vmem [#allocation3], 102
        %v2050 = vld [vmem:[%s2049] ss:$2 sm:$0xff]
        %s2051 = scalar_lea.vmem [#allocation3], 118
        %v2052 = vld [vmem:[%s2051] ss:$2 sm:$0xff]
        %s2053 = scalar_lea.vmem [#allocation3], 134
        %v2054 = vld [vmem:[%s2053] ss:$2 sm:$0xff]
        %v2055 = vpack.c.bf16 %v2040, %v2038
        %v2056 = vpack.c.bf16 %v2044, %v2042
        %v2057 = vpack.c.bf16 %v2048, %v2046
        %v2058 = vpack.c.bf16 %v2052, %v2050
        %v2059 = vpack.c.bf16 %v2054, %v2054
        %s2060 = scalar_lea.vmem %s3, 16
        %v2061 = vld [vmem:[%s2060] sm:$0xf]
        %v2062 = vld [vmem:[%s2060 + $0x4] sm:$0xf]
        %v2063 = vld [vmem:[%s2060 + $0x8] sm:$0xf]
        %v2064 = vld [vmem:[%s2060 + $0xc] sm:$0xf]
        %s2065 = scalar_lea.vmem [#allocation3], 7
        %v2066 = vld [vmem:[%s2065] ss:$2 sm:$0xff]
        %s2067 = scalar_lea.vmem [#allocation3], 23
        %v2068 = vld [vmem:[%s2067] ss:$2 sm:$0xff]
        %s2069 = scalar_lea.vmem [#allocation3], 39
        %v2070 = vld [vmem:[%s2069] ss:$2 sm:$0xff]
        %s2071 = scalar_lea.vmem [#allocation3], 55
        %v2072 = vld [vmem:[%s2071] ss:$2 sm:$0xff]
        %s2073 = scalar_lea.vmem [#allocation3], 71
        %v2074 = vld [vmem:[%s2073] ss:$2 sm:$0xff]
        %s2075 = scalar_lea.vmem [#allocation3], 87
        %v2076 = vld [vmem:[%s2075] ss:$2 sm:$0xff]
        %s2077 = scalar_lea.vmem [#allocation3], 103
        %v2078 = vld [vmem:[%s2077] ss:$2 sm:$0xff]
        %s2079 = scalar_lea.vmem [#allocation3], 119
        %v2080 = vld [vmem:[%s2079] ss:$2 sm:$0xff]
        %s2081 = scalar_lea.vmem [#allocation3], 135
        %v2082 = vld [vmem:[%s2081] ss:$2 sm:$0xff]
        %v2083 = vpack.c.bf16 %v2068, %v2066
        %v2084 = vpack.c.bf16 %v2072, %v2070
        %v2085 = vpack.c.bf16 %v2076, %v2074
        %v2086 = vpack.c.bf16 %v2080, %v2078
        %v2087 = vpack.c.bf16 %v2082, %v2082
        %s2088 = scalar_lea.vmem %s3, 32
        %v2089 = vld [vmem:[%s2088] sm:$0xf]
        %v2090 = vld [vmem:[%s2088 + $0x4] sm:$0xf]
        %v2091 = vld [vmem:[%s2088 + $0x8] sm:$0xf]
        %v2092 = vld [vmem:[%s2088 + $0xc] sm:$0xf]
        %v2097 = vunpack.c.l.b16 %v2089
        %v2098 = vunpack.c.l.b16 %v2090
        %v2099 = vunpack.c.l.b16 %v2091
        %v2100 = vunpack.c.l.b16 %v2092
        %v2101 = vpack.c.b16 %v2098, %v2097
        %v2102 = vpack.c.b16 %v2100, %v2099
        %v2106 = vsel %vm1391, %v2083, 0
        %v2109 = vsel %vm1391, %v2084, 0
        %v2112 = vsel %vm1391, %v2085, 0
        %v2115 = vsel %vm1391, %v2086, 0
        %v2118 = vsel %vm1391, %v2087, 0
        %2120 = vmatprep.subr.bf16.mxu0 0
        %2121 = vmatpush1.bf16.msra.mxu0 %v2101
        %2122 = vmatprep.subr.bf16.mxu0 0
        %2123 = vmatpush1.bf16.msra.mxu0 %v2102
        %2124 = vmatprep.subr.bf16.mxu0 0
        %2125 = vmatpush1.bf16.msra.mxu0 0
        %2126 = vmatprep.subr.bf16.mxu0 0
        %2127 = vmatpush1.bf16.msra.mxu0 0
        %2128 = vmatprep.subr.bf16.mxu0 0
        %2129 = vmatpush1.bf16.msra.mxu0 0
        %2130 = vmatprep.subr.bf16.mxu0 0
        %2131 = vmatpush1.bf16.msra.mxu0 0
        %2132 = vmatprep.subr.bf16.mxu0 0
        %2133 = vmatpush1.bf16.msra.mxu0 0
        %2134 = vmatprep.subr.bf16.mxu0 0
        %2135 = vmatpush1.bf16.msra.mxu0 0
        %2136 = vmatprep.subr.bf16.mxu0 0
        %2137 = vmatpush1.bf16.msra.mxu0 0
        %2138 = vmatprep.subr.bf16.mxu0 0
        %2139 = vmatpush1.bf16.msra.mxu0 0
        %2140 = vmatprep.subr.bf16.mxu0 0
        %2141 = vmatpush1.bf16.msra.mxu0 0
        %2142 = vmatprep.subr.bf16.mxu0 0
        %2143 = vmatpush1.bf16.msra.mxu0 0
        %2144 = vmatprep.subr.bf16.mxu0 0
        %2145 = vmatpush1.bf16.msra.mxu0 0
        %2146 = vmatprep.subr.bf16.mxu0 0
        %2147 = vmatpush1.bf16.msra.mxu0 0
        %2148 = vmatprep.subr.bf16.mxu0 0
        %2149 = vmatpush1.bf16.msra.mxu0 0
        %2150 = vmatprep.subr.bf16.mxu0 0
        %2151 = vmatpush1.bf16.msra.mxu0 0
        %2152 = vmatprep.mubr.bf16.mxu0 0
        %2153 = vmatmul.mubr.bf16.gmra.mrb[0].mxu0 %v2106
        %v2154 = vpop.f32.mrb[0].mxu0
        %v2155 = vadd.f32 0.0, %v2154
        %v2156 = vpop.f32.mrb[0].mxu0
        %v2157 = vpop.f32.mrb[0].mxu0
        %v2158 = vadd.f32 0.0, %v2157
        %v2159 = vpop.f32.mrb[0].mxu0
        %2160 = vmatprep.mubr.bf16.mxu0 0
        %2161 = vmatmul.mubr.bf16.gmra.mrb[0].mxu0 %v2109
        %v2162 = vpop.f32.mrb[0].mxu0
        %v2163 = vadd.f32 0.0, %v2162
        %v2164 = vpop.f32.mrb[0].mxu0
        %v2165 = vpop.f32.mrb[0].mxu0
        %v2166 = vadd.f32 0.0, %v2165
        %v2167 = vpop.f32.mrb[0].mxu0
        %2168 = vmatprep.mubr.bf16.mxu0 0
        %2169 = vmatmul.mubr.bf16.gmra.mrb[0].mxu0 %v2112
        %v2170 = vpop.f32.mrb[0].mxu0
        %v2171 = vadd.f32 0.0, %v2170
        %v2172 = vpop.f32.mrb[0].mxu0
        %v2173 = vpop.f32.mrb[0].mxu0
        %v2174 = vadd.f32 0.0, %v2173
        %v2175 = vpop.f32.mrb[0].mxu0
        %2176 = vmatprep.mubr.bf16.mxu0 0
        %2177 = vmatmul.mubr.bf16.gmra.mrb[0].mxu0 %v2115
        %v2178 = vpop.f32.mrb[0].mxu0
        %v2179 = vadd.f32 0.0, %v2178
        %v2180 = vpop.f32.mrb[0].mxu0
        %v2181 = vpop.f32.mrb[0].mxu0
        %v2182 = vadd.f32 0.0, %v2181
        %v2183 = vpop.f32.mrb[0].mxu0
        %2184 = vmatprep.mubr.bf16.mxu0 0
        %2185 = vmatmul.mubr.bf16.gmra.mrb[0].mxu0 %v2118
        %v2186 = vpop.f32.mrb[0].mxu0
        %v2187 = vadd.f32 0.0, %v2186
        %v2188 = vpop.f32.mrb[0].mxu0
        %v2189 = vpop.f32.mrb[0].mxu0
        %v2190 = vpop.f32.mrb[0].mxu0
        %2191 = vdwg.mxu0
        %v2196 = vunpack.c.l.b16 %v2033
        %v2197 = vunpack.c.l.b16 %v2034
        %v2198 = vunpack.c.l.b16 %v2035
        %v2199 = vunpack.c.l.b16 %v2036
        %v2200 = vpack.c.b16 %v2197, %v2196
        %v2201 = vpack.c.b16 %v2199, %v2198
        %v2205 = vsel %vm1391, %v2028, 0
        %v2208 = vsel %vm1391, %v2029, 0
        %v2211 = vsel %vm1391, %v2030, 0
        %v2214 = vsel %vm1391, %v2031, 0
        %v2217 = vsel %vm1391, %v2032, 0
        %2219 = vmatprep.subr.bf16.mxu0 0
        %2220 = vmatpush1.bf16.msra.mxu0 %v2200
        %2221 = vmatprep.subr.bf16.mxu0 0
        %2222 = vmatpush1.bf16.msra.mxu0 %v2201
        %2223 = vmatprep.subr.bf16.mxu0 0
        %2224 = vmatpush1.bf16.msra.mxu0 0
        %2225 = vmatprep.subr.bf16.mxu0 0
        %2226 = vmatpush1.bf16.msra.mxu0 0
        %2227 = vmatprep.subr.bf16.mxu0 0
        %2228 = vmatpush1.bf16.msra.mxu0 0
        %2229 = vmatprep.subr.bf16.mxu0 0
        %2230 = vmatpush1.bf16.msra.mxu0 0
        %2231 = vmatprep.subr.bf16.mxu0 0
        %2232 = vmatpush1.bf16.msra.mxu0 0
        %2233 = vmatprep.subr.bf16.mxu0 0
        %2234 = vmatpush1.bf16.msra.mxu0 0
        %2235 = vmatprep.subr.bf16.mxu0 0
        %2236 = vmatpush1.bf16.msra.mxu0 0
        %2237 = vmatprep.subr.bf16.mxu0 0
        %2238 = vmatpush1.bf16.msra.mxu0 0
        %2239 = vmatprep.subr.bf16.mxu0 0
        %2240 = vmatpush1.bf16.msra.mxu0 0
        %2241 = vmatprep.subr.bf16.mxu0 0
        %2242 = vmatpush1.bf16.msra.mxu0 0
        %2243 = vmatprep.subr.bf16.mxu0 0
        %2244 = vmatpush1.bf16.msra.mxu0 0
        %2245 = vmatprep.subr.bf16.mxu0 0
        %2246 = vmatpush1.bf16.msra.mxu0 0
        %2247 = vmatprep.subr.bf16.mxu0 0
        %2248 = vmatpush1.bf16.msra.mxu0 0
        %2249 = vmatprep.subr.bf16.mxu0 0
        %2250 = vmatpush1.bf16.msra.mxu0 0
        %2251 = vmatprep.mubr.bf16.mxu0 0
        %2252 = vmatmul.mubr.bf16.gmra.mrb[0].mxu0 %v2205
        %v2253 = vpop.f32.mrb[0].mxu0
        %v2254 = vadd.f32 %v2155, %v2253
        %v2255 = vpop.f32.mrb[0].mxu0
        %v2256 = vpop.f32.mrb[0].mxu0
        %v2257 = vadd.f32 %v2158, %v2256
        %v2258 = vpop.f32.mrb[0].mxu0
        %2259 = vmatprep.mubr.bf16.mxu0 0
        %2260 = vmatmul.mubr.bf16.gmra.mrb[0].mxu0 %v2208
        %v2261 = vpop.f32.mrb[0].mxu0
        %v2262 = vadd.f32 %v2163, %v2261
        %v2263 = vpop.f32.mrb[0].mxu0
        %v2264 = vpop.f32.mrb[0].mxu0
        %v2265 = vadd.f32 %v2166, %v2264
        %v2266 = vpop.f32.mrb[0].mxu0
        %2267 = vmatprep.mubr.bf16.mxu0 0
        %2268 = vmatmul.mubr.bf16.gmra.mrb[0].mxu0 %v2211
        %v2269 = vpop.f32.mrb[0].mxu0
        %v2270 = vadd.f32 %v2171, %v2269
        %v2271 = vpop.f32.mrb[0].mxu0
        %v2272 = vpop.f32.mrb[0].mxu0
        %v2273 = vadd.f32 %v2174, %v2272
        %v2274 = vpop.f32.mrb[0].mxu0
        %2275 = vmatprep.mubr.bf16.mxu0 0
        %2276 = vmatmul.mubr.bf16.gmra.mrb[0].mxu0 %v2214
        %v2277 = vpop.f32.mrb[0].mxu0
        %v2278 = vadd.f32 %v2179, %v2277
        %v2279 = vpop.f32.mrb[0].mxu0
        %v2280 = vpop.f32.mrb[0].mxu0
        %v2281 = vadd.f32 %v2182, %v2280
        %v2282 = vpop.f32.mrb[0].mxu0
        %2283 = vmatprep.mubr.bf16.mxu0 0
        %2284 = vmatmul.mubr.bf16.gmra.mrb[0].mxu0 %v2217
        %v2285 = vpop.f32.mrb[0].mxu0
        %v2286 = vadd.f32 %v2187, %v2285
        %v2287 = vpop.f32.mrb[0].mxu0
        %v2288 = vpop.f32.mrb[0].mxu0
        %v2289 = vpop.f32.mrb[0].mxu0
        %2290 = vdwg.mxu0
        %v2291 = vld [vmem:[%s2067] ss:$2 sm:$0xff]
        %v2292 = vld [vmem:[%s2069] ss:$2 sm:$0xff]
        %v2293 = vld [vmem:[%s2071] ss:$2 sm:$0xff]
        %v2294 = vld [vmem:[%s2073] ss:$2 sm:$0xff]
        %v2295 = vld [vmem:[%s2075] ss:$2 sm:$0xff]
        %v2296 = vld [vmem:[%s2077] ss:$2 sm:$0xff]
        %v2297 = vld [vmem:[%s2079] ss:$2 sm:$0xff]
        %v2298 = vld [vmem:[%s2081] ss:$2 sm:$0xff]
        %s2299 = scalar_lea.vmem [#allocation3], 151
        %v2300 = vld [vmem:[%s2299] ss:$2 sm:$0xff]
        %v2301 = vpack.c.bf16 %v2292, %v2291
        %v2302 = vpack.c.bf16 %v2294, %v2293
        %v2303 = vpack.c.bf16 %v2296, %v2295
        %v2304 = vpack.c.bf16 %v2298, %v2297
        %v2305 = vpack.c.bf16 %v2300, %v2300
        %s2306 = scalar_lea.vmem %s3, 48
        %v2307 = vld [vmem:[%s2306] sm:$0xf]
        %v2308 = vld [vmem:[%s2306 + $0x4] sm:$0xf]
        %v2309 = vld [vmem:[%s2306 + $0x8] sm:$0xf]
        %v2310 = vld [vmem:[%s2306 + $0xc] sm:$0xf]
        %v2315 = vunpack.c.l.b16 %v2307
        %v2316 = vunpack.c.l.b16 %v2308
        %v2317 = vunpack.c.l.b16 %v2309
        %v2318 = vunpack.c.l.b16 %v2310
        %v2319 = vpack.c.b16 %v2316, %v2315
        %v2320 = vpack.c.b16 %v2318, %v2317
        %v2324 = vsel %vm1391, %v2301, 0
        %v2327 = vsel %vm1391, %v2302, 0
        %v2330 = vsel %vm1391, %v2303, 0
        %v2333 = vsel %vm1391, %v2304, 0
        %v2336 = vsel %vm1391, %v2305, 0
        %2338 = vmatprep.subr.bf16.mxu0 0
        %2339 = vmatpush1.bf16.msra.mxu0 %v2319
        %2340 = vmatprep.subr.bf16.mxu0 0
        %2341 = vmatpush1.bf16.msra.mxu0 %v2320
        %2342 = vmatprep.subr.bf16.mxu0 0
        %2343 = vmatpush1.bf16.msra.mxu0 0
        %2344 = vmatprep.subr.bf16.mxu0 0
        %2345 = vmatpush1.bf16.msra.mxu0 0
        %2346 = vmatprep.subr.bf16.mxu0 0
        %2347 = vmatpush1.bf16.msra.mxu0 0
        %2348 = vmatprep.subr.bf16.mxu0 0
        %2349 = vmatpush1.bf16.msra.mxu0 0
        %2350 = vmatprep.subr.bf16.mxu0 0
        %2351 = vmatpush1.bf16.msra.mxu0 0
        %2352 = vmatprep.subr.bf16.mxu0 0
        %2353 = vmatpush1.bf16.msra.mxu0 0
        %2354 = vmatprep.subr.bf16.mxu0 0
        %2355 = vmatpush1.bf16.msra.mxu0 0
        %2356 = vmatprep.subr.bf16.mxu0 0
        %2357 = vmatpush1.bf16.msra.mxu0 0
        %2358 = vmatprep.subr.bf16.mxu0 0
        %2359 = vmatpush1.bf16.msra.mxu0 0
        %2360 = vmatprep.subr.bf16.mxu0 0
        %2361 = vmatpush1.bf16.msra.mxu0 0
        %2362 = vmatprep.subr.bf16.mxu0 0
        %2363 = vmatpush1.bf16.msra.mxu0 0
        %2364 = vmatprep.subr.bf16.mxu0 0
        %2365 = vmatpush1.bf16.msra.mxu0 0
        %2366 = vmatprep.subr.bf16.mxu0 0
        %2367 = vmatpush1.bf16.msra.mxu0 0
        %2368 = vmatprep.subr.bf16.mxu0 0
        %2369 = vmatpush1.bf16.msra.mxu0 0
        %2370 = vmatprep.mubr.bf16.mxu0 0
        %2371 = vmatmul.mubr.bf16.gmra.mrb[0].mxu0 %v2324
        %v2372 = vpop.f32.mrb[0].mxu0
        %v2373 = vadd.f32 0.0, %v2372
        %v2374 = vpop.f32.mrb[0].mxu0
        %v2375 = vpop.f32.mrb[0].mxu0
        %v2376 = vadd.f32 0.0, %v2375
        %v2377 = vpop.f32.mrb[0].mxu0
        %2378 = vmatprep.mubr.bf16.mxu0 0
        %2379 = vmatmul.mubr.bf16.gmra.mrb[0].mxu0 %v2327
        %v2380 = vpop.f32.mrb[0].mxu0
        %v2381 = vadd.f32 0.0, %v2380
        %v2382 = vpop.f32.mrb[0].mxu0
        %v2383 = vpop.f32.mrb[0].mxu0
        %v2384 = vadd.f32 0.0, %v2383
        %v2385 = vpop.f32.mrb[0].mxu0
        %2386 = vmatprep.mubr.bf16.mxu0 0
        %2387 = vmatmul.mubr.bf16.gmra.mrb[0].mxu0 %v2330
        %v2388 = vpop.f32.mrb[0].mxu0
        %v2389 = vadd.f32 0.0, %v2388
        %v2390 = vpop.f32.mrb[0].mxu0
        %v2391 = vpop.f32.mrb[0].mxu0
        %v2392 = vadd.f32 0.0, %v2391
        %v2393 = vpop.f32.mrb[0].mxu0
        %2394 = vmatprep.mubr.bf16.mxu0 0
        %2395 = vmatmul.mubr.bf16.gmra.mrb[0].mxu0 %v2333
        %v2396 = vpop.f32.mrb[0].mxu0
        %v2397 = vadd.f32 0.0, %v2396
        %v2398 = vpop.f32.mrb[0].mxu0
        %v2399 = vpop.f32.mrb[0].mxu0
        %v2400 = vadd.f32 0.0, %v2399
        %v2401 = vpop.f32.mrb[0].mxu0
        %2402 = vmatprep.mubr.bf16.mxu0 0
        %2403 = vmatmul.mubr.bf16.gmra.mrb[0].mxu0 %v2336
        %v2404 = vpop.f32.mrb[0].mxu0
        %v2405 = vadd.f32 0.0, %v2404
        %v2406 = vpop.f32.mrb[0].mxu0
        %v2407 = vpop.f32.mrb[0].mxu0
        %v2408 = vpop.f32.mrb[0].mxu0
        %2409 = vdwg.mxu0
        %v2414 = vunpack.c.l.b16 %v2061
        %v2415 = vunpack.c.l.b16 %v2062
        %v2416 = vunpack.c.l.b16 %v2063
        %v2417 = vunpack.c.l.b16 %v2064
        %v2418 = vpack.c.b16 %v2415, %v2414
        %v2419 = vpack.c.b16 %v2417, %v2416
        %v2423 = vsel %vm1391, %v2055, 0
        %v2426 = vsel %vm1391, %v2056, 0
        %v2429 = vsel %vm1391, %v2057, 0
        %v2432 = vsel %vm1391, %v2058, 0
        %v2435 = vsel %vm1391, %v2059, 0
        %2437 = vmatprep.subr.bf16.mxu0 0
        %2438 = vmatpush1.bf16.msra.mxu0 %v2418
        %2439 = vmatprep.subr.bf16.mxu0 0
        %2440 = vmatpush1.bf16.msra.mxu0 %v2419
        %2441 = vmatprep.subr.bf16.mxu0 0
        %2442 = vmatpush1.bf16.msra.mxu0 0
        %2443 = vmatprep.subr.bf16.mxu0 0
        %2444 = vmatpush1.bf16.msra.mxu0 0
        %2445 = vmatprep.subr.bf16.mxu0 0
        %2446 = vmatpush1.bf16.msra.mxu0 0
        %2447 = vmatprep.subr.bf16.mxu0 0
        %2448 = vmatpush1.bf16.msra.mxu0 0
        %2449 = vmatprep.subr.bf16.mxu0 0
        %2450 = vmatpush1.bf16.msra.mxu0 0
        %2451 = vmatprep.subr.bf16.mxu0 0
        %2452 = vmatpush1.bf16.msra.mxu0 0
        %2453 = vmatprep.subr.bf16.mxu0 0
        %2454 = vmatpush1.bf16.msra.mxu0 0
        %2455 = vmatprep.subr.bf16.mxu0 0
        %2456 = vmatpush1.bf16.msra.mxu0 0
        %2457 = vmatprep.subr.bf16.mxu0 0
        %2458 = vmatpush1.bf16.msra.mxu0 0
        %2459 = vmatprep.subr.bf16.mxu0 0
        %2460 = vmatpush1.bf16.msra.mxu0 0
        %2461 = vmatprep.subr.bf16.mxu0 0
        %2462 = vmatpush1.bf16.msra.mxu0 0
        %2463 = vmatprep.subr.bf16.mxu0 0
        %2464 = vmatpush1.bf16.msra.mxu0 0
        %2465 = vmatprep.subr.bf16.mxu0 0
        %2466 = vmatpush1.bf16.msra.mxu0 0
        %2467 = vmatprep.subr.bf16.mxu0 0
        %2468 = vmatpush1.bf16.msra.mxu0 0
        %2469 = vmatprep.mubr.bf16.mxu0 0
        %2470 = vmatmul.mubr.bf16.gmra.mrb[0].mxu0 %v2423
        %v2471 = vpop.f32.mrb[0].mxu0
        %v2472 = vadd.f32 %v2373, %v2471
        %v2473 = vpop.f32.mrb[0].mxu0
        %v2474 = vpop.f32.mrb[0].mxu0
        %v2475 = vadd.f32 %v2376, %v2474
        %v2476 = vpop.f32.mrb[0].mxu0
        %2477 = vmatprep.mubr.bf16.mxu0 0
        %2478 = vmatmul.mubr.bf16.gmra.mrb[0].mxu0 %v2426
        %v2479 = vpop.f32.mrb[0].mxu0
        %v2480 = vadd.f32 %v2381, %v2479
        %v2481 = vpop.f32.mrb[0].mxu0
        %v2482 = vpop.f32.mrb[0].mxu0
        %v2483 = vadd.f32 %v2384, %v2482
        %v2484 = vpop.f32.mrb[0].mxu0
        %2485 = vmatprep.mubr.bf16.mxu0 0
        %2486 = vmatmul.mubr.bf16.gmra.mrb[0].mxu0 %v2429
        %v2487 = vpop.f32.mrb[0].mxu0
        %v2488 = vadd.f32 %v2389, %v2487
        %v2489 = vpop.f32.mrb[0].mxu0
        %v2490 = vpop.f32.mrb[0].mxu0
        %v2491 = vadd.f32 %v2392, %v2490
        %v2492 = vpop.f32.mrb[0].mxu0
        %2493 = vmatprep.mubr.bf16.mxu0 0
        %2494 = vmatmul.mubr.bf16.gmra.mrb[0].mxu0 %v2432
        %v2495 = vpop.f32.mrb[0].mxu0
        %v2496 = vadd.f32 %v2397, %v2495
        %v2497 = vpop.f32.mrb[0].mxu0
        %v2498 = vpop.f32.mrb[0].mxu0
        %v2499 = vadd.f32 %v2400, %v2498
        %v2500 = vpop.f32.mrb[0].mxu0
        %2501 = vmatprep.mubr.bf16.mxu0 0
        %2502 = vmatmul.mubr.bf16.gmra.mrb[0].mxu0 %v2435
        %v2503 = vpop.f32.mrb[0].mxu0
        %v2504 = vadd.f32 %v2405, %v2503
        %v2505 = vpop.f32.mrb[0].mxu0
        %v2506 = vpop.f32.mrb[0].mxu0
        %v2507 = vpop.f32.mrb[0].mxu0
        %2508 = vdwg.mxu0
        %s2509 = scalar_lea.vmem [#allocation3], 24
        %v2510 = vld [vmem:[%s2509] ss:$2 sm:$0xff]
        %s2511 = scalar_lea.vmem [#allocation3], 40
        %v2512 = vld [vmem:[%s2511] ss:$2 sm:$0xff]
        %s2513 = scalar_lea.vmem [#allocation3], 56
        %v2514 = vld [vmem:[%s2513] ss:$2 sm:$0xff]
        %s2515 = scalar_lea.vmem [#allocation3], 72
        %v2516 = vld [vmem:[%s2515] ss:$2 sm:$0xff]
        %s2517 = scalar_lea.vmem [#allocation3], 88
        %v2518 = vld [vmem:[%s2517] ss:$2 sm:$0xff]
        %s2519 = scalar_lea.vmem [#allocation3], 104
        %v2520 = vld [vmem:[%s2519] ss:$2 sm:$0xff]
        %s2521 = scalar_lea.vmem [#allocation3], 120
        %v2522 = vld [vmem:[%s2521] ss:$2 sm:$0xff]
        %s2523 = scalar_lea.vmem [#allocation3], 136
        %v2524 = vld [vmem:[%s2523] ss:$2 sm:$0xff]
        %s2525 = scalar_lea.vmem [#allocation3], 152
        %v2526 = vld [vmem:[%s2525] ss:$2 sm:$0xff]
        %v2527 = vpack.c.bf16 %v2512, %v2510
        %v2528 = vpack.c.bf16 %v2516, %v2514
        %v2529 = vpack.c.bf16 %v2520, %v2518
        %v2530 = vpack.c.bf16 %v2524, %v2522
        %v2531 = vpack.c.bf16 %v2526, %v2526
        %s2532 = scalar_lea.vmem %s3, 64
        %v2533 = vld [vmem:[%s2532] sm:$0xf]
        %v2534 = vld [vmem:[%s2532 + $0x4] sm:$0xf]
        %v2535 = vld [vmem:[%s2532 + $0x8] sm:$0xf]
        %v2536 = vld [vmem:[%s2532 + $0xc] sm:$0xf]
        %v2541 = vunpack.c.l.b16 %v2533
        %v2542 = vunpack.c.l.b16 %v2534
        %v2543 = vunpack.c.l.b16 %v2535
        %v2544 = vunpack.c.l.b16 %v2536
        %v2545 = vpack.c.b16 %v2542, %v2541
        %v2546 = vpack.c.b16 %v2544, %v2543
        %v2550 = vsel %vm1391, %v2527, 0
        %v2553 = vsel %vm1391, %v2528, 0
        %v2556 = vsel %vm1391, %v2529, 0
        %v2559 = vsel %vm1391, %v2530, 0
        %v2562 = vsel %vm1391, %v2531, 0
        %2564 = vmatprep.subr.bf16.mxu0 0
        %2565 = vmatpush1.bf16.msra.mxu0 %v2545
        %2566 = vmatprep.subr.bf16.mxu0 0
        %2567 = vmatpush1.bf16.msra.mxu0 %v2546
        %2568 = vmatprep.subr.bf16.mxu0 0
        %2569 = vmatpush1.bf16.msra.mxu0 0
        %2570 = vmatprep.subr.bf16.mxu0 0
        %2571 = vmatpush1.bf16.msra.mxu0 0
        %2572 = vmatprep.subr.bf16.mxu0 0
        %2573 = vmatpush1.bf16.msra.mxu0 0
        %2574 = vmatprep.subr.bf16.mxu0 0
        %2575 = vmatpush1.bf16.msra.mxu0 0
        %2576 = vmatprep.subr.bf16.mxu0 0
        %2577 = vmatpush1.bf16.msra.mxu0 0
        %2578 = vmatprep.subr.bf16.mxu0 0
        %2579 = vmatpush1.bf16.msra.mxu0 0
        %2580 = vmatprep.subr.bf16.mxu0 0
        %2581 = vmatpush1.bf16.msra.mxu0 0
        %2582 = vmatprep.subr.bf16.mxu0 0
        %2583 = vmatpush1.bf16.msra.mxu0 0
        %2584 = vmatprep.subr.bf16.mxu0 0
        %2585 = vmatpush1.bf16.msra.mxu0 0
        %2586 = vmatprep.subr.bf16.mxu0 0
        %2587 = vmatpush1.bf16.msra.mxu0 0
        %2588 = vmatprep.subr.bf16.mxu0 0
        %2589 = vmatpush1.bf16.msra.mxu0 0
        %2590 = vmatprep.subr.bf16.mxu0 0
        %2591 = vmatpush1.bf16.msra.mxu0 0
        %2592 = vmatprep.subr.bf16.mxu0 0
        %2593 = vmatpush1.bf16.msra.mxu0 0
        %2594 = vmatprep.subr.bf16.mxu0 0
        %2595 = vmatpush1.bf16.msra.mxu0 0
        %2596 = vmatprep.mubr.bf16.mxu0 0
        %2597 = vmatmul.mubr.bf16.gmra.mrb[0].mxu0 %v2550
        %v2598 = vpop.f32.mrb[0].mxu0
        %v2599 = vadd.f32 0.0, %v2598
        %v2600 = vpop.f32.mrb[0].mxu0
        %v2601 = vpop.f32.mrb[0].mxu0
        %v2602 = vadd.f32 0.0, %v2601
        %v2603 = vpop.f32.mrb[0].mxu0
        %2604 = vmatprep.mubr.bf16.mxu0 0
        %2605 = vmatmul.mubr.bf16.gmra.mrb[0].mxu0 %v2553
        %v2606 = vpop.f32.mrb[0].mxu0
        %v2607 = vadd.f32 0.0, %v2606
        %v2608 = vpop.f32.mrb[0].mxu0
        %v2609 = vpop.f32.mrb[0].mxu0
        %v2610 = vadd.f32 0.0, %v2609
        %v2611 = vpop.f32.mrb[0].mxu0
        %2612 = vmatprep.mubr.bf16.mxu0 0
        %2613 = vmatmul.mubr.bf16.gmra.mrb[0].mxu0 %v2556
        %v2614 = vpop.f32.mrb[0].mxu0
        %v2615 = vadd.f32 0.0, %v2614
        %v2616 = vpop.f32.mrb[0].mxu0
        %v2617 = vpop.f32.mrb[0].mxu0
        %v2618 = vadd.f32 0.0, %v2617
        %v2619 = vpop.f32.mrb[0].mxu0
        %2620 = vmatprep.mubr.bf16.mxu0 0
        %2621 = vmatmul.mubr.bf16.gmra.mrb[0].mxu0 %v2559
        %v2622 = vpop.f32.mrb[0].mxu0
        %v2623 = vadd.f32 0.0, %v2622
        %v2624 = vpop.f32.mrb[0].mxu0
        %v2625 = vpop.f32.mrb[0].mxu0
        %v2626 = vadd.f32 0.0, %v2625
        %v2627 = vpop.f32.mrb[0].mxu0
        %2628 = vmatprep.mubr.bf16.mxu0 0
        %2629 = vmatmul.mubr.bf16.gmra.mrb[0].mxu0 %v2562
        %v2630 = vpop.f32.mrb[0].mxu0
        %v2631 = vadd.f32 0.0, %v2630
        %v2632 = vpop.f32.mrb[0].mxu0
        %v2633 = vpop.f32.mrb[0].mxu0
        %v2634 = vpop.f32.mrb[0].mxu0
        %2635 = vdwg.mxu0
        %v2636 = vadd.f32 %v2254, %v2599
        %v2637 = vadd.f32 %v2257, %v2602
        %v2638 = vadd.f32 %v2262, %v2607
        %v2639 = vadd.f32 %v2265, %v2610
        %v2640 = vadd.f32 %v2270, %v2615
        %v2641 = vadd.f32 %v2273, %v2618
        %v2642 = vadd.f32 %v2278, %v2623
        %v2643 = vadd.f32 %v2281, %v2626
        %v2644 = vadd.f32 %v2286, %v2631
        %s2645 = scalar_lea.vmem [#allocation3], 25
        %v2646 = vld [vmem:[%s2645] ss:$2 sm:$0xff]
        %s2647 = scalar_lea.vmem [#allocation3], 41
        %v2648 = vld [vmem:[%s2647] ss:$2 sm:$0xff]
        %s2649 = scalar_lea.vmem [#allocation3], 57
        %v2650 = vld [vmem:[%s2649] ss:$2 sm:$0xff]
        %s2651 = scalar_lea.vmem [#allocation3], 73
        %v2652 = vld [vmem:[%s2651] ss:$2 sm:$0xff]
        %s2653 = scalar_lea.vmem [#allocation3], 89
        %v2654 = vld [vmem:[%s2653] ss:$2 sm:$0xff]
        %s2655 = scalar_lea.vmem [#allocation3], 105
        %v2656 = vld [vmem:[%s2655] ss:$2 sm:$0xff]
        %s2657 = scalar_lea.vmem [#allocation3], 121
        %v2658 = vld [vmem:[%s2657] ss:$2 sm:$0xff]
        %s2659 = scalar_lea.vmem [#allocation3], 137
        %v2660 = vld [vmem:[%s2659] ss:$2 sm:$0xff]
        %s2661 = scalar_lea.vmem [#allocation3], 153
        %v2662 = vld [vmem:[%s2661] ss:$2 sm:$0xff]
        %v2663 = vpack.c.bf16 %v2648, %v2646
        %v2664 = vpack.c.bf16 %v2652, %v2650
        %v2665 = vpack.c.bf16 %v2656, %v2654
        %v2666 = vpack.c.bf16 %v2660, %v2658
        %v2667 = vpack.c.bf16 %v2662, %v2662
        %s2668 = scalar_lea.vmem %s3, 80
        %v2669 = vld [vmem:[%s2668] sm:$0xf]
        %v2670 = vld [vmem:[%s2668 + $0x4] sm:$0xf]
        %v2671 = vld [vmem:[%s2668 + $0x8] sm:$0xf]
        %v2672 = vld [vmem:[%s2668 + $0xc] sm:$0xf]
        %v2677 = vunpack.c.l.b16 %v2669
        %v2678 = vunpack.c.l.b16 %v2670
        %v2679 = vunpack.c.l.b16 %v2671
        %v2680 = vunpack.c.l.b16 %v2672
        %v2681 = vpack.c.b16 %v2678, %v2677
        %v2682 = vpack.c.b16 %v2680, %v2679
        %v2686 = vsel %vm1391, %v2663, 0
        %v2689 = vsel %vm1391, %v2664, 0
        %v2692 = vsel %vm1391, %v2665, 0
        %v2695 = vsel %vm1391, %v2666, 0
        %v2698 = vsel %vm1391, %v2667, 0
        %2700 = vmatprep.subr.bf16.mxu0 0
        %2701 = vmatpush1.bf16.msra.mxu0 %v2681
        %2702 = vmatprep.subr.bf16.mxu0 0
        %2703 = vmatpush1.bf16.msra.mxu0 %v2682
        %2704 = vmatprep.subr.bf16.mxu0 0
        %2705 = vmatpush1.bf16.msra.mxu0 0
        %2706 = vmatprep.subr.bf16.mxu0 0
        %2707 = vmatpush1.bf16.msra.mxu0 0
        %2708 = vmatprep.subr.bf16.mxu0 0
        %2709 = vmatpush1.bf16.msra.mxu0 0
        %2710 = vmatprep.subr.bf16.mxu0 0
        %2711 = vmatpush1.bf16.msra.mxu0 0
        %2712 = vmatprep.subr.bf16.mxu0 0
        %2713 = vmatpush1.bf16.msra.mxu0 0
        %2714 = vmatprep.subr.bf16.mxu0 0
        %2715 = vmatpush1.bf16.msra.mxu0 0
        %2716 = vmatprep.subr.bf16.mxu0 0
        %2717 = vmatpush1.bf16.msra.mxu0 0
        %2718 = vmatprep.subr.bf16.mxu0 0
        %2719 = vmatpush1.bf16.msra.mxu0 0
        %2720 = vmatprep.subr.bf16.mxu0 0
        %2721 = vmatpush1.bf16.msra.mxu0 0
        %2722 = vmatprep.subr.bf16.mxu0 0
        %2723 = vmatpush1.bf16.msra.mxu0 0
        %2724 = vmatprep.subr.bf16.mxu0 0
        %2725 = vmatpush1.bf16.msra.mxu0 0
        %2726 = vmatprep.subr.bf16.mxu0 0
        %2727 = vmatpush1.bf16.msra.mxu0 0
        %2728 = vmatprep.subr.bf16.mxu0 0
        %2729 = vmatpush1.bf16.msra.mxu0 0
        %2730 = vmatprep.subr.bf16.mxu0 0
        %2731 = vmatpush1.bf16.msra.mxu0 0
        %2732 = vmatprep.mubr.bf16.mxu0 0
        %2733 = vmatmul.mubr.bf16.gmra.mrb[0].mxu0 %v2686
        %v2734 = vpop.f32.mrb[0].mxu0
        %v2735 = vadd.f32 0.0, %v2734
        %v2736 = vpop.f32.mrb[0].mxu0
        %v2737 = vpop.f32.mrb[0].mxu0
        %v2738 = vadd.f32 0.0, %v2737
        %v2739 = vpop.f32.mrb[0].mxu0
        %2740 = vmatprep.mubr.bf16.mxu0 0
        %2741 = vmatmul.mubr.bf16.gmra.mrb[0].mxu0 %v2689
        %v2742 = vpop.f32.mrb[0].mxu0
        %v2743 = vadd.f32 0.0, %v2742
        %v2744 = vpop.f32.mrb[0].mxu0
        %v2745 = vpop.f32.mrb[0].mxu0
        %v2746 = vadd.f32 0.0, %v2745
        %v2747 = vpop.f32.mrb[0].mxu0
        %2748 = vmatprep.mubr.bf16.mxu0 0
        %2749 = vmatmul.mubr.bf16.gmra.mrb[0].mxu0 %v2692
        %v2750 = vpop.f32.mrb[0].mxu0
        %v2751 = vadd.f32 0.0, %v2750
        %v2752 = vpop.f32.mrb[0].mxu0
        %v2753 = vpop.f32.mrb[0].mxu0
        %v2754 = vadd.f32 0.0, %v2753
        %v2755 = vpop.f32.mrb[0].mxu0
        %2756 = vmatprep.mubr.bf16.mxu0 0
        %2757 = vmatmul.mubr.bf16.gmra.mrb[0].mxu0 %v2695
        %v2758 = vpop.f32.mrb[0].mxu0
        %v2759 = vadd.f32 0.0, %v2758
        %v2760 = vpop.f32.mrb[0].mxu0
        %v2761 = vpop.f32.mrb[0].mxu0
        %v2762 = vadd.f32 0.0, %v2761
        %v2763 = vpop.f32.mrb[0].mxu0
        %2764 = vmatprep.mubr.bf16.mxu0 0
        %2765 = vmatmul.mubr.bf16.gmra.mrb[0].mxu0 %v2698
        %v2766 = vpop.f32.mrb[0].mxu0
        %v2767 = vadd.f32 0.0, %v2766
        %v2768 = vpop.f32.mrb[0].mxu0
        %v2769 = vpop.f32.mrb[0].mxu0
        %v2770 = vpop.f32.mrb[0].mxu0
        %2771 = vdwg.mxu0
        %v2772 = vadd.f32 %v2472, %v2735
        %v2773 = vadd.f32 %v2475, %v2738
        %v2774 = vadd.f32 %v2480, %v2743
        %v2775 = vadd.f32 %v2483, %v2746
        %v2776 = vadd.f32 %v2488, %v2751
        %v2777 = vadd.f32 %v2491, %v2754
        %v2778 = vadd.f32 %v2496, %v2759
        %v2779 = vadd.f32 %v2499, %v2762
        %v2780 = vadd.f32 %v2504, %v2767
        %v2781 = vld [vmem:[%s2647] ss:$2 sm:$0xff]
        %v2782 = vld [vmem:[%s2649] ss:$2 sm:$0xff]
        %v2783 = vld [vmem:[%s2651] ss:$2 sm:$0xff]
        %v2784 = vld [vmem:[%s2653] ss:$2 sm:$0xff]
        %v2785 = vld [vmem:[%s2655] ss:$2 sm:$0xff]
        %v2786 = vld [vmem:[%s2657] ss:$2 sm:$0xff]
        %v2787 = vld [vmem:[%s2659] ss:$2 sm:$0xff]
        %v2788 = vld [vmem:[%s2661] ss:$2 sm:$0xff]
        %s2789 = scalar_lea.vmem [#allocation3], 169
        %v2790 = vld [vmem:[%s2789] ss:$2 sm:$0xff]
        %v2791 = vpack.c.bf16 %v2782, %v2781
        %v2792 = vpack.c.bf16 %v2784, %v2783
        %v2793 = vpack.c.bf16 %v2786, %v2785
        %v2794 = vpack.c.bf16 %v2788, %v2787
        %v2795 = vpack.c.bf16 %v2790, %v2790
        %s2796 = scalar_lea.vmem %s3, 96
        %v2797 = vld [vmem:[%s2796] sm:$0xf]
        %v2798 = vld [vmem:[%s2796 + $0x4] sm:$0xf]
        %v2799 = vld [vmem:[%s2796 + $0x8] sm:$0xf]
        %v2800 = vld [vmem:[%s2796 + $0xc] sm:$0xf]
        %v2805 = vunpack.c.l.b16 %v2797
        %v2806 = vunpack.c.l.b16 %v2798
        %v2807 = vunpack.c.l.b16 %v2799
        %v2808 = vunpack.c.l.b16 %v2800
        %v2809 = vpack.c.b16 %v2806, %v2805
        %v2810 = vpack.c.b16 %v2808, %v2807
        %v2814 = vsel %vm1391, %v2791, 0
        %v2817 = vsel %vm1391, %v2792, 0
        %v2820 = vsel %vm1391, %v2793, 0
        %v2823 = vsel %vm1391, %v2794, 0
        %v2826 = vsel %vm1391, %v2795, 0
        %2828 = vmatprep.subr.bf16.mxu0 0
        %2829 = vmatpush1.bf16.msra.mxu0 %v2809
        %2830 = vmatprep.subr.bf16.mxu0 0
        %2831 = vmatpush1.bf16.msra.mxu0 %v2810
        %2832 = vmatprep.subr.bf16.mxu0 0
        %2833 = vmatpush1.bf16.msra.mxu0 0
        %2834 = vmatprep.subr.bf16.mxu0 0
        %2835 = vmatpush1.bf16.msra.mxu0 0
        %2836 = vmatprep.subr.bf16.mxu0 0
        %2837 = vmatpush1.bf16.msra.mxu0 0
        %2838 = vmatprep.subr.bf16.mxu0 0
        %2839 = vmatpush1.bf16.msra.mxu0 0
        %2840 = vmatprep.subr.bf16.mxu0 0
        %2841 = vmatpush1.bf16.msra.mxu0 0
        %2842 = vmatprep.subr.bf16.mxu0 0
        %2843 = vmatpush1.bf16.msra.mxu0 0
        %2844 = vmatprep.subr.bf16.mxu0 0
        %2845 = vmatpush1.bf16.msra.mxu0 0
        %2846 = vmatprep.subr.bf16.mxu0 0
        %2847 = vmatpush1.bf16.msra.mxu0 0
        %2848 = vmatprep.subr.bf16.mxu0 0
        %2849 = vmatpush1.bf16.msra.mxu0 0
        %2850 = vmatprep.subr.bf16.mxu0 0
        %2851 = vmatpush1.bf16.msra.mxu0 0
        %2852 = vmatprep.subr.bf16.mxu0 0
        %2853 = vmatpush1.bf16.msra.mxu0 0
        %2854 = vmatprep.subr.bf16.mxu0 0
        %2855 = vmatpush1.bf16.msra.mxu0 0
        %2856 = vmatprep.subr.bf16.mxu0 0
        %2857 = vmatpush1.bf16.msra.mxu0 0
        %2858 = vmatprep.subr.bf16.mxu0 0
        %2859 = vmatpush1.bf16.msra.mxu0 0
        %2860 = vmatprep.mubr.bf16.mxu0 0
        %2861 = vmatmul.mubr.bf16.gmra.mrb[0].mxu0 %v2814
        %v2862 = vpop.f32.mrb[0].mxu0
        %v2863 = vadd.f32 0.0, %v2862
        %v2864 = vpop.f32.mrb[0].mxu0
        %v2865 = vpop.f32.mrb[0].mxu0
        %v2866 = vadd.f32 0.0, %v2865
        %v2867 = vpop.f32.mrb[0].mxu0
        %2868 = vmatprep.mubr.bf16.mxu0 0
        %2869 = vmatmul.mubr.bf16.gmra.mrb[0].mxu0 %v2817
        %v2870 = vpop.f32.mrb[0].mxu0
        %v2871 = vadd.f32 0.0, %v2870
        %v2872 = vpop.f32.mrb[0].mxu0
        %v2873 = vpop.f32.mrb[0].mxu0
        %v2874 = vadd.f32 0.0, %v2873
        %v2875 = vpop.f32.mrb[0].mxu0
        %2876 = vmatprep.mubr.bf16.mxu0 0
        %2877 = vmatmul.mubr.bf16.gmra.mrb[0].mxu0 %v2820
        %v2878 = vpop.f32.mrb[0].mxu0
        %v2879 = vadd.f32 0.0, %v2878
        %v2880 = vpop.f32.mrb[0].mxu0
        %v2881 = vpop.f32.mrb[0].mxu0
        %v2882 = vadd.f32 0.0, %v2881
        %v2883 = vpop.f32.mrb[0].mxu0
        %2884 = vmatprep.mubr.bf16.mxu0 0
        %2885 = vmatmul.mubr.bf16.gmra.mrb[0].mxu0 %v2823
        %v2886 = vpop.f32.mrb[0].mxu0
        %v2887 = vadd.f32 0.0, %v2886
        %v2888 = vpop.f32.mrb[0].mxu0
        %v2889 = vpop.f32.mrb[0].mxu0
        %v2890 = vadd.f32 0.0, %v2889
        %v2891 = vpop.f32.mrb[0].mxu0
        %2892 = vmatprep.mubr.bf16.mxu0 0
        %2893 = vmatmul.mubr.bf16.gmra.mrb[0].mxu0 %v2826
        %v2894 = vpop.f32.mrb[0].mxu0
        %v2895 = vadd.f32 0.0, %v2894
        %v2896 = vpop.f32.mrb[0].mxu0
        %v2897 = vpop.f32.mrb[0].mxu0
        %v2898 = vpop.f32.mrb[0].mxu0
        %2899 = vdwg.mxu0
        %v2900 = vadd.f32 %v2636, %v2863
        %v2901 = vadd.f32 %v2637, %v2866
        %v2902 = vadd.f32 %v2638, %v2871
        %v2903 = vadd.f32 %v2639, %v2874
        %v2904 = vadd.f32 %v2640, %v2879
        %v2905 = vadd.f32 %v2641, %v2882
        %v2906 = vadd.f32 %v2642, %v2887
        %v2907 = vadd.f32 %v2643, %v2890
        %v2908 = vadd.f32 %v2644, %v2895
        %s2909 = scalar_lea.vmem [#allocation3], 42
        %v2910 = vld [vmem:[%s2909] ss:$2 sm:$0xff]
        %s2911 = scalar_lea.vmem [#allocation3], 58
        %v2912 = vld [vmem:[%s2911] ss:$2 sm:$0xff]
        %s2913 = scalar_lea.vmem [#allocation3], 74
        %v2914 = vld [vmem:[%s2913] ss:$2 sm:$0xff]
        %s2915 = scalar_lea.vmem [#allocation3], 90
        %v2916 = vld [vmem:[%s2915] ss:$2 sm:$0xff]
        %s2917 = scalar_lea.vmem [#allocation3], 106
        %v2918 = vld [vmem:[%s2917] ss:$2 sm:$0xff]
        %s2919 = scalar_lea.vmem [#allocation3], 122
        %v2920 = vld [vmem:[%s2919] ss:$2 sm:$0xff]
        %s2921 = scalar_lea.vmem [#allocation3], 138
        %v2922 = vld [vmem:[%s2921] ss:$2 sm:$0xff]
        %s2923 = scalar_lea.vmem [#allocation3], 154
        %v2924 = vld [vmem:[%s2923] ss:$2 sm:$0xff]
        %s2925 = scalar_lea.vmem [#allocation3], 170
        %v2926 = vld [vmem:[%s2925] ss:$2 sm:$0xff]
        %v2927 = vpack.c.bf16 %v2912, %v2910
        %v2928 = vpack.c.bf16 %v2916, %v2914
        %v2929 = vpack.c.bf16 %v2920, %v2918
        %v2930 = vpack.c.bf16 %v2924, %v2922
        %v2931 = vpack.c.bf16 %v2926, %v2926
        %s2932 = scalar_lea.vmem %s3, 112
        %v2933 = vld [vmem:[%s2932] sm:$0xf]
        %v2934 = vld [vmem:[%s2932 + $0x4] sm:$0xf]
        %v2935 = vld [vmem:[%s2932 + $0x8] sm:$0xf]
        %v2936 = vld [vmem:[%s2932 + $0xc] sm:$0xf]
        %v2941 = vunpack.c.l.b16 %v2933
        %v2942 = vunpack.c.l.b16 %v2934
        %v2943 = vunpack.c.l.b16 %v2935
        %v2944 = vunpack.c.l.b16 %v2936
        %v2945 = vpack.c.b16 %v2942, %v2941
        %v2946 = vpack.c.b16 %v2944, %v2943
        %v2950 = vsel %vm1391, %v2927, 0
        %v2953 = vsel %vm1391, %v2928, 0
        %v2956 = vsel %vm1391, %v2929, 0
        %v2959 = vsel %vm1391, %v2930, 0
        %v2962 = vsel %vm1391, %v2931, 0
        %2964 = vmatprep.subr.bf16.mxu0 0
        %2965 = vmatpush1.bf16.msra.mxu0 %v2945
        %2966 = vmatprep.subr.bf16.mxu0 0
        %2967 = vmatpush1.bf16.msra.mxu0 %v2946
        %2968 = vmatprep.subr.bf16.mxu0 0
        %2969 = vmatpush1.bf16.msra.mxu0 0
        %2970 = vmatprep.subr.bf16.mxu0 0
        %2971 = vmatpush1.bf16.msra.mxu0 0
        %2972 = vmatprep.subr.bf16.mxu0 0
        %2973 = vmatpush1.bf16.msra.mxu0 0
        %2974 = vmatprep.subr.bf16.mxu0 0
        %2975 = vmatpush1.bf16.msra.mxu0 0
        %2976 = vmatprep.subr.bf16.mxu0 0
        %2977 = vmatpush1.bf16.msra.mxu0 0
        %2978 = vmatprep.subr.bf16.mxu0 0
        %2979 = vmatpush1.bf16.msra.mxu0 0
        %2980 = vmatprep.subr.bf16.mxu0 0
        %2981 = vmatpush1.bf16.msra.mxu0 0
        %2982 = vmatprep.subr.bf16.mxu0 0
        %2983 = vmatpush1.bf16.msra.mxu0 0
        %2984 = vmatprep.subr.bf16.mxu0 0
        %2985 = vmatpush1.bf16.msra.mxu0 0
        %2986 = vmatprep.subr.bf16.mxu0 0
        %2987 = vmatpush1.bf16.msra.mxu0 0
        %2988 = vmatprep.subr.bf16.mxu0 0
        %2989 = vmatpush1.bf16.msra.mxu0 0
        %2990 = vmatprep.subr.bf16.mxu0 0
        %2991 = vmatpush1.bf16.msra.mxu0 0
        %2992 = vmatprep.subr.bf16.mxu0 0
        %2993 = vmatpush1.bf16.msra.mxu0 0
        %2994 = vmatprep.subr.bf16.mxu0 0
        %2995 = vmatpush1.bf16.msra.mxu0 0
        %2996 = vmatprep.mubr.bf16.mxu0 0
        %2997 = vmatmul.mubr.bf16.gmra.mrb[0].mxu0 %v2950
        %v2998 = vpop.f32.mrb[0].mxu0
        %v2999 = vadd.f32 0.0, %v2998
        %v3000 = vpop.f32.mrb[0].mxu0
        %v3001 = vpop.f32.mrb[0].mxu0
        %v3002 = vadd.f32 0.0, %v3001
        %v3003 = vpop.f32.mrb[0].mxu0
        %3004 = vmatprep.mubr.bf16.mxu0 0
        %3005 = vmatmul.mubr.bf16.gmra.mrb[0].mxu0 %v2953
        %v3006 = vpop.f32.mrb[0].mxu0
        %v3007 = vadd.f32 0.0, %v3006
        %v3008 = vpop.f32.mrb[0].mxu0
        %v3009 = vpop.f32.mrb[0].mxu0
        %v3010 = vadd.f32 0.0, %v3009
        %v3011 = vpop.f32.mrb[0].mxu0
        %3012 = vmatprep.mubr.bf16.mxu0 0
        %3013 = vmatmul.mubr.bf16.gmra.mrb[0].mxu0 %v2956
        %v3014 = vpop.f32.mrb[0].mxu0
        %v3015 = vadd.f32 0.0, %v3014
        %v3016 = vpop.f32.mrb[0].mxu0
        %v3017 = vpop.f32.mrb[0].mxu0
        %v3018 = vadd.f32 0.0, %v3017
        %v3019 = vpop.f32.mrb[0].mxu0
        %3020 = vmatprep.mubr.bf16.mxu0 0
        %3021 = vmatmul.mubr.bf16.gmra.mrb[0].mxu0 %v2959
        %v3022 = vpop.f32.mrb[0].mxu0
        %v3023 = vadd.f32 0.0, %v3022
        %v3024 = vpop.f32.mrb[0].mxu0
        %v3025 = vpop.f32.mrb[0].mxu0
        %v3026 = vadd.f32 0.0, %v3025
        %v3027 = vpop.f32.mrb[0].mxu0
        %3028 = vmatprep.mubr.bf16.mxu0 0
        %3029 = vmatmul.mubr.bf16.gmra.mrb[0].mxu0 %v2962
        %v3030 = vpop.f32.mrb[0].mxu0
        %v3031 = vadd.f32 0.0, %v3030
        %v3032 = vpop.f32.mrb[0].mxu0
        %v3033 = vpop.f32.mrb[0].mxu0
        %v3034 = vpop.f32.mrb[0].mxu0
        %3035 = vdwg.mxu0
        %v3036 = vadd.f32 %v2772, %v2999
        %v3037 = vadd.f32 %v2773, %v3002
        %v3038 = vadd.f32 %v2774, %v3007
        %v3039 = vadd.f32 %v2775, %v3010
        %v3040 = vadd.f32 %v2776, %v3015
        %v3041 = vadd.f32 %v2777, %v3018
        %v3042 = vadd.f32 %v2778, %v3023
        %v3043 = vadd.f32 %v2779, %v3026
        %v3044 = vadd.f32 %v2780, %v3031
        %s3045 = scalar_lea.vmem [#allocation3], 43
        %v3046 = vld [vmem:[%s3045] ss:$2 sm:$0xff]
        %s3047 = scalar_lea.vmem [#allocation3], 59
        %v3048 = vld [vmem:[%s3047] ss:$2 sm:$0xff]
        %s3049 = scalar_lea.vmem [#allocation3], 75
        %v3050 = vld [vmem:[%s3049] ss:$2 sm:$0xff]
        %s3051 = scalar_lea.vmem [#allocation3], 91
        %v3052 = vld [vmem:[%s3051] ss:$2 sm:$0xff]
        %s3053 = scalar_lea.vmem [#allocation3], 107
        %v3054 = vld [vmem:[%s3053] ss:$2 sm:$0xff]
        %s3055 = scalar_lea.vmem [#allocation3], 123
        %v3056 = vld [vmem:[%s3055] ss:$2 sm:$0xff]
        %s3057 = scalar_lea.vmem [#allocation3], 139
        %v3058 = vld [vmem:[%s3057] ss:$2 sm:$0xff]
        %s3059 = scalar_lea.vmem [#allocation3], 155
        %v3060 = vld [vmem:[%s3059] ss:$2 sm:$0xff]
        %s3061 = scalar_lea.vmem [#allocation3], 171
        %v3062 = vld [vmem:[%s3061] ss:$2 sm:$0xff]
        %v3063 = vpack.c.bf16 %v3048, %v3046
        %v3064 = vpack.c.bf16 %v3052, %v3050
        %v3065 = vpack.c.bf16 %v3056, %v3054
        %v3066 = vpack.c.bf16 %v3060, %v3058
        %v3067 = vpack.c.bf16 %v3062, %v3062
        %s3068 = scalar_lea.vmem %s3, 128
        %v3069 = vld [vmem:[%s3068] sm:$0xf]
        %v3070 = vld [vmem:[%s3068 + $0x4] sm:$0xf]
        %v3071 = vld [vmem:[%s3068 + $0x8] sm:$0xf]
        %v3072 = vld [vmem:[%s3068 + $0xc] sm:$0xf]
        %v3077 = vunpack.c.l.b16 %v3069
        %v3078 = vunpack.c.l.b16 %v3070
        %v3079 = vunpack.c.l.b16 %v3071
        %v3080 = vunpack.c.l.b16 %v3072
        %v3081 = vpack.c.b16 %v3078, %v3077
        %v3082 = vpack.c.b16 %v3080, %v3079
        %v3086 = vsel %vm1391, %v3063, 0
        %v3089 = vsel %vm1391, %v3064, 0
        %v3092 = vsel %vm1391, %v3065, 0
        %v3095 = vsel %vm1391, %v3066, 0
        %v3098 = vsel %vm1391, %v3067, 0
        %3100 = vmatprep.subr.bf16.mxu0 0
        %3101 = vmatpush1.bf16.msra.mxu0 %v3081
        %3102 = vmatprep.subr.bf16.mxu0 0
        %3103 = vmatpush1.bf16.msra.mxu0 %v3082
        %3104 = vmatprep.subr.bf16.mxu0 0
        %3105 = vmatpush1.bf16.msra.mxu0 0
        %3106 = vmatprep.subr.bf16.mxu0 0
        %3107 = vmatpush1.bf16.msra.mxu0 0
        %3108 = vmatprep.subr.bf16.mxu0 0
        %3109 = vmatpush1.bf16.msra.mxu0 0
        %3110 = vmatprep.subr.bf16.mxu0 0
        %3111 = vmatpush1.bf16.msra.mxu0 0
        %3112 = vmatprep.subr.bf16.mxu0 0
        %3113 = vmatpush1.bf16.msra.mxu0 0
        %3114 = vmatprep.subr.bf16.mxu0 0
        %3115 = vmatpush1.bf16.msra.mxu0 0
        %3116 = vmatprep.subr.bf16.mxu0 0
        %3117 = vmatpush1.bf16.msra.mxu0 0
        %3118 = vmatprep.subr.bf16.mxu0 0
        %3119 = vmatpush1.bf16.msra.mxu0 0
        %3120 = vmatprep.subr.bf16.mxu0 0
        %3121 = vmatpush1.bf16.msra.mxu0 0
        %3122 = vmatprep.subr.bf16.mxu0 0
        %3123 = vmatpush1.bf16.msra.mxu0 0
        %3124 = vmatprep.subr.bf16.mxu0 0
        %3125 = vmatpush1.bf16.msra.mxu0 0
        %3126 = vmatprep.subr.bf16.mxu0 0
        %3127 = vmatpush1.bf16.msra.mxu0 0
        %3128 = vmatprep.subr.bf16.mxu0 0
        %3129 = vmatpush1.bf16.msra.mxu0 0
        %3130 = vmatprep.subr.bf16.mxu0 0
        %3131 = vmatpush1.bf16.msra.mxu0 0
        %3132 = vmatprep.mubr.bf16.mxu0 0
        %3133 = vmatmul.mubr.bf16.gmra.mrb[0].mxu0 %v3086
        %v3134 = vpop.f32.mrb[0].mxu0
        %v3135 = vadd.f32 0.0, %v3134
        %v3136 = vpop.f32.mrb[0].mxu0
        %v3137 = vpop.f32.mrb[0].mxu0
        %v3138 = vadd.f32 0.0, %v3137
        %v3139 = vpop.f32.mrb[0].mxu0
        %3140 = vmatprep.mubr.bf16.mxu0 0
        %3141 = vmatmul.mubr.bf16.gmra.mrb[0].mxu0 %v3089
        %v3142 = vpop.f32.mrb[0].mxu0
        %v3143 = vadd.f32 0.0, %v3142
        %v3144 = vpop.f32.mrb[0].mxu0
        %v3145 = vpop.f32.mrb[0].mxu0
        %v3146 = vadd.f32 0.0, %v3145
        %v3147 = vpop.f32.mrb[0].mxu0
        %3148 = vmatprep.mubr.bf16.mxu0 0
        %3149 = vmatmul.mubr.bf16.gmra.mrb[0].mxu0 %v3092
        %v3150 = vpop.f32.mrb[0].mxu0
        %v3151 = vadd.f32 0.0, %v3150
        %v3152 = vpop.f32.mrb[0].mxu0
        %v3153 = vpop.f32.mrb[0].mxu0
        %v3154 = vadd.f32 0.0, %v3153
        %v3155 = vpop.f32.mrb[0].mxu0
        %3156 = vmatprep.mubr.bf16.mxu0 0
        %3157 = vmatmul.mubr.bf16.gmra.mrb[0].mxu0 %v3095
        %v3158 = vpop.f32.mrb[0].mxu0
        %v3159 = vadd.f32 0.0, %v3158
        %v3160 = vpop.f32.mrb[0].mxu0
        %v3161 = vpop.f32.mrb[0].mxu0
        %v3162 = vadd.f32 0.0, %v3161
        %v3163 = vpop.f32.mrb[0].mxu0
        %3164 = vmatprep.mubr.bf16.mxu0 0
        %3165 = vmatmul.mubr.bf16.gmra.mrb[0].mxu0 %v3098
        %v3166 = vpop.f32.mrb[0].mxu0
        %v3167 = vadd.f32 0.0, %v3166
        %v3168 = vpop.f32.mrb[0].mxu0
        %v3169 = vpop.f32.mrb[0].mxu0
        %v3170 = vpop.f32.mrb[0].mxu0
        %3171 = vdwg.mxu0
        %v3172 = vadd.f32 %v2900, %v3135
        %v3173 = vadd.f32 %v2901, %v3138
        %v3174 = vadd.f32 %v2902, %v3143
        %v3175 = vadd.f32 %v2903, %v3146
        %v3176 = vadd.f32 %v2904, %v3151
        %v3177 = vadd.f32 %v2905, %v3154
        %v3178 = vadd.f32 %v2906, %v3159
        %v3179 = vadd.f32 %v2907, %v3162
        %v3180 = vadd.f32 %v2908, %v3167
        %v3181 = vadd.f32 %v3172, %v3036
        %v3182 = vadd.f32 %v3173, %v3037
        %v3183 = vadd.f32 %v3174, %v3038
        %v3184 = vadd.f32 %v3175, %v3039
        %v3185 = vadd.f32 %v3176, %v3040
        %v3186 = vadd.f32 %v3177, %v3041
        %v3187 = vadd.f32 %v3178, %v3042
        %v3188 = vadd.f32 %v3179, %v3043
        %v3189 = vadd.f32 %v3180, %v3044
        %v3190 = vld [vmem:[%s4] sm:$0x1]
        %v3192 = vlaneseq
        %v3193 = vshrl.u32 %v3192, 7
        %v3194 = vsub.s32 0, %v3193
        %v3195 = vrot.slane %v3190, %v3194
        %v3197 = vadd.f32 %v3181, %v3195
        %v3198 = vadd.f32 %v3182, %v3195
        %v3199 = vadd.f32 %v3183, %v3195
        %v3200 = vadd.f32 %v3184, %v3195
        %v3201 = vadd.f32 %v3185, %v3195
        %v3202 = vadd.f32 %v3186, %v3195
        %v3203 = vadd.f32 %v3187, %v3195
        %v3204 = vadd.f32 %v3188, %v3195
        %v3205 = vadd.f32 %v3189, %v3195
        %v3206 = vmax.f32 %v3197, 0.0
        %v3207 = vmax.f32 %v3198, 0.0
        %v3208 = vmax.f32 %v3199, 0.0
        %v3209 = vmax.f32 %v3200, 0.0
        %v3210 = vmax.f32 %v3201, 0.0
        %v3211 = vmax.f32 %v3202, 0.0
        %v3212 = vmax.f32 %v3203, 0.0
        %v3213 = vmax.f32 %v3204, 0.0
        %v3214 = vmax.f32 %v3205, 0.0
        %v3215 = vld [vmem:[%s15] sm:$0xff]
        %v3216 = vld [vmem:[%s15 + $0x8] sm:$0xff]
        %v3217 = vld [vmem:[%s15 + $0x10] sm:$0xff]
        %v3218 = vld [vmem:[%s15 + $0x18] sm:$0xff]
        %v3219 = vld [vmem:[%s15 + $0x20] sm:$0xff]
        %v3220 = vld [vmem:[%s15 + $0x28] sm:$0xff]
        %v3221 = vld [vmem:[%s15 + $0x30] sm:$0xff]
        %v3222 = vld [vmem:[%s15 + $0x38] sm:$0xff]
        %v3223 = vld [vmem:[%s15 + $0x40] sm:$0xff]
        %vm3224 = vcmp.gt.f32.partialorder %v3215, 0.5
        %vm3225 = vcmp.gt.f32.partialorder %v3216, 0.5
        %vm3226 = vcmp.gt.f32.partialorder %v3217, 0.5
        %vm3227 = vcmp.gt.f32.partialorder %v3218, 0.5
        %vm3228 = vcmp.gt.f32.partialorder %v3219, 0.5
        %vm3229 = vcmp.gt.f32.partialorder %v3220, 0.5
        %vm3230 = vcmp.gt.f32.partialorder %v3221, 0.5
        %vm3231 = vcmp.gt.f32.partialorder %v3222, 0.5
        %vm3232 = vcmp.gt.f32.partialorder %v3223, 0.5
        %v3233 = vsel %vm3224, 1, 0
        %v3234 = vsel %vm3225, 1, 0
        %v3235 = vsel %vm3226, 1, 0
        %v3236 = vsel %vm3227, 1, 0
        %v3237 = vsel %vm3228, 1, 0
        %v3238 = vsel %vm3229, 1, 0
        %v3239 = vsel %vm3230, 1, 0
        %v3240 = vsel %vm3231, 1, 0
        %v3241 = vsel %vm3232, 1, 0
        %3242 = vset.pattern.permute.xlu0 0
        %3243 = vperm.xlu0 %3242, %v3233
        %v3244 = vpop.permute.xlu0 %3243
        %3245 = vset.pattern.permute.xlu0 0
        %3246 = vperm.xlu0 %3245, %v3234
        %v3247 = vpop.permute.xlu0 %3246
        %3248 = vset.pattern.permute.xlu0 0
        %3249 = vperm.xlu0 %3248, %v3235
        %v3250 = vpop.permute.xlu0 %3249
        %3251 = vset.pattern.permute.xlu0 0
        %3252 = vperm.xlu0 %3251, %v3236
        %v3253 = vpop.permute.xlu0 %3252
        %3254 = vset.pattern.permute.xlu0 0
        %3255 = vperm.xlu0 %3254, %v3237
        %v3256 = vpop.permute.xlu0 %3255
        %3257 = vset.pattern.permute.xlu0 0
        %3258 = vperm.xlu0 %3257, %v3238
        %v3259 = vpop.permute.xlu0 %3258
        %3260 = vset.pattern.permute.xlu0 0
        %3261 = vperm.xlu0 %3260, %v3239
        %v3262 = vpop.permute.xlu0 %3261
        %3263 = vset.pattern.permute.xlu0 0
        %3264 = vperm.xlu0 %3263, %v3240
        %v3265 = vpop.permute.xlu0 %3264
        %3266 = vset.pattern.permute.xlu0 0
        %3267 = vperm.xlu0 %3266, %v3241
        %v3268 = vpop.permute.xlu0 %3267
        %vm3269 = vcmp.eq.s32.totalorder %v3244, 1
        %vm3270 = vcmp.eq.s32.totalorder %v3247, 1
        %vm3271 = vcmp.eq.s32.totalorder %v3250, 1
        %vm3272 = vcmp.eq.s32.totalorder %v3253, 1
        %vm3273 = vcmp.eq.s32.totalorder %v3256, 1
        %vm3274 = vcmp.eq.s32.totalorder %v3259, 1
        %vm3275 = vcmp.eq.s32.totalorder %v3262, 1
        %vm3276 = vcmp.eq.s32.totalorder %v3265, 1
        %vm3277 = vcmp.eq.s32.totalorder %v3268, 1
        %v3278 = vsel %vm3269, %v3206, 0.0
        %v3279 = vsel %vm3270, %v3207, 0.0
        %v3280 = vsel %vm3271, %v3208, 0.0
        %v3281 = vsel %vm3272, %v3209, 0.0
        %v3282 = vsel %vm3273, %v3210, 0.0
        %v3283 = vsel %vm3274, %v3211, 0.0
        %v3284 = vsel %vm3275, %v3212, 0.0
        %v3285 = vsel %vm3276, %v3213, 0.0
        %v3286 = vsel %vm3277, %v3214, 0.0
        %vm3287 = vcmask 523264
        %3288 = vst.msk [vmem:[#allocation4] sm:$0xff] %vm3287, 0.0
        %3289 = vst.msk [vmem:[#allocation4 + $0x8] sm:$0xff] %vm3287, 0.0
        %3290 = vst.msk [vmem:[#allocation4 + $0x10] sm:$0xff] %vm3287, 0.0
        %3291 = vst.msk [vmem:[#allocation4 + $0x18] sm:$0xff] %vm3287, %v3278
        %3292 = vst.msk [vmem:[#allocation4 + $0x20] sm:$0xff] %vm3287, %v3279
        %3293 = vst.msk [vmem:[#allocation4 + $0x28] sm:$0xff] %vm3287, %v3280
        %3294 = vst.msk [vmem:[#allocation4 + $0x30] sm:$0xff] %vm3287, %v3281
        %3295 = vst.msk [vmem:[#allocation4 + $0x38] sm:$0xff] %vm3287, %v3282
        %3296 = vst.msk [vmem:[#allocation4 + $0x40] sm:$0xff] %vm3287, %v3283
        %3297 = vst.msk [vmem:[#allocation4 + $0x48] sm:$0xff] %vm3287, %v3284
        %3298 = vst.msk [vmem:[#allocation4 + $0x50] sm:$0xff] %vm3287, %v3285
        %3299 = vst.msk [vmem:[#allocation4 + $0x58] sm:$0xff] %vm3287, %v3286
        %3300 = vst.msk [vmem:[#allocation4 + $0x60] sm:$0xff] %vm3287, 0.0
        %3301 = vst.msk [vmem:[#allocation4 + $0x68] sm:$0xff] %vm3287, 0.0
        %3302 = vst.msk [vmem:[#allocation4 + $0x70] sm:$0xff] %vm3287, 0.0
        %3303 = vst.msk [vmem:[#allocation4 + $0x78] sm:$0xff] %vm3287, 0.0
        %3304 = vst.msk [vmem:[#allocation4 + $0x80] sm:$0xff] %vm3287, 0.0
        %3305 = vst.msk [vmem:[#allocation4 + $0x88] sm:$0xff] %vm3287, 0.0
        %3306 = vst.msk [vmem:[#allocation4 + $0x90] sm:$0xff] %vm3287, 0.0
        %v3307 = vld [vmem:[#allocation4 + $0x5] sm:$0xff]
        %v3308 = vld [vmem:[#allocation4 + $0xd] sm:$0xff]
        %v3309 = vld [vmem:[#allocation4 + $0x15] sm:$0xff]
        %v3310 = vld [vmem:[#allocation4 + $0x1d] sm:$0xff]
        %v3311 = vld [vmem:[#allocation4 + $0x25] sm:$0xff]
        %v3312 = vld [vmem:[#allocation4 + $0x2d] sm:$0xff]
        %v3313 = vld [vmem:[#allocation4 + $0x35] sm:$0xff]
        %v3314 = vld [vmem:[#allocation4 + $0x3d] sm:$0xff]
        %v3315 = vld [vmem:[#allocation4 + $0x45] sm:$0xff]
        %v3316 = vpack.c.bf16 %v3308, %v3307
        %v3317 = vpack.c.bf16 %v3310, %v3309
        %v3318 = vpack.c.bf16 %v3312, %v3311
        %v3319 = vpack.c.bf16 %v3314, %v3313
        %v3320 = vpack.c.bf16 %v3315, %v3315
        %v3321 = vld [vmem:[%s5] sm:$0xf]
        %v3322 = vld [vmem:[%s5 + $0x4] sm:$0xf]
        %v3323 = vld [vmem:[%s5 + $0x8] sm:$0xf]
        %v3324 = vld [vmem:[%s5 + $0xc] sm:$0xf]
        %v3325 = vld [vmem:[%s5 + $0x10] sm:$0xf]
        %v3326 = vld [vmem:[%s5 + $0x14] sm:$0xf]
        %v3327 = vld [vmem:[%s5 + $0x18] sm:$0xf]
        %v3328 = vld [vmem:[%s5 + $0x1c] sm:$0xf]
        %v3329 = vld [vmem:[#allocation4 + $0x6] sm:$0xff]
        %v3330 = vld [vmem:[#allocation4 + $0xe] sm:$0xff]
        %v3331 = vld [vmem:[#allocation4 + $0x16] sm:$0xff]
        %v3332 = vld [vmem:[#allocation4 + $0x1e] sm:$0xff]
        %v3333 = vld [vmem:[#allocation4 + $0x26] sm:$0xff]
        %v3334 = vld [vmem:[#allocation4 + $0x2e] sm:$0xff]
        %v3335 = vld [vmem:[#allocation4 + $0x36] sm:$0xff]
        %v3336 = vld [vmem:[#allocation4 + $0x3e] sm:$0xff]
        %v3337 = vld [vmem:[#allocation4 + $0x46] sm:$0xff]
        %v3338 = vpack.c.bf16 %v3330, %v3329
        %v3339 = vpack.c.bf16 %v3332, %v3331
        %v3340 = vpack.c.bf16 %v3334, %v3333
        %v3341 = vpack.c.bf16 %v3336, %v3335
        %v3342 = vpack.c.bf16 %v3337, %v3337
        %s3343 = scalar_lea.vmem %s5, 32
        %v3344 = vld [vmem:[%s3343] sm:$0xf]
        %v3345 = vld [vmem:[%s3343 + $0x4] sm:$0xf]
        %v3346 = vld [vmem:[%s3343 + $0x8] sm:$0xf]
        %v3347 = vld [vmem:[%s3343 + $0xc] sm:$0xf]
        %v3348 = vld [vmem:[%s3343 + $0x10] sm:$0xf]
        %v3349 = vld [vmem:[%s3343 + $0x14] sm:$0xf]
        %v3350 = vld [vmem:[%s3343 + $0x18] sm:$0xf]
        %v3351 = vld [vmem:[%s3343 + $0x1c] sm:$0xf]
        %v3352 = vld [vmem:[#allocation4 + $0x7] sm:$0xff]
        %v3353 = vld [vmem:[#allocation4 + $0xf] sm:$0xff]
        %v3354 = vld [vmem:[#allocation4 + $0x17] sm:$0xff]
        %v3355 = vld [vmem:[#allocation4 + $0x1f] sm:$0xff]
        %v3356 = vld [vmem:[#allocation4 + $0x27] sm:$0xff]
        %v3357 = vld [vmem:[#allocation4 + $0x2f] sm:$0xff]
        %v3358 = vld [vmem:[#allocation4 + $0x37] sm:$0xff]
        %v3359 = vld [vmem:[#allocation4 + $0x3f] sm:$0xff]
        %v3360 = vld [vmem:[#allocation4 + $0x47] sm:$0xff]
        %v3361 = vpack.c.bf16 %v3353, %v3352
        %v3362 = vpack.c.bf16 %v3355, %v3354
        %v3363 = vpack.c.bf16 %v3357, %v3356
        %v3364 = vpack.c.bf16 %v3359, %v3358
        %v3365 = vpack.c.bf16 %v3360, %v3360
        %s3366 = scalar_lea.vmem %s5, 64
        %v3367 = vld [vmem:[%s3366] sm:$0xf]
        %v3368 = vld [vmem:[%s3366 + $0x4] sm:$0xf]
        %v3369 = vld [vmem:[%s3366 + $0x8] sm:$0xf]
        %v3370 = vld [vmem:[%s3366 + $0xc] sm:$0xf]
        %v3371 = vld [vmem:[%s3366 + $0x10] sm:$0xf]
        %v3372 = vld [vmem:[%s3366 + $0x14] sm:$0xf]
        %v3373 = vld [vmem:[%s3366 + $0x18] sm:$0xf]
        %v3374 = vld [vmem:[%s3366 + $0x1c] sm:$0xf]
        %v3383 = vunpack.c.l.b16 %v3367
        %v3384 = vunpack.c.l.b16 %v3368
        %v3385 = vunpack.c.l.b16 %v3369
        %v3386 = vunpack.c.l.b16 %v3370
        %v3387 = vunpack.c.l.b16 %v3371
        %v3388 = vunpack.c.l.b16 %v3372
        %v3389 = vunpack.c.l.b16 %v3373
        %v3390 = vunpack.c.l.b16 %v3374
        %v3391 = vpack.c.b16 %v3384, %v3383
        %v3392 = vpack.c.b16 %v3386, %v3385
        %v3393 = vpack.c.b16 %v3388, %v3387
        %v3394 = vpack.c.b16 %v3390, %v3389
        %v3400 = vsel %vm3287, %v3361, 0
        %v3403 = vsel %vm3287, %v3362, 0
        %v3406 = vsel %vm3287, %v3363, 0
        %v3409 = vsel %vm3287, %v3364, 0
        %v3412 = vsel %vm3287, %v3365, 0
        %3414 = vmatprep.subr.bf16.mxu0 0
        %3415 = vmatpush1.bf16.msra.mxu0 %v3391
        %3416 = vmatprep.subr.bf16.mxu0 0
        %3417 = vmatpush1.bf16.msra.mxu0 %v3392
        %3418 = vmatprep.subr.bf16.mxu0 0
        %3419 = vmatpush1.bf16.msra.mxu0 %v3393
        %3420 = vmatprep.subr.bf16.mxu0 0
        %3421 = vmatpush1.bf16.msra.mxu0 %v3394
        %3422 = vmatprep.subr.bf16.mxu0 0
        %3423 = vmatpush1.bf16.msra.mxu0 0
        %3424 = vmatprep.subr.bf16.mxu0 0
        %3425 = vmatpush1.bf16.msra.mxu0 0
        %3426 = vmatprep.subr.bf16.mxu0 0
        %3427 = vmatpush1.bf16.msra.mxu0 0
        %3428 = vmatprep.subr.bf16.mxu0 0
        %3429 = vmatpush1.bf16.msra.mxu0 0
        %3430 = vmatprep.subr.bf16.mxu0 0
        %3431 = vmatpush1.bf16.msra.mxu0 0
        %3432 = vmatprep.subr.bf16.mxu0 0
        %3433 = vmatpush1.bf16.msra.mxu0 0
        %3434 = vmatprep.subr.bf16.mxu0 0
        %3435 = vmatpush1.bf16.msra.mxu0 0
        %3436 = vmatprep.subr.bf16.mxu0 0
        %3437 = vmatpush1.bf16.msra.mxu0 0
        %3438 = vmatprep.subr.bf16.mxu0 0
        %3439 = vmatpush1.bf16.msra.mxu0 0
        %3440 = vmatprep.subr.bf16.mxu0 0
        %3441 = vmatpush1.bf16.msra.mxu0 0
        %3442 = vmatprep.subr.bf16.mxu0 0
        %3443 = vmatpush1.bf16.msra.mxu0 0
        %3444 = vmatprep.subr.bf16.mxu0 0
        %3445 = vmatpush1.bf16.msra.mxu0 0
        %3446 = vmatprep.mubr.bf16.mxu0 0
        %3447 = vmatmul.mubr.bf16.gmra.mrb[0].mxu0 %v3400
        %v3448 = vpop.f32.mrb[0].mxu0
        %v3449 = vadd.f32 0.0, %v3448
        %v3450 = vpop.f32.mrb[0].mxu0
        %v3451 = vpop.f32.mrb[0].mxu0
        %v3452 = vadd.f32 0.0, %v3451
        %v3453 = vpop.f32.mrb[0].mxu0
        %3454 = vmatprep.mubr.bf16.mxu0 0
        %3455 = vmatmul.mubr.bf16.gmra.mrb[0].mxu0 %v3403
        %v3456 = vpop.f32.mrb[0].mxu0
        %v3457 = vadd.f32 0.0, %v3456
        %v3458 = vpop.f32.mrb[0].mxu0
        %v3459 = vpop.f32.mrb[0].mxu0
        %v3460 = vadd.f32 0.0, %v3459
        %v3461 = vpop.f32.mrb[0].mxu0
        %3462 = vmatprep.mubr.bf16.mxu0 0
        %3463 = vmatmul.mubr.bf16.gmra.mrb[0].mxu0 %v3406
        %v3464 = vpop.f32.mrb[0].mxu0
        %v3465 = vadd.f32 0.0, %v3464
        %v3466 = vpop.f32.mrb[0].mxu0
        %v3467 = vpop.f32.mrb[0].mxu0
        %v3468 = vadd.f32 0.0, %v3467
        %v3469 = vpop.f32.mrb[0].mxu0
        %3470 = vmatprep.mubr.bf16.mxu0 0
        %3471 = vmatmul.mubr.bf16.gmra.mrb[0].mxu0 %v3409
        %v3472 = vpop.f32.mrb[0].mxu0
        %v3473 = vadd.f32 0.0, %v3472
        %v3474 = vpop.f32.mrb[0].mxu0
        %v3475 = vpop.f32.mrb[0].mxu0
        %v3476 = vadd.f32 0.0, %v3475
        %v3477 = vpop.f32.mrb[0].mxu0
        %3478 = vmatprep.mubr.bf16.mxu0 0
        %3479 = vmatmul.mubr.bf16.gmra.mrb[0].mxu0 %v3412
        %v3480 = vpop.f32.mrb[0].mxu0
        %v3481 = vadd.f32 0.0, %v3480
        %v3482 = vpop.f32.mrb[0].mxu0
        %v3483 = vpop.f32.mrb[0].mxu0
        %v3484 = vpop.f32.mrb[0].mxu0
        %3485 = vdwg.mxu0
        %v3494 = vunpack.c.l.b16 %v3321
        %v3495 = vunpack.c.l.b16 %v3322
        %v3496 = vunpack.c.l.b16 %v3323
        %v3497 = vunpack.c.l.b16 %v3324
        %v3498 = vunpack.c.l.b16 %v3325
        %v3499 = vunpack.c.l.b16 %v3326
        %v3500 = vunpack.c.l.b16 %v3327
        %v3501 = vunpack.c.l.b16 %v3328
        %v3502 = vpack.c.b16 %v3495, %v3494
        %v3503 = vpack.c.b16 %v3497, %v3496
        %v3504 = vpack.c.b16 %v3499, %v3498
        %v3505 = vpack.c.b16 %v3501, %v3500
        %v3511 = vsel %vm3287, %v3316, 0
        %v3514 = vsel %vm3287, %v3317, 0
        %v3517 = vsel %vm3287, %v3318, 0
        %v3520 = vsel %vm3287, %v3319, 0
        %v3523 = vsel %vm3287, %v3320, 0
        %3525 = vmatprep.subr.bf16.mxu0 0
        %3526 = vmatpush1.bf16.msra.mxu0 %v3502
        %3527 = vmatprep.subr.bf16.mxu0 0
        %3528 = vmatpush1.bf16.msra.mxu0 %v3503
        %3529 = vmatprep.subr.bf16.mxu0 0
        %3530 = vmatpush1.bf16.msra.mxu0 %v3504
        %3531 = vmatprep.subr.bf16.mxu0 0
        %3532 = vmatpush1.bf16.msra.mxu0 %v3505
        %3533 = vmatprep.subr.bf16.mxu0 0
        %3534 = vmatpush1.bf16.msra.mxu0 0
        %3535 = vmatprep.subr.bf16.mxu0 0
        %3536 = vmatpush1.bf16.msra.mxu0 0
        %3537 = vmatprep.subr.bf16.mxu0 0
        %3538 = vmatpush1.bf16.msra.mxu0 0
        %3539 = vmatprep.subr.bf16.mxu0 0
        %3540 = vmatpush1.bf16.msra.mxu0 0
        %3541 = vmatprep.subr.bf16.mxu0 0
        %3542 = vmatpush1.bf16.msra.mxu0 0
        %3543 = vmatprep.subr.bf16.mxu0 0
        %3544 = vmatpush1.bf16.msra.mxu0 0
        %3545 = vmatprep.subr.bf16.mxu0 0
        %3546 = vmatpush1.bf16.msra.mxu0 0
        %3547 = vmatprep.subr.bf16.mxu0 0
        %3548 = vmatpush1.bf16.msra.mxu0 0
        %3549 = vmatprep.subr.bf16.mxu0 0
        %3550 = vmatpush1.bf16.msra.mxu0 0
        %3551 = vmatprep.subr.bf16.mxu0 0
        %3552 = vmatpush1.bf16.msra.mxu0 0
        %3553 = vmatprep.subr.bf16.mxu0 0
        %3554 = vmatpush1.bf16.msra.mxu0 0
        %3555 = vmatprep.subr.bf16.mxu0 0
        %3556 = vmatpush1.bf16.msra.mxu0 0
        %3557 = vmatprep.mubr.bf16.mxu0 0
        %3558 = vmatmul.mubr.bf16.gmra.mrb[0].mxu0 %v3511
        %v3559 = vpop.f32.mrb[0].mxu0
        %v3560 = vadd.f32 %v3449, %v3559
        %v3561 = vpop.f32.mrb[0].mxu0
        %v3562 = vpop.f32.mrb[0].mxu0
        %v3563 = vadd.f32 %v3452, %v3562
        %v3564 = vpop.f32.mrb[0].mxu0
        %3565 = vmatprep.mubr.bf16.mxu0 0
        %3566 = vmatmul.mubr.bf16.gmra.mrb[0].mxu0 %v3514
        %v3567 = vpop.f32.mrb[0].mxu0
        %v3568 = vadd.f32 %v3457, %v3567
        %v3569 = vpop.f32.mrb[0].mxu0
        %v3570 = vpop.f32.mrb[0].mxu0
        %v3571 = vadd.f32 %v3460, %v3570
        %v3572 = vpop.f32.mrb[0].mxu0
        %3573 = vmatprep.mubr.bf16.mxu0 0
        %3574 = vmatmul.mubr.bf16.gmra.mrb[0].mxu0 %v3517
        %v3575 = vpop.f32.mrb[0].mxu0
        %v3576 = vadd.f32 %v3465, %v3575
        %v3577 = vpop.f32.mrb[0].mxu0
        %v3578 = vpop.f32.mrb[0].mxu0
        %v3579 = vadd.f32 %v3468, %v3578
        %v3580 = vpop.f32.mrb[0].mxu0
        %3581 = vmatprep.mubr.bf16.mxu0 0
        %3582 = vmatmul.mubr.bf16.gmra.mrb[0].mxu0 %v3520
        %v3583 = vpop.f32.mrb[0].mxu0
        %v3584 = vadd.f32 %v3473, %v3583
        %v3585 = vpop.f32.mrb[0].mxu0
        %v3586 = vpop.f32.mrb[0].mxu0
        %v3587 = vadd.f32 %v3476, %v3586
        %v3588 = vpop.f32.mrb[0].mxu0
        %3589 = vmatprep.mubr.bf16.mxu0 0
        %3590 = vmatmul.mubr.bf16.gmra.mrb[0].mxu0 %v3523
        %v3591 = vpop.f32.mrb[0].mxu0
        %v3592 = vadd.f32 %v3481, %v3591
        %v3593 = vpop.f32.mrb[0].mxu0
        %v3594 = vpop.f32.mrb[0].mxu0
        %v3595 = vpop.f32.mrb[0].mxu0
        %3596 = vdwg.mxu0
        %v3597 = vld [vmem:[#allocation4 + $0x17] sm:$0xff]
        %v3598 = vld [vmem:[#allocation4 + $0x1f] sm:$0xff]
        %v3599 = vld [vmem:[#allocation4 + $0x27] sm:$0xff]
        %v3600 = vld [vmem:[#allocation4 + $0x2f] sm:$0xff]
        %v3601 = vld [vmem:[#allocation4 + $0x37] sm:$0xff]
        %v3602 = vld [vmem:[#allocation4 + $0x3f] sm:$0xff]
        %v3603 = vld [vmem:[#allocation4 + $0x47] sm:$0xff]
        %v3604 = vld [vmem:[#allocation4 + $0x4f] sm:$0xff]
        %v3605 = vld [vmem:[#allocation4 + $0x57] sm:$0xff]
        %v3606 = vpack.c.bf16 %v3598, %v3597
        %v3607 = vpack.c.bf16 %v3600, %v3599
        %v3608 = vpack.c.bf16 %v3602, %v3601
        %v3609 = vpack.c.bf16 %v3604, %v3603
        %v3610 = vpack.c.bf16 %v3605, %v3605
        %s3611 = scalar_lea.vmem %s5, 96
        %v3612 = vld [vmem:[%s3611] sm:$0xf]
        %v3613 = vld [vmem:[%s3611 + $0x4] sm:$0xf]
        %v3614 = vld [vmem:[%s3611 + $0x8] sm:$0xf]
        %v3615 = vld [vmem:[%s3611 + $0xc] sm:$0xf]
        %v3616 = vld [vmem:[%s3611 + $0x10] sm:$0xf]
        %v3617 = vld [vmem:[%s3611 + $0x14] sm:$0xf]
        %v3618 = vld [vmem:[%s3611 + $0x18] sm:$0xf]
        %v3619 = vld [vmem:[%s3611 + $0x1c] sm:$0xf]
        %v3628 = vunpack.c.l.b16 %v3612
        %v3629 = vunpack.c.l.b16 %v3613
        %v3630 = vunpack.c.l.b16 %v3614
        %v3631 = vunpack.c.l.b16 %v3615
        %v3632 = vunpack.c.l.b16 %v3616
        %v3633 = vunpack.c.l.b16 %v3617
        %v3634 = vunpack.c.l.b16 %v3618
        %v3635 = vunpack.c.l.b16 %v3619
        %v3636 = vpack.c.b16 %v3629, %v3628
        %v3637 = vpack.c.b16 %v3631, %v3630
        %v3638 = vpack.c.b16 %v3633, %v3632
        %v3639 = vpack.c.b16 %v3635, %v3634
        %v3645 = vsel %vm3287, %v3606, 0
        %v3648 = vsel %vm3287, %v3607, 0
        %v3651 = vsel %vm3287, %v3608, 0
        %v3654 = vsel %vm3287, %v3609, 0
        %v3657 = vsel %vm3287, %v3610, 0
        %3659 = vmatprep.subr.bf16.mxu0 0
        %3660 = vmatpush1.bf16.msra.mxu0 %v3636
        %3661 = vmatprep.subr.bf16.mxu0 0
        %3662 = vmatpush1.bf16.msra.mxu0 %v3637
        %3663 = vmatprep.subr.bf16.mxu0 0
        %3664 = vmatpush1.bf16.msra.mxu0 %v3638
        %3665 = vmatprep.subr.bf16.mxu0 0
        %3666 = vmatpush1.bf16.msra.mxu0 %v3639
        %3667 = vmatprep.subr.bf16.mxu0 0
        %3668 = vmatpush1.bf16.msra.mxu0 0
        %3669 = vmatprep.subr.bf16.mxu0 0
        %3670 = vmatpush1.bf16.msra.mxu0 0
        %3671 = vmatprep.subr.bf16.mxu0 0
        %3672 = vmatpush1.bf16.msra.mxu0 0
        %3673 = vmatprep.subr.bf16.mxu0 0
        %3674 = vmatpush1.bf16.msra.mxu0 0
        %3675 = vmatprep.subr.bf16.mxu0 0
        %3676 = vmatpush1.bf16.msra.mxu0 0
        %3677 = vmatprep.subr.bf16.mxu0 0
        %3678 = vmatpush1.bf16.msra.mxu0 0
        %3679 = vmatprep.subr.bf16.mxu0 0
        %3680 = vmatpush1.bf16.msra.mxu0 0
        %3681 = vmatprep.subr.bf16.mxu0 0
        %3682 = vmatpush1.bf16.msra.mxu0 0
        %3683 = vmatprep.subr.bf16.mxu0 0
        %3684 = vmatpush1.bf16.msra.mxu0 0
        %3685 = vmatprep.subr.bf16.mxu0 0
        %3686 = vmatpush1.bf16.msra.mxu0 0
        %3687 = vmatprep.subr.bf16.mxu0 0
        %3688 = vmatpush1.bf16.msra.mxu0 0
        %3689 = vmatprep.subr.bf16.mxu0 0
        %3690 = vmatpush1.bf16.msra.mxu0 0
        %3691 = vmatprep.mubr.bf16.mxu0 0
        %3692 = vmatmul.mubr.bf16.gmra.mrb[0].mxu0 %v3645
        %v3693 = vpop.f32.mrb[0].mxu0
        %v3694 = vadd.f32 0.0, %v3693
        %v3695 = vpop.f32.mrb[0].mxu0
        %v3696 = vpop.f32.mrb[0].mxu0
        %v3697 = vadd.f32 0.0, %v3696
        %v3698 = vpop.f32.mrb[0].mxu0
        %3699 = vmatprep.mubr.bf16.mxu0 0
        %3700 = vmatmul.mubr.bf16.gmra.mrb[0].mxu0 %v3648
        %v3701 = vpop.f32.mrb[0].mxu0
        %v3702 = vadd.f32 0.0, %v3701
        %v3703 = vpop.f32.mrb[0].mxu0
        %v3704 = vpop.f32.mrb[0].mxu0
        %v3705 = vadd.f32 0.0, %v3704
        %v3706 = vpop.f32.mrb[0].mxu0
        %3707 = vmatprep.mubr.bf16.mxu0 0
        %3708 = vmatmul.mubr.bf16.gmra.mrb[0].mxu0 %v3651
        %v3709 = vpop.f32.mrb[0].mxu0
        %v3710 = vadd.f32 0.0, %v3709
        %v3711 = vpop.f32.mrb[0].mxu0
        %v3712 = vpop.f32.mrb[0].mxu0
        %v3713 = vadd.f32 0.0, %v3712
        %v3714 = vpop.f32.mrb[0].mxu0
        %3715 = vmatprep.mubr.bf16.mxu0 0
        %3716 = vmatmul.mubr.bf16.gmra.mrb[0].mxu0 %v3654
        %v3717 = vpop.f32.mrb[0].mxu0
        %v3718 = vadd.f32 0.0, %v3717
        %v3719 = vpop.f32.mrb[0].mxu0
        %v3720 = vpop.f32.mrb[0].mxu0
        %v3721 = vadd.f32 0.0, %v3720
        %v3722 = vpop.f32.mrb[0].mxu0
        %3723 = vmatprep.mubr.bf16.mxu0 0
        %3724 = vmatmul.mubr.bf16.gmra.mrb[0].mxu0 %v3657
        %v3725 = vpop.f32.mrb[0].mxu0
        %v3726 = vadd.f32 0.0, %v3725
        %v3727 = vpop.f32.mrb[0].mxu0
        %v3728 = vpop.f32.mrb[0].mxu0
        %v3729 = vpop.f32.mrb[0].mxu0
        %3730 = vdwg.mxu0
        %v3739 = vunpack.c.l.b16 %v3344
        %v3740 = vunpack.c.l.b16 %v3345
        %v3741 = vunpack.c.l.b16 %v3346
        %v3742 = vunpack.c.l.b16 %v3347
        %v3743 = vunpack.c.l.b16 %v3348
        %v3744 = vunpack.c.l.b16 %v3349
        %v3745 = vunpack.c.l.b16 %v3350
        %v3746 = vunpack.c.l.b16 %v3351
        %v3747 = vpack.c.b16 %v3740, %v3739
        %v3748 = vpack.c.b16 %v3742, %v3741
        %v3749 = vpack.c.b16 %v3744, %v3743
        %v3750 = vpack.c.b16 %v3746, %v3745
        %v3756 = vsel %vm3287, %v3338, 0
        %v3759 = vsel %vm3287, %v3339, 0
        %v3762 = vsel %vm3287, %v3340, 0
        %v3765 = vsel %vm3287, %v3341, 0
        %v3768 = vsel %vm3287, %v3342, 0
        %3770 = vmatprep.subr.bf16.mxu0 0
        %3771 = vmatpush1.bf16.msra.mxu0 %v3747
        %3772 = vmatprep.subr.bf16.mxu0 0
        %3773 = vmatpush1.bf16.msra.mxu0 %v3748
        %3774 = vmatprep.subr.bf16.mxu0 0
        %3775 = vmatpush1.bf16.msra.mxu0 %v3749
        %3776 = vmatprep.subr.bf16.mxu0 0
        %3777 = vmatpush1.bf16.msra.mxu0 %v3750
        %3778 = vmatprep.subr.bf16.mxu0 0
        %3779 = vmatpush1.bf16.msra.mxu0 0
        %3780 = vmatprep.subr.bf16.mxu0 0
        %3781 = vmatpush1.bf16.msra.mxu0 0
        %3782 = vmatprep.subr.bf16.mxu0 0
        %3783 = vmatpush1.bf16.msra.mxu0 0
        %3784 = vmatprep.subr.bf16.mxu0 0
        %3785 = vmatpush1.bf16.msra.mxu0 0
        %3786 = vmatprep.subr.bf16.mxu0 0
        %3787 = vmatpush1.bf16.msra.mxu0 0
        %3788 = vmatprep.subr.bf16.mxu0 0
        %3789 = vmatpush1.bf16.msra.mxu0 0
        %3790 = vmatprep.subr.bf16.mxu0 0
        %3791 = vmatpush1.bf16.msra.mxu0 0
        %3792 = vmatprep.subr.bf16.mxu0 0
        %3793 = vmatpush1.bf16.msra.mxu0 0
        %3794 = vmatprep.subr.bf16.mxu0 0
        %3795 = vmatpush1.bf16.msra.mxu0 0
        %3796 = vmatprep.subr.bf16.mxu0 0
        %3797 = vmatpush1.bf16.msra.mxu0 0
        %3798 = vmatprep.subr.bf16.mxu0 0
        %3799 = vmatpush1.bf16.msra.mxu0 0
        %3800 = vmatprep.subr.bf16.mxu0 0
        %3801 = vmatpush1.bf16.msra.mxu0 0
        %3802 = vmatprep.mubr.bf16.mxu0 0
        %3803 = vmatmul.mubr.bf16.gmra.mrb[0].mxu0 %v3756
        %v3804 = vpop.f32.mrb[0].mxu0
        %v3805 = vadd.f32 %v3694, %v3804
        %v3806 = vpop.f32.mrb[0].mxu0
        %v3807 = vpop.f32.mrb[0].mxu0
        %v3808 = vadd.f32 %v3697, %v3807
        %v3809 = vpop.f32.mrb[0].mxu0
        %3810 = vmatprep.mubr.bf16.mxu0 0
        %3811 = vmatmul.mubr.bf16.gmra.mrb[0].mxu0 %v3759
        %v3812 = vpop.f32.mrb[0].mxu0
        %v3813 = vadd.f32 %v3702, %v3812
        %v3814 = vpop.f32.mrb[0].mxu0
        %v3815 = vpop.f32.mrb[0].mxu0
        %v3816 = vadd.f32 %v3705, %v3815
        %v3817 = vpop.f32.mrb[0].mxu0
        %3818 = vmatprep.mubr.bf16.mxu0 0
        %3819 = vmatmul.mubr.bf16.gmra.mrb[0].mxu0 %v3762
        %v3820 = vpop.f32.mrb[0].mxu0
        %v3821 = vadd.f32 %v3710, %v3820
        %v3822 = vpop.f32.mrb[0].mxu0
        %v3823 = vpop.f32.mrb[0].mxu0
        %v3824 = vadd.f32 %v3713, %v3823
        %v3825 = vpop.f32.mrb[0].mxu0
        %3826 = vmatprep.mubr.bf16.mxu0 0
        %3827 = vmatmul.mubr.bf16.gmra.mrb[0].mxu0 %v3765
        %v3828 = vpop.f32.mrb[0].mxu0
        %v3829 = vadd.f32 %v3718, %v3828
        %v3830 = vpop.f32.mrb[0].mxu0
        %v3831 = vpop.f32.mrb[0].mxu0
        %v3832 = vadd.f32 %v3721, %v3831
        %v3833 = vpop.f32.mrb[0].mxu0
        %3834 = vmatprep.mubr.bf16.mxu0 0
        %3835 = vmatmul.mubr.bf16.gmra.mrb[0].mxu0 %v3768
        %v3836 = vpop.f32.mrb[0].mxu0
        %v3837 = vadd.f32 %v3726, %v3836
        %v3838 = vpop.f32.mrb[0].mxu0
        %v3839 = vpop.f32.mrb[0].mxu0
        %v3840 = vpop.f32.mrb[0].mxu0
        %3841 = vdwg.mxu0
        %v3842 = vld [vmem:[#allocation4 + $0x18] sm:$0xff]
        %v3843 = vld [vmem:[#allocation4 + $0x20] sm:$0xff]
        %v3844 = vld [vmem:[#allocation4 + $0x28] sm:$0xff]
        %v3845 = vld [vmem:[#allocation4 + $0x30] sm:$0xff]
        %v3846 = vld [vmem:[#allocation4 + $0x38] sm:$0xff]
        %v3847 = vld [vmem:[#allocation4 + $0x40] sm:$0xff]
        %v3848 = vld [vmem:[#allocation4 + $0x48] sm:$0xff]
        %v3849 = vld [vmem:[#allocation4 + $0x50] sm:$0xff]
        %v3850 = vld [vmem:[#allocation4 + $0x58] sm:$0xff]
        %v3851 = vpack.c.bf16 %v3843, %v3842
        %v3852 = vpack.c.bf16 %v3845, %v3844
        %v3853 = vpack.c.bf16 %v3847, %v3846
        %v3854 = vpack.c.bf16 %v3849, %v3848
        %v3855 = vpack.c.bf16 %v3850, %v3850
        %s3856 = scalar_lea.vmem %s5, 128
        %v3857 = vld [vmem:[%s3856] sm:$0xf]
        %v3858 = vld [vmem:[%s3856 + $0x4] sm:$0xf]
        %v3859 = vld [vmem:[%s3856 + $0x8] sm:$0xf]
        %v3860 = vld [vmem:[%s3856 + $0xc] sm:$0xf]
        %v3861 = vld [vmem:[%s3856 + $0x10] sm:$0xf]
        %v3862 = vld [vmem:[%s3856 + $0x14] sm:$0xf]
        %v3863 = vld [vmem:[%s3856 + $0x18] sm:$0xf]
        %v3864 = vld [vmem:[%s3856 + $0x1c] sm:$0xf]
        %v3873 = vunpack.c.l.b16 %v3857
        %v3874 = vunpack.c.l.b16 %v3858
        %v3875 = vunpack.c.l.b16 %v3859
        %v3876 = vunpack.c.l.b16 %v3860
        %v3877 = vunpack.c.l.b16 %v3861
        %v3878 = vunpack.c.l.b16 %v3862
        %v3879 = vunpack.c.l.b16 %v3863
        %v3880 = vunpack.c.l.b16 %v3864
        %v3881 = vpack.c.b16 %v3874, %v3873
        %v3882 = vpack.c.b16 %v3876, %v3875
        %v3883 = vpack.c.b16 %v3878, %v3877
        %v3884 = vpack.c.b16 %v3880, %v3879
        %v3890 = vsel %vm3287, %v3851, 0
        %v3893 = vsel %vm3287, %v3852, 0
        %v3896 = vsel %vm3287, %v3853, 0
        %v3899 = vsel %vm3287, %v3854, 0
        %v3902 = vsel %vm3287, %v3855, 0
        %3904 = vmatprep.subr.bf16.mxu0 0
        %3905 = vmatpush1.bf16.msra.mxu0 %v3881
        %3906 = vmatprep.subr.bf16.mxu0 0
        %3907 = vmatpush1.bf16.msra.mxu0 %v3882
        %3908 = vmatprep.subr.bf16.mxu0 0
        %3909 = vmatpush1.bf16.msra.mxu0 %v3883
        %3910 = vmatprep.subr.bf16.mxu0 0
        %3911 = vmatpush1.bf16.msra.mxu0 %v3884
        %3912 = vmatprep.subr.bf16.mxu0 0
        %3913 = vmatpush1.bf16.msra.mxu0 0
        %3914 = vmatprep.subr.bf16.mxu0 0
        %3915 = vmatpush1.bf16.msra.mxu0 0
        %3916 = vmatprep.subr.bf16.mxu0 0
        %3917 = vmatpush1.bf16.msra.mxu0 0
        %3918 = vmatprep.subr.bf16.mxu0 0
        %3919 = vmatpush1.bf16.msra.mxu0 0
        %3920 = vmatprep.subr.bf16.mxu0 0
        %3921 = vmatpush1.bf16.msra.mxu0 0
        %3922 = vmatprep.subr.bf16.mxu0 0
        %3923 = vmatpush1.bf16.msra.mxu0 0
        %3924 = vmatprep.subr.bf16.mxu0 0
        %3925 = vmatpush1.bf16.msra.mxu0 0
        %3926 = vmatprep.subr.bf16.mxu0 0
        %3927 = vmatpush1.bf16.msra.mxu0 0
        %3928 = vmatprep.subr.bf16.mxu0 0
        %3929 = vmatpush1.bf16.msra.mxu0 0
        %3930 = vmatprep.subr.bf16.mxu0 0
        %3931 = vmatpush1.bf16.msra.mxu0 0
        %3932 = vmatprep.subr.bf16.mxu0 0
        %3933 = vmatpush1.bf16.msra.mxu0 0
        %3934 = vmatprep.subr.bf16.mxu0 0
        %3935 = vmatpush1.bf16.msra.mxu0 0
        %3936 = vmatprep.mubr.bf16.mxu0 0
        %3937 = vmatmul.mubr.bf16.gmra.mrb[0].mxu0 %v3890
        %v3938 = vpop.f32.mrb[0].mxu0
        %v3939 = vadd.f32 0.0, %v3938
        %v3940 = vpop.f32.mrb[0].mxu0
        %v3941 = vpop.f32.mrb[0].mxu0
        %v3942 = vadd.f32 0.0, %v3941
        %v3943 = vpop.f32.mrb[0].mxu0
        %3944 = vmatprep.mubr.bf16.mxu0 0
        %3945 = vmatmul.mubr.bf16.gmra.mrb[0].mxu0 %v3893
        %v3946 = vpop.f32.mrb[0].mxu0
        %v3947 = vadd.f32 0.0, %v3946
        %v3948 = vpop.f32.mrb[0].mxu0
        %v3949 = vpop.f32.mrb[0].mxu0
        %v3950 = vadd.f32 0.0, %v3949
        %v3951 = vpop.f32.mrb[0].mxu0
        %3952 = vmatprep.mubr.bf16.mxu0 0
        %3953 = vmatmul.mubr.bf16.gmra.mrb[0].mxu0 %v3896
        %v3954 = vpop.f32.mrb[0].mxu0
        %v3955 = vadd.f32 0.0, %v3954
        %v3956 = vpop.f32.mrb[0].mxu0
        %v3957 = vpop.f32.mrb[0].mxu0
        %v3958 = vadd.f32 0.0, %v3957
        %v3959 = vpop.f32.mrb[0].mxu0
        %3960 = vmatprep.mubr.bf16.mxu0 0
        %3961 = vmatmul.mubr.bf16.gmra.mrb[0].mxu0 %v3899
        %v3962 = vpop.f32.mrb[0].mxu0
        %v3963 = vadd.f32 0.0, %v3962
        %v3964 = vpop.f32.mrb[0].mxu0
        %v3965 = vpop.f32.mrb[0].mxu0
        %v3966 = vadd.f32 0.0, %v3965
        %v3967 = vpop.f32.mrb[0].mxu0
        %3968 = vmatprep.mubr.bf16.mxu0 0
        %3969 = vmatmul.mubr.bf16.gmra.mrb[0].mxu0 %v3902
        %v3970 = vpop.f32.mrb[0].mxu0
        %v3971 = vadd.f32 0.0, %v3970
        %v3972 = vpop.f32.mrb[0].mxu0
        %v3973 = vpop.f32.mrb[0].mxu0
        %v3974 = vpop.f32.mrb[0].mxu0
        %3975 = vdwg.mxu0
        %v3976 = vadd.f32 %v3560, %v3939
        %v3977 = vadd.f32 %v3563, %v3942
        %v3978 = vadd.f32 %v3568, %v3947
        %v3979 = vadd.f32 %v3571, %v3950
        %v3980 = vadd.f32 %v3576, %v3955
        %v3981 = vadd.f32 %v3579, %v3958
        %v3982 = vadd.f32 %v3584, %v3963
        %v3983 = vadd.f32 %v3587, %v3966
        %v3984 = vadd.f32 %v3592, %v3971
        %v3985 = vld [vmem:[#allocation4 + $0x19] sm:$0xff]
        %v3986 = vld [vmem:[#allocation4 + $0x21] sm:$0xff]
        %v3987 = vld [vmem:[#allocation4 + $0x29] sm:$0xff]
        %v3988 = vld [vmem:[#allocation4 + $0x31] sm:$0xff]
        %v3989 = vld [vmem:[#allocation4 + $0x39] sm:$0xff]
        %v3990 = vld [vmem:[#allocation4 + $0x41] sm:$0xff]
        %v3991 = vld [vmem:[#allocation4 + $0x49] sm:$0xff]
        %v3992 = vld [vmem:[#allocation4 + $0x51] sm:$0xff]
        %v3993 = vld [vmem:[#allocation4 + $0x59] sm:$0xff]
        %v3994 = vpack.c.bf16 %v3986, %v3985
        %v3995 = vpack.c.bf16 %v3988, %v3987
        %v3996 = vpack.c.bf16 %v3990, %v3989
        %v3997 = vpack.c.bf16 %v3992, %v3991
        %v3998 = vpack.c.bf16 %v3993, %v3993
        %s3999 = scalar_lea.vmem %s5, 160
        %v4000 = vld [vmem:[%s3999] sm:$0xf]
        %v4001 = vld [vmem:[%s3999 + $0x4] sm:$0xf]
        %v4002 = vld [vmem:[%s3999 + $0x8] sm:$0xf]
        %v4003 = vld [vmem:[%s3999 + $0xc] sm:$0xf]
        %v4004 = vld [vmem:[%s3999 + $0x10] sm:$0xf]
        %v4005 = vld [vmem:[%s3999 + $0x14] sm:$0xf]
        %v4006 = vld [vmem:[%s3999 + $0x18] sm:$0xf]
        %v4007 = vld [vmem:[%s3999 + $0x1c] sm:$0xf]
        %v4016 = vunpack.c.l.b16 %v4000
        %v4017 = vunpack.c.l.b16 %v4001
        %v4018 = vunpack.c.l.b16 %v4002
        %v4019 = vunpack.c.l.b16 %v4003
        %v4020 = vunpack.c.l.b16 %v4004
        %v4021 = vunpack.c.l.b16 %v4005
        %v4022 = vunpack.c.l.b16 %v4006
        %v4023 = vunpack.c.l.b16 %v4007
        %v4024 = vpack.c.b16 %v4017, %v4016
        %v4025 = vpack.c.b16 %v4019, %v4018
        %v4026 = vpack.c.b16 %v4021, %v4020
        %v4027 = vpack.c.b16 %v4023, %v4022
        %v4033 = vsel %vm3287, %v3994, 0
        %v4036 = vsel %vm3287, %v3995, 0
        %v4039 = vsel %vm3287, %v3996, 0
        %v4042 = vsel %vm3287, %v3997, 0
        %v4045 = vsel %vm3287, %v3998, 0
        %4047 = vmatprep.subr.bf16.mxu0 0
        %4048 = vmatpush1.bf16.msra.mxu0 %v4024
        %4049 = vmatprep.subr.bf16.mxu0 0
        %4050 = vmatpush1.bf16.msra.mxu0 %v4025
        %4051 = vmatprep.subr.bf16.mxu0 0
        %4052 = vmatpush1.bf16.msra.mxu0 %v4026
        %4053 = vmatprep.subr.bf16.mxu0 0
        %4054 = vmatpush1.bf16.msra.mxu0 %v4027
        %4055 = vmatprep.subr.bf16.mxu0 0
        %4056 = vmatpush1.bf16.msra.mxu0 0
        %4057 = vmatprep.subr.bf16.mxu0 0
        %4058 = vmatpush1.bf16.msra.mxu0 0
        %4059 = vmatprep.subr.bf16.mxu0 0
        %4060 = vmatpush1.bf16.msra.mxu0 0
        %4061 = vmatprep.subr.bf16.mxu0 0
        %4062 = vmatpush1.bf16.msra.mxu0 0
        %4063 = vmatprep.subr.bf16.mxu0 0
        %4064 = vmatpush1.bf16.msra.mxu0 0
        %4065 = vmatprep.subr.bf16.mxu0 0
        %4066 = vmatpush1.bf16.msra.mxu0 0
        %4067 = vmatprep.subr.bf16.mxu0 0
        %4068 = vmatpush1.bf16.msra.mxu0 0
        %4069 = vmatprep.subr.bf16.mxu0 0
        %4070 = vmatpush1.bf16.msra.mxu0 0
        %4071 = vmatprep.subr.bf16.mxu0 0
        %4072 = vmatpush1.bf16.msra.mxu0 0
        %4073 = vmatprep.subr.bf16.mxu0 0
        %4074 = vmatpush1.bf16.msra.mxu0 0
        %4075 = vmatprep.subr.bf16.mxu0 0
        %4076 = vmatpush1.bf16.msra.mxu0 0
        %4077 = vmatprep.subr.bf16.mxu0 0
        %4078 = vmatpush1.bf16.msra.mxu0 0
        %4079 = vmatprep.mubr.bf16.mxu0 0
        %4080 = vmatmul.mubr.bf16.gmra.mrb[0].mxu0 %v4033
        %v4081 = vpop.f32.mrb[0].mxu0
        %v4082 = vadd.f32 0.0, %v4081
        %v4083 = vpop.f32.mrb[0].mxu0
        %v4084 = vpop.f32.mrb[0].mxu0
        %v4085 = vadd.f32 0.0, %v4084
        %v4086 = vpop.f32.mrb[0].mxu0
        %4087 = vmatprep.mubr.bf16.mxu0 0
        %4088 = vmatmul.mubr.bf16.gmra.mrb[0].mxu0 %v4036
        %v4089 = vpop.f32.mrb[0].mxu0
        %v4090 = vadd.f32 0.0, %v4089
        %v4091 = vpop.f32.mrb[0].mxu0
        %v4092 = vpop.f32.mrb[0].mxu0
        %v4093 = vadd.f32 0.0, %v4092
        %v4094 = vpop.f32.mrb[0].mxu0
        %4095 = vmatprep.mubr.bf16.mxu0 0
        %4096 = vmatmul.mubr.bf16.gmra.mrb[0].mxu0 %v4039
        %v4097 = vpop.f32.mrb[0].mxu0
        %v4098 = vadd.f32 0.0, %v4097
        %v4099 = vpop.f32.mrb[0].mxu0
        %v4100 = vpop.f32.mrb[0].mxu0
        %v4101 = vadd.f32 0.0, %v4100
        %v4102 = vpop.f32.mrb[0].mxu0
        %4103 = vmatprep.mubr.bf16.mxu0 0
        %4104 = vmatmul.mubr.bf16.gmra.mrb[0].mxu0 %v4042
        %v4105 = vpop.f32.mrb[0].mxu0
        %v4106 = vadd.f32 0.0, %v4105
        %v4107 = vpop.f32.mrb[0].mxu0
        %v4108 = vpop.f32.mrb[0].mxu0
        %v4109 = vadd.f32 0.0, %v4108
        %v4110 = vpop.f32.mrb[0].mxu0
        %4111 = vmatprep.mubr.bf16.mxu0 0
        %4112 = vmatmul.mubr.bf16.gmra.mrb[0].mxu0 %v4045
        %v4113 = vpop.f32.mrb[0].mxu0
        %v4114 = vadd.f32 0.0, %v4113
        %v4115 = vpop.f32.mrb[0].mxu0
        %v4116 = vpop.f32.mrb[0].mxu0
        %v4117 = vpop.f32.mrb[0].mxu0
        %4118 = vdwg.mxu0
        %v4119 = vadd.f32 %v3805, %v4082
        %v4120 = vadd.f32 %v3808, %v4085
        %v4121 = vadd.f32 %v3813, %v4090
        %v4122 = vadd.f32 %v3816, %v4093
        %v4123 = vadd.f32 %v3821, %v4098
        %v4124 = vadd.f32 %v3824, %v4101
        %v4125 = vadd.f32 %v3829, %v4106
        %v4126 = vadd.f32 %v3832, %v4109
        %v4127 = vadd.f32 %v3837, %v4114
        %v4128 = vld [vmem:[#allocation4 + $0x29] sm:$0xff]
        %v4129 = vld [vmem:[#allocation4 + $0x31] sm:$0xff]
        %v4130 = vld [vmem:[#allocation4 + $0x39] sm:$0xff]
        %v4131 = vld [vmem:[#allocation4 + $0x41] sm:$0xff]
        %v4132 = vld [vmem:[#allocation4 + $0x49] sm:$0xff]
        %v4133 = vld [vmem:[#allocation4 + $0x51] sm:$0xff]
        %v4134 = vld [vmem:[#allocation4 + $0x59] sm:$0xff]
        %v4135 = vld [vmem:[#allocation4 + $0x61] sm:$0xff]
        %v4136 = vld [vmem:[#allocation4 + $0x69] sm:$0xff]
        %v4137 = vpack.c.bf16 %v4129, %v4128
        %v4138 = vpack.c.bf16 %v4131, %v4130
        %v4139 = vpack.c.bf16 %v4133, %v4132
        %v4140 = vpack.c.bf16 %v4135, %v4134
        %v4141 = vpack.c.bf16 %v4136, %v4136
        %s4142 = scalar_lea.vmem %s5, 192
        %v4143 = vld [vmem:[%s4142] sm:$0xf]
        %v4144 = vld [vmem:[%s4142 + $0x4] sm:$0xf]
        %v4145 = vld [vmem:[%s4142 + $0x8] sm:$0xf]
        %v4146 = vld [vmem:[%s4142 + $0xc] sm:$0xf]
        %v4147 = vld [vmem:[%s4142 + $0x10] sm:$0xf]
        %v4148 = vld [vmem:[%s4142 + $0x14] sm:$0xf]
        %v4149 = vld [vmem:[%s4142 + $0x18] sm:$0xf]
        %v4150 = vld [vmem:[%s4142 + $0x1c] sm:$0xf]
        %v4159 = vunpack.c.l.b16 %v4143
        %v4160 = vunpack.c.l.b16 %v4144
        %v4161 = vunpack.c.l.b16 %v4145
        %v4162 = vunpack.c.l.b16 %v4146
        %v4163 = vunpack.c.l.b16 %v4147
        %v4164 = vunpack.c.l.b16 %v4148
        %v4165 = vunpack.c.l.b16 %v4149
        %v4166 = vunpack.c.l.b16 %v4150
        %v4167 = vpack.c.b16 %v4160, %v4159
        %v4168 = vpack.c.b16 %v4162, %v4161
        %v4169 = vpack.c.b16 %v4164, %v4163
        %v4170 = vpack.c.b16 %v4166, %v4165
        %v4176 = vsel %vm3287, %v4137, 0
        %v4179 = vsel %vm3287, %v4138, 0
        %v4182 = vsel %vm3287, %v4139, 0
        %v4185 = vsel %vm3287, %v4140, 0
        %v4188 = vsel %vm3287, %v4141, 0
        %4190 = vmatprep.subr.bf16.mxu0 0
        %4191 = vmatpush1.bf16.msra.mxu0 %v4167
        %4192 = vmatprep.subr.bf16.mxu0 0
        %4193 = vmatpush1.bf16.msra.mxu0 %v4168
        %4194 = vmatprep.subr.bf16.mxu0 0
        %4195 = vmatpush1.bf16.msra.mxu0 %v4169
        %4196 = vmatprep.subr.bf16.mxu0 0
        %4197 = vmatpush1.bf16.msra.mxu0 %v4170
        %4198 = vmatprep.subr.bf16.mxu0 0
        %4199 = vmatpush1.bf16.msra.mxu0 0
        %4200 = vmatprep.subr.bf16.mxu0 0
        %4201 = vmatpush1.bf16.msra.mxu0 0
        %4202 = vmatprep.subr.bf16.mxu0 0
        %4203 = vmatpush1.bf16.msra.mxu0 0
        %4204 = vmatprep.subr.bf16.mxu0 0
        %4205 = vmatpush1.bf16.msra.mxu0 0
        %4206 = vmatprep.subr.bf16.mxu0 0
        %4207 = vmatpush1.bf16.msra.mxu0 0
        %4208 = vmatprep.subr.bf16.mxu0 0
        %4209 = vmatpush1.bf16.msra.mxu0 0
        %4210 = vmatprep.subr.bf16.mxu0 0
        %4211 = vmatpush1.bf16.msra.mxu0 0
        %4212 = vmatprep.subr.bf16.mxu0 0
        %4213 = vmatpush1.bf16.msra.mxu0 0
        %4214 = vmatprep.subr.bf16.mxu0 0
        %4215 = vmatpush1.bf16.msra.mxu0 0
        %4216 = vmatprep.subr.bf16.mxu0 0
        %4217 = vmatpush1.bf16.msra.mxu0 0
        %4218 = vmatprep.subr.bf16.mxu0 0
        %4219 = vmatpush1.bf16.msra.mxu0 0
        %4220 = vmatprep.subr.bf16.mxu0 0
        %4221 = vmatpush1.bf16.msra.mxu0 0
        %4222 = vmatprep.mubr.bf16.mxu0 0
        %4223 = vmatmul.mubr.bf16.gmra.mrb[0].mxu0 %v4176
        %v4224 = vpop.f32.mrb[0].mxu0
        %v4225 = vadd.f32 0.0, %v4224
        %v4226 = vpop.f32.mrb[0].mxu0
        %v4227 = vpop.f32.mrb[0].mxu0
        %v4228 = vadd.f32 0.0, %v4227
        %v4229 = vpop.f32.mrb[0].mxu0
        %4230 = vmatprep.mubr.bf16.mxu0 0
        %4231 = vmatmul.mubr.bf16.gmra.mrb[0].mxu0 %v4179
        %v4232 = vpop.f32.mrb[0].mxu0
        %v4233 = vadd.f32 0.0, %v4232
        %v4234 = vpop.f32.mrb[0].mxu0
        %v4235 = vpop.f32.mrb[0].mxu0
        %v4236 = vadd.f32 0.0, %v4235
        %v4237 = vpop.f32.mrb[0].mxu0
        %4238 = vmatprep.mubr.bf16.mxu0 0
        %4239 = vmatmul.mubr.bf16.gmra.mrb[0].mxu0 %v4182
        %v4240 = vpop.f32.mrb[0].mxu0
        %v4241 = vadd.f32 0.0, %v4240
        %v4242 = vpop.f32.mrb[0].mxu0
        %v4243 = vpop.f32.mrb[0].mxu0
        %v4244 = vadd.f32 0.0, %v4243
        %v4245 = vpop.f32.mrb[0].mxu0
        %4246 = vmatprep.mubr.bf16.mxu0 0
        %4247 = vmatmul.mubr.bf16.gmra.mrb[0].mxu0 %v4185
        %v4248 = vpop.f32.mrb[0].mxu0
        %v4249 = vadd.f32 0.0, %v4248
        %v4250 = vpop.f32.mrb[0].mxu0
        %v4251 = vpop.f32.mrb[0].mxu0
        %v4252 = vadd.f32 0.0, %v4251
        %v4253 = vpop.f32.mrb[0].mxu0
        %4254 = vmatprep.mubr.bf16.mxu0 0
        %4255 = vmatmul.mubr.bf16.gmra.mrb[0].mxu0 %v4188
        %v4256 = vpop.f32.mrb[0].mxu0
        %v4257 = vadd.f32 0.0, %v4256
        %v4258 = vpop.f32.mrb[0].mxu0
        %v4259 = vpop.f32.mrb[0].mxu0
        %v4260 = vpop.f32.mrb[0].mxu0
        %4261 = vdwg.mxu0
        %v4262 = vadd.f32 %v3976, %v4225
        %v4263 = vadd.f32 %v3977, %v4228
        %v4264 = vadd.f32 %v3978, %v4233
        %v4265 = vadd.f32 %v3979, %v4236
        %v4266 = vadd.f32 %v3980, %v4241
        %v4267 = vadd.f32 %v3981, %v4244
        %v4268 = vadd.f32 %v3982, %v4249
        %v4269 = vadd.f32 %v3983, %v4252
        %v4270 = vadd.f32 %v3984, %v4257
        %v4271 = vld [vmem:[#allocation4 + $0x2a] sm:$0xff]
        %v4272 = vld [vmem:[#allocation4 + $0x32] sm:$0xff]
        %v4273 = vld [vmem:[#allocation4 + $0x3a] sm:$0xff]
        %v4274 = vld [vmem:[#allocation4 + $0x42] sm:$0xff]
        %v4275 = vld [vmem:[#allocation4 + $0x4a] sm:$0xff]
        %v4276 = vld [vmem:[#allocation4 + $0x52] sm:$0xff]
        %v4277 = vld [vmem:[#allocation4 + $0x5a] sm:$0xff]
        %v4278 = vld [vmem:[#allocation4 + $0x62] sm:$0xff]
        %v4279 = vld [vmem:[#allocation4 + $0x6a] sm:$0xff]
        %v4280 = vpack.c.bf16 %v4272, %v4271
        %v4281 = vpack.c.bf16 %v4274, %v4273
        %v4282 = vpack.c.bf16 %v4276, %v4275
        %v4283 = vpack.c.bf16 %v4278, %v4277
        %v4284 = vpack.c.bf16 %v4279, %v4279
        %s4285 = scalar_lea.vmem %s5, 224
        %v4286 = vld [vmem:[%s4285] sm:$0xf]
        %v4287 = vld [vmem:[%s4285 + $0x4] sm:$0xf]
        %v4288 = vld [vmem:[%s4285 + $0x8] sm:$0xf]
        %v4289 = vld [vmem:[%s4285 + $0xc] sm:$0xf]
        %v4290 = vld [vmem:[%s4285 + $0x10] sm:$0xf]
        %v4291 = vld [vmem:[%s4285 + $0x14] sm:$0xf]
        %v4292 = vld [vmem:[%s4285 + $0x18] sm:$0xf]
        %v4293 = vld [vmem:[%s4285 + $0x1c] sm:$0xf]
        %v4302 = vunpack.c.l.b16 %v4286
        %v4303 = vunpack.c.l.b16 %v4287
        %v4304 = vunpack.c.l.b16 %v4288
        %v4305 = vunpack.c.l.b16 %v4289
        %v4306 = vunpack.c.l.b16 %v4290
        %v4307 = vunpack.c.l.b16 %v4291
        %v4308 = vunpack.c.l.b16 %v4292
        %v4309 = vunpack.c.l.b16 %v4293
        %v4310 = vpack.c.b16 %v4303, %v4302
        %v4311 = vpack.c.b16 %v4305, %v4304
        %v4312 = vpack.c.b16 %v4307, %v4306
        %v4313 = vpack.c.b16 %v4309, %v4308
        %v4319 = vsel %vm3287, %v4280, 0
        %v4322 = vsel %vm3287, %v4281, 0
        %v4325 = vsel %vm3287, %v4282, 0
        %v4328 = vsel %vm3287, %v4283, 0
        %v4331 = vsel %vm3287, %v4284, 0
        %4333 = vmatprep.subr.bf16.mxu0 0
        %4334 = vmatpush1.bf16.msra.mxu0 %v4310
        %4335 = vmatprep.subr.bf16.mxu0 0
        %4336 = vmatpush1.bf16.msra.mxu0 %v4311
        %4337 = vmatprep.subr.bf16.mxu0 0
        %4338 = vmatpush1.bf16.msra.mxu0 %v4312
        %4339 = vmatprep.subr.bf16.mxu0 0
        %4340 = vmatpush1.bf16.msra.mxu0 %v4313
        %4341 = vmatprep.subr.bf16.mxu0 0
        %4342 = vmatpush1.bf16.msra.mxu0 0
        %4343 = vmatprep.subr.bf16.mxu0 0
        %4344 = vmatpush1.bf16.msra.mxu0 0
        %4345 = vmatprep.subr.bf16.mxu0 0
        %4346 = vmatpush1.bf16.msra.mxu0 0
        %4347 = vmatprep.subr.bf16.mxu0 0
        %4348 = vmatpush1.bf16.msra.mxu0 0
        %4349 = vmatprep.subr.bf16.mxu0 0
        %4350 = vmatpush1.bf16.msra.mxu0 0
        %4351 = vmatprep.subr.bf16.mxu0 0
        %4352 = vmatpush1.bf16.msra.mxu0 0
        %4353 = vmatprep.subr.bf16.mxu0 0
        %4354 = vmatpush1.bf16.msra.mxu0 0
        %4355 = vmatprep.subr.bf16.mxu0 0
        %4356 = vmatpush1.bf16.msra.mxu0 0
        %4357 = vmatprep.subr.bf16.mxu0 0
        %4358 = vmatpush1.bf16.msra.mxu0 0
        %4359 = vmatprep.subr.bf16.mxu0 0
        %4360 = vmatpush1.bf16.msra.mxu0 0
        %4361 = vmatprep.subr.bf16.mxu0 0
        %4362 = vmatpush1.bf16.msra.mxu0 0
        %4363 = vmatprep.subr.bf16.mxu0 0
        %4364 = vmatpush1.bf16.msra.mxu0 0
        %4365 = vmatprep.mubr.bf16.mxu0 0
        %4366 = vmatmul.mubr.bf16.gmra.mrb[0].mxu0 %v4319
        %v4367 = vpop.f32.mrb[0].mxu0
        %v4368 = vadd.f32 0.0, %v4367
        %v4369 = vpop.f32.mrb[0].mxu0
        %v4370 = vpop.f32.mrb[0].mxu0
        %v4371 = vadd.f32 0.0, %v4370
        %v4372 = vpop.f32.mrb[0].mxu0
        %4373 = vmatprep.mubr.bf16.mxu0 0
        %4374 = vmatmul.mubr.bf16.gmra.mrb[0].mxu0 %v4322
        %v4375 = vpop.f32.mrb[0].mxu0
        %v4376 = vadd.f32 0.0, %v4375
        %v4377 = vpop.f32.mrb[0].mxu0
        %v4378 = vpop.f32.mrb[0].mxu0
        %v4379 = vadd.f32 0.0, %v4378
        %v4380 = vpop.f32.mrb[0].mxu0
        %4381 = vmatprep.mubr.bf16.mxu0 0
        %4382 = vmatmul.mubr.bf16.gmra.mrb[0].mxu0 %v4325
        %v4383 = vpop.f32.mrb[0].mxu0
        %v4384 = vadd.f32 0.0, %v4383
        %v4385 = vpop.f32.mrb[0].mxu0
        %v4386 = vpop.f32.mrb[0].mxu0
        %v4387 = vadd.f32 0.0, %v4386
        %v4388 = vpop.f32.mrb[0].mxu0
        %4389 = vmatprep.mubr.bf16.mxu0 0
        %4390 = vmatmul.mubr.bf16.gmra.mrb[0].mxu0 %v4328
        %v4391 = vpop.f32.mrb[0].mxu0
        %v4392 = vadd.f32 0.0, %v4391
        %v4393 = vpop.f32.mrb[0].mxu0
        %v4394 = vpop.f32.mrb[0].mxu0
        %v4395 = vadd.f32 0.0, %v4394
        %v4396 = vpop.f32.mrb[0].mxu0
        %4397 = vmatprep.mubr.bf16.mxu0 0
        %4398 = vmatmul.mubr.bf16.gmra.mrb[0].mxu0 %v4331
        %v4399 = vpop.f32.mrb[0].mxu0
        %v4400 = vadd.f32 0.0, %v4399
        %v4401 = vpop.f32.mrb[0].mxu0
        %v4402 = vpop.f32.mrb[0].mxu0
        %v4403 = vpop.f32.mrb[0].mxu0
        %4404 = vdwg.mxu0
        %v4405 = vadd.f32 %v4119, %v4368
        %v4406 = vadd.f32 %v4120, %v4371
        %v4407 = vadd.f32 %v4121, %v4376
        %v4408 = vadd.f32 %v4122, %v4379
        %v4409 = vadd.f32 %v4123, %v4384
        %v4410 = vadd.f32 %v4124, %v4387
        %v4411 = vadd.f32 %v4125, %v4392
        %v4412 = vadd.f32 %v4126, %v4395
        %v4413 = vadd.f32 %v4127, %v4400
        %v4414 = vld [vmem:[#allocation4 + $0x2b] sm:$0xff]
        %v4415 = vld [vmem:[#allocation4 + $0x33] sm:$0xff]
        %v4416 = vld [vmem:[#allocation4 + $0x3b] sm:$0xff]
        %v4417 = vld [vmem:[#allocation4 + $0x43] sm:$0xff]
        %v4418 = vld [vmem:[#allocation4 + $0x4b] sm:$0xff]
        %v4419 = vld [vmem:[#allocation4 + $0x53] sm:$0xff]
        %v4420 = vld [vmem:[#allocation4 + $0x5b] sm:$0xff]
        %v4421 = vld [vmem:[#allocation4 + $0x63] sm:$0xff]
        %v4422 = vld [vmem:[#allocation4 + $0x6b] sm:$0xff]
        %v4423 = vpack.c.bf16 %v4415, %v4414
        %v4424 = vpack.c.bf16 %v4417, %v4416
        %v4425 = vpack.c.bf16 %v4419, %v4418
        %v4426 = vpack.c.bf16 %v4421, %v4420
        %v4427 = vpack.c.bf16 %v4422, %v4422
        %s4428 = scalar_lea.vmem %s5, 256
        %v4429 = vld [vmem:[%s4428] sm:$0xf]
        %v4430 = vld [vmem:[%s4428 + $0x4] sm:$0xf]
        %v4431 = vld [vmem:[%s4428 + $0x8] sm:$0xf]
        %v4432 = vld [vmem:[%s4428 + $0xc] sm:$0xf]
        %v4433 = vld [vmem:[%s4428 + $0x10] sm:$0xf]
        %v4434 = vld [vmem:[%s4428 + $0x14] sm:$0xf]
        %v4435 = vld [vmem:[%s4428 + $0x18] sm:$0xf]
        %v4436 = vld [vmem:[%s4428 + $0x1c] sm:$0xf]
        %v4445 = vunpack.c.l.b16 %v4429
        %v4446 = vunpack.c.l.b16 %v4430
        %v4447 = vunpack.c.l.b16 %v4431
        %v4448 = vunpack.c.l.b16 %v4432
        %v4449 = vunpack.c.l.b16 %v4433
        %v4450 = vunpack.c.l.b16 %v4434
        %v4451 = vunpack.c.l.b16 %v4435
        %v4452 = vunpack.c.l.b16 %v4436
        %v4453 = vpack.c.b16 %v4446, %v4445
        %v4454 = vpack.c.b16 %v4448, %v4447
        %v4455 = vpack.c.b16 %v4450, %v4449
        %v4456 = vpack.c.b16 %v4452, %v4451
        %v4462 = vsel %vm3287, %v4423, 0
        %v4465 = vsel %vm3287, %v4424, 0
        %v4468 = vsel %vm3287, %v4425, 0
        %v4471 = vsel %vm3287, %v4426, 0
        %v4474 = vsel %vm3287, %v4427, 0
        %4476 = vmatprep.subr.bf16.mxu0 0
        %4477 = vmatpush1.bf16.msra.mxu0 %v4453
        %4478 = vmatprep.subr.bf16.mxu0 0
        %4479 = vmatpush1.bf16.msra.mxu0 %v4454
        %4480 = vmatprep.subr.bf16.mxu0 0
        %4481 = vmatpush1.bf16.msra.mxu0 %v4455
        %4482 = vmatprep.subr.bf16.mxu0 0
        %4483 = vmatpush1.bf16.msra.mxu0 %v4456
        %4484 = vmatprep.subr.bf16.mxu0 0
        %4485 = vmatpush1.bf16.msra.mxu0 0
        %4486 = vmatprep.subr.bf16.mxu0 0
        %4487 = vmatpush1.bf16.msra.mxu0 0
        %4488 = vmatprep.subr.bf16.mxu0 0
        %4489 = vmatpush1.bf16.msra.mxu0 0
        %4490 = vmatprep.subr.bf16.mxu0 0
        %4491 = vmatpush1.bf16.msra.mxu0 0
        %4492 = vmatprep.subr.bf16.mxu0 0
        %4493 = vmatpush1.bf16.msra.mxu0 0
        %4494 = vmatprep.subr.bf16.mxu0 0
        %4495 = vmatpush1.bf16.msra.mxu0 0
        %4496 = vmatprep.subr.bf16.mxu0 0
        %4497 = vmatpush1.bf16.msra.mxu0 0
        %4498 = vmatprep.subr.bf16.mxu0 0
        %4499 = vmatpush1.bf16.msra.mxu0 0
        %4500 = vmatprep.subr.bf16.mxu0 0
        %4501 = vmatpush1.bf16.msra.mxu0 0
        %4502 = vmatprep.subr.bf16.mxu0 0
        %4503 = vmatpush1.bf16.msra.mxu0 0
        %4504 = vmatprep.subr.bf16.mxu0 0
        %4505 = vmatpush1.bf16.msra.mxu0 0
        %4506 = vmatprep.subr.bf16.mxu0 0
        %4507 = vmatpush1.bf16.msra.mxu0 0
        %4508 = vmatprep.mubr.bf16.mxu0 0
        %4509 = vmatmul.mubr.bf16.gmra.mrb[0].mxu0 %v4462
        %v4510 = vpop.f32.mrb[0].mxu0
        %v4511 = vadd.f32 0.0, %v4510
        %v4512 = vpop.f32.mrb[0].mxu0
        %v4513 = vpop.f32.mrb[0].mxu0
        %v4514 = vadd.f32 0.0, %v4513
        %v4515 = vpop.f32.mrb[0].mxu0
        %4516 = vmatprep.mubr.bf16.mxu0 0
        %4517 = vmatmul.mubr.bf16.gmra.mrb[0].mxu0 %v4465
        %v4518 = vpop.f32.mrb[0].mxu0
        %v4519 = vadd.f32 0.0, %v4518
        %v4520 = vpop.f32.mrb[0].mxu0
        %v4521 = vpop.f32.mrb[0].mxu0
        %v4522 = vadd.f32 0.0, %v4521
        %v4523 = vpop.f32.mrb[0].mxu0
        %4524 = vmatprep.mubr.bf16.mxu0 0
        %4525 = vmatmul.mubr.bf16.gmra.mrb[0].mxu0 %v4468
        %v4526 = vpop.f32.mrb[0].mxu0
        %v4527 = vadd.f32 0.0, %v4526
        %v4528 = vpop.f32.mrb[0].mxu0
        %v4529 = vpop.f32.mrb[0].mxu0
        %v4530 = vadd.f32 0.0, %v4529
        %v4531 = vpop.f32.mrb[0].mxu0
        %4532 = vmatprep.mubr.bf16.mxu0 0
        %4533 = vmatmul.mubr.bf16.gmra.mrb[0].mxu0 %v4471
        %v4534 = vpop.f32.mrb[0].mxu0
        %v4535 = vadd.f32 0.0, %v4534
        %v4536 = vpop.f32.mrb[0].mxu0
        %v4537 = vpop.f32.mrb[0].mxu0
        %v4538 = vadd.f32 0.0, %v4537
        %v4539 = vpop.f32.mrb[0].mxu0
        %4540 = vmatprep.mubr.bf16.mxu0 0
        %4541 = vmatmul.mubr.bf16.gmra.mrb[0].mxu0 %v4474
        %v4542 = vpop.f32.mrb[0].mxu0
        %v4543 = vadd.f32 0.0, %v4542
        %v4544 = vpop.f32.mrb[0].mxu0
        %v4545 = vpop.f32.mrb[0].mxu0
        %v4546 = vpop.f32.mrb[0].mxu0
        %4547 = vdwg.mxu0
        %v4548 = vadd.f32 %v4262, %v4511
        %v4549 = vadd.f32 %v4263, %v4514
        %v4550 = vadd.f32 %v4264, %v4519
        %v4551 = vadd.f32 %v4265, %v4522
        %v4552 = vadd.f32 %v4266, %v4527
        %v4553 = vadd.f32 %v4267, %v4530
        %v4554 = vadd.f32 %v4268, %v4535
        %v4555 = vadd.f32 %v4269, %v4538
        %v4556 = vadd.f32 %v4270, %v4543
        %v4557 = vadd.f32 %v4548, %v4405
        %v4558 = vadd.f32 %v4549, %v4406
        %v4559 = vadd.f32 %v4550, %v4407
        %v4560 = vadd.f32 %v4551, %v4408
        %v4561 = vadd.f32 %v4552, %v4409
        %v4562 = vadd.f32 %v4553, %v4410
        %v4563 = vadd.f32 %v4554, %v4411
        %v4564 = vadd.f32 %v4555, %v4412
        %v4565 = vadd.f32 %v4556, %v4413
        %v4566 = vld [vmem:[%s6] sm:$0x1]
        %v4568 = vlaneseq
        %v4569 = vshrl.u32 %v4568, 7
        %v4570 = vsub.s32 0, %v4569
        %v4571 = vrot.slane %v4566, %v4570
        %v4573 = vadd.f32 %v4557, %v4571
        %v4574 = vadd.f32 %v4558, %v4571
        %v4575 = vadd.f32 %v4559, %v4571
        %v4576 = vadd.f32 %v4560, %v4571
        %v4577 = vadd.f32 %v4561, %v4571
        %v4578 = vadd.f32 %v4562, %v4571
        %v4579 = vadd.f32 %v4563, %v4571
        %v4580 = vadd.f32 %v4564, %v4571
        %v4581 = vadd.f32 %v4565, %v4571
        %v4582 = vmax.f32 %v4573, 0.0
        %v4583 = vmax.f32 %v4574, 0.0
        %v4584 = vmax.f32 %v4575, 0.0
        %v4585 = vmax.f32 %v4576, 0.0
        %v4586 = vmax.f32 %v4577, 0.0
        %v4587 = vmax.f32 %v4578, 0.0
        %v4588 = vmax.f32 %v4579, 0.0
        %v4589 = vmax.f32 %v4580, 0.0
        %v4590 = vmax.f32 %v4581, 0.0
        %v4591 = vld [vmem:[%s15] sm:$0xff]
        %v4592 = vld [vmem:[%s15 + $0x8] sm:$0xff]
        %v4593 = vld [vmem:[%s15 + $0x10] sm:$0xff]
        %v4594 = vld [vmem:[%s15 + $0x18] sm:$0xff]
        %v4595 = vld [vmem:[%s15 + $0x20] sm:$0xff]
        %v4596 = vld [vmem:[%s15 + $0x28] sm:$0xff]
        %v4597 = vld [vmem:[%s15 + $0x30] sm:$0xff]
        %v4598 = vld [vmem:[%s15 + $0x38] sm:$0xff]
        %v4599 = vld [vmem:[%s15 + $0x40] sm:$0xff]
        %vm4600 = vcmp.gt.f32.partialorder %v4591, 0.5
        %vm4601 = vcmp.gt.f32.partialorder %v4592, 0.5
        %vm4602 = vcmp.gt.f32.partialorder %v4593, 0.5
        %vm4603 = vcmp.gt.f32.partialorder %v4594, 0.5
        %vm4604 = vcmp.gt.f32.partialorder %v4595, 0.5
        %vm4605 = vcmp.gt.f32.partialorder %v4596, 0.5
        %vm4606 = vcmp.gt.f32.partialorder %v4597, 0.5
        %vm4607 = vcmp.gt.f32.partialorder %v4598, 0.5
        %vm4608 = vcmp.gt.f32.partialorder %v4599, 0.5
        %v4609 = vsel %vm4600, 1, 0
        %v4610 = vsel %vm4601, 1, 0
        %v4611 = vsel %vm4602, 1, 0
        %v4612 = vsel %vm4603, 1, 0
        %v4613 = vsel %vm4604, 1, 0
        %v4614 = vsel %vm4605, 1, 0
        %v4615 = vsel %vm4606, 1, 0
        %v4616 = vsel %vm4607, 1, 0
        %v4617 = vsel %vm4608, 1, 0
        %4618 = vset.pattern.permute.xlu0 0
        %4619 = vperm.xlu0 %4618, %v4609
        %v4620 = vpop.permute.xlu0 %4619
        %4621 = vset.pattern.permute.xlu0 0
        %4622 = vperm.xlu0 %4621, %v4610
        %v4623 = vpop.permute.xlu0 %4622
        %4624 = vset.pattern.permute.xlu0 0
        %4625 = vperm.xlu0 %4624, %v4611
        %v4626 = vpop.permute.xlu0 %4625
        %4627 = vset.pattern.permute.xlu0 0
        %4628 = vperm.xlu0 %4627, %v4612
        %v4629 = vpop.permute.xlu0 %4628
        %4630 = vset.pattern.permute.xlu0 0
        %4631 = vperm.xlu0 %4630, %v4613
        %v4632 = vpop.permute.xlu0 %4631
        %4633 = vset.pattern.permute.xlu0 0
        %4634 = vperm.xlu0 %4633, %v4614
        %v4635 = vpop.permute.xlu0 %4634
        %4636 = vset.pattern.permute.xlu0 0
        %4637 = vperm.xlu0 %4636, %v4615
        %v4638 = vpop.permute.xlu0 %4637
        %4639 = vset.pattern.permute.xlu0 0
        %4640 = vperm.xlu0 %4639, %v4616
        %v4641 = vpop.permute.xlu0 %4640
        %4642 = vset.pattern.permute.xlu0 0
        %4643 = vperm.xlu0 %4642, %v4617
        %v4644 = vpop.permute.xlu0 %4643
        %vm4645 = vcmp.eq.s32.totalorder %v4620, 1
        %vm4646 = vcmp.eq.s32.totalorder %v4623, 1
        %vm4647 = vcmp.eq.s32.totalorder %v4626, 1
        %vm4648 = vcmp.eq.s32.totalorder %v4629, 1
        %vm4649 = vcmp.eq.s32.totalorder %v4632, 1
        %vm4650 = vcmp.eq.s32.totalorder %v4635, 1
        %vm4651 = vcmp.eq.s32.totalorder %v4638, 1
        %vm4652 = vcmp.eq.s32.totalorder %v4641, 1
        %vm4653 = vcmp.eq.s32.totalorder %v4644, 1
        %v4654 = vsel %vm4645, %v4582, 0.0
        %v4655 = vsel %vm4646, %v4583, 0.0
        %v4656 = vsel %vm4647, %v4584, 0.0
        %v4657 = vsel %vm4648, %v4585, 0.0
        %v4658 = vsel %vm4649, %v4586, 0.0
        %v4659 = vsel %vm4650, %v4587, 0.0
        %v4660 = vsel %vm4651, %v4588, 0.0
        %v4661 = vsel %vm4652, %v4589, 0.0
        %v4662 = vsel %vm4653, %v4590, 0.0
        %4663 = vst.msk [vmem:[#allocation5] sm:$0xff] %vm3287, 0.0
        %4664 = vst.msk [vmem:[#allocation5 + $0x8] sm:$0xff] %vm3287, 0.0
        %4665 = vst.msk [vmem:[#allocation5 + $0x10] sm:$0xff] %vm3287, 0.0
        %4666 = vst.msk [vmem:[#allocation5 + $0x18] sm:$0xff] %vm3287, %v4654
        %4667 = vst.msk [vmem:[#allocation5 + $0x20] sm:$0xff] %vm3287, %v4655
        %4668 = vst.msk [vmem:[#allocation5 + $0x28] sm:$0xff] %vm3287, %v4656
        %4669 = vst.msk [vmem:[#allocation5 + $0x30] sm:$0xff] %vm3287, %v4657
        %4670 = vst.msk [vmem:[#allocation5 + $0x38] sm:$0xff] %vm3287, %v4658
        %4671 = vst.msk [vmem:[#allocation5 + $0x40] sm:$0xff] %vm3287, %v4659
        %4672 = vst.msk [vmem:[#allocation5 + $0x48] sm:$0xff] %vm3287, %v4660
        %4673 = vst.msk [vmem:[#allocation5 + $0x50] sm:$0xff] %vm3287, %v4661
        %4674 = vst.msk [vmem:[#allocation5 + $0x58] sm:$0xff] %vm3287, %v4662
        %4675 = vst.msk [vmem:[#allocation5 + $0x60] sm:$0xff] %vm3287, 0.0
        %4676 = vst.msk [vmem:[#allocation5 + $0x68] sm:$0xff] %vm3287, 0.0
        %4677 = vst.msk [vmem:[#allocation5 + $0x70] sm:$0xff] %vm3287, 0.0
        %4678 = vst.msk [vmem:[#allocation5 + $0x78] sm:$0xff] %vm3287, 0.0
        %4679 = vst.msk [vmem:[#allocation5 + $0x80] sm:$0xff] %vm3287, 0.0
        %4680 = vst.msk [vmem:[#allocation5 + $0x88] sm:$0xff] %vm3287, 0.0
        %4681 = vst.msk [vmem:[#allocation5 + $0x90] sm:$0xff] %vm3287, 0.0
        %s4682 = scalar_lea.vmem [#allocation5], 5
        %v4683 = vld [vmem:[%s4682] ss:$2 sm:$0xff]
        %s4684 = scalar_lea.vmem [#allocation5], 21
        %v4685 = vld [vmem:[%s4684] ss:$2 sm:$0xff]
        %s4686 = scalar_lea.vmem [#allocation5], 37
        %v4687 = vld [vmem:[%s4686] ss:$2 sm:$0xff]
        %s4688 = scalar_lea.vmem [#allocation5], 53
        %v4689 = vld [vmem:[%s4688] ss:$2 sm:$0xff]
        %s4690 = scalar_lea.vmem [#allocation5], 69
        %v4691 = vld [vmem:[%s4690] ss:$2 sm:$0xf]
        %v4692 = vpack.c.bf16 %v4685, %v4683
        %v4693 = vpack.c.bf16 %v4689, %v4687
        %v4694 = vpack.c.bf16 %v4691, %v4691
        %v4695 = vld [vmem:[%s7] sm:$0xf]
        %v4696 = vld [vmem:[%s7 + $0x4] sm:$0xf]
        %v4697 = vld [vmem:[%s7 + $0x8] sm:$0xf]
        %v4698 = vld [vmem:[%s7 + $0xc] sm:$0xf]
        %v4699 = vld [vmem:[%s7 + $0x10] sm:$0xf]
        %v4700 = vld [vmem:[%s7 + $0x14] sm:$0xf]
        %v4701 = vld [vmem:[%s7 + $0x18] sm:$0xf]
        %v4702 = vld [vmem:[%s7 + $0x1c] sm:$0xf]
        %s4703 = scalar_lea.vmem [#allocation5], 6
        %v4704 = vld [vmem:[%s4703] ss:$2 sm:$0xff]
        %s4705 = scalar_lea.vmem [#allocation5], 22
        %v4706 = vld [vmem:[%s4705] ss:$2 sm:$0xff]
        %s4707 = scalar_lea.vmem [#allocation5], 38
        %v4708 = vld [vmem:[%s4707] ss:$2 sm:$0xff]
        %s4709 = scalar_lea.vmem [#allocation5], 54
        %v4710 = vld [vmem:[%s4709] ss:$2 sm:$0xff]
        %s4711 = scalar_lea.vmem [#allocation5], 70
        %v4712 = vld [vmem:[%s4711] ss:$2 sm:$0xf]
        %v4713 = vpack.c.bf16 %v4706, %v4704
        %v4714 = vpack.c.bf16 %v4710, %v4708
        %v4715 = vpack.c.bf16 %v4712, %v4712
        %s4716 = scalar_lea.vmem %s7, 32
        %v4717 = vld [vmem:[%s4716] sm:$0xf]
        %v4718 = vld [vmem:[%s4716 + $0x4] sm:$0xf]
        %v4719 = vld [vmem:[%s4716 + $0x8] sm:$0xf]
        %v4720 = vld [vmem:[%s4716 + $0xc] sm:$0xf]
        %v4721 = vld [vmem:[%s4716 + $0x10] sm:$0xf]
        %v4722 = vld [vmem:[%s4716 + $0x14] sm:$0xf]
        %v4723 = vld [vmem:[%s4716 + $0x18] sm:$0xf]
        %v4724 = vld [vmem:[%s4716 + $0x1c] sm:$0xf]
        %s4725 = scalar_lea.vmem [#allocation5], 7
        %v4726 = vld [vmem:[%s4725] ss:$2 sm:$0xff]
        %s4727 = scalar_lea.vmem [#allocation5], 23
        %v4728 = vld [vmem:[%s4727] ss:$2 sm:$0xff]
        %s4729 = scalar_lea.vmem [#allocation5], 39
        %v4730 = vld [vmem:[%s4729] ss:$2 sm:$0xff]
        %s4731 = scalar_lea.vmem [#allocation5], 55
        %v4732 = vld [vmem:[%s4731] ss:$2 sm:$0xff]
        %s4733 = scalar_lea.vmem [#allocation5], 71
        %v4734 = vld [vmem:[%s4733] ss:$2 sm:$0xf]
        %v4735 = vpack.c.bf16 %v4728, %v4726
        %v4736 = vpack.c.bf16 %v4732, %v4730
        %v4737 = vpack.c.bf16 %v4734, %v4734
        %s4738 = scalar_lea.vmem %s7, 64
        %v4739 = vld [vmem:[%s4738] sm:$0xf]
        %v4740 = vld [vmem:[%s4738 + $0x4] sm:$0xf]
        %v4741 = vld [vmem:[%s4738 + $0x8] sm:$0xf]
        %v4742 = vld [vmem:[%s4738 + $0xc] sm:$0xf]
        %v4743 = vld [vmem:[%s4738 + $0x10] sm:$0xf]
        %v4744 = vld [vmem:[%s4738 + $0x14] sm:$0xf]
        %v4745 = vld [vmem:[%s4738 + $0x18] sm:$0xf]
        %v4746 = vld [vmem:[%s4738 + $0x1c] sm:$0xf]
        %v4755 = vunpack.c.l.b16 %v4739
        %v4756 = vunpack.c.l.b16 %v4740
        %v4757 = vunpack.c.l.b16 %v4741
        %v4758 = vunpack.c.l.b16 %v4742
        %v4759 = vunpack.c.l.b16 %v4743
        %v4760 = vunpack.c.l.b16 %v4744
        %v4761 = vunpack.c.l.b16 %v4745
        %v4762 = vunpack.c.l.b16 %v4746
        %v4763 = vpack.c.b16 %v4756, %v4755
        %v4764 = vpack.c.b16 %v4758, %v4757
        %v4765 = vpack.c.b16 %v4760, %v4759
        %v4766 = vpack.c.b16 %v4762, %v4761
        %v4772 = vsel %vm3287, %v4735, 0
        %v4775 = vsel %vm3287, %v4736, 0
        %v4778 = vsel %vm3287, %v4737, 0
        %4780 = vmatprep.subr.bf16.mxu0 0
        %4781 = vmatpush1.bf16.msra.mxu0 %v4763
        %4782 = vmatprep.subr.bf16.mxu0 0
        %4783 = vmatpush1.bf16.msra.mxu0 %v4764
        %4784 = vmatprep.subr.bf16.mxu0 0
        %4785 = vmatpush1.bf16.msra.mxu0 %v4765
        %4786 = vmatprep.subr.bf16.mxu0 0
        %4787 = vmatpush1.bf16.msra.mxu0 %v4766
        %4788 = vmatprep.subr.bf16.mxu0 0
        %4789 = vmatpush1.bf16.msra.mxu0 0
        %4790 = vmatprep.subr.bf16.mxu0 0
        %4791 = vmatpush1.bf16.msra.mxu0 0
        %4792 = vmatprep.subr.bf16.mxu0 0
        %4793 = vmatpush1.bf16.msra.mxu0 0
        %4794 = vmatprep.subr.bf16.mxu0 0
        %4795 = vmatpush1.bf16.msra.mxu0 0
        %4796 = vmatprep.subr.bf16.mxu0 0
        %4797 = vmatpush1.bf16.msra.mxu0 0
        %4798 = vmatprep.subr.bf16.mxu0 0
        %4799 = vmatpush1.bf16.msra.mxu0 0
        %4800 = vmatprep.subr.bf16.mxu0 0
        %4801 = vmatpush1.bf16.msra.mxu0 0
        %4802 = vmatprep.subr.bf16.mxu0 0
        %4803 = vmatpush1.bf16.msra.mxu0 0
        %4804 = vmatprep.subr.bf16.mxu0 0
        %4805 = vmatpush1.bf16.msra.mxu0 0
        %4806 = vmatprep.subr.bf16.mxu0 0
        %4807 = vmatpush1.bf16.msra.mxu0 0
        %4808 = vmatprep.subr.bf16.mxu0 0
        %4809 = vmatpush1.bf16.msra.mxu0 0
        %4810 = vmatprep.subr.bf16.mxu0 0
        %4811 = vmatpush1.bf16.msra.mxu0 0
        %4812 = vmatprep.mubr.bf16.mxu0 0
        %4813 = vmatmul.mubr.bf16.gmra.mrb[0].mxu0 %v4772
        %v4814 = vpop.f32.mrb[0].mxu0
        %v4815 = vadd.f32 0.0, %v4814
        %v4816 = vpop.f32.mrb[0].mxu0
        %v4817 = vpop.f32.mrb[0].mxu0
        %v4818 = vadd.f32 0.0, %v4817
        %v4819 = vpop.f32.mrb[0].mxu0
        %4820 = vmatprep.mubr.bf16.mxu0 0
        %4821 = vmatmul.mubr.bf16.gmra.mrb[0].mxu0 %v4775
        %v4822 = vpop.f32.mrb[0].mxu0
        %v4823 = vadd.f32 0.0, %v4822
        %v4824 = vpop.f32.mrb[0].mxu0
        %v4825 = vpop.f32.mrb[0].mxu0
        %v4826 = vadd.f32 0.0, %v4825
        %v4827 = vpop.f32.mrb[0].mxu0
        %4828 = vmatprep.mubr.bf16.mxu0 0
        %4829 = vmatmul.mubr.bf16.gmra.mrb[0].mxu0 %v4778
        %v4830 = vpop.f32.mrb[0].mxu0
        %v4831 = vadd.f32 0.0, %v4830
        %v4832 = vpop.f32.mrb[0].mxu0
        %v4833 = vpop.f32.mrb[0].mxu0
        %v4834 = vpop.f32.mrb[0].mxu0
        %4835 = vdwg.mxu0
        %v4844 = vunpack.c.l.b16 %v4695
        %v4845 = vunpack.c.l.b16 %v4696
        %v4846 = vunpack.c.l.b16 %v4697
        %v4847 = vunpack.c.l.b16 %v4698
        %v4848 = vunpack.c.l.b16 %v4699
        %v4849 = vunpack.c.l.b16 %v4700
        %v4850 = vunpack.c.l.b16 %v4701
        %v4851 = vunpack.c.l.b16 %v4702
        %v4852 = vpack.c.b16 %v4845, %v4844
        %v4853 = vpack.c.b16 %v4847, %v4846
        %v4854 = vpack.c.b16 %v4849, %v4848
        %v4855 = vpack.c.b16 %v4851, %v4850
        %v4861 = vsel %vm3287, %v4692, 0
        %v4864 = vsel %vm3287, %v4693, 0
        %v4867 = vsel %vm3287, %v4694, 0
        %4869 = vmatprep.subr.bf16.mxu0 0
        %4870 = vmatpush1.bf16.msra.mxu0 %v4852
        %4871 = vmatprep.subr.bf16.mxu0 0
        %4872 = vmatpush1.bf16.msra.mxu0 %v4853
        %4873 = vmatprep.subr.bf16.mxu0 0
        %4874 = vmatpush1.bf16.msra.mxu0 %v4854
        %4875 = vmatprep.subr.bf16.mxu0 0
        %4876 = vmatpush1.bf16.msra.mxu0 %v4855
        %4877 = vmatprep.subr.bf16.mxu0 0
        %4878 = vmatpush1.bf16.msra.mxu0 0
        %4879 = vmatprep.subr.bf16.mxu0 0
        %4880 = vmatpush1.bf16.msra.mxu0 0
        %4881 = vmatprep.subr.bf16.mxu0 0
        %4882 = vmatpush1.bf16.msra.mxu0 0
        %4883 = vmatprep.subr.bf16.mxu0 0
        %4884 = vmatpush1.bf16.msra.mxu0 0
        %4885 = vmatprep.subr.bf16.mxu0 0
        %4886 = vmatpush1.bf16.msra.mxu0 0
        %4887 = vmatprep.subr.bf16.mxu0 0
        %4888 = vmatpush1.bf16.msra.mxu0 0
        %4889 = vmatprep.subr.bf16.mxu0 0
        %4890 = vmatpush1.bf16.msra.mxu0 0
        %4891 = vmatprep.subr.bf16.mxu0 0
        %4892 = vmatpush1.bf16.msra.mxu0 0
        %4893 = vmatprep.subr.bf16.mxu0 0
        %4894 = vmatpush1.bf16.msra.mxu0 0
        %4895 = vmatprep.subr.bf16.mxu0 0
        %4896 = vmatpush1.bf16.msra.mxu0 0
        %4897 = vmatprep.subr.bf16.mxu0 0
        %4898 = vmatpush1.bf16.msra.mxu0 0
        %4899 = vmatprep.subr.bf16.mxu0 0
        %4900 = vmatpush1.bf16.msra.mxu0 0
        %4901 = vmatprep.mubr.bf16.mxu0 0
        %4902 = vmatmul.mubr.bf16.gmra.mrb[0].mxu0 %v4861
        %v4903 = vpop.f32.mrb[0].mxu0
        %v4904 = vadd.f32 %v4815, %v4903
        %v4905 = vpop.f32.mrb[0].mxu0
        %v4906 = vpop.f32.mrb[0].mxu0
        %v4907 = vadd.f32 %v4818, %v4906
        %v4908 = vpop.f32.mrb[0].mxu0
        %4909 = vmatprep.mubr.bf16.mxu0 0
        %4910 = vmatmul.mubr.bf16.gmra.mrb[0].mxu0 %v4864
        %v4911 = vpop.f32.mrb[0].mxu0
        %v4912 = vadd.f32 %v4823, %v4911
        %v4913 = vpop.f32.mrb[0].mxu0
        %v4914 = vpop.f32.mrb[0].mxu0
        %v4915 = vadd.f32 %v4826, %v4914
        %v4916 = vpop.f32.mrb[0].mxu0
        %4917 = vmatprep.mubr.bf16.mxu0 0
        %4918 = vmatmul.mubr.bf16.gmra.mrb[0].mxu0 %v4867
        %v4919 = vpop.f32.mrb[0].mxu0
        %v4920 = vadd.f32 %v4831, %v4919
        %v4921 = vpop.f32.mrb[0].mxu0
        %v4922 = vpop.f32.mrb[0].mxu0
        %v4923 = vpop.f32.mrb[0].mxu0
        %4924 = vdwg.mxu0
        %v4925 = vld [vmem:[%s4727] ss:$2 sm:$0xff]
        %v4926 = vld [vmem:[%s4729] ss:$2 sm:$0xff]
        %v4927 = vld [vmem:[%s4731] ss:$2 sm:$0xff]
        %v4928 = vld [vmem:[%s4733] ss:$2 sm:$0xff]
        %s4929 = scalar_lea.vmem [#allocation5], 87
        %v4930 = vld [vmem:[%s4929] ss:$2 sm:$0xf]
        %v4931 = vpack.c.bf16 %v4926, %v4925
        %v4932 = vpack.c.bf16 %v4928, %v4927
        %v4933 = vpack.c.bf16 %v4930, %v4930
        %s4934 = scalar_lea.vmem %s7, 96
        %v4935 = vld [vmem:[%s4934] sm:$0xf]
        %v4936 = vld [vmem:[%s4934 + $0x4] sm:$0xf]
        %v4937 = vld [vmem:[%s4934 + $0x8] sm:$0xf]
        %v4938 = vld [vmem:[%s4934 + $0xc] sm:$0xf]
        %v4939 = vld [vmem:[%s4934 + $0x10] sm:$0xf]
        %v4940 = vld [vmem:[%s4934 + $0x14] sm:$0xf]
        %v4941 = vld [vmem:[%s4934 + $0x18] sm:$0xf]
        %v4942 = vld [vmem:[%s4934 + $0x1c] sm:$0xf]
        %v4951 = vunpack.c.l.b16 %v4935
        %v4952 = vunpack.c.l.b16 %v4936
        %v4953 = vunpack.c.l.b16 %v4937
        %v4954 = vunpack.c.l.b16 %v4938
        %v4955 = vunpack.c.l.b16 %v4939
        %v4956 = vunpack.c.l.b16 %v4940
        %v4957 = vunpack.c.l.b16 %v4941
        %v4958 = vunpack.c.l.b16 %v4942
        %v4959 = vpack.c.b16 %v4952, %v4951
        %v4960 = vpack.c.b16 %v4954, %v4953
        %v4961 = vpack.c.b16 %v4956, %v4955
        %v4962 = vpack.c.b16 %v4958, %v4957
        %v4968 = vsel %vm3287, %v4931, 0
        %v4971 = vsel %vm3287, %v4932, 0
        %v4974 = vsel %vm3287, %v4933, 0
        %4976 = vmatprep.subr.bf16.mxu0 0
        %4977 = vmatpush1.bf16.msra.mxu0 %v4959
        %4978 = vmatprep.subr.bf16.mxu0 0
        %4979 = vmatpush1.bf16.msra.mxu0 %v4960
        %4980 = vmatprep.subr.bf16.mxu0 0
        %4981 = vmatpush1.bf16.msra.mxu0 %v4961
        %4982 = vmatprep.subr.bf16.mxu0 0
        %4983 = vmatpush1.bf16.msra.mxu0 %v4962
        %4984 = vmatprep.subr.bf16.mxu0 0
        %4985 = vmatpush1.bf16.msra.mxu0 0
        %4986 = vmatprep.subr.bf16.mxu0 0
        %4987 = vmatpush1.bf16.msra.mxu0 0
        %4988 = vmatprep.subr.bf16.mxu0 0
        %4989 = vmatpush1.bf16.msra.mxu0 0
        %4990 = vmatprep.subr.bf16.mxu0 0
        %4991 = vmatpush1.bf16.msra.mxu0 0
        %4992 = vmatprep.subr.bf16.mxu0 0
        %4993 = vmatpush1.bf16.msra.mxu0 0
        %4994 = vmatprep.subr.bf16.mxu0 0
        %4995 = vmatpush1.bf16.msra.mxu0 0
        %4996 = vmatprep.subr.bf16.mxu0 0
        %4997 = vmatpush1.bf16.msra.mxu0 0
        %4998 = vmatprep.subr.bf16.mxu0 0
        %4999 = vmatpush1.bf16.msra.mxu0 0
        %5000 = vmatprep.subr.bf16.mxu0 0
        %5001 = vmatpush1.bf16.msra.mxu0 0
        %5002 = vmatprep.subr.bf16.mxu0 0
        %5003 = vmatpush1.bf16.msra.mxu0 0
        %5004 = vmatprep.subr.bf16.mxu0 0
        %5005 = vmatpush1.bf16.msra.mxu0 0
        %5006 = vmatprep.subr.bf16.mxu0 0
        %5007 = vmatpush1.bf16.msra.mxu0 0
        %5008 = vmatprep.mubr.bf16.mxu0 0
        %5009 = vmatmul.mubr.bf16.gmra.mrb[0].mxu0 %v4968
        %v5010 = vpop.f32.mrb[0].mxu0
        %v5011 = vadd.f32 0.0, %v5010
        %v5012 = vpop.f32.mrb[0].mxu0
        %v5013 = vpop.f32.mrb[0].mxu0
        %v5014 = vadd.f32 0.0, %v5013
        %v5015 = vpop.f32.mrb[0].mxu0
        %5016 = vmatprep.mubr.bf16.mxu0 0
        %5017 = vmatmul.mubr.bf16.gmra.mrb[0].mxu0 %v4971
        %v5018 = vpop.f32.mrb[0].mxu0
        %v5019 = vadd.f32 0.0, %v5018
        %v5020 = vpop.f32.mrb[0].mxu0
        %v5021 = vpop.f32.mrb[0].mxu0
        %v5022 = vadd.f32 0.0, %v5021
        %v5023 = vpop.f32.mrb[0].mxu0
        %5024 = vmatprep.mubr.bf16.mxu0 0
        %5025 = vmatmul.mubr.bf16.gmra.mrb[0].mxu0 %v4974
        %v5026 = vpop.f32.mrb[0].mxu0
        %v5027 = vadd.f32 0.0, %v5026
        %v5028 = vpop.f32.mrb[0].mxu0
        %v5029 = vpop.f32.mrb[0].mxu0
        %v5030 = vpop.f32.mrb[0].mxu0
        %5031 = vdwg.mxu0
        %v5040 = vunpack.c.l.b16 %v4717
        %v5041 = vunpack.c.l.b16 %v4718
        %v5042 = vunpack.c.l.b16 %v4719
        %v5043 = vunpack.c.l.b16 %v4720
        %v5044 = vunpack.c.l.b16 %v4721
        %v5045 = vunpack.c.l.b16 %v4722
        %v5046 = vunpack.c.l.b16 %v4723
        %v5047 = vunpack.c.l.b16 %v4724
        %v5048 = vpack.c.b16 %v5041, %v5040
        %v5049 = vpack.c.b16 %v5043, %v5042
        %v5050 = vpack.c.b16 %v5045, %v5044
        %v5051 = vpack.c.b16 %v5047, %v5046
        %v5057 = vsel %vm3287, %v4713, 0
        %v5060 = vsel %vm3287, %v4714, 0
        %v5063 = vsel %vm3287, %v4715, 0
        %5065 = vmatprep.subr.bf16.mxu0 0
        %5066 = vmatpush1.bf16.msra.mxu0 %v5048
        %5067 = vmatprep.subr.bf16.mxu0 0
        %5068 = vmatpush1.bf16.msra.mxu0 %v5049
        %5069 = vmatprep.subr.bf16.mxu0 0
        %5070 = vmatpush1.bf16.msra.mxu0 %v5050
        %5071 = vmatprep.subr.bf16.mxu0 0
        %5072 = vmatpush1.bf16.msra.mxu0 %v5051
        %5073 = vmatprep.subr.bf16.mxu0 0
        %5074 = vmatpush1.bf16.msra.mxu0 0
        %5075 = vmatprep.subr.bf16.mxu0 0
        %5076 = vmatpush1.bf16.msra.mxu0 0
        %5077 = vmatprep.subr.bf16.mxu0 0
        %5078 = vmatpush1.bf16.msra.mxu0 0
        %5079 = vmatprep.subr.bf16.mxu0 0
        %5080 = vmatpush1.bf16.msra.mxu0 0
        %5081 = vmatprep.subr.bf16.mxu0 0
        %5082 = vmatpush1.bf16.msra.mxu0 0
        %5083 = vmatprep.subr.bf16.mxu0 0
        %5084 = vmatpush1.bf16.msra.mxu0 0
        %5085 = vmatprep.subr.bf16.mxu0 0
        %5086 = vmatpush1.bf16.msra.mxu0 0
        %5087 = vmatprep.subr.bf16.mxu0 0
        %5088 = vmatpush1.bf16.msra.mxu0 0
        %5089 = vmatprep.subr.bf16.mxu0 0
        %5090 = vmatpush1.bf16.msra.mxu0 0
        %5091 = vmatprep.subr.bf16.mxu0 0
        %5092 = vmatpush1.bf16.msra.mxu0 0
        %5093 = vmatprep.subr.bf16.mxu0 0
        %5094 = vmatpush1.bf16.msra.mxu0 0
        %5095 = vmatprep.subr.bf16.mxu0 0
        %5096 = vmatpush1.bf16.msra.mxu0 0
        %5097 = vmatprep.mubr.bf16.mxu0 0
        %5098 = vmatmul.mubr.bf16.gmra.mrb[0].mxu0 %v5057
        %v5099 = vpop.f32.mrb[0].mxu0
        %v5100 = vadd.f32 %v5011, %v5099
        %v5101 = vpop.f32.mrb[0].mxu0
        %v5102 = vpop.f32.mrb[0].mxu0
        %v5103 = vadd.f32 %v5014, %v5102
        %v5104 = vpop.f32.mrb[0].mxu0
        %5105 = vmatprep.mubr.bf16.mxu0 0
        %5106 = vmatmul.mubr.bf16.gmra.mrb[0].mxu0 %v5060
        %v5107 = vpop.f32.mrb[0].mxu0
        %v5108 = vadd.f32 %v5019, %v5107
        %v5109 = vpop.f32.mrb[0].mxu0
        %v5110 = vpop.f32.mrb[0].mxu0
        %v5111 = vadd.f32 %v5022, %v5110
        %v5112 = vpop.f32.mrb[0].mxu0
        %5113 = vmatprep.mubr.bf16.mxu0 0
        %5114 = vmatmul.mubr.bf16.gmra.mrb[0].mxu0 %v5063
        %v5115 = vpop.f32.mrb[0].mxu0
        %v5116 = vadd.f32 %v5027, %v5115
        %v5117 = vpop.f32.mrb[0].mxu0
        %v5118 = vpop.f32.mrb[0].mxu0
        %v5119 = vpop.f32.mrb[0].mxu0
        %5120 = vdwg.mxu0
        %s5121 = scalar_lea.vmem [#allocation5], 24
        %v5122 = vld [vmem:[%s5121] ss:$2 sm:$0xff]
        %s5123 = scalar_lea.vmem [#allocation5], 40
        %v5124 = vld [vmem:[%s5123] ss:$2 sm:$0xff]
        %s5125 = scalar_lea.vmem [#allocation5], 56
        %v5126 = vld [vmem:[%s5125] ss:$2 sm:$0xff]
        %s5127 = scalar_lea.vmem [#allocation5], 72
        %v5128 = vld [vmem:[%s5127] ss:$2 sm:$0xff]
        %s5129 = scalar_lea.vmem [#allocation5], 88
        %v5130 = vld [vmem:[%s5129] ss:$2 sm:$0xf]
        %v5131 = vpack.c.bf16 %v5124, %v5122
        %v5132 = vpack.c.bf16 %v5128, %v5126
        %v5133 = vpack.c.bf16 %v5130, %v5130
        %s5134 = scalar_lea.vmem %s7, 128
        %v5135 = vld [vmem:[%s5134] sm:$0xf]
        %v5136 = vld [vmem:[%s5134 + $0x4] sm:$0xf]
        %v5137 = vld [vmem:[%s5134 + $0x8] sm:$0xf]
        %v5138 = vld [vmem:[%s5134 + $0xc] sm:$0xf]
        %v5139 = vld [vmem:[%s5134 + $0x10] sm:$0xf]
        %v5140 = vld [vmem:[%s5134 + $0x14] sm:$0xf]
        %v5141 = vld [vmem:[%s5134 + $0x18] sm:$0xf]
        %v5142 = vld [vmem:[%s5134 + $0x1c] sm:$0xf]
        %v5151 = vunpack.c.l.b16 %v5135
        %v5152 = vunpack.c.l.b16 %v5136
        %v5153 = vunpack.c.l.b16 %v5137
        %v5154 = vunpack.c.l.b16 %v5138
        %v5155 = vunpack.c.l.b16 %v5139
        %v5156 = vunpack.c.l.b16 %v5140
        %v5157 = vunpack.c.l.b16 %v5141
        %v5158 = vunpack.c.l.b16 %v5142
        %v5159 = vpack.c.b16 %v5152, %v5151
        %v5160 = vpack.c.b16 %v5154, %v5153
        %v5161 = vpack.c.b16 %v5156, %v5155
        %v5162 = vpack.c.b16 %v5158, %v5157
        %v5168 = vsel %vm3287, %v5131, 0
        %v5171 = vsel %vm3287, %v5132, 0
        %v5174 = vsel %vm3287, %v5133, 0
        %5176 = vmatprep.subr.bf16.mxu0 0
        %5177 = vmatpush1.bf16.msra.mxu0 %v5159
        %5178 = vmatprep.subr.bf16.mxu0 0
        %5179 = vmatpush1.bf16.msra.mxu0 %v5160
        %5180 = vmatprep.subr.bf16.mxu0 0
        %5181 = vmatpush1.bf16.msra.mxu0 %v5161
        %5182 = vmatprep.subr.bf16.mxu0 0
        %5183 = vmatpush1.bf16.msra.mxu0 %v5162
        %5184 = vmatprep.subr.bf16.mxu0 0
        %5185 = vmatpush1.bf16.msra.mxu0 0
        %5186 = vmatprep.subr.bf16.mxu0 0
        %5187 = vmatpush1.bf16.msra.mxu0 0
        %5188 = vmatprep.subr.bf16.mxu0 0
        %5189 = vmatpush1.bf16.msra.mxu0 0
        %5190 = vmatprep.subr.bf16.mxu0 0
        %5191 = vmatpush1.bf16.msra.mxu0 0
        %5192 = vmatprep.subr.bf16.mxu0 0
        %5193 = vmatpush1.bf16.msra.mxu0 0
        %5194 = vmatprep.subr.bf16.mxu0 0
        %5195 = vmatpush1.bf16.msra.mxu0 0
        %5196 = vmatprep.subr.bf16.mxu0 0
        %5197 = vmatpush1.bf16.msra.mxu0 0
        %5198 = vmatprep.subr.bf16.mxu0 0
        %5199 = vmatpush1.bf16.msra.mxu0 0
        %5200 = vmatprep.subr.bf16.mxu0 0
        %5201 = vmatpush1.bf16.msra.mxu0 0
        %5202 = vmatprep.subr.bf16.mxu0 0
        %5203 = vmatpush1.bf16.msra.mxu0 0
        %5204 = vmatprep.subr.bf16.mxu0 0
        %5205 = vmatpush1.bf16.msra.mxu0 0
        %5206 = vmatprep.subr.bf16.mxu0 0
        %5207 = vmatpush1.bf16.msra.mxu0 0
        %5208 = vmatprep.mubr.bf16.mxu0 0
        %5209 = vmatmul.mubr.bf16.gmra.mrb[0].mxu0 %v5168
        %v5210 = vpop.f32.mrb[0].mxu0
        %v5211 = vadd.f32 0.0, %v5210
        %v5212 = vpop.f32.mrb[0].mxu0
        %v5213 = vpop.f32.mrb[0].mxu0
        %v5214 = vadd.f32 0.0, %v5213
        %v5215 = vpop.f32.mrb[0].mxu0
        %5216 = vmatprep.mubr.bf16.mxu0 0
        %5217 = vmatmul.mubr.bf16.gmra.mrb[0].mxu0 %v5171
        %v5218 = vpop.f32.mrb[0].mxu0
        %v5219 = vadd.f32 0.0, %v5218
        %v5220 = vpop.f32.mrb[0].mxu0
        %v5221 = vpop.f32.mrb[0].mxu0
        %v5222 = vadd.f32 0.0, %v5221
        %v5223 = vpop.f32.mrb[0].mxu0
        %5224 = vmatprep.mubr.bf16.mxu0 0
        %5225 = vmatmul.mubr.bf16.gmra.mrb[0].mxu0 %v5174
        %v5226 = vpop.f32.mrb[0].mxu0
        %v5227 = vadd.f32 0.0, %v5226
        %v5228 = vpop.f32.mrb[0].mxu0
        %v5229 = vpop.f32.mrb[0].mxu0
        %v5230 = vpop.f32.mrb[0].mxu0
        %5231 = vdwg.mxu0
        %v5232 = vadd.f32 %v4904, %v5211
        %v5233 = vadd.f32 %v4907, %v5214
        %v5234 = vadd.f32 %v4912, %v5219
        %v5235 = vadd.f32 %v4915, %v5222
        %v5236 = vadd.f32 %v4920, %v5227
        %s5237 = scalar_lea.vmem [#allocation5], 25
        %v5238 = vld [vmem:[%s5237] ss:$2 sm:$0xff]
        %s5239 = scalar_lea.vmem [#allocation5], 41
        %v5240 = vld [vmem:[%s5239] ss:$2 sm:$0xff]
        %s5241 = scalar_lea.vmem [#allocation5], 57
        %v5242 = vld [vmem:[%s5241] ss:$2 sm:$0xff]
        %s5243 = scalar_lea.vmem [#allocation5], 73
        %v5244 = vld [vmem:[%s5243] ss:$2 sm:$0xff]
        %s5245 = scalar_lea.vmem [#allocation5], 89
        %v5246 = vld [vmem:[%s5245] ss:$2 sm:$0xf]
        %v5247 = vpack.c.bf16 %v5240, %v5238
        %v5248 = vpack.c.bf16 %v5244, %v5242
        %v5249 = vpack.c.bf16 %v5246, %v5246
        %s5250 = scalar_lea.vmem %s7, 160
        %v5251 = vld [vmem:[%s5250] sm:$0xf]
        %v5252 = vld [vmem:[%s5250 + $0x4] sm:$0xf]
        %v5253 = vld [vmem:[%s5250 + $0x8] sm:$0xf]
        %v5254 = vld [vmem:[%s5250 + $0xc] sm:$0xf]
        %v5255 = vld [vmem:[%s5250 + $0x10] sm:$0xf]
        %v5256 = vld [vmem:[%s5250 + $0x14] sm:$0xf]
        %v5257 = vld [vmem:[%s5250 + $0x18] sm:$0xf]
        %v5258 = vld [vmem:[%s5250 + $0x1c] sm:$0xf]
        %v5267 = vunpack.c.l.b16 %v5251
        %v5268 = vunpack.c.l.b16 %v5252
        %v5269 = vunpack.c.l.b16 %v5253
        %v5270 = vunpack.c.l.b16 %v5254
        %v5271 = vunpack.c.l.b16 %v5255
        %v5272 = vunpack.c.l.b16 %v5256
        %v5273 = vunpack.c.l.b16 %v5257
        %v5274 = vunpack.c.l.b16 %v5258
        %v5275 = vpack.c.b16 %v5268, %v5267
        %v5276 = vpack.c.b16 %v5270, %v5269
        %v5277 = vpack.c.b16 %v5272, %v5271
        %v5278 = vpack.c.b16 %v5274, %v5273
        %v5284 = vsel %vm3287, %v5247, 0
        %v5287 = vsel %vm3287, %v5248, 0
        %v5290 = vsel %vm3287, %v5249, 0
        %5292 = vmatprep.subr.bf16.mxu0 0
        %5293 = vmatpush1.bf16.msra.mxu0 %v5275
        %5294 = vmatprep.subr.bf16.mxu0 0
        %5295 = vmatpush1.bf16.msra.mxu0 %v5276
        %5296 = vmatprep.subr.bf16.mxu0 0
        %5297 = vmatpush1.bf16.msra.mxu0 %v5277
        %5298 = vmatprep.subr.bf16.mxu0 0
        %5299 = vmatpush1.bf16.msra.mxu0 %v5278
        %5300 = vmatprep.subr.bf16.mxu0 0
        %5301 = vmatpush1.bf16.msra.mxu0 0
        %5302 = vmatprep.subr.bf16.mxu0 0
        %5303 = vmatpush1.bf16.msra.mxu0 0
        %5304 = vmatprep.subr.bf16.mxu0 0
        %5305 = vmatpush1.bf16.msra.mxu0 0
        %5306 = vmatprep.subr.bf16.mxu0 0
        %5307 = vmatpush1.bf16.msra.mxu0 0
        %5308 = vmatprep.subr.bf16.mxu0 0
        %5309 = vmatpush1.bf16.msra.mxu0 0
        %5310 = vmatprep.subr.bf16.mxu0 0
        %5311 = vmatpush1.bf16.msra.mxu0 0
        %5312 = vmatprep.subr.bf16.mxu0 0
        %5313 = vmatpush1.bf16.msra.mxu0 0
        %5314 = vmatprep.subr.bf16.mxu0 0
        %5315 = vmatpush1.bf16.msra.mxu0 0
        %5316 = vmatprep.subr.bf16.mxu0 0
        %5317 = vmatpush1.bf16.msra.mxu0 0
        %5318 = vmatprep.subr.bf16.mxu0 0
        %5319 = vmatpush1.bf16.msra.mxu0 0
        %5320 = vmatprep.subr.bf16.mxu0 0
        %5321 = vmatpush1.bf16.msra.mxu0 0
        %5322 = vmatprep.subr.bf16.mxu0 0
        %5323 = vmatpush1.bf16.msra.mxu0 0
        %5324 = vmatprep.mubr.bf16.mxu0 0
        %5325 = vmatmul.mubr.bf16.gmra.mrb[0].mxu0 %v5284
        %v5326 = vpop.f32.mrb[0].mxu0
        %v5327 = vadd.f32 0.0, %v5326
        %v5328 = vpop.f32.mrb[0].mxu0
        %v5329 = vpop.f32.mrb[0].mxu0
        %v5330 = vadd.f32 0.0, %v5329
        %v5331 = vpop.f32.mrb[0].mxu0
        %5332 = vmatprep.mubr.bf16.mxu0 0
        %5333 = vmatmul.mubr.bf16.gmra.mrb[0].mxu0 %v5287
        %v5334 = vpop.f32.mrb[0].mxu0
        %v5335 = vadd.f32 0.0, %v5334
        %v5336 = vpop.f32.mrb[0].mxu0
        %v5337 = vpop.f32.mrb[0].mxu0
        %v5338 = vadd.f32 0.0, %v5337
        %v5339 = vpop.f32.mrb[0].mxu0
        %5340 = vmatprep.mubr.bf16.mxu0 0
        %5341 = vmatmul.mubr.bf16.gmra.mrb[0].mxu0 %v5290
        %v5342 = vpop.f32.mrb[0].mxu0
        %v5343 = vadd.f32 0.0, %v5342
        %v5344 = vpop.f32.mrb[0].mxu0
        %v5345 = vpop.f32.mrb[0].mxu0
        %v5346 = vpop.f32.mrb[0].mxu0
        %5347 = vdwg.mxu0
        %v5348 = vadd.f32 %v5100, %v5327
        %v5349 = vadd.f32 %v5103, %v5330
        %v5350 = vadd.f32 %v5108, %v5335
        %v5351 = vadd.f32 %v5111, %v5338
        %v5352 = vadd.f32 %v5116, %v5343
        %v5353 = vld [vmem:[%s5239] ss:$2 sm:$0xff]
        %v5354 = vld [vmem:[%s5241] ss:$2 sm:$0xff]
        %v5355 = vld [vmem:[%s5243] ss:$2 sm:$0xff]
        %v5356 = vld [vmem:[%s5245] ss:$2 sm:$0xff]
        %s5357 = scalar_lea.vmem [#allocation5], 105
        %v5358 = vld [vmem:[%s5357] ss:$2 sm:$0xf]
        %v5359 = vpack.c.bf16 %v5354, %v5353
        %v5360 = vpack.c.bf16 %v5356, %v5355
        %v5361 = vpack.c.bf16 %v5358, %v5358
        %s5362 = scalar_lea.vmem %s7, 192
        %v5363 = vld [vmem:[%s5362] sm:$0xf]
        %v5364 = vld [vmem:[%s5362 + $0x4] sm:$0xf]
        %v5365 = vld [vmem:[%s5362 + $0x8] sm:$0xf]
        %v5366 = vld [vmem:[%s5362 + $0xc] sm:$0xf]
        %v5367 = vld [vmem:[%s5362 + $0x10] sm:$0xf]
        %v5368 = vld [vmem:[%s5362 + $0x14] sm:$0xf]
        %v5369 = vld [vmem:[%s5362 + $0x18] sm:$0xf]
        %v5370 = vld [vmem:[%s5362 + $0x1c] sm:$0xf]
        %v5379 = vunpack.c.l.b16 %v5363
        %v5380 = vunpack.c.l.b16 %v5364
        %v5381 = vunpack.c.l.b16 %v5365
        %v5382 = vunpack.c.l.b16 %v5366
        %v5383 = vunpack.c.l.b16 %v5367
        %v5384 = vunpack.c.l.b16 %v5368
        %v5385 = vunpack.c.l.b16 %v5369
        %v5386 = vunpack.c.l.b16 %v5370
        %v5387 = vpack.c.b16 %v5380, %v5379
        %v5388 = vpack.c.b16 %v5382, %v5381
        %v5389 = vpack.c.b16 %v5384, %v5383
        %v5390 = vpack.c.b16 %v5386, %v5385
        %v5396 = vsel %vm3287, %v5359, 0
        %v5399 = vsel %vm3287, %v5360, 0
        %v5402 = vsel %vm3287, %v5361, 0
        %5404 = vmatprep.subr.bf16.mxu0 0
        %5405 = vmatpush1.bf16.msra.mxu0 %v5387
        %5406 = vmatprep.subr.bf16.mxu0 0
        %5407 = vmatpush1.bf16.msra.mxu0 %v5388
        %5408 = vmatprep.subr.bf16.mxu0 0
        %5409 = vmatpush1.bf16.msra.mxu0 %v5389
        %5410 = vmatprep.subr.bf16.mxu0 0
        %5411 = vmatpush1.bf16.msra.mxu0 %v5390
        %5412 = vmatprep.subr.bf16.mxu0 0
        %5413 = vmatpush1.bf16.msra.mxu0 0
        %5414 = vmatprep.subr.bf16.mxu0 0
        %5415 = vmatpush1.bf16.msra.mxu0 0
        %5416 = vmatprep.subr.bf16.mxu0 0
        %5417 = vmatpush1.bf16.msra.mxu0 0
        %5418 = vmatprep.subr.bf16.mxu0 0
        %5419 = vmatpush1.bf16.msra.mxu0 0
        %5420 = vmatprep.subr.bf16.mxu0 0
        %5421 = vmatpush1.bf16.msra.mxu0 0
        %5422 = vmatprep.subr.bf16.mxu0 0
        %5423 = vmatpush1.bf16.msra.mxu0 0
        %5424 = vmatprep.subr.bf16.mxu0 0
        %5425 = vmatpush1.bf16.msra.mxu0 0
        %5426 = vmatprep.subr.bf16.mxu0 0
        %5427 = vmatpush1.bf16.msra.mxu0 0
        %5428 = vmatprep.subr.bf16.mxu0 0
        %5429 = vmatpush1.bf16.msra.mxu0 0
        %5430 = vmatprep.subr.bf16.mxu0 0
        %5431 = vmatpush1.bf16.msra.mxu0 0
        %5432 = vmatprep.subr.bf16.mxu0 0
        %5433 = vmatpush1.bf16.msra.mxu0 0
        %5434 = vmatprep.subr.bf16.mxu0 0
        %5435 = vmatpush1.bf16.msra.mxu0 0
        %5436 = vmatprep.mubr.bf16.mxu0 0
        %5437 = vmatmul.mubr.bf16.gmra.mrb[0].mxu0 %v5396
        %v5438 = vpop.f32.mrb[0].mxu0
        %v5439 = vadd.f32 0.0, %v5438
        %v5440 = vpop.f32.mrb[0].mxu0
        %v5441 = vpop.f32.mrb[0].mxu0
        %v5442 = vadd.f32 0.0, %v5441
        %v5443 = vpop.f32.mrb[0].mxu0
        %5444 = vmatprep.mubr.bf16.mxu0 0
        %5445 = vmatmul.mubr.bf16.gmra.mrb[0].mxu0 %v5399
        %v5446 = vpop.f32.mrb[0].mxu0
        %v5447 = vadd.f32 0.0, %v5446
        %v5448 = vpop.f32.mrb[0].mxu0
        %v5449 = vpop.f32.mrb[0].mxu0
        %v5450 = vadd.f32 0.0, %v5449
        %v5451 = vpop.f32.mrb[0].mxu0
        %5452 = vmatprep.mubr.bf16.mxu0 0
        %5453 = vmatmul.mubr.bf16.gmra.mrb[0].mxu0 %v5402
        %v5454 = vpop.f32.mrb[0].mxu0
        %v5455 = vadd.f32 0.0, %v5454
        %v5456 = vpop.f32.mrb[0].mxu0
        %v5457 = vpop.f32.mrb[0].mxu0
        %v5458 = vpop.f32.mrb[0].mxu0
        %5459 = vdwg.mxu0
        %v5460 = vadd.f32 %v5232, %v5439
        %v5461 = vadd.f32 %v5233, %v5442
        %v5462 = vadd.f32 %v5234, %v5447
        %v5463 = vadd.f32 %v5235, %v5450
        %v5464 = vadd.f32 %v5236, %v5455
        %s5465 = scalar_lea.vmem [#allocation5], 42
        %v5466 = vld [vmem:[%s5465] ss:$2 sm:$0xff]
        %s5467 = scalar_lea.vmem [#allocation5], 58
        %v5468 = vld [vmem:[%s5467] ss:$2 sm:$0xff]
        %s5469 = scalar_lea.vmem [#allocation5], 74
        %v5470 = vld [vmem:[%s5469] ss:$2 sm:$0xff]
        %s5471 = scalar_lea.vmem [#allocation5], 90
        %v5472 = vld [vmem:[%s5471] ss:$2 sm:$0xff]
        %s5473 = scalar_lea.vmem [#allocation5], 106
        %v5474 = vld [vmem:[%s5473] ss:$2 sm:$0xf]
        %v5475 = vpack.c.bf16 %v5468, %v5466
        %v5476 = vpack.c.bf16 %v5472, %v5470
        %v5477 = vpack.c.bf16 %v5474, %v5474
        %s5478 = scalar_lea.vmem %s7, 224
        %v5479 = vld [vmem:[%s5478] sm:$0xf]
        %v5480 = vld [vmem:[%s5478 + $0x4] sm:$0xf]
        %v5481 = vld [vmem:[%s5478 + $0x8] sm:$0xf]
        %v5482 = vld [vmem:[%s5478 + $0xc] sm:$0xf]
        %v5483 = vld [vmem:[%s5478 + $0x10] sm:$0xf]
        %v5484 = vld [vmem:[%s5478 + $0x14] sm:$0xf]
        %v5485 = vld [vmem:[%s5478 + $0x18] sm:$0xf]
        %v5486 = vld [vmem:[%s5478 + $0x1c] sm:$0xf]
        %v5495 = vunpack.c.l.b16 %v5479
        %v5496 = vunpack.c.l.b16 %v5480
        %v5497 = vunpack.c.l.b16 %v5481
        %v5498 = vunpack.c.l.b16 %v5482
        %v5499 = vunpack.c.l.b16 %v5483
        %v5500 = vunpack.c.l.b16 %v5484
        %v5501 = vunpack.c.l.b16 %v5485
        %v5502 = vunpack.c.l.b16 %v5486
        %v5503 = vpack.c.b16 %v5496, %v5495
        %v5504 = vpack.c.b16 %v5498, %v5497
        %v5505 = vpack.c.b16 %v5500, %v5499
        %v5506 = vpack.c.b16 %v5502, %v5501
        %v5512 = vsel %vm3287, %v5475, 0
        %v5515 = vsel %vm3287, %v5476, 0
        %v5518 = vsel %vm3287, %v5477, 0
        %5520 = vmatprep.subr.bf16.mxu0 0
        %5521 = vmatpush1.bf16.msra.mxu0 %v5503
        %5522 = vmatprep.subr.bf16.mxu0 0
        %5523 = vmatpush1.bf16.msra.mxu0 %v5504
        %5524 = vmatprep.subr.bf16.mxu0 0
        %5525 = vmatpush1.bf16.msra.mxu0 %v5505
        %5526 = vmatprep.subr.bf16.mxu0 0
        %5527 = vmatpush1.bf16.msra.mxu0 %v5506
        %5528 = vmatprep.subr.bf16.mxu0 0
        %5529 = vmatpush1.bf16.msra.mxu0 0
        %5530 = vmatprep.subr.bf16.mxu0 0
        %5531 = vmatpush1.bf16.msra.mxu0 0
        %5532 = vmatprep.subr.bf16.mxu0 0
        %5533 = vmatpush1.bf16.msra.mxu0 0
        %5534 = vmatprep.subr.bf16.mxu0 0
        %5535 = vmatpush1.bf16.msra.mxu0 0
        %5536 = vmatprep.subr.bf16.mxu0 0
        %5537 = vmatpush1.bf16.msra.mxu0 0
        %5538 = vmatprep.subr.bf16.mxu0 0
        %5539 = vmatpush1.bf16.msra.mxu0 0
        %5540 = vmatprep.subr.bf16.mxu0 0
        %5541 = vmatpush1.bf16.msra.mxu0 0
        %5542 = vmatprep.subr.bf16.mxu0 0
        %5543 = vmatpush1.bf16.msra.mxu0 0
        %5544 = vmatprep.subr.bf16.mxu0 0
        %5545 = vmatpush1.bf16.msra.mxu0 0
        %5546 = vmatprep.subr.bf16.mxu0 0
        %5547 = vmatpush1.bf16.msra.mxu0 0
        %5548 = vmatprep.subr.bf16.mxu0 0
        %5549 = vmatpush1.bf16.msra.mxu0 0
        %5550 = vmatprep.subr.bf16.mxu0 0
        %5551 = vmatpush1.bf16.msra.mxu0 0
        %5552 = vmatprep.mubr.bf16.mxu0 0
        %5553 = vmatmul.mubr.bf16.gmra.mrb[0].mxu0 %v5512
        %v5554 = vpop.f32.mrb[0].mxu0
        %v5555 = vadd.f32 0.0, %v5554
        %v5556 = vpop.f32.mrb[0].mxu0
        %v5557 = vpop.f32.mrb[0].mxu0
        %v5558 = vadd.f32 0.0, %v5557
        %v5559 = vpop.f32.mrb[0].mxu0
        %5560 = vmatprep.mubr.bf16.mxu0 0
        %5561 = vmatmul.mubr.bf16.gmra.mrb[0].mxu0 %v5515
        %v5562 = vpop.f32.mrb[0].mxu0
        %v5563 = vadd.f32 0.0, %v5562
        %v5564 = vpop.f32.mrb[0].mxu0
        %v5565 = vpop.f32.mrb[0].mxu0
        %v5566 = vadd.f32 0.0, %v5565
        %v5567 = vpop.f32.mrb[0].mxu0
        %5568 = vmatprep.mubr.bf16.mxu0 0
        %5569 = vmatmul.mubr.bf16.gmra.mrb[0].mxu0 %v5518
        %v5570 = vpop.f32.mrb[0].mxu0
        %v5571 = vadd.f32 0.0, %v5570
        %v5572 = vpop.f32.mrb[0].mxu0
        %v5573 = vpop.f32.mrb[0].mxu0
        %v5574 = vpop.f32.mrb[0].mxu0
        %5575 = vdwg.mxu0
        %v5576 = vadd.f32 %v5348, %v5555
        %v5577 = vadd.f32 %v5349, %v5558
        %v5578 = vadd.f32 %v5350, %v5563
        %v5579 = vadd.f32 %v5351, %v5566
        %v5580 = vadd.f32 %v5352, %v5571
        %s5581 = scalar_lea.vmem [#allocation5], 43
        %v5582 = vld [vmem:[%s5581] ss:$2 sm:$0xff]
        %s5583 = scalar_lea.vmem [#allocation5], 59
        %v5584 = vld [vmem:[%s5583] ss:$2 sm:$0xff]
        %s5585 = scalar_lea.vmem [#allocation5], 75
        %v5586 = vld [vmem:[%s5585] ss:$2 sm:$0xff]
        %s5587 = scalar_lea.vmem [#allocation5], 91
        %v5588 = vld [vmem:[%s5587] ss:$2 sm:$0xff]
        %s5589 = scalar_lea.vmem [#allocation5], 107
        %v5590 = vld [vmem:[%s5589] ss:$2 sm:$0xf]
        %v5591 = vpack.c.bf16 %v5584, %v5582
        %v5592 = vpack.c.bf16 %v5588, %v5586
        %v5593 = vpack.c.bf16 %v5590, %v5590
        %s5594 = scalar_lea.vmem %s7, 256
        %v5595 = vld [vmem:[%s5594] sm:$0xf]
        %v5596 = vld [vmem:[%s5594 + $0x4] sm:$0xf]
        %v5597 = vld [vmem:[%s5594 + $0x8] sm:$0xf]
        %v5598 = vld [vmem:[%s5594 + $0xc] sm:$0xf]
        %v5599 = vld [vmem:[%s5594 + $0x10] sm:$0xf]
        %v5600 = vld [vmem:[%s5594 + $0x14] sm:$0xf]
        %v5601 = vld [vmem:[%s5594 + $0x18] sm:$0xf]
        %v5602 = vld [vmem:[%s5594 + $0x1c] sm:$0xf]
        %v5611 = vunpack.c.l.b16 %v5595
        %v5612 = vunpack.c.l.b16 %v5596
        %v5613 = vunpack.c.l.b16 %v5597
        %v5614 = vunpack.c.l.b16 %v5598
        %v5615 = vunpack.c.l.b16 %v5599
        %v5616 = vunpack.c.l.b16 %v5600
        %v5617 = vunpack.c.l.b16 %v5601
        %v5618 = vunpack.c.l.b16 %v5602
        %v5619 = vpack.c.b16 %v5612, %v5611
        %v5620 = vpack.c.b16 %v5614, %v5613
        %v5621 = vpack.c.b16 %v5616, %v5615
        %v5622 = vpack.c.b16 %v5618, %v5617
        %v5628 = vsel %vm3287, %v5591, 0
        %v5631 = vsel %vm3287, %v5592, 0
        %v5634 = vsel %vm3287, %v5593, 0
        %5636 = vmatprep.subr.bf16.mxu0 0
        %5637 = vmatpush1.bf16.msra.mxu0 %v5619
        %5638 = vmatprep.subr.bf16.mxu0 0
        %5639 = vmatpush1.bf16.msra.mxu0 %v5620
        %5640 = vmatprep.subr.bf16.mxu0 0
        %5641 = vmatpush1.bf16.msra.mxu0 %v5621
        %5642 = vmatprep.subr.bf16.mxu0 0
        %5643 = vmatpush1.bf16.msra.mxu0 %v5622
        %5644 = vmatprep.subr.bf16.mxu0 0
        %5645 = vmatpush1.bf16.msra.mxu0 0
        %5646 = vmatprep.subr.bf16.mxu0 0
        %5647 = vmatpush1.bf16.msra.mxu0 0
        %5648 = vmatprep.subr.bf16.mxu0 0
        %5649 = vmatpush1.bf16.msra.mxu0 0
        %5650 = vmatprep.subr.bf16.mxu0 0
        %5651 = vmatpush1.bf16.msra.mxu0 0
        %5652 = vmatprep.subr.bf16.mxu0 0
        %5653 = vmatpush1.bf16.msra.mxu0 0
        %5654 = vmatprep.subr.bf16.mxu0 0
        %5655 = vmatpush1.bf16.msra.mxu0 0
        %5656 = vmatprep.subr.bf16.mxu0 0
        %5657 = vmatpush1.bf16.msra.mxu0 0
        %5658 = vmatprep.subr.bf16.mxu0 0
        %5659 = vmatpush1.bf16.msra.mxu0 0
        %5660 = vmatprep.subr.bf16.mxu0 0
        %5661 = vmatpush1.bf16.msra.mxu0 0
        %5662 = vmatprep.subr.bf16.mxu0 0
        %5663 = vmatpush1.bf16.msra.mxu0 0
        %5664 = vmatprep.subr.bf16.mxu0 0
        %5665 = vmatpush1.bf16.msra.mxu0 0
        %5666 = vmatprep.subr.bf16.mxu0 0
        %5667 = vmatpush1.bf16.msra.mxu0 0
        %5668 = vmatprep.mubr.bf16.mxu0 0
        %5669 = vmatmul.mubr.bf16.gmra.mrb[0].mxu0 %v5628
        %v5670 = vpop.f32.mrb[0].mxu0
        %v5671 = vadd.f32 0.0, %v5670
        %v5672 = vpop.f32.mrb[0].mxu0
        %v5673 = vpop.f32.mrb[0].mxu0
        %v5674 = vadd.f32 0.0, %v5673
        %v5675 = vpop.f32.mrb[0].mxu0
        %5676 = vmatprep.mubr.bf16.mxu0 0
        %5677 = vmatmul.mubr.bf16.gmra.mrb[0].mxu0 %v5631
        %v5678 = vpop.f32.mrb[0].mxu0
        %v5679 = vadd.f32 0.0, %v5678
        %v5680 = vpop.f32.mrb[0].mxu0
        %v5681 = vpop.f32.mrb[0].mxu0
        %v5682 = vadd.f32 0.0, %v5681
        %v5683 = vpop.f32.mrb[0].mxu0
        %5684 = vmatprep.mubr.bf16.mxu0 0
        %5685 = vmatmul.mubr.bf16.gmra.mrb[0].mxu0 %v5634
        %v5686 = vpop.f32.mrb[0].mxu0
        %v5687 = vadd.f32 0.0, %v5686
        %v5688 = vpop.f32.mrb[0].mxu0
        %v5689 = vpop.f32.mrb[0].mxu0
        %v5690 = vpop.f32.mrb[0].mxu0
        %5691 = vdwg.mxu0
        %v5692 = vadd.f32 %v5460, %v5671
        %v5693 = vadd.f32 %v5461, %v5674
        %v5694 = vadd.f32 %v5462, %v5679
        %v5695 = vadd.f32 %v5463, %v5682
        %v5696 = vadd.f32 %v5464, %v5687
        %v5697 = vadd.f32 %v5692, %v5576
        %v5698 = vadd.f32 %v5693, %v5577
        %v5699 = vadd.f32 %v5694, %v5578
        %v5700 = vadd.f32 %v5695, %v5579
        %v5701 = vadd.f32 %v5696, %v5580
        %v5702 = vld [vmem:[%s8] sm:$0x1]
        %v5704 = vlaneseq
        %v5705 = vshrl.u32 %v5704, 7
        %v5706 = vsub.s32 0, %v5705
        %v5707 = vrot.slane %v5702, %v5706
        %v5709 = vadd.f32 %v5697, %v5707
        %v5710 = vadd.f32 %v5698, %v5707
        %v5711 = vadd.f32 %v5699, %v5707
        %v5712 = vadd.f32 %v5700, %v5707
        %v5713 = vadd.f32 %v5701, %v5707
        %v5714 = vmax.f32 %v5709, 0.0
        %v5715 = vmax.f32 %v5710, 0.0
        %v5716 = vmax.f32 %v5711, 0.0
        %v5717 = vmax.f32 %v5712, 0.0
        %v5718 = vmax.f32 %v5713, 0.0
        %v5719 = vld [vmem:[%s16] sm:$0xff]
        %v5720 = vld [vmem:[%s16 + $0x8] sm:$0xff]
        %v5721 = vld [vmem:[%s16 + $0x10] sm:$0xff]
        %v5722 = vld [vmem:[%s16 + $0x18] sm:$0xff]
        %v5723 = vld [vmem:[%s16 + $0x20] sm:$0xf]
        %vm5724 = vcmp.gt.f32.partialorder %v5719, 0.5
        %vm5725 = vcmp.gt.f32.partialorder %v5720, 0.5
        %vm5726 = vcmp.gt.f32.partialorder %v5721, 0.5
        %vm5727 = vcmp.gt.f32.partialorder %v5722, 0.5
        %vm5728 = vcmp.gt.f32.partialorder %v5723, 0.5
        %v5729 = vsel %vm5724, 1, 0
        %v5730 = vsel %vm5725, 1, 0
        %v5731 = vsel %vm5726, 1, 0
        %v5732 = vsel %vm5727, 1, 0
        %v5733 = vsel %vm5728, 1, 0
        %5734 = vset.pattern.permute.xlu0 0
        %5735 = vperm.xlu0 %5734, %v5729
        %v5736 = vpop.permute.xlu0 %5735
        %5737 = vset.pattern.permute.xlu0 0
        %5738 = vperm.xlu0 %5737, %v5730
        %v5739 = vpop.permute.xlu0 %5738
        %5740 = vset.pattern.permute.xlu0 0
        %5741 = vperm.xlu0 %5740, %v5731
        %v5742 = vpop.permute.xlu0 %5741
        %5743 = vset.pattern.permute.xlu0 0
        %5744 = vperm.xlu0 %5743, %v5732
        %v5745 = vpop.permute.xlu0 %5744
        %5746 = vset.pattern.permute.xlu0 0
        %5747 = vperm.xlu0 %5746, %v5733
        %v5748 = vpop.permute.xlu0 %5747
        %vm5749 = vcmp.eq.s32.totalorder %v5736, 1
        %vm5750 = vcmp.eq.s32.totalorder %v5739, 1
        %vm5751 = vcmp.eq.s32.totalorder %v5742, 1
        %vm5752 = vcmp.eq.s32.totalorder %v5745, 1
        %vm5753 = vcmp.eq.s32.totalorder %v5748, 1
        %v5754 = vsel %vm5749, %v5714, 0.0
        %v5755 = vsel %vm5750, %v5715, 0.0
        %v5756 = vsel %vm5751, %v5716, 0.0
        %v5757 = vsel %vm5752, %v5717, 0.0
        %v5758 = vsel %vm5753, %v5718, 0.0
        %5759 = vst [vmem:[#allocation6] sm:$0xff] 0.0
        %5760 = vst [vmem:[#allocation6 + $0x8] sm:$0xff] 0.0
        %5761 = vst [vmem:[#allocation6 + $0x10] sm:$0xff] 0.0
        %5762 = vst [vmem:[#allocation6 + $0x18] sm:$0xff] %v5754
        %5763 = vst [vmem:[#allocation6 + $0x20] sm:$0xff] %v5755
        %5764 = vst [vmem:[#allocation6 + $0x28] sm:$0xff] %v5756
        %5765 = vst [vmem:[#allocation6 + $0x30] sm:$0xff] %v5757
        %5766 = vst [vmem:[#allocation6 + $0x38] sm:$0xf] %v5758
        %5767 = vst [vmem:[#allocation6 + $0x3c] sm:$0xff] 0.0
        %5768 = vst [vmem:[#allocation6 + $0x44] sm:$0xff] 0.0
        %5769 = vst [vmem:[#allocation6 + $0x4c] sm:$0xff] 0.0
        %5770 = vst [vmem:[#allocation6 + $0x54] sm:$0xff] 0.0
        %5771 = vst [vmem:[#allocation6 + $0x5c] sm:$0xff] 0.0
        %5772 = vst [vmem:[#allocation6 + $0x64] sm:$0xff] 0.0
        %5773 = vst [vmem:[#allocation6 + $0x6c] sm:$0xff] 0.0
        %5774 = vst [vmem:[#allocation6 + $0x74] sm:$0xf] 0.0
        %v5775 = vld [vmem:[#allocation6 + $0x5] sm:$0xff]
        %v5776 = vld [vmem:[#allocation6 + $0xd] sm:$0xff]
        %v5777 = vld [vmem:[#allocation6 + $0x15] sm:$0xff]
        %v5778 = vld [vmem:[#allocation6 + $0x1d] sm:$0xff]
        %v5779 = vld [vmem:[#allocation6 + $0x25] sm:$0xf]
        %v5780 = vpack.c.bf16 %v5776, %v5775
        %v5781 = vpack.c.bf16 %v5778, %v5777
        %v5782 = vpack.c.bf16 %v5779, %v5779
        %v5783 = vld [vmem:[%s9] sm:$0xf]
        %v5784 = vld [vmem:[%s9 + $0x4] sm:$0xf]
        %v5785 = vld [vmem:[%s9 + $0x8] sm:$0xf]
        %v5786 = vld [vmem:[%s9 + $0xc] sm:$0xf]
        %v5787 = vld [vmem:[%s9 + $0x10] sm:$0xf]
        %v5788 = vld [vmem:[%s9 + $0x14] sm:$0xf]
        %v5789 = vld [vmem:[%s9 + $0x18] sm:$0xf]
        %v5790 = vld [vmem:[%s9 + $0x1c] sm:$0xf]
        %v5791 = vld [vmem:[%s9 + $0x20] sm:$0xf]
        %v5792 = vld [vmem:[%s9 + $0x24] sm:$0xf]
        %v5793 = vld [vmem:[%s9 + $0x28] sm:$0xf]
        %v5794 = vld [vmem:[%s9 + $0x2c] sm:$0xf]
        %v5795 = vld [vmem:[%s9 + $0x30] sm:$0xf]
        %v5796 = vld [vmem:[%s9 + $0x34] sm:$0xf]
        %v5797 = vld [vmem:[%s9 + $0x38] sm:$0xf]
        %v5798 = vld [vmem:[%s9 + $0x3c] sm:$0xf]
        %v5799 = vld [vmem:[#allocation6 + $0x6] sm:$0xff]
        %v5800 = vld [vmem:[#allocation6 + $0xe] sm:$0xff]
        %v5801 = vld [vmem:[#allocation6 + $0x16] sm:$0xff]
        %v5802 = vld [vmem:[#allocation6 + $0x1e] sm:$0xff]
        %v5803 = vld [vmem:[#allocation6 + $0x26] sm:$0xf]
        %v5804 = vpack.c.bf16 %v5800, %v5799
        %v5805 = vpack.c.bf16 %v5802, %v5801
        %v5806 = vpack.c.bf16 %v5803, %v5803
        %s5807 = scalar_lea.vmem %s9, 64
        %v5808 = vld [vmem:[%s5807] sm:$0xf]
        %v5809 = vld [vmem:[%s5807 + $0x4] sm:$0xf]
        %v5810 = vld [vmem:[%s5807 + $0x8] sm:$0xf]
        %v5811 = vld [vmem:[%s5807 + $0xc] sm:$0xf]
        %v5812 = vld [vmem:[%s5807 + $0x10] sm:$0xf]
        %v5813 = vld [vmem:[%s5807 + $0x14] sm:$0xf]
        %v5814 = vld [vmem:[%s5807 + $0x18] sm:$0xf]
        %v5815 = vld [vmem:[%s5807 + $0x1c] sm:$0xf]
        %v5816 = vld [vmem:[%s5807 + $0x20] sm:$0xf]
        %v5817 = vld [vmem:[%s5807 + $0x24] sm:$0xf]
        %v5818 = vld [vmem:[%s5807 + $0x28] sm:$0xf]
        %v5819 = vld [vmem:[%s5807 + $0x2c] sm:$0xf]
        %v5820 = vld [vmem:[%s5807 + $0x30] sm:$0xf]
        %v5821 = vld [vmem:[%s5807 + $0x34] sm:$0xf]
        %v5822 = vld [vmem:[%s5807 + $0x38] sm:$0xf]
        %v5823 = vld [vmem:[%s5807 + $0x3c] sm:$0xf]
        %v5824 = vld [vmem:[#allocation6 + $0x7] sm:$0xff]
        %v5825 = vld [vmem:[#allocation6 + $0xf] sm:$0xff]
        %v5826 = vld [vmem:[#allocation6 + $0x17] sm:$0xff]
        %v5827 = vld [vmem:[#allocation6 + $0x1f] sm:$0xff]
        %v5828 = vld [vmem:[#allocation6 + $0x27] sm:$0xf]
        %v5829 = vpack.c.bf16 %v5825, %v5824
        %v5830 = vpack.c.bf16 %v5827, %v5826
        %v5831 = vpack.c.bf16 %v5828, %v5828
        %s5832 = scalar_lea.vmem %s9, 128
        %v5833 = vld [vmem:[%s5832] sm:$0xf]
        %v5834 = vld [vmem:[%s5832 + $0x4] sm:$0xf]
        %v5835 = vld [vmem:[%s5832 + $0x8] sm:$0xf]
        %v5836 = vld [vmem:[%s5832 + $0xc] sm:$0xf]
        %v5837 = vld [vmem:[%s5832 + $0x10] sm:$0xf]
        %v5838 = vld [vmem:[%s5832 + $0x14] sm:$0xf]
        %v5839 = vld [vmem:[%s5832 + $0x18] sm:$0xf]
        %v5840 = vld [vmem:[%s5832 + $0x1c] sm:$0xf]
        %v5841 = vld [vmem:[%s5832 + $0x20] sm:$0xf]
        %v5842 = vld [vmem:[%s5832 + $0x24] sm:$0xf]
        %v5843 = vld [vmem:[%s5832 + $0x28] sm:$0xf]
        %v5844 = vld [vmem:[%s5832 + $0x2c] sm:$0xf]
        %v5845 = vld [vmem:[%s5832 + $0x30] sm:$0xf]
        %v5846 = vld [vmem:[%s5832 + $0x34] sm:$0xf]
        %v5847 = vld [vmem:[%s5832 + $0x38] sm:$0xf]
        %v5848 = vld [vmem:[%s5832 + $0x3c] sm:$0xf]
        %v5865 = vunpack.c.l.b16 %v5833
        %v5866 = vunpack.c.l.b16 %v5834
        %v5867 = vunpack.c.l.b16 %v5835
        %v5868 = vunpack.c.l.b16 %v5836
        %v5869 = vunpack.c.l.b16 %v5837
        %v5870 = vunpack.c.l.b16 %v5838
        %v5871 = vunpack.c.l.b16 %v5839
        %v5872 = vunpack.c.l.b16 %v5840
        %v5873 = vunpack.c.l.b16 %v5841
        %v5874 = vunpack.c.l.b16 %v5842
        %v5875 = vunpack.c.l.b16 %v5843
        %v5876 = vunpack.c.l.b16 %v5844
        %v5877 = vunpack.c.l.b16 %v5845
        %v5878 = vunpack.c.l.b16 %v5846
        %v5879 = vunpack.c.l.b16 %v5847
        %v5880 = vunpack.c.l.b16 %v5848
        %v5881 = vpack.c.b16 %v5866, %v5865
        %v5882 = vpack.c.b16 %v5868, %v5867
        %v5883 = vpack.c.b16 %v5870, %v5869
        %v5884 = vpack.c.b16 %v5872, %v5871
        %v5885 = vpack.c.b16 %v5874, %v5873
        %v5886 = vpack.c.b16 %v5876, %v5875
        %v5887 = vpack.c.b16 %v5878, %v5877
        %v5888 = vpack.c.b16 %v5880, %v5879
        %5897 = vmatprep.subr.bf16.mxu0 0
        %5898 = vmatpush1.bf16.msra.mxu0 %v5881
        %5899 = vmatprep.subr.bf16.mxu0 0
        %5900 = vmatpush1.bf16.msra.mxu0 %v5882
        %5901 = vmatprep.subr.bf16.mxu0 0
        %5902 = vmatpush1.bf16.msra.mxu0 %v5883
        %5903 = vmatprep.subr.bf16.mxu0 0
        %5904 = vmatpush1.bf16.msra.mxu0 %v5884
        %5905 = vmatprep.subr.bf16.mxu0 0
        %5906 = vmatpush1.bf16.msra.mxu0 %v5885
        %5907 = vmatprep.subr.bf16.mxu0 0
        %5908 = vmatpush1.bf16.msra.mxu0 %v5886
        %5909 = vmatprep.subr.bf16.mxu0 0
        %5910 = vmatpush1.bf16.msra.mxu0 %v5887
        %5911 = vmatprep.subr.bf16.mxu0 0
        %5912 = vmatpush1.bf16.msra.mxu0 %v5888
        %5913 = vmatprep.subr.bf16.mxu0 0
        %5914 = vmatpush1.bf16.msra.mxu0 0
        %5915 = vmatprep.subr.bf16.mxu0 0
        %5916 = vmatpush1.bf16.msra.mxu0 0
        %5917 = vmatprep.subr.bf16.mxu0 0
        %5918 = vmatpush1.bf16.msra.mxu0 0
        %5919 = vmatprep.subr.bf16.mxu0 0
        %5920 = vmatpush1.bf16.msra.mxu0 0
        %5921 = vmatprep.subr.bf16.mxu0 0
        %5922 = vmatpush1.bf16.msra.mxu0 0
        %5923 = vmatprep.subr.bf16.mxu0 0
        %5924 = vmatpush1.bf16.msra.mxu0 0
        %5925 = vmatprep.subr.bf16.mxu0 0
        %5926 = vmatpush1.bf16.msra.mxu0 0
        %5927 = vmatprep.subr.bf16.mxu0 0
        %5928 = vmatpush1.bf16.msra.mxu0 0
        %5929 = vmatprep.mubr.bf16.mxu0 0
        %5930 = vmatmul.mubr.bf16.gmra.mrb[0].mxu0 %v5829
        %v5931 = vpop.f32.mrb[0].mxu0
        %v5932 = vadd.f32 0.0, %v5931
        %v5933 = vpop.f32.mrb[0].mxu0
        %v5934 = vpop.f32.mrb[0].mxu0
        %v5935 = vadd.f32 0.0, %v5934
        %v5936 = vpop.f32.mrb[0].mxu0
        %5937 = vmatprep.mubr.bf16.mxu0 0
        %5938 = vmatmul.mubr.bf16.gmra.mrb[0].mxu0 %v5830
        %v5939 = vpop.f32.mrb[0].mxu0
        %v5940 = vadd.f32 0.0, %v5939
        %v5941 = vpop.f32.mrb[0].mxu0
        %v5942 = vpop.f32.mrb[0].mxu0
        %v5943 = vadd.f32 0.0, %v5942
        %v5944 = vpop.f32.mrb[0].mxu0
        %5945 = vmatprep.mubr.bf16.mxu0 0
        %5946 = vmatmul.mubr.bf16.gmra.mrb[0].mxu0 %v5831
        %v5947 = vpop.f32.mrb[0].mxu0
        %v5948 = vadd.f32 0.0, %v5947
        %v5949 = vpop.f32.mrb[0].mxu0
        %v5950 = vpop.f32.mrb[0].mxu0
        %v5951 = vpop.f32.mrb[0].mxu0
        %5952 = vdwg.mxu0
        %v5969 = vunpack.c.l.b16 %v5783
        %v5970 = vunpack.c.l.b16 %v5784
        %v5971 = vunpack.c.l.b16 %v5785
        %v5972 = vunpack.c.l.b16 %v5786
        %v5973 = vunpack.c.l.b16 %v5787
        %v5974 = vunpack.c.l.b16 %v5788
        %v5975 = vunpack.c.l.b16 %v5789
        %v5976 = vunpack.c.l.b16 %v5790
        %v5977 = vunpack.c.l.b16 %v5791
        %v5978 = vunpack.c.l.b16 %v5792
        %v5979 = vunpack.c.l.b16 %v5793
        %v5980 = vunpack.c.l.b16 %v5794
        %v5981 = vunpack.c.l.b16 %v5795
        %v5982 = vunpack.c.l.b16 %v5796
        %v5983 = vunpack.c.l.b16 %v5797
        %v5984 = vunpack.c.l.b16 %v5798
        %v5985 = vpack.c.b16 %v5970, %v5969
        %v5986 = vpack.c.b16 %v5972, %v5971
        %v5987 = vpack.c.b16 %v5974, %v5973
        %v5988 = vpack.c.b16 %v5976, %v5975
        %v5989 = vpack.c.b16 %v5978, %v5977
        %v5990 = vpack.c.b16 %v5980, %v5979
        %v5991 = vpack.c.b16 %v5982, %v5981
        %v5992 = vpack.c.b16 %v5984, %v5983
        %6001 = vmatprep.subr.bf16.mxu0 0
        %6002 = vmatpush1.bf16.msra.mxu0 %v5985
        %6003 = vmatprep.subr.bf16.mxu0 0
        %6004 = vmatpush1.bf16.msra.mxu0 %v5986
        %6005 = vmatprep.subr.bf16.mxu0 0
        %6006 = vmatpush1.bf16.msra.mxu0 %v5987
        %6007 = vmatprep.subr.bf16.mxu0 0
        %6008 = vmatpush1.bf16.msra.mxu0 %v5988
        %6009 = vmatprep.subr.bf16.mxu0 0
        %6010 = vmatpush1.bf16.msra.mxu0 %v5989
        %6011 = vmatprep.subr.bf16.mxu0 0
        %6012 = vmatpush1.bf16.msra.mxu0 %v5990
        %6013 = vmatprep.subr.bf16.mxu0 0
        %6014 = vmatpush1.bf16.msra.mxu0 %v5991
        %6015 = vmatprep.subr.bf16.mxu0 0
        %6016 = vmatpush1.bf16.msra.mxu0 %v5992
        %6017 = vmatprep.subr.bf16.mxu0 0
        %6018 = vmatpush1.bf16.msra.mxu0 0
        %6019 = vmatprep.subr.bf16.mxu0 0
        %6020 = vmatpush1.bf16.msra.mxu0 0
        %6021 = vmatprep.subr.bf16.mxu0 0
        %6022 = vmatpush1.bf16.msra.mxu0 0
        %6023 = vmatprep.subr.bf16.mxu0 0
        %6024 = vmatpush1.bf16.msra.mxu0 0
        %6025 = vmatprep.subr.bf16.mxu0 0
        %6026 = vmatpush1.bf16.msra.mxu0 0
        %6027 = vmatprep.subr.bf16.mxu0 0
        %6028 = vmatpush1.bf16.msra.mxu0 0
        %6029 = vmatprep.subr.bf16.mxu0 0
        %6030 = vmatpush1.bf16.msra.mxu0 0
        %6031 = vmatprep.subr.bf16.mxu0 0
        %6032 = vmatpush1.bf16.msra.mxu0 0
        %6033 = vmatprep.mubr.bf16.mxu0 0
        %6034 = vmatmul.mubr.bf16.gmra.mrb[0].mxu0 %v5780
        %v6035 = vpop.f32.mrb[0].mxu0
        %v6036 = vadd.f32 %v5932, %v6035
        %v6037 = vpop.f32.mrb[0].mxu0
        %v6038 = vpop.f32.mrb[0].mxu0
        %v6039 = vadd.f32 %v5935, %v6038
        %v6040 = vpop.f32.mrb[0].mxu0
        %6041 = vmatprep.mubr.bf16.mxu0 0
        %6042 = vmatmul.mubr.bf16.gmra.mrb[0].mxu0 %v5781
        %v6043 = vpop.f32.mrb[0].mxu0
        %v6044 = vadd.f32 %v5940, %v6043
        %v6045 = vpop.f32.mrb[0].mxu0
        %v6046 = vpop.f32.mrb[0].mxu0
        %v6047 = vadd.f32 %v5943, %v6046
        %v6048 = vpop.f32.mrb[0].mxu0
        %6049 = vmatprep.mubr.bf16.mxu0 0
        %6050 = vmatmul.mubr.bf16.gmra.mrb[0].mxu0 %v5782
        %v6051 = vpop.f32.mrb[0].mxu0
        %v6052 = vadd.f32 %v5948, %v6051
        %v6053 = vpop.f32.mrb[0].mxu0
        %v6054 = vpop.f32.mrb[0].mxu0
        %v6055 = vpop.f32.mrb[0].mxu0
        %6056 = vdwg.mxu0
        %v6057 = vld [vmem:[#allocation6 + $0x17] sm:$0xff]
        %v6058 = vld [vmem:[#allocation6 + $0x1f] sm:$0xff]
        %v6059 = vld [vmem:[#allocation6 + $0x27] sm:$0xff]
        %v6060 = vld [vmem:[#allocation6 + $0x2f] sm:$0xff]
        %v6061 = vld [vmem:[#allocation6 + $0x37] sm:$0xf]
        %v6062 = vpack.c.bf16 %v6058, %v6057
        %v6063 = vpack.c.bf16 %v6060, %v6059
        %v6064 = vpack.c.bf16 %v6061, %v6061
        %s6065 = scalar_lea.vmem %s9, 192
        %v6066 = vld [vmem:[%s6065] sm:$0xf]
        %v6067 = vld [vmem:[%s6065 + $0x4] sm:$0xf]
        %v6068 = vld [vmem:[%s6065 + $0x8] sm:$0xf]
        %v6069 = vld [vmem:[%s6065 + $0xc] sm:$0xf]
        %v6070 = vld [vmem:[%s6065 + $0x10] sm:$0xf]
        %v6071 = vld [vmem:[%s6065 + $0x14] sm:$0xf]
        %v6072 = vld [vmem:[%s6065 + $0x18] sm:$0xf]
        %v6073 = vld [vmem:[%s6065 + $0x1c] sm:$0xf]
        %v6074 = vld [vmem:[%s6065 + $0x20] sm:$0xf]
        %v6075 = vld [vmem:[%s6065 + $0x24] sm:$0xf]
        %v6076 = vld [vmem:[%s6065 + $0x28] sm:$0xf]
        %v6077 = vld [vmem:[%s6065 + $0x2c] sm:$0xf]
        %v6078 = vld [vmem:[%s6065 + $0x30] sm:$0xf]
        %v6079 = vld [vmem:[%s6065 + $0x34] sm:$0xf]
        %v6080 = vld [vmem:[%s6065 + $0x38] sm:$0xf]
        %v6081 = vld [vmem:[%s6065 + $0x3c] sm:$0xf]
        %v6098 = vunpack.c.l.b16 %v6066
        %v6099 = vunpack.c.l.b16 %v6067
        %v6100 = vunpack.c.l.b16 %v6068
        %v6101 = vunpack.c.l.b16 %v6069
        %v6102 = vunpack.c.l.b16 %v6070
        %v6103 = vunpack.c.l.b16 %v6071
        %v6104 = vunpack.c.l.b16 %v6072
        %v6105 = vunpack.c.l.b16 %v6073
        %v6106 = vunpack.c.l.b16 %v6074
        %v6107 = vunpack.c.l.b16 %v6075
        %v6108 = vunpack.c.l.b16 %v6076
        %v6109 = vunpack.c.l.b16 %v6077
        %v6110 = vunpack.c.l.b16 %v6078
        %v6111 = vunpack.c.l.b16 %v6079
        %v6112 = vunpack.c.l.b16 %v6080
        %v6113 = vunpack.c.l.b16 %v6081
        %v6114 = vpack.c.b16 %v6099, %v6098
        %v6115 = vpack.c.b16 %v6101, %v6100
        %v6116 = vpack.c.b16 %v6103, %v6102
        %v6117 = vpack.c.b16 %v6105, %v6104
        %v6118 = vpack.c.b16 %v6107, %v6106
        %v6119 = vpack.c.b16 %v6109, %v6108
        %v6120 = vpack.c.b16 %v6111, %v6110
        %v6121 = vpack.c.b16 %v6113, %v6112
        %6130 = vmatprep.subr.bf16.mxu0 0
        %6131 = vmatpush1.bf16.msra.mxu0 %v6114
        %6132 = vmatprep.subr.bf16.mxu0 0
        %6133 = vmatpush1.bf16.msra.mxu0 %v6115
        %6134 = vmatprep.subr.bf16.mxu0 0
        %6135 = vmatpush1.bf16.msra.mxu0 %v6116
        %6136 = vmatprep.subr.bf16.mxu0 0
        %6137 = vmatpush1.bf16.msra.mxu0 %v6117
        %6138 = vmatprep.subr.bf16.mxu0 0
        %6139 = vmatpush1.bf16.msra.mxu0 %v6118
        %6140 = vmatprep.subr.bf16.mxu0 0
        %6141 = vmatpush1.bf16.msra.mxu0 %v6119
        %6142 = vmatprep.subr.bf16.mxu0 0
        %6143 = vmatpush1.bf16.msra.mxu0 %v6120
        %6144 = vmatprep.subr.bf16.mxu0 0
        %6145 = vmatpush1.bf16.msra.mxu0 %v6121
        %6146 = vmatprep.subr.bf16.mxu0 0
        %6147 = vmatpush1.bf16.msra.mxu0 0
        %6148 = vmatprep.subr.bf16.mxu0 0
        %6149 = vmatpush1.bf16.msra.mxu0 0
        %6150 = vmatprep.subr.bf16.mxu0 0
        %6151 = vmatpush1.bf16.msra.mxu0 0
        %6152 = vmatprep.subr.bf16.mxu0 0
        %6153 = vmatpush1.bf16.msra.mxu0 0
        %6154 = vmatprep.subr.bf16.mxu0 0
        %6155 = vmatpush1.bf16.msra.mxu0 0
        %6156 = vmatprep.subr.bf16.mxu0 0
        %6157 = vmatpush1.bf16.msra.mxu0 0
        %6158 = vmatprep.subr.bf16.mxu0 0
        %6159 = vmatpush1.bf16.msra.mxu0 0
        %6160 = vmatprep.subr.bf16.mxu0 0
        %6161 = vmatpush1.bf16.msra.mxu0 0
        %6162 = vmatprep.mubr.bf16.mxu0 0
        %6163 = vmatmul.mubr.bf16.gmra.mrb[0].mxu0 %v6062
        %v6164 = vpop.f32.mrb[0].mxu0
        %v6165 = vadd.f32 0.0, %v6164
        %v6166 = vpop.f32.mrb[0].mxu0
        %v6167 = vpop.f32.mrb[0].mxu0
        %v6168 = vadd.f32 0.0, %v6167
        %v6169 = vpop.f32.mrb[0].mxu0
        %6170 = vmatprep.mubr.bf16.mxu0 0
        %6171 = vmatmul.mubr.bf16.gmra.mrb[0].mxu0 %v6063
        %v6172 = vpop.f32.mrb[0].mxu0
        %v6173 = vadd.f32 0.0, %v6172
        %v6174 = vpop.f32.mrb[0].mxu0
        %v6175 = vpop.f32.mrb[0].mxu0
        %v6176 = vadd.f32 0.0, %v6175
        %v6177 = vpop.f32.mrb[0].mxu0
        %6178 = vmatprep.mubr.bf16.mxu0 0
        %6179 = vmatmul.mubr.bf16.gmra.mrb[0].mxu0 %v6064
        %v6180 = vpop.f32.mrb[0].mxu0
        %v6181 = vadd.f32 0.0, %v6180
        %v6182 = vpop.f32.mrb[0].mxu0
        %v6183 = vpop.f32.mrb[0].mxu0
        %v6184 = vpop.f32.mrb[0].mxu0
        %6185 = vdwg.mxu0
        %v6202 = vunpack.c.l.b16 %v5808
        %v6203 = vunpack.c.l.b16 %v5809
        %v6204 = vunpack.c.l.b16 %v5810
        %v6205 = vunpack.c.l.b16 %v5811
        %v6206 = vunpack.c.l.b16 %v5812
        %v6207 = vunpack.c.l.b16 %v5813
        %v6208 = vunpack.c.l.b16 %v5814
        %v6209 = vunpack.c.l.b16 %v5815
        %v6210 = vunpack.c.l.b16 %v5816
        %v6211 = vunpack.c.l.b16 %v5817
        %v6212 = vunpack.c.l.b16 %v5818
        %v6213 = vunpack.c.l.b16 %v5819
        %v6214 = vunpack.c.l.b16 %v5820
        %v6215 = vunpack.c.l.b16 %v5821
        %v6216 = vunpack.c.l.b16 %v5822
        %v6217 = vunpack.c.l.b16 %v5823
        %v6218 = vpack.c.b16 %v6203, %v6202
        %v6219 = vpack.c.b16 %v6205, %v6204
        %v6220 = vpack.c.b16 %v6207, %v6206
        %v6221 = vpack.c.b16 %v6209, %v6208
        %v6222 = vpack.c.b16 %v6211, %v6210
        %v6223 = vpack.c.b16 %v6213, %v6212
        %v6224 = vpack.c.b16 %v6215, %v6214
        %v6225 = vpack.c.b16 %v6217, %v6216
        %6234 = vmatprep.subr.bf16.mxu0 0
        %6235 = vmatpush1.bf16.msra.mxu0 %v6218
        %6236 = vmatprep.subr.bf16.mxu0 0
        %6237 = vmatpush1.bf16.msra.mxu0 %v6219
        %6238 = vmatprep.subr.bf16.mxu0 0
        %6239 = vmatpush1.bf16.msra.mxu0 %v6220
        %6240 = vmatprep.subr.bf16.mxu0 0
        %6241 = vmatpush1.bf16.msra.mxu0 %v6221
        %6242 = vmatprep.subr.bf16.mxu0 0
        %6243 = vmatpush1.bf16.msra.mxu0 %v6222
        %6244 = vmatprep.subr.bf16.mxu0 0
        %6245 = vmatpush1.bf16.msra.mxu0 %v6223
        %6246 = vmatprep.subr.bf16.mxu0 0
        %6247 = vmatpush1.bf16.msra.mxu0 %v6224
        %6248 = vmatprep.subr.bf16.mxu0 0
        %6249 = vmatpush1.bf16.msra.mxu0 %v6225
        %6250 = vmatprep.subr.bf16.mxu0 0
        %6251 = vmatpush1.bf16.msra.mxu0 0
        %6252 = vmatprep.subr.bf16.mxu0 0
        %6253 = vmatpush1.bf16.msra.mxu0 0
        %6254 = vmatprep.subr.bf16.mxu0 0
        %6255 = vmatpush1.bf16.msra.mxu0 0
        %6256 = vmatprep.subr.bf16.mxu0 0
        %6257 = vmatpush1.bf16.msra.mxu0 0
        %6258 = vmatprep.subr.bf16.mxu0 0
        %6259 = vmatpush1.bf16.msra.mxu0 0
        %6260 = vmatprep.subr.bf16.mxu0 0
        %6261 = vmatpush1.bf16.msra.mxu0 0
        %6262 = vmatprep.subr.bf16.mxu0 0
        %6263 = vmatpush1.bf16.msra.mxu0 0
        %6264 = vmatprep.subr.bf16.mxu0 0
        %6265 = vmatpush1.bf16.msra.mxu0 0
        %6266 = vmatprep.mubr.bf16.mxu0 0
        %6267 = vmatmul.mubr.bf16.gmra.mrb[0].mxu0 %v5804
        %v6268 = vpop.f32.mrb[0].mxu0
        %v6269 = vadd.f32 %v6165, %v6268
        %v6270 = vpop.f32.mrb[0].mxu0
        %v6271 = vpop.f32.mrb[0].mxu0
        %v6272 = vadd.f32 %v6168, %v6271
        %v6273 = vpop.f32.mrb[0].mxu0
        %6274 = vmatprep.mubr.bf16.mxu0 0
        %6275 = vmatmul.mubr.bf16.gmra.mrb[0].mxu0 %v5805
        %v6276 = vpop.f32.mrb[0].mxu0
        %v6277 = vadd.f32 %v6173, %v6276
        %v6278 = vpop.f32.mrb[0].mxu0
        %v6279 = vpop.f32.mrb[0].mxu0
        %v6280 = vadd.f32 %v6176, %v6279
        %v6281 = vpop.f32.mrb[0].mxu0
        %6282 = vmatprep.mubr.bf16.mxu0 0
        %6283 = vmatmul.mubr.bf16.gmra.mrb[0].mxu0 %v5806
        %v6284 = vpop.f32.mrb[0].mxu0
        %v6285 = vadd.f32 %v6181, %v6284
        %v6286 = vpop.f32.mrb[0].mxu0
        %v6287 = vpop.f32.mrb[0].mxu0
        %v6288 = vpop.f32.mrb[0].mxu0
        %6289 = vdwg.mxu0
        %v6290 = vld [vmem:[#allocation6 + $0x18] sm:$0xff]
        %v6291 = vld [vmem:[#allocation6 + $0x20] sm:$0xff]
        %v6292 = vld [vmem:[#allocation6 + $0x28] sm:$0xff]
        %v6293 = vld [vmem:[#allocation6 + $0x30] sm:$0xff]
        %v6294 = vld [vmem:[#allocation6 + $0x38] sm:$0xf]
        %v6295 = vpack.c.bf16 %v6291, %v6290
        %v6296 = vpack.c.bf16 %v6293, %v6292
        %v6297 = vpack.c.bf16 %v6294, %v6294
        %s6298 = scalar_lea.vmem %s9, 256
        %v6299 = vld [vmem:[%s6298] sm:$0xf]
        %v6300 = vld [vmem:[%s6298 + $0x4] sm:$0xf]
        %v6301 = vld [vmem:[%s6298 + $0x8] sm:$0xf]
        %v6302 = vld [vmem:[%s6298 + $0xc] sm:$0xf]
        %v6303 = vld [vmem:[%s6298 + $0x10] sm:$0xf]
        %v6304 = vld [vmem:[%s6298 + $0x14] sm:$0xf]
        %v6305 = vld [vmem:[%s6298 + $0x18] sm:$0xf]
        %v6306 = vld [vmem:[%s6298 + $0x1c] sm:$0xf]
        %v6307 = vld [vmem:[%s6298 + $0x20] sm:$0xf]
        %v6308 = vld [vmem:[%s6298 + $0x24] sm:$0xf]
        %v6309 = vld [vmem:[%s6298 + $0x28] sm:$0xf]
        %v6310 = vld [vmem:[%s6298 + $0x2c] sm:$0xf]
        %v6311 = vld [vmem:[%s6298 + $0x30] sm:$0xf]
        %v6312 = vld [vmem:[%s6298 + $0x34] sm:$0xf]
        %v6313 = vld [vmem:[%s6298 + $0x38] sm:$0xf]
        %v6314 = vld [vmem:[%s6298 + $0x3c] sm:$0xf]
        %v6331 = vunpack.c.l.b16 %v6299
        %v6332 = vunpack.c.l.b16 %v6300
        %v6333 = vunpack.c.l.b16 %v6301
        %v6334 = vunpack.c.l.b16 %v6302
        %v6335 = vunpack.c.l.b16 %v6303
        %v6336 = vunpack.c.l.b16 %v6304
        %v6337 = vunpack.c.l.b16 %v6305
        %v6338 = vunpack.c.l.b16 %v6306
        %v6339 = vunpack.c.l.b16 %v6307
        %v6340 = vunpack.c.l.b16 %v6308
        %v6341 = vunpack.c.l.b16 %v6309
        %v6342 = vunpack.c.l.b16 %v6310
        %v6343 = vunpack.c.l.b16 %v6311
        %v6344 = vunpack.c.l.b16 %v6312
        %v6345 = vunpack.c.l.b16 %v6313
        %v6346 = vunpack.c.l.b16 %v6314
        %v6347 = vpack.c.b16 %v6332, %v6331
        %v6348 = vpack.c.b16 %v6334, %v6333
        %v6349 = vpack.c.b16 %v6336, %v6335
        %v6350 = vpack.c.b16 %v6338, %v6337
        %v6351 = vpack.c.b16 %v6340, %v6339
        %v6352 = vpack.c.b16 %v6342, %v6341
        %v6353 = vpack.c.b16 %v6344, %v6343
        %v6354 = vpack.c.b16 %v6346, %v6345
        %6363 = vmatprep.subr.bf16.mxu0 0
        %6364 = vmatpush1.bf16.msra.mxu0 %v6347
        %6365 = vmatprep.subr.bf16.mxu0 0
        %6366 = vmatpush1.bf16.msra.mxu0 %v6348
        %6367 = vmatprep.subr.bf16.mxu0 0
        %6368 = vmatpush1.bf16.msra.mxu0 %v6349
        %6369 = vmatprep.subr.bf16.mxu0 0
        %6370 = vmatpush1.bf16.msra.mxu0 %v6350
        %6371 = vmatprep.subr.bf16.mxu0 0
        %6372 = vmatpush1.bf16.msra.mxu0 %v6351
        %6373 = vmatprep.subr.bf16.mxu0 0
        %6374 = vmatpush1.bf16.msra.mxu0 %v6352
        %6375 = vmatprep.subr.bf16.mxu0 0
        %6376 = vmatpush1.bf16.msra.mxu0 %v6353
        %6377 = vmatprep.subr.bf16.mxu0 0
        %6378 = vmatpush1.bf16.msra.mxu0 %v6354
        %6379 = vmatprep.subr.bf16.mxu0 0
        %6380 = vmatpush1.bf16.msra.mxu0 0
        %6381 = vmatprep.subr.bf16.mxu0 0
        %6382 = vmatpush1.bf16.msra.mxu0 0
        %6383 = vmatprep.subr.bf16.mxu0 0
        %6384 = vmatpush1.bf16.msra.mxu0 0
        %6385 = vmatprep.subr.bf16.mxu0 0
        %6386 = vmatpush1.bf16.msra.mxu0 0
        %6387 = vmatprep.subr.bf16.mxu0 0
        %6388 = vmatpush1.bf16.msra.mxu0 0
        %6389 = vmatprep.subr.bf16.mxu0 0
        %6390 = vmatpush1.bf16.msra.mxu0 0
        %6391 = vmatprep.subr.bf16.mxu0 0
        %6392 = vmatpush1.bf16.msra.mxu0 0
        %6393 = vmatprep.subr.bf16.mxu0 0
        %6394 = vmatpush1.bf16.msra.mxu0 0
        %6395 = vmatprep.mubr.bf16.mxu0 0
        %6396 = vmatmul.mubr.bf16.gmra.mrb[0].mxu0 %v6295
        %v6397 = vpop.f32.mrb[0].mxu0
        %v6398 = vadd.f32 0.0, %v6397
        %v6399 = vpop.f32.mrb[0].mxu0
        %v6400 = vpop.f32.mrb[0].mxu0
        %v6401 = vadd.f32 0.0, %v6400
        %v6402 = vpop.f32.mrb[0].mxu0
        %6403 = vmatprep.mubr.bf16.mxu0 0
        %6404 = vmatmul.mubr.bf16.gmra.mrb[0].mxu0 %v6296
        %v6405 = vpop.f32.mrb[0].mxu0
        %v6406 = vadd.f32 0.0, %v6405
        %v6407 = vpop.f32.mrb[0].mxu0
        %v6408 = vpop.f32.mrb[0].mxu0
        %v6409 = vadd.f32 0.0, %v6408
        %v6410 = vpop.f32.mrb[0].mxu0
        %6411 = vmatprep.mubr.bf16.mxu0 0
        %6412 = vmatmul.mubr.bf16.gmra.mrb[0].mxu0 %v6297
        %v6413 = vpop.f32.mrb[0].mxu0
        %v6414 = vadd.f32 0.0, %v6413
        %v6415 = vpop.f32.mrb[0].mxu0
        %v6416 = vpop.f32.mrb[0].mxu0
        %v6417 = vpop.f32.mrb[0].mxu0
        %6418 = vdwg.mxu0
        %v6419 = vadd.f32 %v6036, %v6398
        %v6420 = vadd.f32 %v6039, %v6401
        %v6421 = vadd.f32 %v6044, %v6406
        %v6422 = vadd.f32 %v6047, %v6409
        %v6423 = vadd.f32 %v6052, %v6414
        %v6424 = vld [vmem:[#allocation6 + $0x19] sm:$0xff]
        %v6425 = vld [vmem:[#allocation6 + $0x21] sm:$0xff]
        %v6426 = vld [vmem:[#allocation6 + $0x29] sm:$0xff]
        %v6427 = vld [vmem:[#allocation6 + $0x31] sm:$0xff]
        %v6428 = vld [vmem:[#allocation6 + $0x39] sm:$0xf]
        %v6429 = vpack.c.bf16 %v6425, %v6424
        %v6430 = vpack.c.bf16 %v6427, %v6426
        %v6431 = vpack.c.bf16 %v6428, %v6428
        %s6432 = scalar_lea.vmem %s9, 320
        %v6433 = vld [vmem:[%s6432] sm:$0xf]
        %v6434 = vld [vmem:[%s6432 + $0x4] sm:$0xf]
        %v6435 = vld [vmem:[%s6432 + $0x8] sm:$0xf]
        %v6436 = vld [vmem:[%s6432 + $0xc] sm:$0xf]
        %v6437 = vld [vmem:[%s6432 + $0x10] sm:$0xf]
        %v6438 = vld [vmem:[%s6432 + $0x14] sm:$0xf]
        %v6439 = vld [vmem:[%s6432 + $0x18] sm:$0xf]
        %v6440 = vld [vmem:[%s6432 + $0x1c] sm:$0xf]
        %v6441 = vld [vmem:[%s6432 + $0x20] sm:$0xf]
        %v6442 = vld [vmem:[%s6432 + $0x24] sm:$0xf]
        %v6443 = vld [vmem:[%s6432 + $0x28] sm:$0xf]
        %v6444 = vld [vmem:[%s6432 + $0x2c] sm:$0xf]
        %v6445 = vld [vmem:[%s6432 + $0x30] sm:$0xf]
        %v6446 = vld [vmem:[%s6432 + $0x34] sm:$0xf]
        %v6447 = vld [vmem:[%s6432 + $0x38] sm:$0xf]
        %v6448 = vld [vmem:[%s6432 + $0x3c] sm:$0xf]
        %v6465 = vunpack.c.l.b16 %v6433
        %v6466 = vunpack.c.l.b16 %v6434
        %v6467 = vunpack.c.l.b16 %v6435
        %v6468 = vunpack.c.l.b16 %v6436
        %v6469 = vunpack.c.l.b16 %v6437
        %v6470 = vunpack.c.l.b16 %v6438
        %v6471 = vunpack.c.l.b16 %v6439
        %v6472 = vunpack.c.l.b16 %v6440
        %v6473 = vunpack.c.l.b16 %v6441
        %v6474 = vunpack.c.l.b16 %v6442
        %v6475 = vunpack.c.l.b16 %v6443
        %v6476 = vunpack.c.l.b16 %v6444
        %v6477 = vunpack.c.l.b16 %v6445
        %v6478 = vunpack.c.l.b16 %v6446
        %v6479 = vunpack.c.l.b16 %v6447
        %v6480 = vunpack.c.l.b16 %v6448
        %v6481 = vpack.c.b16 %v6466, %v6465
        %v6482 = vpack.c.b16 %v6468, %v6467
        %v6483 = vpack.c.b16 %v6470, %v6469
        %v6484 = vpack.c.b16 %v6472, %v6471
        %v6485 = vpack.c.b16 %v6474, %v6473
        %v6486 = vpack.c.b16 %v6476, %v6475
        %v6487 = vpack.c.b16 %v6478, %v6477
        %v6488 = vpack.c.b16 %v6480, %v6479
        %6497 = vmatprep.subr.bf16.mxu0 0
        %6498 = vmatpush1.bf16.msra.mxu0 %v6481
        %6499 = vmatprep.subr.bf16.mxu0 0
        %6500 = vmatpush1.bf16.msra.mxu0 %v6482
        %6501 = vmatprep.subr.bf16.mxu0 0
        %6502 = vmatpush1.bf16.msra.mxu0 %v6483
        %6503 = vmatprep.subr.bf16.mxu0 0
        %6504 = vmatpush1.bf16.msra.mxu0 %v6484
        %6505 = vmatprep.subr.bf16.mxu0 0
        %6506 = vmatpush1.bf16.msra.mxu0 %v6485
        %6507 = vmatprep.subr.bf16.mxu0 0
        %6508 = vmatpush1.bf16.msra.mxu0 %v6486
        %6509 = vmatprep.subr.bf16.mxu0 0
        %6510 = vmatpush1.bf16.msra.mxu0 %v6487
        %6511 = vmatprep.subr.bf16.mxu0 0
        %6512 = vmatpush1.bf16.msra.mxu0 %v6488
        %6513 = vmatprep.subr.bf16.mxu0 0
        %6514 = vmatpush1.bf16.msra.mxu0 0
        %6515 = vmatprep.subr.bf16.mxu0 0
        %6516 = vmatpush1.bf16.msra.mxu0 0
        %6517 = vmatprep.subr.bf16.mxu0 0
        %6518 = vmatpush1.bf16.msra.mxu0 0
        %6519 = vmatprep.subr.bf16.mxu0 0
        %6520 = vmatpush1.bf16.msra.mxu0 0
        %6521 = vmatprep.subr.bf16.mxu0 0
        %6522 = vmatpush1.bf16.msra.mxu0 0
        %6523 = vmatprep.subr.bf16.mxu0 0
        %6524 = vmatpush1.bf16.msra.mxu0 0
        %6525 = vmatprep.subr.bf16.mxu0 0
        %6526 = vmatpush1.bf16.msra.mxu0 0
        %6527 = vmatprep.subr.bf16.mxu0 0
        %6528 = vmatpush1.bf16.msra.mxu0 0
        %6529 = vmatprep.mubr.bf16.mxu0 0
        %6530 = vmatmul.mubr.bf16.gmra.mrb[0].mxu0 %v6429
        %v6531 = vpop.f32.mrb[0].mxu0
        %v6532 = vadd.f32 0.0, %v6531
        %v6533 = vpop.f32.mrb[0].mxu0
        %v6534 = vpop.f32.mrb[0].mxu0
        %v6535 = vadd.f32 0.0, %v6534
        %v6536 = vpop.f32.mrb[0].mxu0
        %6537 = vmatprep.mubr.bf16.mxu0 0
        %6538 = vmatmul.mubr.bf16.gmra.mrb[0].mxu0 %v6430
        %v6539 = vpop.f32.mrb[0].mxu0
        %v6540 = vadd.f32 0.0, %v6539
        %v6541 = vpop.f32.mrb[0].mxu0
        %v6542 = vpop.f32.mrb[0].mxu0
        %v6543 = vadd.f32 0.0, %v6542
        %v6544 = vpop.f32.mrb[0].mxu0
        %6545 = vmatprep.mubr.bf16.mxu0 0
        %6546 = vmatmul.mubr.bf16.gmra.mrb[0].mxu0 %v6431
        %v6547 = vpop.f32.mrb[0].mxu0
        %v6548 = vadd.f32 0.0, %v6547
        %v6549 = vpop.f32.mrb[0].mxu0
        %v6550 = vpop.f32.mrb[0].mxu0
        %v6551 = vpop.f32.mrb[0].mxu0
        %6552 = vdwg.mxu0
        %v6553 = vadd.f32 %v6269, %v6532
        %v6554 = vadd.f32 %v6272, %v6535
        %v6555 = vadd.f32 %v6277, %v6540
        %v6556 = vadd.f32 %v6280, %v6543
        %v6557 = vadd.f32 %v6285, %v6548
        %v6558 = vld [vmem:[#allocation6 + $0x29] sm:$0xff]
        %v6559 = vld [vmem:[#allocation6 + $0x31] sm:$0xff]
        %v6560 = vld [vmem:[#allocation6 + $0x39] sm:$0xff]
        %v6561 = vld [vmem:[#allocation6 + $0x41] sm:$0xff]
        %v6562 = vld [vmem:[#allocation6 + $0x49] sm:$0xf]
        %v6563 = vpack.c.bf16 %v6559, %v6558
        %v6564 = vpack.c.bf16 %v6561, %v6560
        %v6565 = vpack.c.bf16 %v6562, %v6562
        %s6566 = scalar_lea.vmem %s9, 384
        %v6567 = vld [vmem:[%s6566] sm:$0xf]
        %v6568 = vld [vmem:[%s6566 + $0x4] sm:$0xf]
        %v6569 = vld [vmem:[%s6566 + $0x8] sm:$0xf]
        %v6570 = vld [vmem:[%s6566 + $0xc] sm:$0xf]
        %v6571 = vld [vmem:[%s6566 + $0x10] sm:$0xf]
        %v6572 = vld [vmem:[%s6566 + $0x14] sm:$0xf]
        %v6573 = vld [vmem:[%s6566 + $0x18] sm:$0xf]
        %v6574 = vld [vmem:[%s6566 + $0x1c] sm:$0xf]
        %v6575 = vld [vmem:[%s6566 + $0x20] sm:$0xf]
        %v6576 = vld [vmem:[%s6566 + $0x24] sm:$0xf]
        %v6577 = vld [vmem:[%s6566 + $0x28] sm:$0xf]
        %v6578 = vld [vmem:[%s6566 + $0x2c] sm:$0xf]
        %v6579 = vld [vmem:[%s6566 + $0x30] sm:$0xf]
        %v6580 = vld [vmem:[%s6566 + $0x34] sm:$0xf]
        %v6581 = vld [vmem:[%s6566 + $0x38] sm:$0xf]
        %v6582 = vld [vmem:[%s6566 + $0x3c] sm:$0xf]
        %v6599 = vunpack.c.l.b16 %v6567
        %v6600 = vunpack.c.l.b16 %v6568
        %v6601 = vunpack.c.l.b16 %v6569
        %v6602 = vunpack.c.l.b16 %v6570
        %v6603 = vunpack.c.l.b16 %v6571
        %v6604 = vunpack.c.l.b16 %v6572
        %v6605 = vunpack.c.l.b16 %v6573
        %v6606 = vunpack.c.l.b16 %v6574
        %v6607 = vunpack.c.l.b16 %v6575
        %v6608 = vunpack.c.l.b16 %v6576
        %v6609 = vunpack.c.l.b16 %v6577
        %v6610 = vunpack.c.l.b16 %v6578
        %v6611 = vunpack.c.l.b16 %v6579
        %v6612 = vunpack.c.l.b16 %v6580
        %v6613 = vunpack.c.l.b16 %v6581
        %v6614 = vunpack.c.l.b16 %v6582
        %v6615 = vpack.c.b16 %v6600, %v6599
        %v6616 = vpack.c.b16 %v6602, %v6601
        %v6617 = vpack.c.b16 %v6604, %v6603
        %v6618 = vpack.c.b16 %v6606, %v6605
        %v6619 = vpack.c.b16 %v6608, %v6607
        %v6620 = vpack.c.b16 %v6610, %v6609
        %v6621 = vpack.c.b16 %v6612, %v6611
        %v6622 = vpack.c.b16 %v6614, %v6613
        %6631 = vmatprep.subr.bf16.mxu0 0
        %6632 = vmatpush1.bf16.msra.mxu0 %v6615
        %6633 = vmatprep.subr.bf16.mxu0 0
        %6634 = vmatpush1.bf16.msra.mxu0 %v6616
        %6635 = vmatprep.subr.bf16.mxu0 0
        %6636 = vmatpush1.bf16.msra.mxu0 %v6617
        %6637 = vmatprep.subr.bf16.mxu0 0
        %6638 = vmatpush1.bf16.msra.mxu0 %v6618
        %6639 = vmatprep.subr.bf16.mxu0 0
        %6640 = vmatpush1.bf16.msra.mxu0 %v6619
        %6641 = vmatprep.subr.bf16.mxu0 0
        %6642 = vmatpush1.bf16.msra.mxu0 %v6620
        %6643 = vmatprep.subr.bf16.mxu0 0
        %6644 = vmatpush1.bf16.msra.mxu0 %v6621
        %6645 = vmatprep.subr.bf16.mxu0 0
        %6646 = vmatpush1.bf16.msra.mxu0 %v6622
        %6647 = vmatprep.subr.bf16.mxu0 0
        %6648 = vmatpush1.bf16.msra.mxu0 0
        %6649 = vmatprep.subr.bf16.mxu0 0
        %6650 = vmatpush1.bf16.msra.mxu0 0
        %6651 = vmatprep.subr.bf16.mxu0 0
        %6652 = vmatpush1.bf16.msra.mxu0 0
        %6653 = vmatprep.subr.bf16.mxu0 0
        %6654 = vmatpush1.bf16.msra.mxu0 0
        %6655 = vmatprep.subr.bf16.mxu0 0
        %6656 = vmatpush1.bf16.msra.mxu0 0
        %6657 = vmatprep.subr.bf16.mxu0 0
        %6658 = vmatpush1.bf16.msra.mxu0 0
        %6659 = vmatprep.subr.bf16.mxu0 0
        %6660 = vmatpush1.bf16.msra.mxu0 0
        %6661 = vmatprep.subr.bf16.mxu0 0
        %6662 = vmatpush1.bf16.msra.mxu0 0
        %6663 = vmatprep.mubr.bf16.mxu0 0
        %6664 = vmatmul.mubr.bf16.gmra.mrb[0].mxu0 %v6563
        %v6665 = vpop.f32.mrb[0].mxu0
        %v6666 = vadd.f32 0.0, %v6665
        %v6667 = vpop.f32.mrb[0].mxu0
        %v6668 = vpop.f32.mrb[0].mxu0
        %v6669 = vadd.f32 0.0, %v6668
        %v6670 = vpop.f32.mrb[0].mxu0
        %6671 = vmatprep.mubr.bf16.mxu0 0
        %6672 = vmatmul.mubr.bf16.gmra.mrb[0].mxu0 %v6564
        %v6673 = vpop.f32.mrb[0].mxu0
        %v6674 = vadd.f32 0.0, %v6673
        %v6675 = vpop.f32.mrb[0].mxu0
        %v6676 = vpop.f32.mrb[0].mxu0
        %v6677 = vadd.f32 0.0, %v6676
        %v6678 = vpop.f32.mrb[0].mxu0
        %6679 = vmatprep.mubr.bf16.mxu0 0
        %6680 = vmatmul.mubr.bf16.gmra.mrb[0].mxu0 %v6565
        %v6681 = vpop.f32.mrb[0].mxu0
        %v6682 = vadd.f32 0.0, %v6681
        %v6683 = vpop.f32.mrb[0].mxu0
        %v6684 = vpop.f32.mrb[0].mxu0
        %v6685 = vpop.f32.mrb[0].mxu0
        %6686 = vdwg.mxu0
        %v6687 = vadd.f32 %v6419, %v6666
        %v6688 = vadd.f32 %v6420, %v6669
        %v6689 = vadd.f32 %v6421, %v6674
        %v6690 = vadd.f32 %v6422, %v6677
        %v6691 = vadd.f32 %v6423, %v6682
        %v6692 = vld [vmem:[#allocation6 + $0x2a] sm:$0xff]
        %v6693 = vld [vmem:[#allocation6 + $0x32] sm:$0xff]
        %v6694 = vld [vmem:[#allocation6 + $0x3a] sm:$0xff]
        %v6695 = vld [vmem:[#allocation6 + $0x42] sm:$0xff]
        %v6696 = vld [vmem:[#allocation6 + $0x4a] sm:$0xf]
        %v6697 = vpack.c.bf16 %v6693, %v6692
        %v6698 = vpack.c.bf16 %v6695, %v6694
        %v6699 = vpack.c.bf16 %v6696, %v6696
        %s6700 = scalar_lea.vmem %s9, 448
        %v6701 = vld [vmem:[%s6700] sm:$0xf]
        %v6702 = vld [vmem:[%s6700 + $0x4] sm:$0xf]
        %v6703 = vld [vmem:[%s6700 + $0x8] sm:$0xf]
        %v6704 = vld [vmem:[%s6700 + $0xc] sm:$0xf]
        %v6705 = vld [vmem:[%s6700 + $0x10] sm:$0xf]
        %v6706 = vld [vmem:[%s6700 + $0x14] sm:$0xf]
        %v6707 = vld [vmem:[%s6700 + $0x18] sm:$0xf]
        %v6708 = vld [vmem:[%s6700 + $0x1c] sm:$0xf]
        %v6709 = vld [vmem:[%s6700 + $0x20] sm:$0xf]
        %v6710 = vld [vmem:[%s6700 + $0x24] sm:$0xf]
        %v6711 = vld [vmem:[%s6700 + $0x28] sm:$0xf]
        %v6712 = vld [vmem:[%s6700 + $0x2c] sm:$0xf]
        %v6713 = vld [vmem:[%s6700 + $0x30] sm:$0xf]
        %v6714 = vld [vmem:[%s6700 + $0x34] sm:$0xf]
        %v6715 = vld [vmem:[%s6700 + $0x38] sm:$0xf]
        %v6716 = vld [vmem:[%s6700 + $0x3c] sm:$0xf]
        %v6733 = vunpack.c.l.b16 %v6701
        %v6734 = vunpack.c.l.b16 %v6702
        %v6735 = vunpack.c.l.b16 %v6703
        %v6736 = vunpack.c.l.b16 %v6704
        %v6737 = vunpack.c.l.b16 %v6705
        %v6738 = vunpack.c.l.b16 %v6706
        %v6739 = vunpack.c.l.b16 %v6707
        %v6740 = vunpack.c.l.b16 %v6708
        %v6741 = vunpack.c.l.b16 %v6709
        %v6742 = vunpack.c.l.b16 %v6710
        %v6743 = vunpack.c.l.b16 %v6711
        %v6744 = vunpack.c.l.b16 %v6712
        %v6745 = vunpack.c.l.b16 %v6713
        %v6746 = vunpack.c.l.b16 %v6714
        %v6747 = vunpack.c.l.b16 %v6715
        %v6748 = vunpack.c.l.b16 %v6716
        %v6749 = vpack.c.b16 %v6734, %v6733
        %v6750 = vpack.c.b16 %v6736, %v6735
        %v6751 = vpack.c.b16 %v6738, %v6737
        %v6752 = vpack.c.b16 %v6740, %v6739
        %v6753 = vpack.c.b16 %v6742, %v6741
        %v6754 = vpack.c.b16 %v6744, %v6743
        %v6755 = vpack.c.b16 %v6746, %v6745
        %v6756 = vpack.c.b16 %v6748, %v6747
        %6765 = vmatprep.subr.bf16.mxu0 0
        %6766 = vmatpush1.bf16.msra.mxu0 %v6749
        %6767 = vmatprep.subr.bf16.mxu0 0
        %6768 = vmatpush1.bf16.msra.mxu0 %v6750
        %6769 = vmatprep.subr.bf16.mxu0 0
        %6770 = vmatpush1.bf16.msra.mxu0 %v6751
        %6771 = vmatprep.subr.bf16.mxu0 0
        %6772 = vmatpush1.bf16.msra.mxu0 %v6752
        %6773 = vmatprep.subr.bf16.mxu0 0
        %6774 = vmatpush1.bf16.msra.mxu0 %v6753
        %6775 = vmatprep.subr.bf16.mxu0 0
        %6776 = vmatpush1.bf16.msra.mxu0 %v6754
        %6777 = vmatprep.subr.bf16.mxu0 0
        %6778 = vmatpush1.bf16.msra.mxu0 %v6755
        %6779 = vmatprep.subr.bf16.mxu0 0
        %6780 = vmatpush1.bf16.msra.mxu0 %v6756
        %6781 = vmatprep.subr.bf16.mxu0 0
        %6782 = vmatpush1.bf16.msra.mxu0 0
        %6783 = vmatprep.subr.bf16.mxu0 0
        %6784 = vmatpush1.bf16.msra.mxu0 0
        %6785 = vmatprep.subr.bf16.mxu0 0
        %6786 = vmatpush1.bf16.msra.mxu0 0
        %6787 = vmatprep.subr.bf16.mxu0 0
        %6788 = vmatpush1.bf16.msra.mxu0 0
        %6789 = vmatprep.subr.bf16.mxu0 0
        %6790 = vmatpush1.bf16.msra.mxu0 0
        %6791 = vmatprep.subr.bf16.mxu0 0
        %6792 = vmatpush1.bf16.msra.mxu0 0
        %6793 = vmatprep.subr.bf16.mxu0 0
        %6794 = vmatpush1.bf16.msra.mxu0 0
        %6795 = vmatprep.subr.bf16.mxu0 0
        %6796 = vmatpush1.bf16.msra.mxu0 0
        %6797 = vmatprep.mubr.bf16.mxu0 0
        %6798 = vmatmul.mubr.bf16.gmra.mrb[0].mxu0 %v6697
        %v6799 = vpop.f32.mrb[0].mxu0
        %v6800 = vadd.f32 0.0, %v6799
        %v6801 = vpop.f32.mrb[0].mxu0
        %v6802 = vpop.f32.mrb[0].mxu0
        %v6803 = vadd.f32 0.0, %v6802
        %v6804 = vpop.f32.mrb[0].mxu0
        %6805 = vmatprep.mubr.bf16.mxu0 0
        %6806 = vmatmul.mubr.bf16.gmra.mrb[0].mxu0 %v6698
        %v6807 = vpop.f32.mrb[0].mxu0
        %v6808 = vadd.f32 0.0, %v6807
        %v6809 = vpop.f32.mrb[0].mxu0
        %v6810 = vpop.f32.mrb[0].mxu0
        %v6811 = vadd.f32 0.0, %v6810
        %v6812 = vpop.f32.mrb[0].mxu0
        %6813 = vmatprep.mubr.bf16.mxu0 0
        %6814 = vmatmul.mubr.bf16.gmra.mrb[0].mxu0 %v6699
        %v6815 = vpop.f32.mrb[0].mxu0
        %v6816 = vadd.f32 0.0, %v6815
        %v6817 = vpop.f32.mrb[0].mxu0
        %v6818 = vpop.f32.mrb[0].mxu0
        %v6819 = vpop.f32.mrb[0].mxu0
        %6820 = vdwg.mxu0
        %v6821 = vadd.f32 %v6553, %v6800
        %v6822 = vadd.f32 %v6554, %v6803
        %v6823 = vadd.f32 %v6555, %v6808
        %v6824 = vadd.f32 %v6556, %v6811
        %v6825 = vadd.f32 %v6557, %v6816
        %v6826 = vld [vmem:[#allocation6 + $0x2b] sm:$0xff]
        %v6827 = vld [vmem:[#allocation6 + $0x33] sm:$0xff]
        %v6828 = vld [vmem:[#allocation6 + $0x3b] sm:$0xff]
        %v6829 = vld [vmem:[#allocation6 + $0x43] sm:$0xff]
        %v6830 = vld [vmem:[#allocation6 + $0x4b] sm:$0xf]
        %v6831 = vpack.c.bf16 %v6827, %v6826
        %v6832 = vpack.c.bf16 %v6829, %v6828
        %v6833 = vpack.c.bf16 %v6830, %v6830
        %s6834 = scalar_lea.vmem %s9, 512
        %v6835 = vld [vmem:[%s6834] sm:$0xf]
        %v6836 = vld [vmem:[%s6834 + $0x4] sm:$0xf]
        %v6837 = vld [vmem:[%s6834 + $0x8] sm:$0xf]
        %v6838 = vld [vmem:[%s6834 + $0xc] sm:$0xf]
        %v6839 = vld [vmem:[%s6834 + $0x10] sm:$0xf]
        %v6840 = vld [vmem:[%s6834 + $0x14] sm:$0xf]
        %v6841 = vld [vmem:[%s6834 + $0x18] sm:$0xf]
        %v6842 = vld [vmem:[%s6834 + $0x1c] sm:$0xf]
        %v6843 = vld [vmem:[%s6834 + $0x20] sm:$0xf]
        %v6844 = vld [vmem:[%s6834 + $0x24] sm:$0xf]
        %v6845 = vld [vmem:[%s6834 + $0x28] sm:$0xf]
        %v6846 = vld [vmem:[%s6834 + $0x2c] sm:$0xf]
        %v6847 = vld [vmem:[%s6834 + $0x30] sm:$0xf]
        %v6848 = vld [vmem:[%s6834 + $0x34] sm:$0xf]
        %v6849 = vld [vmem:[%s6834 + $0x38] sm:$0xf]
        %v6850 = vld [vmem:[%s6834 + $0x3c] sm:$0xf]
        %v6867 = vunpack.c.l.b16 %v6835
        %v6868 = vunpack.c.l.b16 %v6836
        %v6869 = vunpack.c.l.b16 %v6837
        %v6870 = vunpack.c.l.b16 %v6838
        %v6871 = vunpack.c.l.b16 %v6839
        %v6872 = vunpack.c.l.b16 %v6840
        %v6873 = vunpack.c.l.b16 %v6841
        %v6874 = vunpack.c.l.b16 %v6842
        %v6875 = vunpack.c.l.b16 %v6843
        %v6876 = vunpack.c.l.b16 %v6844
        %v6877 = vunpack.c.l.b16 %v6845
        %v6878 = vunpack.c.l.b16 %v6846
        %v6879 = vunpack.c.l.b16 %v6847
        %v6880 = vunpack.c.l.b16 %v6848
        %v6881 = vunpack.c.l.b16 %v6849
        %v6882 = vunpack.c.l.b16 %v6850
        %v6883 = vpack.c.b16 %v6868, %v6867
        %v6884 = vpack.c.b16 %v6870, %v6869
        %v6885 = vpack.c.b16 %v6872, %v6871
        %v6886 = vpack.c.b16 %v6874, %v6873
        %v6887 = vpack.c.b16 %v6876, %v6875
        %v6888 = vpack.c.b16 %v6878, %v6877
        %v6889 = vpack.c.b16 %v6880, %v6879
        %v6890 = vpack.c.b16 %v6882, %v6881
        %6899 = vmatprep.subr.bf16.mxu0 0
        %6900 = vmatpush1.bf16.msra.mxu0 %v6883
        %6901 = vmatprep.subr.bf16.mxu0 0
        %6902 = vmatpush1.bf16.msra.mxu0 %v6884
        %6903 = vmatprep.subr.bf16.mxu0 0
        %6904 = vmatpush1.bf16.msra.mxu0 %v6885
        %6905 = vmatprep.subr.bf16.mxu0 0
        %6906 = vmatpush1.bf16.msra.mxu0 %v6886
        %6907 = vmatprep.subr.bf16.mxu0 0
        %6908 = vmatpush1.bf16.msra.mxu0 %v6887
        %6909 = vmatprep.subr.bf16.mxu0 0
        %6910 = vmatpush1.bf16.msra.mxu0 %v6888
        %6911 = vmatprep.subr.bf16.mxu0 0
        %6912 = vmatpush1.bf16.msra.mxu0 %v6889
        %6913 = vmatprep.subr.bf16.mxu0 0
        %6914 = vmatpush1.bf16.msra.mxu0 %v6890
        %6915 = vmatprep.subr.bf16.mxu0 0
        %6916 = vmatpush1.bf16.msra.mxu0 0
        %6917 = vmatprep.subr.bf16.mxu0 0
        %6918 = vmatpush1.bf16.msra.mxu0 0
        %6919 = vmatprep.subr.bf16.mxu0 0
        %6920 = vmatpush1.bf16.msra.mxu0 0
        %6921 = vmatprep.subr.bf16.mxu0 0
        %6922 = vmatpush1.bf16.msra.mxu0 0
        %6923 = vmatprep.subr.bf16.mxu0 0
        %6924 = vmatpush1.bf16.msra.mxu0 0
        %6925 = vmatprep.subr.bf16.mxu0 0
        %6926 = vmatpush1.bf16.msra.mxu0 0
        %6927 = vmatprep.subr.bf16.mxu0 0
        %6928 = vmatpush1.bf16.msra.mxu0 0
        %6929 = vmatprep.subr.bf16.mxu0 0
        %6930 = vmatpush1.bf16.msra.mxu0 0
        %6931 = vmatprep.mubr.bf16.mxu0 0
        %6932 = vmatmul.mubr.bf16.gmra.mrb[0].mxu0 %v6831
        %v6933 = vpop.f32.mrb[0].mxu0
        %v6934 = vadd.f32 0.0, %v6933
        %v6935 = vpop.f32.mrb[0].mxu0
        %v6936 = vpop.f32.mrb[0].mxu0
        %v6937 = vadd.f32 0.0, %v6936
        %v6938 = vpop.f32.mrb[0].mxu0
        %6939 = vmatprep.mubr.bf16.mxu0 0
        %6940 = vmatmul.mubr.bf16.gmra.mrb[0].mxu0 %v6832
        %v6941 = vpop.f32.mrb[0].mxu0
        %v6942 = vadd.f32 0.0, %v6941
        %v6943 = vpop.f32.mrb[0].mxu0
        %v6944 = vpop.f32.mrb[0].mxu0
        %v6945 = vadd.f32 0.0, %v6944
        %v6946 = vpop.f32.mrb[0].mxu0
        %6947 = vmatprep.mubr.bf16.mxu0 0
        %6948 = vmatmul.mubr.bf16.gmra.mrb[0].mxu0 %v6833
        %v6949 = vpop.f32.mrb[0].mxu0
        %v6950 = vadd.f32 0.0, %v6949
        %v6951 = vpop.f32.mrb[0].mxu0
        %v6952 = vpop.f32.mrb[0].mxu0
        %v6953 = vpop.f32.mrb[0].mxu0
        %6954 = vdwg.mxu0
        %v6955 = vadd.f32 %v6687, %v6934
        %v6956 = vadd.f32 %v6688, %v6937
        %v6957 = vadd.f32 %v6689, %v6942
        %v6958 = vadd.f32 %v6690, %v6945
        %v6959 = vadd.f32 %v6691, %v6950
        %v6960 = vadd.f32 %v6955, %v6821
        %v6961 = vadd.f32 %v6956, %v6822
        %v6962 = vadd.f32 %v6957, %v6823
        %v6963 = vadd.f32 %v6958, %v6824
        %v6964 = vadd.f32 %v6959, %v6825
        %v6965 = vld [vmem:[%s10] sm:$0x1]
        %v6967 = vlaneseq
        %v6968 = vshrl.u32 %v6967, 7
        %v6969 = vsub.s32 0, %v6968
        %v6970 = vrot.slane %v6965, %v6969
        %v6972 = vadd.f32 %v6960, %v6970
        %v6973 = vadd.f32 %v6961, %v6970
        %v6974 = vadd.f32 %v6962, %v6970
        %v6975 = vadd.f32 %v6963, %v6970
        %v6976 = vadd.f32 %v6964, %v6970
        %v6977 = vmax.f32 %v6972, 0.0
        %v6978 = vmax.f32 %v6973, 0.0
        %v6979 = vmax.f32 %v6974, 0.0
        %v6980 = vmax.f32 %v6975, 0.0
        %v6981 = vmax.f32 %v6976, 0.0
        %v6982 = vld [vmem:[%s16] sm:$0xff]
        %v6983 = vld [vmem:[%s16 + $0x8] sm:$0xff]
        %v6984 = vld [vmem:[%s16 + $0x10] sm:$0xff]
        %v6985 = vld [vmem:[%s16 + $0x18] sm:$0xff]
        %v6986 = vld [vmem:[%s16 + $0x20] sm:$0xf]
        %vm6987 = vcmp.gt.f32.partialorder %v6982, 0.5
        %vm6988 = vcmp.gt.f32.partialorder %v6983, 0.5
        %vm6989 = vcmp.gt.f32.partialorder %v6984, 0.5
        %vm6990 = vcmp.gt.f32.partialorder %v6985, 0.5
        %vm6991 = vcmp.gt.f32.partialorder %v6986, 0.5
        %v6992 = vsel %vm6987, 1, 0
        %v6993 = vsel %vm6988, 1, 0
        %v6994 = vsel %vm6989, 1, 0
        %v6995 = vsel %vm6990, 1, 0
        %v6996 = vsel %vm6991, 1, 0
        %6997 = vset.pattern.permute.xlu0 0
        %6998 = vperm.xlu0 %6997, %v6992
        %v6999 = vpop.permute.xlu0 %6998
        %7000 = vset.pattern.permute.xlu0 0
        %7001 = vperm.xlu0 %7000, %v6993
        %v7002 = vpop.permute.xlu0 %7001
        %7003 = vset.pattern.permute.xlu0 0
        %7004 = vperm.xlu0 %7003, %v6994
        %v7005 = vpop.permute.xlu0 %7004
        %7006 = vset.pattern.permute.xlu0 0
        %7007 = vperm.xlu0 %7006, %v6995
        %v7008 = vpop.permute.xlu0 %7007
        %7009 = vset.pattern.permute.xlu0 0
        %7010 = vperm.xlu0 %7009, %v6996
        %v7011 = vpop.permute.xlu0 %7010
        %vm7012 = vcmp.eq.s32.totalorder %v6999, 1
        %vm7013 = vcmp.eq.s32.totalorder %v7002, 1
        %vm7014 = vcmp.eq.s32.totalorder %v7005, 1
        %vm7015 = vcmp.eq.s32.totalorder %v7008, 1
        %vm7016 = vcmp.eq.s32.totalorder %v7011, 1
        %v7017 = vsel %vm7012, %v6977, 0.0
        %v7018 = vsel %vm7013, %v6978, 0.0
        %v7019 = vsel %vm7014, %v6979, 0.0
        %v7020 = vsel %vm7015, %v6980, 0.0
        %v7021 = vsel %vm7016, %v6981, 0.0
        %v7022 = vadd.f32 %v7017, %v7018
        %v7023 = vadd.f32 %v7022, %v7019
        %v7024 = vadd.f32 %v7023, %v7020
        %vm7025 = vcmask 1043456
        %v7026 = vsel %vm7025, %v7021, 0.0
        %v7027 = vadd.f32 %v7024, %v7026
        %v7028 = vrot.slane %v7027, 4
        %v7029 = vadd.f32 %v7027, %v7028
        %v7030 = vrot.slane %v7029, 2
        %v7031 = vadd.f32 %v7029, %v7030
        %v7032 = vrot.slane %v7031, 1
        %v7033 = vadd.f32 %v7031, %v7032
        %v7034 = vmul.f32 %v7033, 0.25
        %v7035 = vld [vmem:[%s11] sm:$0xff]
        %v7036 = vld [vmem:[%s11 + $0x8] sm:$0xff]
        %v7037 = vld [vmem:[%s11 + $0x10] sm:$0xff]
        %v7038 = vld [vmem:[%s11 + $0x18] sm:$0xff]
        %v7039 = vld [vmem:[%s11 + $0x20] sm:$0xff]
        %v7040 = vld [vmem:[%s11 + $0x28] sm:$0xff]
        %v7041 = vld [vmem:[%s11 + $0x30] sm:$0xff]
        %v7042 = vld [vmem:[%s11 + $0x38] sm:$0xff]
        %v7043 = vld [vmem:[%s11 + $0x40] sm:$0xff]
        %v7044 = vld [vmem:[%s11 + $0x48] sm:$0xff]
        %v7045 = vld [vmem:[%s11 + $0x50] sm:$0xff]
        %v7046 = vld [vmem:[%s11 + $0x58] sm:$0xff]
        %v7047 = vld [vmem:[%s11 + $0x60] sm:$0xff]
        %v7048 = vld [vmem:[%s11 + $0x68] sm:$0xff]
        %v7049 = vld [vmem:[%s11 + $0x70] sm:$0xff]
        %v7050 = vld [vmem:[%s11 + $0x78] sm:$0xff]
        %v7051 = vld [vmem:[%s12] sm:$0x1]
        %7052 = vmatprep.subr.mxu0 0.0
        %7053 = vmatpush1.msra.mxu0 %v7035
        %7054 = vmatprep.subr.mxu0 0.0
        %7055 = vmatpush1.msra.mxu0 %v7036
        %7056 = vmatprep.subr.mxu0 0.0
        %7057 = vmatpush1.msra.mxu0 %v7037
        %7058 = vmatprep.subr.mxu0 0.0
        %7059 = vmatpush1.msra.mxu0 %v7038
        %7060 = vmatprep.subr.mxu0 0.0
        %7061 = vmatpush1.msra.mxu0 %v7039
        %7062 = vmatprep.subr.mxu0 0.0
        %7063 = vmatpush1.msra.mxu0 %v7040
        %7064 = vmatprep.subr.mxu0 0.0
        %7065 = vmatpush1.msra.mxu0 %v7041
        %7066 = vmatprep.subr.mxu0 0.0
        %7067 = vmatpush1.msra.mxu0 %v7042
        %7068 = vmatprep.subr.mxu0 0.0
        %7069 = vmatpush1.msra.mxu0 %v7043
        %7070 = vmatprep.subr.mxu0 0.0
        %7071 = vmatpush1.msra.mxu0 %v7044
        %7072 = vmatprep.subr.mxu0 0.0
        %7073 = vmatpush1.msra.mxu0 %v7045
        %7074 = vmatprep.subr.mxu0 0.0
        %7075 = vmatpush1.msra.mxu0 %v7046
        %7076 = vmatprep.subr.mxu0 0.0
        %7077 = vmatpush1.msra.mxu0 %v7047
        %7078 = vmatprep.subr.mxu0 0.0
        %7079 = vmatpush1.msra.mxu0 %v7048
        %7080 = vmatprep.subr.mxu0 0.0
        %7081 = vmatpush1.msra.mxu0 %v7049
        %7082 = vmatprep.subr.mxu0 0.0
        %7083 = vmatpush1.msra.mxu0 %v7050
        %7084 = vmatprep.subr.mxu0 0.0
        %7085 = vmatpush1.msra.mxu0 0.0
        %7086 = vmatprep.subr.mxu0 0.0
        %7087 = vmatpush1.msra.mxu0 0.0
        %7088 = vmatprep.subr.mxu0 0.0
        %7089 = vmatpush1.msra.mxu0 0.0
        %7090 = vmatprep.subr.mxu0 0.0
        %7091 = vmatpush1.msra.mxu0 0.0
        %7092 = vmatprep.subr.mxu0 0.0
        %7093 = vmatpush1.msra.mxu0 0.0
        %7094 = vmatprep.subr.mxu0 0.0
        %7095 = vmatpush1.msra.mxu0 0.0
        %7096 = vmatprep.subr.mxu0 0.0
        %7097 = vmatpush1.msra.mxu0 0.0
        %7098 = vmatprep.subr.mxu0 0.0
        %7099 = vmatpush1.msra.mxu0 0.0
        %7100 = vmatprep.subr.mxu0 0.0
        %7101 = vmatpush1.msra.mxu0 0.0
        %7102 = vmatprep.subr.mxu0 0.0
        %7103 = vmatpush1.msra.mxu0 0.0
        %7104 = vmatprep.subr.mxu0 0.0
        %7105 = vmatpush1.msra.mxu0 0.0
        %7106 = vmatprep.subr.mxu0 0.0
        %7107 = vmatpush1.msra.mxu0 0.0
        %7108 = vmatprep.subr.mxu0 0.0
        %7109 = vmatpush1.msra.mxu0 0.0
        %7110 = vmatprep.subr.mxu0 0.0
        %7111 = vmatpush1.msra.mxu0 0.0
        %7112 = vmatprep.subr.mxu0 0.0
        %7113 = vmatpush1.msra.mxu0 0.0
        %7114 = vmatprep.subr.mxu0 0.0
        %7115 = vmatpush1.msra.mxu0 0.0
        %7116 = vmatprep.mubr.f32.mxu0 0.0
        %7117 = vmatmul.mubr.f32.gmra.mrb[0].mxu0 %v7034
        %v7118 = vpop.f32.mrb[0].mxu0
        %v7119 = vadd.f32 %v7051, %v7118
        %v7120 = vpop.f32.mrb[0].mxu0
        %7121 = vdwg.mxu0
        %vm7122 = vcmask 40960
        %7123 = vst.msk [vmem:[%s540] sm:$0x1] %vm7122, %v7119
        %s7124 = sand.u32 %s401, 1
        %s7125 = scalar_lea.sflag [#allocation8], %s7124
        %s7126 = sand.u32 %s401, 1
        %s7127 = scalar_lea.vmem [#allocation7], %s7126
        // Predicated region
        $region89: #{cnn_classifier_forward.1} parent=87 // pred_check
          %p7128 = pneg %p411
        $region90: #{cnn_classifier_forward.1} parent=87 // pred_check_branch
          %7130 = sbr.rel (%p7128) target = $region92
        $region91: #{cnn_classifier_forward.1} parent=87 // pred_region
          %s7132 = ssub.s32 16, 16
          %7133 = vsyncadd %s7125, %s7132
          %s7134 = smul.addr %s31, 16
          %s7135 = scalar_lea.hbm %s17, %s7134
          %s7137 = sshll.u32 %s7127, 4
          %s7138 = int_to_ptr.vmem [resolvable:$true] %s7137
          %7140 = dma.vmem_to_hbm [thread:$0]  %s7138, 16, %s7135, %s7125
        $region92: #{cnn_classifier_forward.1} parent=87 // pred_fallthru
          _
      $region88: #{cnn_classifier_forward.1} parent=5 // pred_fallthru
        _
      %p7141 = scmp.le.s32.totalorder 2, %s26
      // Predicated region
      $region93: #{cnn_classifier_forward.1} parent=5 // pred_check
        %p7142 = pneg %p7141
      $region94: #{cnn_classifier_forward.1} parent=5 // pred_check_branch
        %7144 = sbr.rel (%p7142) target = $region96
      $region95: #{cnn_classifier_forward.1} parent=5 // pred_region
        %s7145 = ssub.s32 %s26, 2
        // Predicated region
        $region97: #{cnn_classifier_forward.1} parent=95 // pred_check
          %p7146 = pneg %p417
        $region98: #{cnn_classifier_forward.1} parent=95 // pred_check_branch
          %7148 = sbr.rel (%p7146) target = $region100
        $region99: #{cnn_classifier_forward.1} parent=95 // pred_region
          %s7149 = sand.u32 %s402, 1
          %s7150 = scalar_lea.sflag [#allocation8], %s7149
          %s7151 = sand.u32 %s402, 1
          %s7152 = scalar_lea.vmem [#allocation7], %s7151
          %7153 = dma.done %s7150, 16
        $region100: #{cnn_classifier_forward.1} parent=95 // pred_fallthru
          _
      $region96: #{cnn_classifier_forward.1} parent=5 // pred_fallthru
        _
    $region6: #{cnn_classifier_forward.1} parent=1 // loop_footer
      %s30 = sadd.s32 1, %s26
    $region7: #{cnn_classifier_forward.1} parent=1 // loop_footer_branch
      %25 = sbr.rel target = $region3
    $region8: #{cnn_classifier_forward.1} parent=1 // loop_exit
      _
    %7154 = vsyncpa [#allocation8], 1
    %s7155 = scalar_lea.sflag [#allocation8], 1
    %7156 = vsyncpa %s7155, 1

</llo_original>
